<compile_context>
chip_gen: v6e
topology: v6e:2x2x1
jax: 0.10.0
libtpu: 0.0.40
codegen_flags: <defaults>
</compile_context>

<pallas_src>
import math
import functools

import jax
import jax.numpy as jnp
from jax import lax
from jax.experimental import pallas as pl
from jax.experimental.pallas import tpu as pltpu

# ---------------- small synthetic config ----------------
B = 2            # batch
N_PTS = 64       # points per cloud
NUM_GROUP = 16   # G
GROUP_SIZE = 8   # M
ENC_DIM = 128    # pc_encoder_dim
TRANS_DIM = 128  # pc_feat_dim
EMBED_DIM = 128  # embed_dim
NUM_HEADS = 4
HEAD_DIM = TRANS_DIM // NUM_HEADS
MLP_DIM = 4 * TRANS_DIM
DEPTH = 2        # number of transformer blocks (synthetic; timm model is external)
LN_EPS = 1e-5
BN_EPS = 1e-5
W_DTYPE = jnp.bfloat16   # matmul weights stored bf16; f32 accumulation inside kernels
ACT_DTYPE = jnp.bfloat16 # inter-kernel activation storage (halves HBM traffic)


# ======================= small helpers =======================

def _full_spec(shape):
    nd = len(shape)
    return pl.BlockSpec(shape, lambda i, _nd=nd: (0,) * _nd)


def _depth_spec(w):
    """BlockSpec selecting the grid-step-l slice of a (DEPTH, ...) stacked weight."""
    nrest = w.ndim - 1
    return pl.BlockSpec((None,) + w.shape[1:],
                        lambda l, _n=nrest: (l,) + (0,) * _n)


def _ln(x, g, b):
    mu = jnp.mean(x, axis=-1, keepdims=True)
    var = jnp.mean(jnp.square(x - mu), axis=-1, keepdims=True)
    return (x - mu) * lax.rsqrt(var + LN_EPS) * g + b


# ======================= encoder kernel =======================

def _encoder_kernel(x_ref, c_ref,
                    w1, b1, s1, t1, w2, b2,
                    w3g, w3l, b3, s3, t3, w4, b4,
                    ew, eb, pw1, pb1,
                    o_ref):
    """Fused Uni3D Encoder + encoder2trans + pos_embed(center).
    x_ref: (bg, M, 6); c_ref: (bg, 3); o_ref: (bg, TRANS_DIM) bf16."""
    tg, m, _ = x_ref.shape
    x = x_ref[...].reshape(tg * m, 6)

    # first_conv Conv1d(6,128): K=6 contraction as 6 broadcast-FMAs on the VPU
    # (a K=6 MXU pass would leave >95% of the systolic array idle).
    h = b1[...] + x[:, 0:1] * w1[0:1, :]
    for k in range(1, 6):
        h = h + x[:, k:k + 1] * w1[k:k + 1, :]
    # BN (eval, folded affine) + ReLU + Conv1d(128,256)
    h = jnp.maximum(h * s1[...] + t1[...], 0.0)
    feat = jnp.dot(h.astype(w2.dtype), w2[...], preferred_element_type=jnp.float32) + b2[...]

    # global max over the M points of each group (no broadcast/concat materialized)
    fglob = jnp.max(feat.reshape(tg, m, 256), axis=1)                      # (tg, 256)

    # second_conv Conv1d(512,512): concat([global, local]) @ W == global@Wg + local@Wl
    loc = jnp.dot(feat.astype(w3l.dtype), w3l[...], preferred_element_type=jnp.float32)
    glo = jnp.dot(fglob.astype(w3g.dtype), w3g[...], preferred_element_type=jnp.float32)
    h2 = loc.reshape(tg, m, 512) + (glo + b3[...])[:, None, :]
    h2 = jnp.maximum(h2 * s3[...] + t3[...], 0.0)
    h2 = jnp.dot(h2.reshape(tg * m, 512).astype(w4.dtype), w4[...],
                 preferred_element_type=jnp.float32) + b4[...]
    tok = jnp.max(h2.reshape(tg, m, ENC_DIM), axis=1)                      # (tg, ENC_DIM)

    # pos_embed first Linear(3,128): K=3 as broadcast-FMAs on the VPU, then GELU
    c = c_ref[...]
    p1 = pb1[...] + c[:, 0:1] * pw1[0:1, :] + c[:, 1:2] * pw1[1:2, :] + c[:, 2:3] * pw1[2:3, :]
    # TODO(synk): PyTorch nn.GELU is exact (erf); tanh approximation used for robust lowering.
    p1 = jax.nn.gelu(p1, approximate=True)

    # encoder2trans and pos_embed second Linear fused into ONE K=256 matmul
    tp = jnp.concatenate([tok, p1], axis=-1)                               # (tg, ENC_DIM+128)
    out = jnp.dot(tp.astype(ew.dtype), ew[...], preferred_element_type=jnp.float32) + eb[...]
    o_ref[...] = out.astype(o_ref.dtype)


def encoder_forward(features, center, p):
    """features: (B*G, M, 6), center: (B*G, 3) -> (B*G, TRANS_DIM) bf16 tokens(+pos)."""
    bg, m, _ = features.shape
    weights = (p["w1"], p["b1"], p["s1"], p["t1"], p["w2"], p["b2"],
               p["w3g"], p["w3l"], p["b3"], p["s3"], p["t3"], p["w4"], p["b4"],
               p["e2t_pos_w"], p["e2t_pos_b"], p["pos_w1"], p["pos_b1"])
    # Single grid step over the whole (B*G) tile: on 1-TC chips a serial split only adds
    # per-step overhead and halves matmul rows per MXU pass.
    # TODO(synk): on v7x (2 TCs) a parallel 2-way group split + VMEM-budgeted tile would help
    # once scaled to real Uni3D sizes.
    in_specs = [pl.BlockSpec((bg, m, 6), lambda i: (0, 0, 0)),
                pl.BlockSpec((bg, 3), lambda i: (0, 0))]
    in_specs += [_full_spec(w.shape) for w in weights]
    return pl.pallas_call(
        _encoder_kernel,
        out_shape=jax.ShapeDtypeStruct((bg, TRANS_DIM), ACT_DTYPE),
        grid=(1,),
        in_specs=in_specs,
        out_specs=pl.BlockSpec((bg, TRANS_DIM), lambda i: (0, 0)),
    )(features, center, *weights)


# ======================= fused transformer depth + tail kernel =======================

def _vit_kernel(x_ref,
                ln1g, ln1b, wqkv, bqkv, wo, bo,
                ln2g, ln2b, mw1, mb1, mw2, mb2,
                ng, nb, fg, fb, t2e_w, t2e_b,
                o_ref, x_sc, sc_sc, ctx_sc, *, num_heads, head_dim, s_valid):
    """grid=(DEPTH,) 'arbitrary'; x carried in VMEM scratch across depth; tail fused on
    the last grid step.  Full batch processed per step (row-wise LN/QKV/MLP on (B*S, D))."""
    l = pl.program_id(0)
    bb, ss, dd = x_sc.shape
    d = num_heads * head_dim

    @pl.when(l == 0)
    def _():
        x_sc[...] = x_ref[...].astype(jnp.float32)

    x = x_sc[...].reshape(bb * ss, dd)                                     # (B*S, D) f32

    # ---- attention (1/sqrt(head_dim) pre-folded into the q columns of wqkv/bqkv) ----
    h = _ln(x, ln1g[...], ln1b[...])
    qkv = jnp.dot(h.astype(wqkv.dtype), wqkv[...], preferred_element_type=jnp.float32) + bqkv[...]
    wo_f = wo[...]

    # padded key columns (>= s_valid) masked before softmax
    key_mask = lax.broadcasted_iota(jnp.int32, (1, ss), 1) >= s_valid
    neg = jnp.where(key_mask, jnp.float32(-1e30), jnp.float32(0.0))        # (1, S)

    attn_rows = []
    for b in range(bb):
        qkv_b = qkv[b * ss:(b + 1) * ss, :]
        # stack all heads' SxS scores along sublanes -> one softmax per batch element
        for hh in range(num_heads):
            lo = hh * head_dim
            qh = qkv_b[:, lo:lo + head_dim]
            kh = qkv_b[:, d + lo:d + lo + head_dim]
            sc_sc[hh * ss:(hh + 1) * ss, :] = lax.dot_general(
                qh, kh, (((1,), (1,)), ((), ())), preferred_element_type=jnp.float32)
        pr = jax.nn.softmax(sc_sc[...] + neg, axis=-1)                     # (H*S, S)
        # gather each head's ctx into lane offsets of an (S, D) scratch -> ONE K=D Wo dot
        for hh in range(num_heads):
            lo = hh * head_dim
            vh = qkv_b[:, 2 * d + lo:2 * d + lo + head_dim]
            ctx_sc[:, lo:lo + head_dim] = jnp.dot(pr[hh * ss:(hh + 1) * ss, :], vh,
                                                  preferred_element_type=jnp.float32)
        attn_rows.append(jnp.dot(ctx_sc[...].astype(wo_f.dtype), wo_f,
                                 preferred_element_type=jnp.float32))
    attn = jnp.concatenate(attn_rows, axis=0)                              # (B*S, D)
    x = x + attn + bo[...]

    # ---- MLP ----
    h2 = _ln(x, ln2g[...], ln2b[...])
    m1 = jnp.dot(h2.astype(mw1.dtype), mw1[...], preferred_element_type=jnp.float32) + mb1[...]
    m1 = jax.nn.gelu(m1, approximate=True)
    m2 = jnp.dot(m1.astype(mw2.dtype), mw2[...], preferred_element_type=jnp.float32) + mb2[...]
    x = x + m2

    x_sc[...] = x.reshape(bb, ss, dd)

    # ---- fused tail on the final block: visual_norm -> fc_norm -> trans2embed ----
    @pl.when(l == pl.num_programs(0) - 1)
    def _():
        cls_x = jnp.concatenate([x[b * ss:b * ss + 1, :] for b in range(bb)], axis=0)  # (B, D)
        cls_x = _ln(cls_x, ng[...], nb[...])
        cls_x = _ln(cls_x, fg[...], fb[...])
        o_ref[...] = (jnp.dot(cls_x.astype(t2e_w.dtype), t2e_w[...],
                              preferred_element_type=jnp.float32) + t2e_b[...]).astype(o_ref.dtype)


def vit_forward(x, params, s_valid):
    """x: (B, S_pad, D) bf16 (cls + tokens+pos, zero-padded) -> (B, EMBED_DIM) f32."""
    bb, s, d = x.shape
    blk = params["blocks"]
    per_depth = (blk["ln1_g"], blk["ln1_b"], blk["wqkv"], blk["bqkv"], blk["wo"], blk["bo"],
                 blk["ln2_g"], blk["ln2_b"], blk["mw1"], blk["mb1"], blk["mw2"], blk["mb2"])
    const_w = (params["norm_g"], params["norm_b"], params["fc_norm_g"], params["fc_norm_b"],
               params["trans2embed_w"], params["trans2embed_b"])

    in_specs = ([pl.BlockSpec((bb, s, d), lambda l: (0, 0, 0))]
                + [_depth_spec(w) for w in per_depth]
                + [_full_spec(w.shape) for w in const_w])

    kern = functools.partial(_vit_kernel, num_heads=NUM_HEADS, head_dim=HEAD_DIM,
                             s_valid=s_valid)
    return pl.pallas_call(
        kern,
        out_shape=jax.ShapeDtypeStruct((bb, EMBED_DIM), jnp.float32),
        grid=(DEPTH,),
        in_specs=in_specs,
        out_specs=pl.BlockSpec((bb, EMBED_DIM), lambda l: (0, 0)),
        scratch_shapes=[pltpu.VMEM((bb, s, d), jnp.float32),          # x carried across depth
                        pltpu.VMEM((NUM_HEADS * s, s), jnp.float32),  # stacked per-head scores
                        pltpu.VMEM((s, d), jnp.float32)],             # per-batch ctx gather
        compiler_params=pltpu.CompilerParams(dimension_semantics=("arbitrary",)),
    )(x, *per_depth, *const_w)


# ======================= group divider (plain JAX glue) =======================

def farthest_point_sampling(xyz, k):
    """xyz: (B, N, 3) -> (B, k) indices (deterministic, starts at index 0)."""
    b, n, _ = xyz.shape

    def body(i, state):
        dists, idxs, last = state
        last_pt = jnp.take_along_axis(xyz, last[:, None, None], axis=1)    # (B, 1, 3)
        d = jnp.sum(jnp.square(xyz - last_pt), axis=-1)                    # (B, N)
        dists = jnp.minimum(dists, d)
        nxt = jnp.argmax(dists, axis=-1).astype(jnp.int32)
        idxs = idxs.at[:, i].set(nxt)
        return dists, idxs, nxt

    idxs = jnp.zeros((b, k), jnp.int32)
    start = jnp.zeros((b,), jnp.int32)
    dists = jnp.full((b, n), jnp.inf, jnp.float32)
    _, idxs, _ = jax.lax.fori_loop(1, k, body, (dists, idxs, start))
    return idxs


def knn_point(nsample, xyz, new_xyz):
    """xyz: (B, N, 3), new_xyz: (B, G, 3) -> (B, G, nsample) nearest-point indices."""
    d = -2.0 * jnp.einsum("bgc,bnc->bgn", new_xyz, xyz)
    d += jnp.sum(new_xyz ** 2, axis=-1)[..., None]
    d += jnp.sum(xyz ** 2, axis=-1)[:, None, :]
    _, idx = jax.lax.top_k(-d, nsample)
    return idx


def group_divider(pts, colors):
    fps_idx = farthest_point_sampling(pts, NUM_GROUP)                      # (B, G)
    center = jnp.take_along_axis(pts, fps_idx[..., None], axis=1)          # (B, G, 3)
    idx = knn_point(GROUP_SIZE, pts, center)                               # (B, G, M)
    gather = jax.vmap(lambda p, i: p[i])                                   # (N,3),(G,M)->(G,M,3)
    neighborhood = gather(pts, idx) - center[:, :, None, :]
    neighborhood_color = gather(colors, idx)
    features = jnp.concatenate([neighborhood, neighborhood_color], axis=-1)  # (B, G, M, 6)
    return center, features


# ======================= full forward (eval=True path) =======================

def uni3d_forward(pcd, params):
    pts = pcd[..., :3]
    colors = pcd[..., 3:]
    center, features = group_divider(pts, colors)
    bb, g, m, _ = features.shape

    # fused: per-group pointnet encoder + (encoder2trans ⊕ pos_embed) epilogue, bf16 out
    tok_pos = encoder_forward(features.reshape(bb * g, m, 6),
                              center.reshape(bb * g, 3), params["enc"])    # (B*G, D) bf16
    tok_pos = tok_pos.reshape(bb, g, TRANS_DIM)

    cls = jnp.broadcast_to((params["cls_token"] + params["cls_pos"]).astype(ACT_DTYPE),
                           (bb, 1, TRANS_DIM))
    x = jnp.concatenate([cls, tok_pos], axis=1)                            # (B, G+1, D)
    s_valid = g + 1
    pad = (-s_valid) % 8                                                    # sublane-dense seq
    if pad:
        x = jnp.pad(x, ((0, 0), (0, pad), (0, 0)))

    # eval=True: random_point_dropout / PatchDropout / pos_drop are identity.
    # TODO(synk): timm EVA02 blocks (RoPE, SwiGLU, q/k-norm) are external; standard pre-norm
    # ViT blocks used here. All DEPTH blocks + norm/fc_norm/trans2embed run in ONE pallas_call.
    return vit_forward(x, params, s_valid)


# ======================= deterministic parameter init =======================

def init_params(key):
    keys = iter(jax.random.split(key, 96))
    f32 = jnp.float32

    def nrm(shape, scale=0.02, dtype=W_DTYPE):
        return (scale * jax.random.normal(next(keys), shape)).astype(dtype)

    # eval-mode BatchNorm folded to per-channel affine (defaults: gamma=1, beta=0, mean=0, var=1)
    # TODO(synk): loading a real checkpoint requires folding actual running stats/affine params.
    bn_scale = 1.0 / math.sqrt(1.0 + BN_EPS)
    p = {}

    # encoder2trans and pos_embed second Linear fused into one (ENC_DIM+128, TRANS_DIM) weight
    e2t_w = 0.02 * jax.random.normal(next(keys), (ENC_DIM, TRANS_DIM))
    pos_w2 = 0.02 * jax.random.normal(next(keys), (128, TRANS_DIM))
    e2t_b = 0.02 * jax.random.normal(next(keys), (1, TRANS_DIM))
    pos_b2 = 0.02 * jax.random.normal(next(keys), (1, TRANS_DIM))

    p["enc"] = dict(
        w1=nrm((6, 128), dtype=f32), b1=nrm((1, 128), dtype=f32),          # K=6 FMA path: keep f32
        s1=jnp.full((1, 128), bn_scale, f32), t1=jnp.zeros((1, 128), f32),
        w2=nrm((128, 256)), b2=nrm((1, 256), dtype=f32),
        # second_conv Conv1d(512,512) split into the [global | local] input-channel halves
        w3g=nrm((256, 512)), w3l=nrm((256, 512)), b3=nrm((1, 512), dtype=f32),
        s3=jnp.full((1, 512), bn_scale, f32), t3=jnp.zeros((1, 512), f32),
        w4=nrm((512, ENC_DIM)), b4=nrm((1, ENC_DIM), dtype=f32),
        e2t_pos_w=jnp.concatenate([e2t_w, pos_w2], axis=0).astype(W_DTYPE),
        e2t_pos_b=(e2t_b + pos_b2).astype(f32),
        pos_w1=nrm((3, 128), dtype=f32), pos_b1=nrm((1, 128), dtype=f32),  # K=3 FMA path: f32
    )
    p["trans2embed_w"] = nrm((TRANS_DIM, EMBED_DIM))
    p["trans2embed_b"] = nrm((1, EMBED_DIM), dtype=f32)
    p["cls_token"] = jnp.zeros((1, 1, TRANS_DIM), f32)          # nn.Parameter(torch.zeros)
    p["cls_pos"] = nrm((1, 1, TRANS_DIM), 1.0, dtype=f32)       # nn.Parameter(torch.randn)

    # attention scale 1/sqrt(head_dim) folded into the Q columns of the qkv projection
    scale = 1.0 / math.sqrt(HEAD_DIM)
    qk_fold = jnp.concatenate([jnp.full((TRANS_DIM,), scale, f32),
                               jnp.ones((2 * TRANS_DIM,), f32)])
    blocks = []
    for _ in range(DEPTH):
        wqkv = 0.02 * jax.random.normal(next(keys), (TRANS_DIM, 3 * TRANS_DIM))
        bqkv = 0.02 * jax.random.normal(next(keys), (1, 3 * TRANS_DIM))
        blocks.append(dict(
            ln1_g=jnp.ones((1, TRANS_DIM), f32), ln1_b=jnp.zeros((1, TRANS_DIM), f32),
            wqkv=(wqkv * qk_fold[None, :]).astype(W_DTYPE),
            bqkv=(bqkv * qk_fold[None, :]).astype(f32),
            wo=nrm((TRANS_DIM, TRANS_DIM)), bo=nrm((1, TRANS_DIM), dtype=f32),
            ln2_g=jnp.ones((1, TRANS_DIM), f32), ln2_b=jnp.zeros((1, TRANS_DIM), f32),
            mw1=nrm((TRANS_DIM, MLP_DIM)), mb1=nrm((1, MLP_DIM), dtype=f32),
            mw2=nrm((MLP_DIM, TRANS_DIM)), mb2=nrm((1, TRANS_DIM), dtype=f32),
        ))
    # stack per-block weights along a leading DEPTH dim (selected by the grid index)
    p["blocks"] = {k: jnp.stack([b[k] for b in blocks], axis=0) for k in blocks[0]}

    p["norm_g"] = jnp.ones((1, TRANS_DIM), f32); p["norm_b"] = jnp.zeros((1, TRANS_DIM), f32)
    p["fc_norm_g"] = jnp.ones((1, TRANS_DIM), f32); p["fc_norm_b"] = jnp.zeros((1, TRANS_DIM), f32)
    return p


if __name__ == "__main__":
    key = jax.random.PRNGKey(0)
    pkey, dkey = jax.random.split(key)
    params = init_params(pkey)
    # pcd: (B, N, 6) = xyz + rgb
    pcd = jax.random.uniform(dkey, (B, N_PTS, 6), jnp.float32)

    out = jax.jit(uni3d_forward)(pcd, params)                  # forward(pcd, eval=True) path
    out = jax.block_until_ready(out)
    assert out.shape == (B, EMBED_DIM) and out.dtype == jnp.float32
    assert bool(jnp.all(jnp.isfinite(out)))
    print("KERNEL_OK")
</pallas_src>

<mosaic_0001>
module attributes {stable_mosaic.version = 11 : i64} {
  func.func @_encoder_kernel(%arg0: i32, %arg1: memref<32x8x6xf32, #tpu.memory_space<vmem>>, %arg2: memref<32x3xf32, #tpu.memory_space<vmem>>, %arg3: memref<6x128xf32, #tpu.memory_space<vmem>>, %arg4: memref<1x128xf32, #tpu.memory_space<vmem>>, %arg5: memref<1x128xf32, #tpu.memory_space<vmem>>, %arg6: memref<1x128xf32, #tpu.memory_space<vmem>>, %arg7: memref<128x256xbf16, #tpu.memory_space<vmem>>, %arg8: memref<1x256xf32, #tpu.memory_space<vmem>>, %arg9: memref<256x512xbf16, #tpu.memory_space<vmem>>, %arg10: memref<256x512xbf16, #tpu.memory_space<vmem>>, %arg11: memref<1x512xf32, #tpu.memory_space<vmem>>, %arg12: memref<1x512xf32, #tpu.memory_space<vmem>>, %arg13: memref<1x512xf32, #tpu.memory_space<vmem>>, %arg14: memref<512x128xbf16, #tpu.memory_space<vmem>>, %arg15: memref<1x128xf32, #tpu.memory_space<vmem>>, %arg16: memref<256x128xbf16, #tpu.memory_space<vmem>>, %arg17: memref<1x128xf32, #tpu.memory_space<vmem>>, %arg18: memref<3x128xf32, #tpu.memory_space<vmem>>, %arg19: memref<1x128xf32, #tpu.memory_space<vmem>>, %arg20: memref<32x128xbf16, #tpu.memory_space<vmem>>) attributes {dimension_semantics = [#tpu.dimension_semantics<arbitrary>], iteration_bounds = array<i64: 1>, scalar_prefetch = 0 : i64, scratch_operands = 0 : i64, tpu.core_type = #tpu.core_type<tc>, window_params = [{pipeline_mode = #tpu.pipeline_mode<synchronous>, transform_indices = @transform_0, window_bounds = array<i64: 32, 8, 6>}, {pipeline_mode = #tpu.pipeline_mode<synchronous>, transform_indices = @transform_1, window_bounds = array<i64: 32, 3>}, {pipeline_mode = #tpu.pipeline_mode<synchronous>, transform_indices = @transform_2, window_bounds = array<i64: 6, 128>}, {pipeline_mode = #tpu.pipeline_mode<synchronous>, transform_indices = @transform_3, window_bounds = array<i64: 1, 128>}, {pipeline_mode = #tpu.pipeline_mode<synchronous>, transform_indices = @transform_4, window_bounds = array<i64: 1, 128>}, {pipeline_mode = #tpu.pipeline_mode<synchronous>, transform_indices = @transform_5, window_bounds = array<i64: 1, 128>}, {pipeline_mode = #tpu.pipeline_mode<synchronous>, transform_indices = @transform_6, window_bounds = array<i64: 128, 256>}, {pipeline_mode = #tpu.pipeline_mode<synchronous>, transform_indices = @transform_7, window_bounds = array<i64: 1, 256>}, {pipeline_mode = #tpu.pipeline_mode<synchronous>, transform_indices = @transform_8, window_bounds = array<i64: 256, 512>}, {pipeline_mode = #tpu.pipeline_mode<synchronous>, transform_indices = @transform_9, window_bounds = array<i64: 256, 512>}, {pipeline_mode = #tpu.pipeline_mode<synchronous>, transform_indices = @transform_10, window_bounds = array<i64: 1, 512>}, {pipeline_mode = #tpu.pipeline_mode<synchronous>, transform_indices = @transform_11, window_bounds = array<i64: 1, 512>}, {pipeline_mode = #tpu.pipeline_mode<synchronous>, transform_indices = @transform_12, window_bounds = array<i64: 1, 512>}, {pipeline_mode = #tpu.pipeline_mode<synchronous>, transform_indices = @transform_13, window_bounds = array<i64: 512, 128>}, {pipeline_mode = #tpu.pipeline_mode<synchronous>, transform_indices = @transform_14, window_bounds = array<i64: 1, 128>}, {pipeline_mode = #tpu.pipeline_mode<synchronous>, transform_indices = @transform_15, window_bounds = array<i64: 256, 128>}, {pipeline_mode = #tpu.pipeline_mode<synchronous>, transform_indices = @transform_16, window_bounds = array<i64: 1, 128>}, {pipeline_mode = #tpu.pipeline_mode<synchronous>, transform_indices = @transform_17, window_bounds = array<i64: 3, 128>}, {pipeline_mode = #tpu.pipeline_mode<synchronous>, transform_indices = @transform_18, window_bounds = array<i64: 1, 128>}, {pipeline_mode = #tpu.pipeline_mode<synchronous>, transform_indices = @transform_19, window_bounds = array<i64: 32, 128>}]} {
    %c0 = arith.constant 0 : index
    %c0_0 = arith.constant 0 : index
    %c0_1 = arith.constant 0 : index
    %0 = vector.load %arg1[%c0, %c0_0, %c0_1] : memref<32x8x6xf32, #tpu.memory_space<vmem>>, vector<32x8x6xf32>
    %1 = vector.shape_cast %0 : vector<32x8x6xf32> to vector<256x6xf32>
    %c0_2 = arith.constant 0 : index
    %c0_3 = arith.constant 0 : index
    %2 = vector.load %arg4[%c0_2, %c0_3] : memref<1x128xf32, #tpu.memory_space<vmem>>, vector<1x128xf32>
    %3 = vector.extract_strided_slice %1 {offsets = [0, 0], sizes = [256, 1], strides = [1, 1]} : vector<256x6xf32> to vector<256x1xf32>
    %c0_4 = arith.constant 0 : index
    %c0_5 = arith.constant 0 : index
    %4 = vector.load %arg3[%c0_4, %c0_5] : memref<6x128xf32, #tpu.memory_space<vmem>>, vector<1x128xf32>
    %5 = vector.broadcast %3 : vector<256x1xf32> to vector<256x128xf32>
    %6 = vector.broadcast %4 : vector<1x128xf32> to vector<256x128xf32>
    %7 = arith.mulf %5, %6 : vector<256x128xf32>
    %8 = vector.broadcast %2 : vector<1x128xf32> to vector<256x128xf32>
    %9 = arith.addf %8, %7 : vector<256x128xf32>
    %10 = vector.extract_strided_slice %1 {offsets = [0, 1], sizes = [256, 1], strides = [1, 1]} : vector<256x6xf32> to vector<256x1xf32>
    %c1 = arith.constant 1 : index
    %c0_6 = arith.constant 0 : index
    %11 = vector.load %arg3[%c1, %c0_6] : memref<6x128xf32, #tpu.memory_space<vmem>>, vector<1x128xf32>
    %12 = vector.broadcast %10 : vector<256x1xf32> to vector<256x128xf32>
    %13 = vector.broadcast %11 : vector<1x128xf32> to vector<256x128xf32>
    %14 = arith.mulf %12, %13 : vector<256x128xf32>
    %15 = arith.addf %9, %14 : vector<256x128xf32>
    %16 = vector.extract_strided_slice %1 {offsets = [0, 2], sizes = [256, 1], strides = [1, 1]} : vector<256x6xf32> to vector<256x1xf32>
    %c2 = arith.constant 2 : index
    %c0_7 = arith.constant 0 : index
    %17 = vector.load %arg3[%c2, %c0_7] : memref<6x128xf32, #tpu.memory_space<vmem>>, vector<1x128xf32>
    %18 = vector.broadcast %16 : vector<256x1xf32> to vector<256x128xf32>
    %19 = vector.broadcast %17 : vector<1x128xf32> to vector<256x128xf32>
    %20 = arith.mulf %18, %19 : vector<256x128xf32>
    %21 = arith.addf %15, %20 : vector<256x128xf32>
    %22 = vector.extract_strided_slice %1 {offsets = [0, 3], sizes = [256, 1], strides = [1, 1]} : vector<256x6xf32> to vector<256x1xf32>
    %c3 = arith.constant 3 : index
    %c0_8 = arith.constant 0 : index
    %23 = vector.load %arg3[%c3, %c0_8] : memref<6x128xf32, #tpu.memory_space<vmem>>, vector<1x128xf32>
    %24 = vector.broadcast %22 : vector<256x1xf32> to vector<256x128xf32>
    %25 = vector.broadcast %23 : vector<1x128xf32> to vector<256x128xf32>
    %26 = arith.mulf %24, %25 : vector<256x128xf32>
    %27 = arith.addf %21, %26 : vector<256x128xf32>
    %28 = vector.extract_strided_slice %1 {offsets = [0, 4], sizes = [256, 1], strides = [1, 1]} : vector<256x6xf32> to vector<256x1xf32>
    %c4 = arith.constant 4 : index
    %c0_9 = arith.constant 0 : index
    %29 = vector.load %arg3[%c4, %c0_9] : memref<6x128xf32, #tpu.memory_space<vmem>>, vector<1x128xf32>
    %30 = vector.broadcast %28 : vector<256x1xf32> to vector<256x128xf32>
    %31 = vector.broadcast %29 : vector<1x128xf32> to vector<256x128xf32>
    %32 = arith.mulf %30, %31 : vector<256x128xf32>
    %33 = arith.addf %27, %32 : vector<256x128xf32>
    %34 = vector.extract_strided_slice %1 {offsets = [0, 5], sizes = [256, 1], strides = [1, 1]} : vector<256x6xf32> to vector<256x1xf32>
    %c5 = arith.constant 5 : index
    %c0_10 = arith.constant 0 : index
    %35 = vector.load %arg3[%c5, %c0_10] : memref<6x128xf32, #tpu.memory_space<vmem>>, vector<1x128xf32>
    %36 = vector.broadcast %34 : vector<256x1xf32> to vector<256x128xf32>
    %37 = vector.broadcast %35 : vector<1x128xf32> to vector<256x128xf32>
    %38 = arith.mulf %36, %37 : vector<256x128xf32>
    %39 = arith.addf %33, %38 : vector<256x128xf32>
    %c0_11 = arith.constant 0 : index
    %c0_12 = arith.constant 0 : index
    %40 = vector.load %arg5[%c0_11, %c0_12] : memref<1x128xf32, #tpu.memory_space<vmem>>, vector<1x128xf32>
    %41 = vector.broadcast %40 : vector<1x128xf32> to vector<256x128xf32>
    %42 = arith.mulf %39, %41 : vector<256x128xf32>
    %c0_13 = arith.constant 0 : index
    %c0_14 = arith.constant 0 : index
    %43 = vector.load %arg6[%c0_13, %c0_14] : memref<1x128xf32, #tpu.memory_space<vmem>>, vector<1x128xf32>
    %44 = vector.broadcast %43 : vector<1x128xf32> to vector<256x128xf32>
    %45 = arith.addf %42, %44 : vector<256x128xf32>
    %cst = arith.constant 0.000000e+00 : f32
    %46 = vector.broadcast %cst : f32 to vector<256x128xf32>
    %47 = arith.maximumf %45, %46 : vector<256x128xf32>
    %48 = arith.truncf %47 : vector<256x128xf32> to vector<256x128xbf16>
    %c0_15 = arith.constant 0 : index
    %c0_16 = arith.constant 0 : index
    %49 = vector.load %arg7[%c0_15, %c0_16] : memref<128x256xbf16, #tpu.memory_space<vmem>>, vector<128x256xbf16>
    %cst_17 = arith.constant dense<0.000000e+00> : vector<256x256xf32>
    %50 = tpu.matmul %48, %49, %cst_17 {dimension_numbers = #tpu.dot_dimension_numbers<[1], [0], [0], [1], [0, 0, 1, 1], [], []>} : vector<256x128xbf16>, vector<128x256xbf16>, vector<256x256xf32> -> vector<256x256xf32>
    %c0_18 = arith.constant 0 : index
    %c0_19 = arith.constant 0 : index
    %51 = vector.load %arg8[%c0_18, %c0_19] : memref<1x256xf32, #tpu.memory_space<vmem>>, vector<1x256xf32>
    %52 = vector.broadcast %51 : vector<1x256xf32> to vector<256x256xf32>
    %53 = arith.addf %50, %52 : vector<256x256xf32>
    %54 = vector.shape_cast %53 : vector<256x256xf32> to vector<32x8x256xf32>
    %cst_20 = arith.constant dense<0xFF800000> : vector<32x256xf32>
    %55 = vector.multi_reduction <maximumf>, %54, %cst_20 [1] : vector<32x8x256xf32> to vector<32x256xf32>
    %56 = arith.truncf %53 : vector<256x256xf32> to vector<256x256xbf16>
    %c0_21 = arith.constant 0 : index
    %c0_22 = arith.constant 0 : index
    %57 = vector.load %arg10[%c0_21, %c0_22] : memref<256x512xbf16, #tpu.memory_space<vmem>>, vector<256x512xbf16>
    %cst_23 = arith.constant dense<0.000000e+00> : vector<256x512xf32>
    %58 = tpu.matmul %56, %57, %cst_23 {dimension_numbers = #tpu.dot_dimension_numbers<[1], [0], [0], [1], [0, 0, 1, 1], [], []>} : vector<256x256xbf16>, vector<256x512xbf16>, vector<256x512xf32> -> vector<256x512xf32>
    %59 = arith.truncf %55 : vector<32x256xf32> to vector<32x256xbf16>
    %c0_24 = arith.constant 0 : index
    %c0_25 = arith.constant 0 : index
    %60 = vector.load %arg9[%c0_24, %c0_25] : memref<256x512xbf16, #tpu.memory_space<vmem>>, vector<256x512xbf16>
    %cst_26 = arith.constant dense<0.000000e+00> : vector<32x512xf32>
    %61 = tpu.matmul %59, %60, %cst_26 {dimension_numbers = #tpu.dot_dimension_numbers<[1], [0], [0], [1], [0, 0, 1, 1], [], []>} : vector<32x256xbf16>, vector<256x512xbf16>, vector<32x512xf32> -> vector<32x512xf32>
    %62 = vector.shape_cast %58 : vector<256x512xf32> to vector<32x8x512xf32>
    %c0_27 = arith.constant 0 : index
    %c0_28 = arith.constant 0 : index
    %63 = vector.load %arg11[%c0_27, %c0_28] : memref<1x512xf32, #tpu.memory_space<vmem>>, vector<1x512xf32>
    %64 = vector.broadcast %63 : vector<1x512xf32> to vector<32x512xf32>
    %65 = arith.addf %61, %64 : vector<32x512xf32>
    %66 = vector.shape_cast %65 : vector<32x512xf32> to vector<32x1x512xf32>
    %67 = vector.broadcast %66 : vector<32x1x512xf32> to vector<32x8x512xf32>
    %68 = arith.addf %62, %67 : vector<32x8x512xf32>
    %c0_29 = arith.constant 0 : index
    %c0_30 = arith.constant 0 : index
    %69 = vector.load %arg12[%c0_29, %c0_30] : memref<1x512xf32, #tpu.memory_space<vmem>>, vector<1x512xf32>
    %70 = vector.shape_cast %69 : vector<1x512xf32> to vector<1x1x512xf32>
    %71 = vector.broadcast %70 : vector<1x1x512xf32> to vector<32x8x512xf32>
    %72 = arith.mulf %68, %71 : vector<32x8x512xf32>
    %c0_31 = arith.constant 0 : index
    %c0_32 = arith.constant 0 : index
    %73 = vector.load %arg13[%c0_31, %c0_32] : memref<1x512xf32, #tpu.memory_space<vmem>>, vector<1x512xf32>
    %74 = vector.shape_cast %73 : vector<1x512xf32> to vector<1x1x512xf32>
    %75 = vector.broadcast %74 : vector<1x1x512xf32> to vector<32x8x512xf32>
    %76 = arith.addf %72, %75 : vector<32x8x512xf32>
    %cst_33 = arith.constant 0.000000e+00 : f32
    %77 = vector.broadcast %cst_33 : f32 to vector<32x8x512xf32>
    %78 = arith.maximumf %76, %77 : vector<32x8x512xf32>
    %79 = vector.shape_cast %78 : vector<32x8x512xf32> to vector<256x512xf32>
    %80 = arith.truncf %79 : vector<256x512xf32> to vector<256x512xbf16>
    %c0_34 = arith.constant 0 : index
    %c0_35 = arith.constant 0 : index
    %81 = vector.load %arg14[%c0_34, %c0_35] : memref<512x128xbf16, #tpu.memory_space<vmem>>, vector<512x128xbf16>
    %cst_36 = arith.constant dense<0.000000e+00> : vector<256x128xf32>
    %82 = tpu.matmul %80, %81, %cst_36 {dimension_numbers = #tpu.dot_dimension_numbers<[1], [0], [0], [1], [0, 0, 1, 1], [], []>} : vector<256x512xbf16>, vector<512x128xbf16>, vector<256x128xf32> -> vector<256x128xf32>
    %c0_37 = arith.constant 0 : index
    %c0_38 = arith.constant 0 : index
    %83 = vector.load %arg15[%c0_37, %c0_38] : memref<1x128xf32, #tpu.memory_space<vmem>>, vector<1x128xf32>
    %84 = vector.broadcast %83 : vector<1x128xf32> to vector<256x128xf32>
    %85 = arith.addf %82, %84 : vector<256x128xf32>
    %86 = vector.shape_cast %85 : vector<256x128xf32> to vector<32x8x128xf32>
    %cst_39 = arith.constant dense<0xFF800000> : vector<32x128xf32>
    %87 = vector.multi_reduction <maximumf>, %86, %cst_39 [1] : vector<32x8x128xf32> to vector<32x128xf32>
    %c0_40 = arith.constant 0 : index
    %c0_41 = arith.constant 0 : index
    %88 = vector.load %arg2[%c0_40, %c0_41] : memref<32x3xf32, #tpu.memory_space<vmem>>, vector<32x3xf32>
    %c0_42 = arith.constant 0 : index
    %c0_43 = arith.constant 0 : index
    %89 = vector.load %arg19[%c0_42, %c0_43] : memref<1x128xf32, #tpu.memory_space<vmem>>, vector<1x128xf32>
    %90 = vector.extract_strided_slice %88 {offsets = [0, 0], sizes = [32, 1], strides = [1, 1]} : vector<32x3xf32> to vector<32x1xf32>
    %c0_44 = arith.constant 0 : index
    %c0_45 = arith.constant 0 : index
    %91 = vector.load %arg18[%c0_44, %c0_45] : memref<3x128xf32, #tpu.memory_space<vmem>>, vector<1x128xf32>
    %92 = vector.broadcast %90 : vector<32x1xf32> to vector<32x128xf32>
    %93 = vector.broadcast %91 : vector<1x128xf32> to vector<32x128xf32>
    %94 = arith.mulf %92, %93 : vector<32x128xf32>
    %95 = vector.broadcast %89 : vector<1x128xf32> to vector<32x128xf32>
    %96 = arith.addf %95, %94 : vector<32x128xf32>
    %97 = vector.extract_strided_slice %88 {offsets = [0, 1], sizes = [32, 1], strides = [1, 1]} : vector<32x3xf32> to vector<32x1xf32>
    %c1_46 = arith.constant 1 : index
    %c0_47 = arith.constant 0 : index
    %98 = vector.load %arg18[%c1_46, %c0_47] : memref<3x128xf32, #tpu.memory_space<vmem>>, vector<1x128xf32>
    %99 = vector.broadcast %97 : vector<32x1xf32> to vector<32x128xf32>
    %100 = vector.broadcast %98 : vector<1x128xf32> to vector<32x128xf32>
    %101 = arith.mulf %99, %100 : vector<32x128xf32>
    %102 = arith.addf %96, %101 : vector<32x128xf32>
    %103 = vector.extract_strided_slice %88 {offsets = [0, 2], sizes = [32, 1], strides = [1, 1]} : vector<32x3xf32> to vector<32x1xf32>
    %c2_48 = arith.constant 2 : index
    %c0_49 = arith.constant 0 : index
    %104 = vector.load %arg18[%c2_48, %c0_49] : memref<3x128xf32, #tpu.memory_space<vmem>>, vector<1x128xf32>
    %105 = vector.broadcast %103 : vector<32x1xf32> to vector<32x128xf32>
    %106 = vector.broadcast %104 : vector<1x128xf32> to vector<32x128xf32>
    %107 = arith.mulf %105, %106 : vector<32x128xf32>
    %108 = arith.addf %102, %107 : vector<32x128xf32>
    %109 = arith.mulf %108, %108 : vector<32x128xf32>
    %110 = arith.mulf %108, %109 : vector<32x128xf32>
    %cst_50 = arith.constant 4.471500e-02 : f32
    %111 = vector.broadcast %cst_50 : f32 to vector<32x128xf32>
    %112 = arith.mulf %111, %110 : vector<32x128xf32>
    %113 = arith.addf %108, %112 : vector<32x128xf32>
    %cst_51 = arith.constant 0.797884583 : f32
    %114 = vector.broadcast %cst_51 : f32 to vector<32x128xf32>
    %115 = arith.mulf %114, %113 : vector<32x128xf32>
    %116 = math.tanh %115 : vector<32x128xf32>
    %cst_52 = arith.constant 1.000000e+00 : f32
    %117 = vector.broadcast %cst_52 : f32 to vector<32x128xf32>
    %118 = arith.addf %117, %116 : vector<32x128xf32>
    %cst_53 = arith.constant 5.000000e-01 : f32
    %119 = vector.broadcast %cst_53 : f32 to vector<32x128xf32>
    %120 = arith.mulf %119, %118 : vector<32x128xf32>
    %121 = arith.mulf %108, %120 : vector<32x128xf32>
    %122 = tpu.concatenate %87, %121 in 1 : vector<32x128xf32>, vector<32x128xf32> -> vector<32x256xf32>
    %123 = arith.truncf %122 : vector<32x256xf32> to vector<32x256xbf16>
    %c0_54 = arith.constant 0 : index
    %c0_55 = arith.constant 0 : index
    %124 = vector.load %arg16[%c0_54, %c0_55] : memref<256x128xbf16, #tpu.memory_space<vmem>>, vector<256x128xbf16>
    %cst_56 = arith.constant dense<0.000000e+00> : vector<32x128xf32>
    %125 = tpu.matmul %123, %124, %cst_56 {dimension_numbers = #tpu.dot_dimension_numbers<[1], [0], [0], [1], [0, 0, 1, 1], [], []>} : vector<32x256xbf16>, vector<256x128xbf16>, vector<32x128xf32> -> vector<32x128xf32>
    %c0_57 = arith.constant 0 : index
    %c0_58 = arith.constant 0 : index
    %126 = vector.load %arg17[%c0_57, %c0_58] : memref<1x128xf32, #tpu.memory_space<vmem>>, vector<1x128xf32>
    %127 = vector.broadcast %126 : vector<1x128xf32> to vector<32x128xf32>
    %128 = arith.addf %125, %127 : vector<32x128xf32>
    %129 = arith.truncf %128 : vector<32x128xf32> to vector<32x128xbf16>
    %c0_59 = arith.constant 0 : index
    %c0_60 = arith.constant 0 : index
    %130 = vector.load %arg20[%c0_59, %c0_60] : memref<32x128xbf16, #tpu.memory_space<vmem>>, vector<32x128xbf16>
    tpu.vector_store %arg20[%c0_59, %c0_60], %129 {strides = array<i32>} : memref<32x128xbf16, #tpu.memory_space<vmem>>, vector<32x128xbf16>,
    return
  }
  func.func @transform_0(%arg0: i32) -> (i32, i32, i32) {
    %c0_i32 = arith.constant 0 : i32
    %c0_i32_0 = arith.constant 0 : i32
    %c0_i32_1 = arith.constant 0 : i32
    %c0_i32_2 = arith.constant 0 : i32
    return %c0_i32, %c0_i32_0, %c0_i32_1 : i32, i32, i32
  }
  func.func @transform_1(%arg0: i32) -> (i32, i32) {
    %c0_i32 = arith.constant 0 : i32
    %c0_i32_0 = arith.constant 0 : i32
    %c0_i32_1 = arith.constant 0 : i32
    return %c0_i32, %c0_i32_0 : i32, i32
  }
  func.func @transform_2(%arg0: i32) -> (i32, i32) {
    %c0_i32 = arith.constant 0 : i32
    %c0_i32_0 = arith.constant 0 : i32
    %c0_i32_1 = arith.constant 0 : i32
    return %c0_i32, %c0_i32_0 : i32, i32
  }
  func.func @transform_3(%arg0: i32) -> (i32, i32) {
    %c0_i32 = arith.constant 0 : i32
    %c0_i32_0 = arith.constant 0 : i32
    %c0_i32_1 = arith.constant 0 : i32
    return %c0_i32, %c0_i32_0 : i32, i32
  }
  func.func @transform_4(%arg0: i32) -> (i32, i32) {
    %c0_i32 = arith.constant 0 : i32
    %c0_i32_0 = arith.constant 0 : i32
    %c0_i32_1 = arith.constant 0 : i32
    return %c0_i32, %c0_i32_0 : i32, i32
  }
  func.func @transform_5(%arg0: i32) -> (i32, i32) {
    %c0_i32 = arith.constant 0 : i32
    %c0_i32_0 = arith.constant 0 : i32
    %c0_i32_1 = arith.constant 0 : i32
    return %c0_i32, %c0_i32_0 : i32, i32
  }
  func.func @transform_6(%arg0: i32) -> (i32, i32) {
    %c0_i32 = arith.constant 0 : i32
    %c0_i32_0 = arith.constant 0 : i32
    %c0_i32_1 = arith.constant 0 : i32
    return %c0_i32, %c0_i32_0 : i32, i32
  }
  func.func @transform_7(%arg0: i32) -> (i32, i32) {
    %c0_i32 = arith.constant 0 : i32
    %c0_i32_0 = arith.constant 0 : i32
    %c0_i32_1 = arith.constant 0 : i32
    return %c0_i32, %c0_i32_0 : i32, i32
  }
  func.func @transform_8(%arg0: i32) -> (i32, i32) {
    %c0_i32 = arith.constant 0 : i32
    %c0_i32_0 = arith.constant 0 : i32
    %c0_i32_1 = arith.constant 0 : i32
    return %c0_i32, %c0_i32_0 : i32, i32
  }
  func.func @transform_9(%arg0: i32) -> (i32, i32) {
    %c0_i32 = arith.constant 0 : i32
    %c0_i32_0 = arith.constant 0 : i32
    %c0_i32_1 = arith.constant 0 : i32
    return %c0_i32, %c0_i32_0 : i32, i32
  }
  func.func @transform_10(%arg0: i32) -> (i32, i32) {
    %c0_i32 = arith.constant 0 : i32
    %c0_i32_0 = arith.constant 0 : i32
    %c0_i32_1 = arith.constant 0 : i32
    return %c0_i32, %c0_i32_0 : i32, i32
  }
  func.func @transform_11(%arg0: i32) -> (i32, i32) {
    %c0_i32 = arith.constant 0 : i32
    %c0_i32_0 = arith.constant 0 : i32
    %c0_i32_1 = arith.constant 0 : i32
    return %c0_i32, %c0_i32_0 : i32, i32
  }
  func.func @transform_12(%arg0: i32) -> (i32, i32) {
    %c0_i32 = arith.constant 0 : i32
    %c0_i32_0 = arith.constant 0 : i32
    %c0_i32_1 = arith.constant 0 : i32
    return %c0_i32, %c0_i32_0 : i32, i32
  }
  func.func @transform_13(%arg0: i32) -> (i32, i32) {
    %c0_i32 = arith.constant 0 : i32
    %c0_i32_0 = arith.constant 0 : i32
    %c0_i32_1 = arith.constant 0 : i32
    return %c0_i32, %c0_i32_0 : i32, i32
  }
  func.func @transform_14(%arg0: i32) -> (i32, i32) {
    %c0_i32 = arith.constant 0 : i32
    %c0_i32_0 = arith.constant 0 : i32
    %c0_i32_1 = arith.constant 0 : i32
    return %c0_i32, %c0_i32_0 : i32, i32
  }
  func.func @transform_15(%arg0: i32) -> (i32, i32) {
    %c0_i32 = arith.constant 0 : i32
    %c0_i32_0 = arith.constant 0 : i32
    %c0_i32_1 = arith.constant 0 : i32
    return %c0_i32, %c0_i32_0 : i32, i32
  }
  func.func @transform_16(%arg0: i32) -> (i32, i32) {
    %c0_i32 = arith.constant 0 : i32
    %c0_i32_0 = arith.constant 0 : i32
    %c0_i32_1 = arith.constant 0 : i32
    return %c0_i32, %c0_i32_0 : i32, i32
  }
  func.func @transform_17(%arg0: i32) -> (i32, i32) {
    %c0_i32 = arith.constant 0 : i32
    %c0_i32_0 = arith.constant 0 : i32
    %c0_i32_1 = arith.constant 0 : i32
    return %c0_i32, %c0_i32_0 : i32, i32
  }
  func.func @transform_18(%arg0: i32) -> (i32, i32) {
    %c0_i32 = arith.constant 0 : i32
    %c0_i32_0 = arith.constant 0 : i32
    %c0_i32_1 = arith.constant 0 : i32
    return %c0_i32, %c0_i32_0 : i32, i32
  }
  func.func @transform_19(%arg0: i32) -> (i32, i32) {
    %c0_i32 = arith.constant 0 : i32
    %c0_i32_0 = arith.constant 0 : i32
    %c0_i32_1 = arith.constant 0 : i32
    return %c0_i32, %c0_i32_0 : i32, i32
  }
}

module attributes {stable_mosaic.version = 11 : i64} {
  func.func @_vit_kernel(%arg0: i32, %arg1: memref<2x24x128xbf16, #tpu.memory_space<vmem>>, %arg2: memref<1x1x128xf32, #tpu.memory_space<vmem>>, %arg3: memref<1x1x128xf32, #tpu.memory_space<vmem>>, %arg4: memref<1x128x384xbf16, #tpu.memory_space<vmem>>, %arg5: memref<1x1x384xf32, #tpu.memory_space<vmem>>, %arg6: memref<1x128x128xbf16, #tpu.memory_space<vmem>>, %arg7: memref<1x1x128xf32, #tpu.memory_space<vmem>>, %arg8: memref<1x1x128xf32, #tpu.memory_space<vmem>>, %arg9: memref<1x1x128xf32, #tpu.memory_space<vmem>>, %arg10: memref<1x128x512xbf16, #tpu.memory_space<vmem>>, %arg11: memref<1x1x512xf32, #tpu.memory_space<vmem>>, %arg12: memref<1x512x128xbf16, #tpu.memory_space<vmem>>, %arg13: memref<1x1x128xf32, #tpu.memory_space<vmem>>, %arg14: memref<1x128xf32, #tpu.memory_space<vmem>>, %arg15: memref<1x128xf32, #tpu.memory_space<vmem>>, %arg16: memref<1x128xf32, #tpu.memory_space<vmem>>, %arg17: memref<1x128xf32, #tpu.memory_space<vmem>>, %arg18: memref<128x128xbf16, #tpu.memory_space<vmem>>, %arg19: memref<1x128xf32, #tpu.memory_space<vmem>>, %arg20: memref<2x128xf32, #tpu.memory_space<vmem>>, %arg21: memref<2x24x128xf32, #tpu.memory_space<vmem>>, %arg22: memref<96x24xf32, #tpu.memory_space<vmem>>, %arg23: memref<24x128xf32, #tpu.memory_space<vmem>>) attributes {dimension_semantics = [#tpu.dimension_semantics<arbitrary>], iteration_bounds = array<i64: 2>, scalar_prefetch = 0 : i64, scratch_operands = 3 : i64, tpu.core_type = #tpu.core_type<tc>, window_params = [{pipeline_mode = #tpu.pipeline_mode<synchronous>, transform_indices = @transform_0, window_bounds = array<i64: 2, 24, 128>}, {transform_indices = @transform_1, window_bounds = array<i64: 1, 1, 128>}, {transform_indices = @transform_2, window_bounds = array<i64: 1, 1, 128>}, {transform_indices = @transform_3, window_bounds = array<i64: 1, 128, 384>}, {transform_indices = @transform_4, window_bounds = array<i64: 1, 1, 384>}, {transform_indices = @transform_5, window_bounds = array<i64: 1, 128, 128>}, {transform_indices = @transform_6, window_bounds = array<i64: 1, 1, 128>}, {transform_indices = @transform_7, window_bounds = array<i64: 1, 1, 128>}, {transform_indices = @transform_8, window_bounds = array<i64: 1, 1, 128>}, {transform_indices = @transform_9, window_bounds = array<i64: 1, 128, 512>}, {transform_indices = @transform_10, window_bounds = array<i64: 1, 1, 512>}, {transform_indices = @transform_11, window_bounds = array<i64: 1, 512, 128>}, {transform_indices = @transform_12, window_bounds = array<i64: 1, 1, 128>}, {pipeline_mode = #tpu.pipeline_mode<synchronous>, transform_indices = @transform_13, window_bounds = array<i64: 1, 128>}, {pipeline_mode = #tpu.pipeline_mode<synchronous>, transform_indices = @transform_14, window_bounds = array<i64: 1, 128>}, {pipeline_mode = #tpu.pipeline_mode<synchronous>, transform_indices = @transform_15, window_bounds = array<i64: 1, 128>}, {pipeline_mode = #tpu.pipeline_mode<synchronous>, transform_indices = @transform_16, window_bounds = array<i64: 1, 128>}, {pipeline_mode = #tpu.pipeline_mode<synchronous>, transform_indices = @transform_17, window_bounds = array<i64: 128, 128>}, {pipeline_mode = #tpu.pipeline_mode<synchronous>, transform_indices = @transform_18, window_bounds = array<i64: 1, 128>}, {pipeline_mode = #tpu.pipeline_mode<synchronous>, transform_indices = @transform_19, window_bounds = array<i64: 2, 128>}]} {
    %c0_i32 = arith.constant 0 : i32
    %0 = arith.cmpi eq, %arg0, %c0_i32 : i32
    %1 = arith.extui %0 : i1 to i32
    %c0_i32_0 = arith.constant 0 : i32
    %2 = arith.cmpi ne, %1, %c0_i32_0 : i32
    scf.if %2 {
      %c0_119 = arith.constant 0 : index
      %c0_120 = arith.constant 0 : index
      %c0_121 = arith.constant 0 : index
      %214 = vector.load %arg1[%c0_119, %c0_120, %c0_121] : memref<2x24x128xbf16, #tpu.memory_space<vmem>>, vector<2x24x128xbf16>
      %215 = arith.extf %214 : vector<2x24x128xbf16> to vector<2x24x128xf32>
      %c0_122 = arith.constant 0 : index
      %c0_123 = arith.constant 0 : index
      %c0_124 = arith.constant 0 : index
      %216 = vector.load %arg21[%c0_122, %c0_123, %c0_124] : memref<2x24x128xf32, #tpu.memory_space<vmem>>, vector<2x24x128xf32>
      tpu.vector_store %arg21[%c0_122, %c0_123, %c0_124], %215 {strides = array<i32>} : memref<2x24x128xf32, #tpu.memory_space<vmem>>, vector<2x24x128xf32>,
    } else {
    }
    %c0 = arith.constant 0 : index
    %c0_1 = arith.constant 0 : index
    %c0_2 = arith.constant 0 : index
    %3 = vector.load %arg21[%c0, %c0_1, %c0_2] : memref<2x24x128xf32, #tpu.memory_space<vmem>>, vector<2x24x128xf32>
    %4 = vector.shape_cast %3 : vector<2x24x128xf32> to vector<48x128xf32>
    %c0_3 = arith.constant 0 : index
    %c0_4 = arith.constant 0 : index
    %c0_5 = arith.constant 0 : index
    %5 = vector.load %arg2[%c0_3, %c0_4, %c0_5] : memref<1x1x128xf32, #tpu.memory_space<vmem>>, vector<1x1x128xf32>
    %6 = vector.shape_cast %5 : vector<1x1x128xf32> to vector<1x128xf32>
    %c0_6 = arith.constant 0 : index
    %c0_7 = arith.constant 0 : index
    %c0_8 = arith.constant 0 : index
    %7 = vector.load %arg3[%c0_6, %c0_7, %c0_8] : memref<1x1x128xf32, #tpu.memory_space<vmem>>, vector<1x1x128xf32>
    %8 = vector.shape_cast %7 : vector<1x1x128xf32> to vector<1x128xf32>
    %cst = arith.constant dense<0.000000e+00> : vector<48xf32>
    %9 = vector.multi_reduction <add>, %4, %cst [1] : vector<48x128xf32> to vector<48xf32>
    %10 = vector.shape_cast %9 : vector<48xf32> to vector<48x1xf32>
    %cst_9 = arith.constant 1.280000e+02 : f32
    %11 = vector.broadcast %cst_9 : f32 to vector<48x1xf32>
    %12 = arith.divf %10, %11 : vector<48x1xf32>
    %13 = vector.broadcast %12 : vector<48x1xf32> to vector<48x128xf32>
    %14 = arith.subf %4, %13 : vector<48x128xf32>
    %15 = arith.mulf %14, %14 : vector<48x128xf32>
    %cst_10 = arith.constant dense<0.000000e+00> : vector<48xf32>
    %16 = vector.multi_reduction <add>, %15, %cst_10 [1] : vector<48x128xf32> to vector<48xf32>
    %17 = vector.shape_cast %16 : vector<48xf32> to vector<48x1xf32>
    %cst_11 = arith.constant 1.280000e+02 : f32
    %18 = vector.broadcast %cst_11 : f32 to vector<48x1xf32>
    %19 = arith.divf %17, %18 : vector<48x1xf32>
    %20 = vector.broadcast %12 : vector<48x1xf32> to vector<48x128xf32>
    %21 = arith.subf %4, %20 : vector<48x128xf32>
    %cst_12 = arith.constant 9.99999974E-6 : f32
    %22 = vector.broadcast %cst_12 : f32 to vector<48x1xf32>
    %23 = arith.addf %19, %22 : vector<48x1xf32>
    %24 = math.rsqrt %23 : vector<48x1xf32>
    %25 = vector.broadcast %24 : vector<48x1xf32> to vector<48x128xf32>
    %26 = arith.mulf %21, %25 : vector<48x128xf32>
    %27 = vector.broadcast %6 : vector<1x128xf32> to vector<48x128xf32>
    %28 = arith.mulf %26, %27 : vector<48x128xf32>
    %29 = vector.broadcast %8 : vector<1x128xf32> to vector<48x128xf32>
    %30 = arith.addf %28, %29 : vector<48x128xf32>
    %31 = arith.truncf %30 : vector<48x128xf32> to vector<48x128xbf16>
    %c0_13 = arith.constant 0 : index
    %c0_14 = arith.constant 0 : index
    %c0_15 = arith.constant 0 : index
    %32 = vector.load %arg4[%c0_13, %c0_14, %c0_15] : memref<1x128x384xbf16, #tpu.memory_space<vmem>>, vector<1x128x384xbf16>
    %33 = vector.shape_cast %32 : vector<1x128x384xbf16> to vector<128x384xbf16>
    %cst_16 = arith.constant dense<0.000000e+00> : vector<48x384xf32>
    %34 = tpu.matmul %31, %33, %cst_16 {dimension_numbers = #tpu.dot_dimension_numbers<[1], [0], [0], [1], [0, 0, 1, 1], [], []>} : vector<48x128xbf16>, vector<128x384xbf16>, vector<48x384xf32> -> vector<48x384xf32>
    %c0_17 = arith.constant 0 : index
    %c0_18 = arith.constant 0 : index
    %c0_19 = arith.constant 0 : index
    %35 = vector.load %arg5[%c0_17, %c0_18, %c0_19] : memref<1x1x384xf32, #tpu.memory_space<vmem>>, vector<1x1x384xf32>
    %36 = vector.shape_cast %35 : vector<1x1x384xf32> to vector<1x384xf32>
    %37 = vector.broadcast %36 : vector<1x384xf32> to vector<48x384xf32>
    %38 = arith.addf %34, %37 : vector<48x384xf32>
    %c0_20 = arith.constant 0 : index
    %c0_21 = arith.constant 0 : index
    %c0_22 = arith.constant 0 : index
    %39 = vector.load %arg6[%c0_20, %c0_21, %c0_22] : memref<1x128x128xbf16, #tpu.memory_space<vmem>>, vector<1x128x128xbf16>
    %40 = vector.shape_cast %39 : vector<1x128x128xbf16> to vector<128x128xbf16>
    %41 = tpu.iota {dimensions = array<i32: 1>} : vector<1x24xi32>
    %c17_i32 = arith.constant 17 : i32
    %42 = vector.broadcast %c17_i32 : i32 to vector<1x24xi32>
    %43 = arith.cmpi sge, %41, %42 : vector<1x24xi32>
    %cst_23 = arith.constant -1.000000e+30 : f32
    %cst_24 = arith.constant 0.000000e+00 : f32
    %44 = vector.broadcast %cst_23 : f32 to vector<1x24xf32>
    %45 = vector.broadcast %cst_24 : f32 to vector<1x24xf32>
    %46 = arith.select %43, %44, %45 : vector<1x24xi1>, vector<1x24xf32>
    %47 = vector.extract_strided_slice %38 {offsets = [0, 0], sizes = [24, 384], strides = [1, 1]} : vector<48x384xf32> to vector<24x384xf32>
    %48 = vector.extract_strided_slice %47 {offsets = [0, 0], sizes = [24, 32], strides = [1, 1]} : vector<24x384xf32> to vector<24x32xf32>
    %49 = vector.extract_strided_slice %47 {offsets = [0, 128], sizes = [24, 32], strides = [1, 1]} : vector<24x384xf32> to vector<24x32xf32>
    %cst_25 = arith.constant dense<0.000000e+00> : vector<24x24xf32>
    %50 = tpu.matmul %48, %49, %cst_25 {dimension_numbers = #tpu.dot_dimension_numbers<[1], [1], [0], [0], [0, 0, 1, 0], [], []>} : vector<24x32xf32>, vector<24x32xf32>, vector<24x24xf32> -> vector<24x24xf32>
    %c0_26 = arith.constant 0 : index
    %c0_27 = arith.constant 0 : index
    %51 = vector.load %arg22[%c0_26, %c0_27] : memref<96x24xf32, #tpu.memory_space<vmem>>, vector<24x24xf32>
    tpu.vector_store %arg22[%c0_26, %c0_27], %50 {strides = array<i32>} : memref<96x24xf32, #tpu.memory_space<vmem>>, vector<24x24xf32>,
    %52 = vector.extract_strided_slice %47 {offsets = [0, 32], sizes = [24, 32], strides = [1, 1]} : vector<24x384xf32> to vector<24x32xf32>
    %53 = vector.extract_strided_slice %47 {offsets = [0, 160], sizes = [24, 32], strides = [1, 1]} : vector<24x384xf32> to vector<24x32xf32>
    %cst_28 = arith.constant dense<0.000000e+00> : vector<24x24xf32>
    %54 = tpu.matmul %52, %53, %cst_28 {dimension_numbers = #tpu.dot_dimension_numbers<[1], [1], [0], [0], [0, 0, 1, 0], [], []>} : vector<24x32xf32>, vector<24x32xf32>, vector<24x24xf32> -> vector<24x24xf32>
    %c24 = arith.constant 24 : index
    %c0_29 = arith.constant 0 : index
    %55 = vector.load %arg22[%c24, %c0_29] : memref<96x24xf32, #tpu.memory_space<vmem>>, vector<24x24xf32>
    tpu.vector_store %arg22[%c24, %c0_29], %54 {strides = array<i32>} : memref<96x24xf32, #tpu.memory_space<vmem>>, vector<24x24xf32>,
    %56 = vector.extract_strided_slice %47 {offsets = [0, 64], sizes = [24, 32], strides = [1, 1]} : vector<24x384xf32> to vector<24x32xf32>
    %57 = vector.extract_strided_slice %47 {offsets = [0, 192], sizes = [24, 32], strides = [1, 1]} : vector<24x384xf32> to vector<24x32xf32>
    %cst_30 = arith.constant dense<0.000000e+00> : vector<24x24xf32>
    %58 = tpu.matmul %56, %57, %cst_30 {dimension_numbers = #tpu.dot_dimension_numbers<[1], [1], [0], [0], [0, 0, 1, 0], [], []>} : vector<24x32xf32>, vector<24x32xf32>, vector<24x24xf32> -> vector<24x24xf32>
    %c48 = arith.constant 48 : index
    %c0_31 = arith.constant 0 : index
    %59 = vector.load %arg22[%c48, %c0_31] : memref<96x24xf32, #tpu.memory_space<vmem>>, vector<24x24xf32>
    tpu.vector_store %arg22[%c48, %c0_31], %58 {strides = array<i32>} : memref<96x24xf32, #tpu.memory_space<vmem>>, vector<24x24xf32>,
    %60 = vector.extract_strided_slice %47 {offsets = [0, 96], sizes = [24, 32], strides = [1, 1]} : vector<24x384xf32> to vector<24x32xf32>
    %61 = vector.extract_strided_slice %47 {offsets = [0, 224], sizes = [24, 32], strides = [1, 1]} : vector<24x384xf32> to vector<24x32xf32>
    %cst_32 = arith.constant dense<0.000000e+00> : vector<24x24xf32>
    %62 = tpu.matmul %60, %61, %cst_32 {dimension_numbers = #tpu.dot_dimension_numbers<[1], [1], [0], [0], [0, 0, 1, 0], [], []>} : vector<24x32xf32>, vector<24x32xf32>, vector<24x24xf32> -> vector<24x24xf32>
    %c72 = arith.constant 72 : index
    %c0_33 = arith.constant 0 : index
    %63 = vector.load %arg22[%c72, %c0_33] : memref<96x24xf32, #tpu.memory_space<vmem>>, vector<24x24xf32>
    tpu.vector_store %arg22[%c72, %c0_33], %62 {strides = array<i32>} : memref<96x24xf32, #tpu.memory_space<vmem>>, vector<24x24xf32>,
    %c0_34 = arith.constant 0 : index
    %c0_35 = arith.constant 0 : index
    %64 = vector.load %arg22[%c0_34, %c0_35] : memref<96x24xf32, #tpu.memory_space<vmem>>, vector<96x24xf32>
    %65 = vector.broadcast %46 : vector<1x24xf32> to vector<96x24xf32>
    %66 = arith.addf %64, %65 : vector<96x24xf32>
    %cst_36 = arith.constant dense<0xFF800000> : vector<96xf32>
    %67 = vector.multi_reduction <maximumf>, %66, %cst_36 [1] : vector<96x24xf32> to vector<96xf32>
    %cst_37 = arith.constant 0xFF800000 : f32
    %68 = vector.broadcast %cst_37 : f32 to vector<96xf32>
    %69 = arith.maximumf %68, %67 : vector<96xf32>
    %70 = vector.shape_cast %69 : vector<96xf32> to vector<96x1xf32>
    %71 = vector.broadcast %70 : vector<96x1xf32> to vector<96x24xf32>
    %72 = arith.subf %66, %71 : vector<96x24xf32>
    %73 = math.exp %72 : vector<96x24xf32>
    %cst_38 = arith.constant dense<0.000000e+00> : vector<96xf32>
    %74 = vector.multi_reduction <add>, %73, %cst_38 [1] : vector<96x24xf32> to vector<96xf32>
    %75 = vector.shape_cast %74 : vector<96xf32> to vector<96x1xf32>
    %76 = vector.broadcast %75 : vector<96x1xf32> to vector<96x24xf32>
    %77 = arith.divf %73, %76 : vector<96x24xf32>
    %78 = vector.extract_strided_slice %47 {offsets = [0, 256], sizes = [24, 32], strides = [1, 1]} : vector<24x384xf32> to vector<24x32xf32>
    %79 = vector.extract_strided_slice %77 {offsets = [0, 0], sizes = [24, 24], strides = [1, 1]} : vector<96x24xf32> to vector<24x24xf32>
    %cst_39 = arith.constant dense<0.000000e+00> : vector<24x32xf32>
    %80 = tpu.matmul %79, %78, %cst_39 {dimension_numbers = #tpu.dot_dimension_numbers<[1], [0], [0], [1], [0, 0, 1, 1], [], []>} : vector<24x24xf32>, vector<24x32xf32>, vector<24x32xf32> -> vector<24x32xf32>
    %c0_40 = arith.constant 0 : index
    %c0_41 = arith.constant 0 : index
    %81 = vector.load %arg23[%c0_40, %c0_41] : memref<24x128xf32, #tpu.memory_space<vmem>>, vector<24x32xf32>
    tpu.vector_store %arg23[%c0_40, %c0_41], %80 {strides = array<i32>} : memref<24x128xf32, #tpu.memory_space<vmem>>, vector<24x32xf32>,
    %82 = vector.extract_strided_slice %47 {offsets = [0, 288], sizes = [24, 32], strides = [1, 1]} : vector<24x384xf32> to vector<24x32xf32>
    %83 = vector.extract_strided_slice %77 {offsets = [24, 0], sizes = [24, 24], strides = [1, 1]} : vector<96x24xf32> to vector<24x24xf32>
    %cst_42 = arith.constant dense<0.000000e+00> : vector<24x32xf32>
    %84 = tpu.matmul %83, %82, %cst_42 {dimension_numbers = #tpu.dot_dimension_numbers<[1], [0], [0], [1], [0, 0, 1, 1], [], []>} : vector<24x24xf32>, vector<24x32xf32>, vector<24x32xf32> -> vector<24x32xf32>
    %c0_43 = arith.constant 0 : index
    %c32 = arith.constant 32 : index
    %85 = vector.load %arg23[%c0_43, %c32] : memref<24x128xf32, #tpu.memory_space<vmem>>, vector<24x32xf32>
    tpu.vector_store %arg23[%c0_43, %c32], %84 {strides = array<i32>} : memref<24x128xf32, #tpu.memory_space<vmem>>, vector<24x32xf32>,
    %86 = vector.extract_strided_slice %47 {offsets = [0, 320], sizes = [24, 32], strides = [1, 1]} : vector<24x384xf32> to vector<24x32xf32>
    %87 = vector.extract_strided_slice %77 {offsets = [48, 0], sizes = [24, 24], strides = [1, 1]} : vector<96x24xf32> to vector<24x24xf32>
    %cst_44 = arith.constant dense<0.000000e+00> : vector<24x32xf32>
    %88 = tpu.matmul %87, %86, %cst_44 {dimension_numbers = #tpu.dot_dimension_numbers<[1], [0], [0], [1], [0, 0, 1, 1], [], []>} : vector<24x24xf32>, vector<24x32xf32>, vector<24x32xf32> -> vector<24x32xf32>
    %c0_45 = arith.constant 0 : index
    %c64 = arith.constant 64 : index
    %89 = vector.load %arg23[%c0_45, %c64] : memref<24x128xf32, #tpu.memory_space<vmem>>, vector<24x32xf32>
    tpu.vector_store %arg23[%c0_45, %c64], %88 {strides = array<i32>} : memref<24x128xf32, #tpu.memory_space<vmem>>, vector<24x32xf32>,
    %90 = vector.extract_strided_slice %47 {offsets = [0, 352], sizes = [24, 32], strides = [1, 1]} : vector<24x384xf32> to vector<24x32xf32>
    %91 = vector.extract_strided_slice %77 {offsets = [72, 0], sizes = [24, 24], strides = [1, 1]} : vector<96x24xf32> to vector<24x24xf32>
    %cst_46 = arith.constant dense<0.000000e+00> : vector<24x32xf32>
    %92 = tpu.matmul %91, %90, %cst_46 {dimension_numbers = #tpu.dot_dimension_numbers<[1], [0], [0], [1], [0, 0, 1, 1], [], []>} : vector<24x24xf32>, vector<24x32xf32>, vector<24x32xf32> -> vector<24x32xf32>
    %c0_47 = arith.constant 0 : index
    %c96 = arith.constant 96 : index
    %93 = vector.load %arg23[%c0_47, %c96] : memref<24x128xf32, #tpu.memory_space<vmem>>, vector<24x32xf32>
    tpu.vector_store %arg23[%c0_47, %c96], %92 {strides = array<i32>} : memref<24x128xf32, #tpu.memory_space<vmem>>, vector<24x32xf32>,
    %c0_48 = arith.constant 0 : index
    %c0_49 = arith.constant 0 : index
    %94 = vector.load %arg23[%c0_48, %c0_49] : memref<24x128xf32, #tpu.memory_space<vmem>>, vector<24x128xf32>
    %95 = arith.truncf %94 : vector<24x128xf32> to vector<24x128xbf16>
    %cst_50 = arith.constant dense<0.000000e+00> : vector<24x128xf32>
    %96 = tpu.matmul %95, %40, %cst_50 {dimension_numbers = #tpu.dot_dimension_numbers<[1], [0], [0], [1], [0, 0, 1, 1], [], []>} : vector<24x128xbf16>, vector<128x128xbf16>, vector<24x128xf32> -> vector<24x128xf32>
    %97 = vector.extract_strided_slice %38 {offsets = [24, 0], sizes = [24, 384], strides = [1, 1]} : vector<48x384xf32> to vector<24x384xf32>
    %98 = vector.extract_strided_slice %97 {offsets = [0, 0], sizes = [24, 32], strides = [1, 1]} : vector<24x384xf32> to vector<24x32xf32>
    %99 = vector.extract_strided_slice %97 {offsets = [0, 128], sizes = [24, 32], strides = [1, 1]} : vector<24x384xf32> to vector<24x32xf32>
    %cst_51 = arith.constant dense<0.000000e+00> : vector<24x24xf32>
    %100 = tpu.matmul %98, %99, %cst_51 {dimension_numbers = #tpu.dot_dimension_numbers<[1], [1], [0], [0], [0, 0, 1, 0], [], []>} : vector<24x32xf32>, vector<24x32xf32>, vector<24x24xf32> -> vector<24x24xf32>
    %c0_52 = arith.constant 0 : index
    %c0_53 = arith.constant 0 : index
    %101 = vector.load %arg22[%c0_52, %c0_53] : memref<96x24xf32, #tpu.memory_space<vmem>>, vector<24x24xf32>
    tpu.vector_store %arg22[%c0_52, %c0_53], %100 {strides = array<i32>} : memref<96x24xf32, #tpu.memory_space<vmem>>, vector<24x24xf32>,
    %102 = vector.extract_strided_slice %97 {offsets = [0, 32], sizes = [24, 32], strides = [1, 1]} : vector<24x384xf32> to vector<24x32xf32>
    %103 = vector.extract_strided_slice %97 {offsets = [0, 160], sizes = [24, 32], strides = [1, 1]} : vector<24x384xf32> to vector<24x32xf32>
    %cst_54 = arith.constant dense<0.000000e+00> : vector<24x24xf32>
    %104 = tpu.matmul %102, %103, %cst_54 {dimension_numbers = #tpu.dot_dimension_numbers<[1], [1], [0], [0], [0, 0, 1, 0], [], []>} : vector<24x32xf32>, vector<24x32xf32>, vector<24x24xf32> -> vector<24x24xf32>
    %c24_55 = arith.constant 24 : index
    %c0_56 = arith.constant 0 : index
    %105 = vector.load %arg22[%c24_55, %c0_56] : memref<96x24xf32, #tpu.memory_space<vmem>>, vector<24x24xf32>
    tpu.vector_store %arg22[%c24_55, %c0_56], %104 {strides = array<i32>} : memref<96x24xf32, #tpu.memory_space<vmem>>, vector<24x24xf32>,
    %106 = vector.extract_strided_slice %97 {offsets = [0, 64], sizes = [24, 32], strides = [1, 1]} : vector<24x384xf32> to vector<24x32xf32>
    %107 = vector.extract_strided_slice %97 {offsets = [0, 192], sizes = [24, 32], strides = [1, 1]} : vector<24x384xf32> to vector<24x32xf32>
    %cst_57 = arith.constant dense<0.000000e+00> : vector<24x24xf32>
    %108 = tpu.matmul %106, %107, %cst_57 {dimension_numbers = #tpu.dot_dimension_numbers<[1], [1], [0], [0], [0, 0, 1, 0], [], []>} : vector<24x32xf32>, vector<24x32xf32>, vector<24x24xf32> -> vector<24x24xf32>
    %c48_58 = arith.constant 48 : index
    %c0_59 = arith.constant 0 : index
    %109 = vector.load %arg22[%c48_58, %c0_59] : memref<96x24xf32, #tpu.memory_space<vmem>>, vector<24x24xf32>
    tpu.vector_store %arg22[%c48_58, %c0_59], %108 {strides = array<i32>} : memref<96x24xf32, #tpu.memory_space<vmem>>, vector<24x24xf32>,
    %110 = vector.extract_strided_slice %97 {offsets = [0, 96], sizes = [24, 32], strides = [1, 1]} : vector<24x384xf32> to vector<24x32xf32>
    %111 = vector.extract_strided_slice %97 {offsets = [0, 224], sizes = [24, 32], strides = [1, 1]} : vector<24x384xf32> to vector<24x32xf32>
    %cst_60 = arith.constant dense<0.000000e+00> : vector<24x24xf32>
    %112 = tpu.matmul %110, %111, %cst_60 {dimension_numbers = #tpu.dot_dimension_numbers<[1], [1], [0], [0], [0, 0, 1, 0], [], []>} : vector<24x32xf32>, vector<24x32xf32>, vector<24x24xf32> -> vector<24x24xf32>
    %c72_61 = arith.constant 72 : index
    %c0_62 = arith.constant 0 : index
    %113 = vector.load %arg22[%c72_61, %c0_62] : memref<96x24xf32, #tpu.memory_space<vmem>>, vector<24x24xf32>
    tpu.vector_store %arg22[%c72_61, %c0_62], %112 {strides = array<i32>} : memref<96x24xf32, #tpu.memory_space<vmem>>, vector<24x24xf32>,
    %c0_63 = arith.constant 0 : index
    %c0_64 = arith.constant 0 : index
    %114 = vector.load %arg22[%c0_63, %c0_64] : memref<96x24xf32, #tpu.memory_space<vmem>>, vector<96x24xf32>
    %115 = vector.broadcast %46 : vector<1x24xf32> to vector<96x24xf32>
    %116 = arith.addf %114, %115 : vector<96x24xf32>
    %cst_65 = arith.constant dense<0xFF800000> : vector<96xf32>
    %117 = vector.multi_reduction <maximumf>, %116, %cst_65 [1] : vector<96x24xf32> to vector<96xf32>
    %cst_66 = arith.constant 0xFF800000 : f32
    %118 = vector.broadcast %cst_66 : f32 to vector<96xf32>
    %119 = arith.maximumf %118, %117 : vector<96xf32>
    %120 = vector.shape_cast %119 : vector<96xf32> to vector<96x1xf32>
    %121 = vector.broadcast %120 : vector<96x1xf32> to vector<96x24xf32>
    %122 = arith.subf %116, %121 : vector<96x24xf32>
    %123 = math.exp %122 : vector<96x24xf32>
    %cst_67 = arith.constant dense<0.000000e+00> : vector<96xf32>
    %124 = vector.multi_reduction <add>, %123, %cst_67 [1] : vector<96x24xf32> to vector<96xf32>
    %125 = vector.shape_cast %124 : vector<96xf32> to vector<96x1xf32>
    %126 = vector.broadcast %125 : vector<96x1xf32> to vector<96x24xf32>
    %127 = arith.divf %123, %126 : vector<96x24xf32>
    %128 = vector.extract_strided_slice %97 {offsets = [0, 256], sizes = [24, 32], strides = [1, 1]} : vector<24x384xf32> to vector<24x32xf32>
    %129 = vector.extract_strided_slice %127 {offsets = [0, 0], sizes = [24, 24], strides = [1, 1]} : vector<96x24xf32> to vector<24x24xf32>
    %cst_68 = arith.constant dense<0.000000e+00> : vector<24x32xf32>
    %130 = tpu.matmul %129, %128, %cst_68 {dimension_numbers = #tpu.dot_dimension_numbers<[1], [0], [0], [1], [0, 0, 1, 1], [], []>} : vector<24x24xf32>, vector<24x32xf32>, vector<24x32xf32> -> vector<24x32xf32>
    %c0_69 = arith.constant 0 : index
    %c0_70 = arith.constant 0 : index
    %131 = vector.load %arg23[%c0_69, %c0_70] : memref<24x128xf32, #tpu.memory_space<vmem>>, vector<24x32xf32>
    tpu.vector_store %arg23[%c0_69, %c0_70], %130 {strides = array<i32>} : memref<24x128xf32, #tpu.memory_space<vmem>>, vector<24x32xf32>,
    %132 = vector.extract_strided_slice %97 {offsets = [0, 288], sizes = [24, 32], strides = [1, 1]} : vector<24x384xf32> to vector<24x32xf32>
    %133 = vector.extract_strided_slice %127 {offsets = [24, 0], sizes = [24, 24], strides = [1, 1]} : vector<96x24xf32> to vector<24x24xf32>
    %cst_71 = arith.constant dense<0.000000e+00> : vector<24x32xf32>
    %134 = tpu.matmul %133, %132, %cst_71 {dimension_numbers = #tpu.dot_dimension_numbers<[1], [0], [0], [1], [0, 0, 1, 1], [], []>} : vector<24x24xf32>, vector<24x32xf32>, vector<24x32xf32> -> vector<24x32xf32>
    %c0_72 = arith.constant 0 : index
    %c32_73 = arith.constant 32 : index
    %135 = vector.load %arg23[%c0_72, %c32_73] : memref<24x128xf32, #tpu.memory_space<vmem>>, vector<24x32xf32>
    tpu.vector_store %arg23[%c0_72, %c32_73], %134 {strides = array<i32>} : memref<24x128xf32, #tpu.memory_space<vmem>>, vector<24x32xf32>,
    %136 = vector.extract_strided_slice %97 {offsets = [0, 320], sizes = [24, 32], strides = [1, 1]} : vector<24x384xf32> to vector<24x32xf32>
    %137 = vector.extract_strided_slice %127 {offsets = [48, 0], sizes = [24, 24], strides = [1, 1]} : vector<96x24xf32> to vector<24x24xf32>
    %cst_74 = arith.constant dense<0.000000e+00> : vector<24x32xf32>
    %138 = tpu.matmul %137, %136, %cst_74 {dimension_numbers = #tpu.dot_dimension_numbers<[1], [0], [0], [1], [0, 0, 1, 1], [], []>} : vector<24x24xf32>, vector<24x32xf32>, vector<24x32xf32> -> vector<24x32xf32>
    %c0_75 = arith.constant 0 : index
    %c64_76 = arith.constant 64 : index
    %139 = vector.load %arg23[%c0_75, %c64_76] : memref<24x128xf32, #tpu.memory_space<vmem>>, vector<24x32xf32>
    tpu.vector_store %arg23[%c0_75, %c64_76], %138 {strides = array<i32>} : memref<24x128xf32, #tpu.memory_space<vmem>>, vector<24x32xf32>,
    %140 = vector.extract_strided_slice %97 {offsets = [0, 352], sizes = [24, 32], strides = [1, 1]} : vector<24x384xf32> to vector<24x32xf32>
    %141 = vector.extract_strided_slice %127 {offsets = [72, 0], sizes = [24, 24], strides = [1, 1]} : vector<96x24xf32> to vector<24x24xf32>
    %cst_77 = arith.constant dense<0.000000e+00> : vector<24x32xf32>
    %142 = tpu.matmul %141, %140, %cst_77 {dimension_numbers = #tpu.dot_dimension_numbers<[1], [0], [0], [1], [0, 0, 1, 1], [], []>} : vector<24x24xf32>, vector<24x32xf32>, vector<24x32xf32> -> vector<24x32xf32>
    %c0_78 = arith.constant 0 : index
    %c96_79 = arith.constant 96 : index
    %143 = vector.load %arg23[%c0_78, %c96_79] : memref<24x128xf32, #tpu.memory_space<vmem>>, vector<24x32xf32>
    tpu.vector_store %arg23[%c0_78, %c96_79], %142 {strides = array<i32>} : memref<24x128xf32, #tpu.memory_space<vmem>>, vector<24x32xf32>,
    %c0_80 = arith.constant 0 : index
    %c0_81 = arith.constant 0 : index
    %144 = vector.load %arg23[%c0_80, %c0_81] : memref<24x128xf32, #tpu.memory_space<vmem>>, vector<24x128xf32>
    %145 = arith.truncf %144 : vector<24x128xf32> to vector<24x128xbf16>
    %cst_82 = arith.constant dense<0.000000e+00> : vector<24x128xf32>
    %146 = tpu.matmul %145, %40, %cst_82 {dimension_numbers = #tpu.dot_dimension_numbers<[1], [0], [0], [1], [0, 0, 1, 1], [], []>} : vector<24x128xbf16>, vector<128x128xbf16>, vector<24x128xf32> -> vector<24x128xf32>
    %147 = tpu.concatenate %96, %146 in 0 : vector<24x128xf32>, vector<24x128xf32> -> vector<48x128xf32>
    %148 = arith.addf %4, %147 : vector<48x128xf32>
    %c0_83 = arith.constant 0 : index
    %c0_84 = arith.constant 0 : index
    %c0_85 = arith.constant 0 : index
    %149 = vector.load %arg7[%c0_83, %c0_84, %c0_85] : memref<1x1x128xf32, #tpu.memory_space<vmem>>, vector<1x1x128xf32>
    %150 = vector.shape_cast %149 : vector<1x1x128xf32> to vector<1x128xf32>
    %151 = vector.broadcast %150 : vector<1x128xf32> to vector<48x128xf32>
    %152 = arith.addf %148, %151 : vector<48x128xf32>
    %c0_86 = arith.constant 0 : index
    %c0_87 = arith.constant 0 : index
    %c0_88 = arith.constant 0 : index
    %153 = vector.load %arg8[%c0_86, %c0_87, %c0_88] : memref<1x1x128xf32, #tpu.memory_space<vmem>>, vector<1x1x128xf32>
    %154 = vector.shape_cast %153 : vector<1x1x128xf32> to vector<1x128xf32>
    %c0_89 = arith.constant 0 : index
    %c0_90 = arith.constant 0 : index
    %c0_91 = arith.constant 0 : index
    %155 = vector.load %arg9[%c0_89, %c0_90, %c0_91] : memref<1x1x128xf32, #tpu.memory_space<vmem>>, vector<1x1x128xf32>
    %156 = vector.shape_cast %155 : vector<1x1x128xf32> to vector<1x128xf32>
    %cst_92 = arith.constant dense<0.000000e+00> : vector<48xf32>
    %157 = vector.multi_reduction <add>, %152, %cst_92 [1] : vector<48x128xf32> to vector<48xf32>
    %158 = vector.shape_cast %157 : vector<48xf32> to vector<48x1xf32>
    %cst_93 = arith.constant 1.280000e+02 : f32
    %159 = vector.broadcast %cst_93 : f32 to vector<48x1xf32>
    %160 = arith.divf %158, %159 : vector<48x1xf32>
    %161 = vector.broadcast %160 : vector<48x1xf32> to vector<48x128xf32>
    %162 = arith.subf %152, %161 : vector<48x128xf32>
    %163 = arith.mulf %162, %162 : vector<48x128xf32>
    %cst_94 = arith.constant dense<0.000000e+00> : vector<48xf32>
    %164 = vector.multi_reduction <add>, %163, %cst_94 [1] : vector<48x128xf32> to vector<48xf32>
    %165 = vector.shape_cast %164 : vector<48xf32> to vector<48x1xf32>
    %cst_95 = arith.constant 1.280000e+02 : f32
    %166 = vector.broadcast %cst_95 : f32 to vector<48x1xf32>
    %167 = arith.divf %165, %166 : vector<48x1xf32>
    %168 = vector.broadcast %160 : vector<48x1xf32> to vector<48x128xf32>
    %169 = arith.subf %152, %168 : vector<48x128xf32>
    %cst_96 = arith.constant 9.99999974E-6 : f32
    %170 = vector.broadcast %cst_96 : f32 to vector<48x1xf32>
    %171 = arith.addf %167, %170 : vector<48x1xf32>
    %172 = math.rsqrt %171 : vector<48x1xf32>
    %173 = vector.broadcast %172 : vector<48x1xf32> to vector<48x128xf32>
    %174 = arith.mulf %169, %173 : vector<48x128xf32>
    %175 = vector.broadcast %154 : vector<1x128xf32> to vector<48x128xf32>
    %176 = arith.mulf %174, %175 : vector<48x128xf32>
    %177 = vector.broadcast %156 : vector<1x128xf32> to vector<48x128xf32>
    %178 = arith.addf %176, %177 : vector<48x128xf32>
    %179 = arith.truncf %178 : vector<48x128xf32> to vector<48x128xbf16>
    %c0_97 = arith.constant 0 : index
    %c0_98 = arith.constant 0 : index
    %c0_99 = arith.constant 0 : index
    %180 = vector.load %arg10[%c0_97, %c0_98, %c0_99] : memref<1x128x512xbf16, #tpu.memory_space<vmem>>, vector<1x128x512xbf16>
    %181 = vector.shape_cast %180 : vector<1x128x512xbf16> to vector<128x512xbf16>
    %cst_100 = arith.constant dense<0.000000e+00> : vector<48x512xf32>
    %182 = tpu.matmul %179, %181, %cst_100 {dimension_numbers = #tpu.dot_dimension_numbers<[1], [0], [0], [1], [0, 0, 1, 1], [], []>} : vector<48x128xbf16>, vector<128x512xbf16>, vector<48x512xf32> -> vector<48x512xf32>
    %c0_101 = arith.constant 0 : index
    %c0_102 = arith.constant 0 : index
    %c0_103 = arith.constant 0 : index
    %183 = vector.load %arg11[%c0_101, %c0_102, %c0_103] : memref<1x1x512xf32, #tpu.memory_space<vmem>>, vector<1x1x512xf32>
    %184 = vector.shape_cast %183 : vector<1x1x512xf32> to vector<1x512xf32>
    %185 = vector.broadcast %184 : vector<1x512xf32> to vector<48x512xf32>
    %186 = arith.addf %182, %185 : vector<48x512xf32>
    %187 = arith.mulf %186, %186 : vector<48x512xf32>
    %188 = arith.mulf %186, %187 : vector<48x512xf32>
    %cst_104 = arith.constant 4.471500e-02 : f32
    %189 = vector.broadcast %cst_104 : f32 to vector<48x512xf32>
    %190 = arith.mulf %189, %188 : vector<48x512xf32>
    %191 = arith.addf %186, %190 : vector<48x512xf32>
    %cst_105 = arith.constant 0.797884583 : f32
    %192 = vector.broadcast %cst_105 : f32 to vector<48x512xf32>
    %193 = arith.mulf %192, %191 : vector<48x512xf32>
    %194 = math.tanh %193 : vector<48x512xf32>
    %cst_106 = arith.constant 1.000000e+00 : f32
    %195 = vector.broadcast %cst_106 : f32 to vector<48x512xf32>
    %196 = arith.addf %195, %194 : vector<48x512xf32>
    %cst_107 = arith.constant 5.000000e-01 : f32
    %197 = vector.broadcast %cst_107 : f32 to vector<48x512xf32>
    %198 = arith.mulf %197, %196 : vector<48x512xf32>
    %199 = arith.mulf %186, %198 : vector<48x512xf32>
    %200 = arith.truncf %199 : vector<48x512xf32> to vector<48x512xbf16>
    %c0_108 = arith.constant 0 : index
    %c0_109 = arith.constant 0 : index
    %c0_110 = arith.constant 0 : index
    %201 = vector.load %arg12[%c0_108, %c0_109, %c0_110] : memref<1x512x128xbf16, #tpu.memory_space<vmem>>, vector<1x512x128xbf16>
    %202 = vector.shape_cast %201 : vector<1x512x128xbf16> to vector<512x128xbf16>
    %cst_111 = arith.constant dense<0.000000e+00> : vector<48x128xf32>
    %203 = tpu.matmul %200, %202, %cst_111 {dimension_numbers = #tpu.dot_dimension_numbers<[1], [0], [0], [1], [0, 0, 1, 1], [], []>} : vector<48x512xbf16>, vector<512x128xbf16>, vector<48x128xf32> -> vector<48x128xf32>
    %c0_112 = arith.constant 0 : index
    %c0_113 = arith.constant 0 : index
    %c0_114 = arith.constant 0 : index
    %204 = vector.load %arg13[%c0_112, %c0_113, %c0_114] : memref<1x1x128xf32, #tpu.memory_space<vmem>>, vector<1x1x128xf32>
    %205 = vector.shape_cast %204 : vector<1x1x128xf32> to vector<1x128xf32>
    %206 = vector.broadcast %205 : vector<1x128xf32> to vector<48x128xf32>
    %207 = arith.addf %203, %206 : vector<48x128xf32>
    %208 = arith.addf %152, %207 : vector<48x128xf32>
    %209 = vector.shape_cast %208 : vector<48x128xf32> to vector<2x24x128xf32>
    %c0_115 = arith.constant 0 : index
    %c0_116 = arith.constant 0 : index
    %c0_117 = arith.constant 0 : index
    %210 = vector.load %arg21[%c0_115, %c0_116, %c0_117] : memref<2x24x128xf32, #tpu.memory_space<vmem>>, vector<2x24x128xf32>
    tpu.vector_store %arg21[%c0_115, %c0_116, %c0_117], %209 {strides = array<i32>} : memref<2x24x128xf32, #tpu.memory_space<vmem>>, vector<2x24x128xf32>,
    %c1_i32 = arith.constant 1 : i32
    %211 = arith.cmpi eq, %arg0, %c1_i32 : i32
    %212 = arith.extui %211 : i1 to i32
    %c0_i32_118 = arith.constant 0 : i32
    %213 = arith.cmpi ne, %212, %c0_i32_118 : i32
    scf.if %213 {
      %214 = vector.extract_strided_slice %208 {offsets = [0, 0], sizes = [1, 128], strides = [1, 1]} : vector<48x128xf32> to vector<1x128xf32>
      %215 = vector.extract_strided_slice %208 {offsets = [24, 0], sizes = [1, 128], strides = [1, 1]} : vector<48x128xf32> to vector<1x128xf32>
      %216 = tpu.concatenate %214, %215 in 0 : vector<1x128xf32>, vector<1x128xf32> -> vector<2x128xf32>
      %c0_119 = arith.constant 0 : index
      %c0_120 = arith.constant 0 : index
      %217 = vector.load %arg14[%c0_119, %c0_120] : memref<1x128xf32, #tpu.memory_space<vmem>>, vector<1x128xf32>
      %c0_121 = arith.constant 0 : index
      %c0_122 = arith.constant 0 : index
      %218 = vector.load %arg15[%c0_121, %c0_122] : memref<1x128xf32, #tpu.memory_space<vmem>>, vector<1x128xf32>
      %cst_123 = arith.constant dense<0.000000e+00> : vector<2xf32>
      %219 = vector.multi_reduction <add>, %216, %cst_123 [1] : vector<2x128xf32> to vector<2xf32>
      %220 = vector.shape_cast %219 : vector<2xf32> to vector<2x1xf32>
      %cst_124 = arith.constant 1.280000e+02 : f32
      %221 = vector.broadcast %cst_124 : f32 to vector<2x1xf32>
      %222 = arith.divf %220, %221 : vector<2x1xf32>
      %223 = vector.broadcast %222 : vector<2x1xf32> to vector<2x128xf32>
      %224 = arith.subf %216, %223 : vector<2x128xf32>
      %225 = arith.mulf %224, %224 : vector<2x128xf32>
      %cst_125 = arith.constant dense<0.000000e+00> : vector<2xf32>
      %226 = vector.multi_reduction <add>, %225, %cst_125 [1] : vector<2x128xf32> to vector<2xf32>
      %227 = vector.shape_cast %226 : vector<2xf32> to vector<2x1xf32>
      %cst_126 = arith.constant 1.280000e+02 : f32
      %228 = vector.broadcast %cst_126 : f32 to vector<2x1xf32>
      %229 = arith.divf %227, %228 : vector<2x1xf32>
      %230 = vector.broadcast %222 : vector<2x1xf32> to vector<2x128xf32>
      %231 = arith.subf %216, %230 : vector<2x128xf32>
      %cst_127 = arith.constant 9.99999974E-6 : f32
      %232 = vector.broadcast %cst_127 : f32 to vector<2x1xf32>
      %233 = arith.addf %229, %232 : vector<2x1xf32>
      %234 = math.rsqrt %233 : vector<2x1xf32>
      %235 = vector.broadcast %234 : vector<2x1xf32> to vector<2x128xf32>
      %236 = arith.mulf %231, %235 : vector<2x128xf32>
      %237 = vector.broadcast %217 : vector<1x128xf32> to vector<2x128xf32>
      %238 = arith.mulf %236, %237 : vector<2x128xf32>
      %239 = vector.broadcast %218 : vector<1x128xf32> to vector<2x128xf32>
      %240 = arith.addf %238, %239 : vector<2x128xf32>
      %c0_128 = arith.constant 0 : index
      %c0_129 = arith.constant 0 : index
      %241 = vector.load %arg16[%c0_128, %c0_129] : memref<1x128xf32, #tpu.memory_space<vmem>>, vector<1x128xf32>
      %c0_130 = arith.constant 0 : index
      %c0_131 = arith.constant 0 : index
      %242 = vector.load %arg17[%c0_130, %c0_131] : memref<1x128xf32, #tpu.memory_space<vmem>>, vector<1x128xf32>
      %cst_132 = arith.constant dense<0.000000e+00> : vector<2xf32>
      %243 = vector.multi_reduction <add>, %240, %cst_132 [1] : vector<2x128xf32> to vector<2xf32>
      %244 = vector.shape_cast %243 : vector<2xf32> to vector<2x1xf32>
      %cst_133 = arith.constant 1.280000e+02 : f32
      %245 = vector.broadcast %cst_133 : f32 to vector<2x1xf32>
      %246 = arith.divf %244, %245 : vector<2x1xf32>
      %247 = vector.broadcast %246 : vector<2x1xf32> to vector<2x128xf32>
      %248 = arith.subf %240, %247 : vector<2x128xf32>
      %249 = arith.mulf %248, %248 : vector<2x128xf32>
      %cst_134 = arith.constant dense<0.000000e+00> : vector<2xf32>
      %250 = vector.multi_reduction <add>, %249, %cst_134 [1] : vector<2x128xf32> to vector<2xf32>
      %251 = vector.shape_cast %250 : vector<2xf32> to vector<2x1xf32>
      %cst_135 = arith.constant 1.280000e+02 : f32
      %252 = vector.broadcast %cst_135 : f32 to vector<2x1xf32>
      %253 = arith.divf %251, %252 : vector<2x1xf32>
      %254 = vector.broadcast %246 : vector<2x1xf32> to vector<2x128xf32>
      %255 = arith.subf %240, %254 : vector<2x128xf32>
      %cst_136 = arith.constant 9.99999974E-6 : f32
      %256 = vector.broadcast %cst_136 : f32 to vector<2x1xf32>
      %257 = arith.addf %253, %256 : vector<2x1xf32>
      %258 = math.rsqrt %257 : vector<2x1xf32>
      %259 = vector.broadcast %258 : vector<2x1xf32> to vector<2x128xf32>
      %260 = arith.mulf %255, %259 : vector<2x128xf32>
      %261 = vector.broadcast %241 : vector<1x128xf32> to vector<2x128xf32>
      %262 = arith.mulf %260, %261 : vector<2x128xf32>
      %263 = vector.broadcast %242 : vector<1x128xf32> to vector<2x128xf32>
      %264 = arith.addf %262, %263 : vector<2x128xf32>
      %265 = arith.truncf %264 : vector<2x128xf32> to vector<2x128xbf16>
      %c0_137 = arith.constant 0 : index
      %c0_138 = arith.constant 0 : index
      %266 = vector.load %arg18[%c0_137, %c0_138] : memref<128x128xbf16, #tpu.memory_space<vmem>>, vector<128x128xbf16>
      %cst_139 = arith.constant dense<0.000000e+00> : vector<2x128xf32>
      %267 = tpu.matmul %265, %266, %cst_139 {dimension_numbers = #tpu.dot_dimension_numbers<[1], [0], [0], [1], [0, 0, 1, 1], [], []>} : vector<2x128xbf16>, vector<128x128xbf16>, vector<2x128xf32> -> vector<2x128xf32>
      %c0_140 = arith.constant 0 : index
      %c0_141 = arith.constant 0 : index
      %268 = vector.load %arg19[%c0_140, %c0_141] : memref<1x128xf32, #tpu.memory_space<vmem>>, vector<1x128xf32>
      %269 = vector.broadcast %268 : vector<1x128xf32> to vector<2x128xf32>
      %270 = arith.addf %267, %269 : vector<2x128xf32>
      %c0_142 = arith.constant 0 : index
      %c0_143 = arith.constant 0 : index
      %271 = vector.load %arg20[%c0_142, %c0_143] : memref<2x128xf32, #tpu.memory_space<vmem>>, vector<2x128xf32>
      tpu.vector_store %arg20[%c0_142, %c0_143], %270 {strides = array<i32>} : memref<2x128xf32, #tpu.memory_space<vmem>>, vector<2x128xf32>,
    } else {
    }
    return
  }
  func.func @transform_0(%arg0: i32) -> (i32, i32, i32) {
    %c0_i32 = arith.constant 0 : i32
    %c0_i32_0 = arith.constant 0 : i32
    %c0_i32_1 = arith.constant 0 : i32
    %c0_i32_2 = arith.constant 0 : i32
    return %c0_i32, %c0_i32_0, %c0_i32_1 : i32, i32, i32
  }
  func.func @transform_1(%arg0: i32) -> (i32, i32, i32) {
    %c0_i32 = arith.constant 0 : i32
    %c0_i32_0 = arith.constant 0 : i32
    %c0_i32_1 = arith.constant 0 : i32
    return %arg0, %c0_i32, %c0_i32_0 : i32, i32, i32
  }
  func.func @transform_2(%arg0: i32) -> (i32, i32, i32) {
    %c0_i32 = arith.constant 0 : i32
    %c0_i32_0 = arith.constant 0 : i32
    %c0_i32_1 = arith.constant 0 : i32
    return %arg0, %c0_i32, %c0_i32_0 : i32, i32, i32
  }
  func.func @transform_3(%arg0: i32) -> (i32, i32, i32) {
    %c0_i32 = arith.constant 0 : i32
    %c0_i32_0 = arith.constant 0 : i32
    %c0_i32_1 = arith.constant 0 : i32
    return %arg0, %c0_i32, %c0_i32_0 : i32, i32, i32
  }
  func.func @transform_4(%arg0: i32) -> (i32, i32, i32) {
    %c0_i32 = arith.constant 0 : i32
    %c0_i32_0 = arith.constant 0 : i32
    %c0_i32_1 = arith.constant 0 : i32
    return %arg0, %c0_i32, %c0_i32_0 : i32, i32, i32
  }
  func.func @transform_5(%arg0: i32) -> (i32, i32, i32) {
    %c0_i32 = arith.constant 0 : i32
    %c0_i32_0 = arith.constant 0 : i32
    %c0_i32_1 = arith.constant 0 : i32
    return %arg0, %c0_i32, %c0_i32_0 : i32, i32, i32
  }
  func.func @transform_6(%arg0: i32) -> (i32, i32, i32) {
    %c0_i32 = arith.constant 0 : i32
    %c0_i32_0 = arith.constant 0 : i32
    %c0_i32_1 = arith.constant 0 : i32
    return %arg0, %c0_i32, %c0_i32_0 : i32, i32, i32
  }
  func.func @transform_7(%arg0: i32) -> (i32, i32, i32) {
    %c0_i32 = arith.constant 0 : i32
    %c0_i32_0 = arith.constant 0 : i32
    %c0_i32_1 = arith.constant 0 : i32
    return %arg0, %c0_i32, %c0_i32_0 : i32, i32, i32
  }
  func.func @transform_8(%arg0: i32) -> (i32, i32, i32) {
    %c0_i32 = arith.constant 0 : i32
    %c0_i32_0 = arith.constant 0 : i32
    %c0_i32_1 = arith.constant 0 : i32
    return %arg0, %c0_i32, %c0_i32_0 : i32, i32, i32
  }
  func.func @transform_9(%arg0: i32) -> (i32, i32, i32) {
    %c0_i32 = arith.constant 0 : i32
    %c0_i32_0 = arith.constant 0 : i32
    %c0_i32_1 = arith.constant 0 : i32
    return %arg0, %c0_i32, %c0_i32_0 : i32, i32, i32
  }
  func.func @transform_10(%arg0: i32) -> (i32, i32, i32) {
    %c0_i32 = arith.constant 0 : i32
    %c0_i32_0 = arith.constant 0 : i32
    %c0_i32_1 = arith.constant 0 : i32
    return %arg0, %c0_i32, %c0_i32_0 : i32, i32, i32
  }
  func.func @transform_11(%arg0: i32) -> (i32, i32, i32) {
    %c0_i32 = arith.constant 0 : i32
    %c0_i32_0 = arith.constant 0 : i32
    %c0_i32_1 = arith.constant 0 : i32
    return %arg0, %c0_i32, %c0_i32_0 : i32, i32, i32
  }
  func.func @transform_12(%arg0: i32) -> (i32, i32, i32) {
    %c0_i32 = arith.constant 0 : i32
    %c0_i32_0 = arith.constant 0 : i32
    %c0_i32_1 = arith.constant 0 : i32
    return %arg0, %c0_i32, %c0_i32_0 : i32, i32, i32
  }
  func.func @transform_13(%arg0: i32) -> (i32, i32) {
    %c0_i32 = arith.constant 0 : i32
    %c0_i32_0 = arith.constant 0 : i32
    %c0_i32_1 = arith.constant 0 : i32
    return %c0_i32, %c0_i32_0 : i32, i32
  }
  func.func @transform_14(%arg0: i32) -> (i32, i32) {
    %c0_i32 = arith.constant 0 : i32
    %c0_i32_0 = arith.constant 0 : i32
    %c0_i32_1 = arith.constant 0 : i32
    return %c0_i32, %c0_i32_0 : i32, i32
  }
  func.func @transform_15(%arg0: i32) -> (i32, i32) {
    %c0_i32 = arith.constant 0 : i32
    %c0_i32_0 = arith.constant 0 : i32
    %c0_i32_1 = arith.constant 0 : i32
    return %c0_i32, %c0_i32_0 : i32, i32
  }
  func.func @transform_16(%arg0: i32) -> (i32, i32) {
    %c0_i32 = arith.constant 0 : i32
    %c0_i32_0 = arith.constant 0 : i32
    %c0_i32_1 = arith.constant 0 : i32
    return %c0_i32, %c0_i32_0 : i32, i32
  }
  func.func @transform_17(%arg0: i32) -> (i32, i32) {
    %c0_i32 = arith.constant 0 : i32
    %c0_i32_0 = arith.constant 0 : i32
    %c0_i32_1 = arith.constant 0 : i32
    return %c0_i32, %c0_i32_0 : i32, i32
  }
  func.func @transform_18(%arg0: i32) -> (i32, i32) {
    %c0_i32 = arith.constant 0 : i32
    %c0_i32_0 = arith.constant 0 : i32
    %c0_i32_1 = arith.constant 0 : i32
    return %c0_i32, %c0_i32_0 : i32, i32
  }
  func.func @transform_19(%arg0: i32) -> (i32, i32) {
    %c0_i32 = arith.constant 0 : i32
    %c0_i32_0 = arith.constant 0 : i32
    %c0_i32_1 = arith.constant 0 : i32
    return %c0_i32, %c0_i32_0 : i32, i32
  }
}

</mosaic_0001>

<llo_original>
// kernel: custom-call.8
$region0: #{custom-call.8}
  %s0 = inlined_call_operand.vmem [shape: f32[2,64], index: 0, kind: output, shape index: {}]

// kernel: uni3d_forward.2
$region0: #{uni3d_forward.2}
  #allocation0 [shape = 'u32[]', space=smem, size = 0x4, offset = 0x4, fixed_abs, tag = 'smem constant byte address 0x4 - core index']
  #allocation1 [shape = 'u32[144,128]{1,0:T(1,128)}', space=vmem, size = 0x12000, scoped, tag = 'internal scratch']
  %s0 = inlined_call_operand.vmem [shape: f32[32,8,6], index: 0, kind: input, shape index: {}]
  %s1 = inlined_call_operand.vmem [shape: f32[32,3], index: 1, kind: input, shape index: {}]
  %s2 = inlined_call_operand.vmem [shape: f32[6,128], index: 2, kind: input, shape index: {}]
  %s3 = inlined_call_operand.vmem [shape: f32[1,128], index: 3, kind: input, shape index: {}]
  %s4 = inlined_call_operand.vmem [shape: f32[1,128], index: 4, kind: input, shape index: {}]
  %s5 = inlined_call_operand.vmem [shape: f32[1,128], index: 5, kind: input, shape index: {}]
  %s6 = inlined_call_operand.vmem [shape: bf16[128,256], index: 6, kind: input, shape index: {}]
  %s7 = inlined_call_operand.vmem [shape: f32[1,256], index: 7, kind: input, shape index: {}]
  %s8 = inlined_call_operand.vmem [shape: bf16[256,512], index: 8, kind: input, shape index: {}]
  %s9 = inlined_call_operand.vmem [shape: bf16[256,512], index: 9, kind: input, shape index: {}]
  %s10 = inlined_call_operand.vmem [shape: f32[1,512], index: 10, kind: input, shape index: {}]
  %s11 = inlined_call_operand.vmem [shape: f32[1,512], index: 11, kind: input, shape index: {}]
  %s12 = inlined_call_operand.vmem [shape: f32[1,512], index: 12, kind: input, shape index: {}]
  %s13 = inlined_call_operand.vmem [shape: bf16[512,128], index: 13, kind: input, shape index: {}]
  %s14 = inlined_call_operand.vmem [shape: f32[1,128], index: 14, kind: input, shape index: {}]
  %s15 = inlined_call_operand.vmem [shape: bf16[256,128], index: 15, kind: input, shape index: {}]
  %s16 = inlined_call_operand.vmem [shape: f32[1,128], index: 16, kind: input, shape index: {}]
  %s17 = inlined_call_operand.vmem [shape: f32[3,128], index: 17, kind: input, shape index: {}]
  %s18 = inlined_call_operand.vmem [shape: f32[1,128], index: 18, kind: input, shape index: {}]
  %s19 = inlined_call_operand.vmem [shape: bf16[32,128], index: 19, kind: output, shape index: {}]
  %s20 = sld [smem:[#allocation0]]
  $region86: #{uni3d_forward.2} parent=0
    _
  %s22 = ssub.s32 1, %s20
  %s23 = scalar_select 0, %s22, %s20
  // Predicated region
  $region2: #{uni3d_forward.2} parent=0 // pred_check
    _
  $region3: #{uni3d_forward.2} parent=0 // pred_check_branch
    %25 = sbr.rel (0) target = $region5
  $region4: #{uni3d_forward.2} parent=0 // pred_region
    _
  $region5: #{uni3d_forward.2} parent=0 // pred_fallthru
    _
  // Predicated region
  $region6: #{uni3d_forward.2} parent=0 // pred_check
    _
  $region7: #{uni3d_forward.2} parent=0 // pred_check_branch
    %27 = sbr.rel (0) target = $region9
  $region8: #{uni3d_forward.2} parent=0 // pred_region
    _
  $region9: #{uni3d_forward.2} parent=0 // pred_fallthru
    _
  // Predicated region
  $region10: #{uni3d_forward.2} parent=0 // pred_check
    _
  $region11: #{uni3d_forward.2} parent=0 // pred_check_branch
    %29 = sbr.rel (0) target = $region13
  $region12: #{uni3d_forward.2} parent=0 // pred_region
    _
  $region13: #{uni3d_forward.2} parent=0 // pred_fallthru
    _
  // Predicated region
  $region14: #{uni3d_forward.2} parent=0 // pred_check
    _
  $region15: #{uni3d_forward.2} parent=0 // pred_check_branch
    %31 = sbr.rel (0) target = $region17
  $region16: #{uni3d_forward.2} parent=0 // pred_region
    _
  $region17: #{uni3d_forward.2} parent=0 // pred_fallthru
    _
  // Predicated region
  $region18: #{uni3d_forward.2} parent=0 // pred_check
    _
  $region19: #{uni3d_forward.2} parent=0 // pred_check_branch
    %33 = sbr.rel (0) target = $region21
  $region20: #{uni3d_forward.2} parent=0 // pred_region
    _
  $region21: #{uni3d_forward.2} parent=0 // pred_fallthru
    _
  // Predicated region
  $region22: #{uni3d_forward.2} parent=0 // pred_check
    _
  $region23: #{uni3d_forward.2} parent=0 // pred_check_branch
    %35 = sbr.rel (0) target = $region25
  $region24: #{uni3d_forward.2} parent=0 // pred_region
    _
  $region25: #{uni3d_forward.2} parent=0 // pred_fallthru
    _
  // Predicated region
  $region26: #{uni3d_forward.2} parent=0 // pred_check
    _
  $region27: #{uni3d_forward.2} parent=0 // pred_check_branch
    %37 = sbr.rel (0) target = $region29
  $region28: #{uni3d_forward.2} parent=0 // pred_region
    _
  $region29: #{uni3d_forward.2} parent=0 // pred_fallthru
    _
  // Predicated region
  $region30: #{uni3d_forward.2} parent=0 // pred_check
    _
  $region31: #{uni3d_forward.2} parent=0 // pred_check_branch
    %39 = sbr.rel (0) target = $region33
  $region32: #{uni3d_forward.2} parent=0 // pred_region
    _
  $region33: #{uni3d_forward.2} parent=0 // pred_fallthru
    _
  // Predicated region
  $region34: #{uni3d_forward.2} parent=0 // pred_check
    _
  $region35: #{uni3d_forward.2} parent=0 // pred_check_branch
    %41 = sbr.rel (0) target = $region37
  $region36: #{uni3d_forward.2} parent=0 // pred_region
    _
  $region37: #{uni3d_forward.2} parent=0 // pred_fallthru
    _
  // Predicated region
  $region38: #{uni3d_forward.2} parent=0 // pred_check
    _
  $region39: #{uni3d_forward.2} parent=0 // pred_check_branch
    %43 = sbr.rel (0) target = $region41
  $region40: #{uni3d_forward.2} parent=0 // pred_region
    _
  $region41: #{uni3d_forward.2} parent=0 // pred_fallthru
    _
  // Predicated region
  $region42: #{uni3d_forward.2} parent=0 // pred_check
    _
  $region43: #{uni3d_forward.2} parent=0 // pred_check_branch
    %45 = sbr.rel (0) target = $region45
  $region44: #{uni3d_forward.2} parent=0 // pred_region
    _
  $region45: #{uni3d_forward.2} parent=0 // pred_fallthru
    _
  // Predicated region
  $region46: #{uni3d_forward.2} parent=0 // pred_check
    _
  $region47: #{uni3d_forward.2} parent=0 // pred_check_branch
    %47 = sbr.rel (0) target = $region49
  $region48: #{uni3d_forward.2} parent=0 // pred_region
    _
  $region49: #{uni3d_forward.2} parent=0 // pred_fallthru
    _
  // Predicated region
  $region50: #{uni3d_forward.2} parent=0 // pred_check
    _
  $region51: #{uni3d_forward.2} parent=0 // pred_check_branch
    %49 = sbr.rel (0) target = $region53
  $region52: #{uni3d_forward.2} parent=0 // pred_region
    _
  $region53: #{uni3d_forward.2} parent=0 // pred_fallthru
    _
  // Predicated region
  $region54: #{uni3d_forward.2} parent=0 // pred_check
    _
  $region55: #{uni3d_forward.2} parent=0 // pred_check_branch
    %51 = sbr.rel (0) target = $region57
  $region56: #{uni3d_forward.2} parent=0 // pred_region
    _
  $region57: #{uni3d_forward.2} parent=0 // pred_fallthru
    _
  // Predicated region
  $region58: #{uni3d_forward.2} parent=0 // pred_check
    _
  $region59: #{uni3d_forward.2} parent=0 // pred_check_branch
    %53 = sbr.rel (0) target = $region61
  $region60: #{uni3d_forward.2} parent=0 // pred_region
    _
  $region61: #{uni3d_forward.2} parent=0 // pred_fallthru
    _
  // Predicated region
  $region62: #{uni3d_forward.2} parent=0 // pred_check
    _
  $region63: #{uni3d_forward.2} parent=0 // pred_check_branch
    %55 = sbr.rel (0) target = $region65
  $region64: #{uni3d_forward.2} parent=0 // pred_region
    _
  $region65: #{uni3d_forward.2} parent=0 // pred_fallthru
    _
  // Predicated region
  $region66: #{uni3d_forward.2} parent=0 // pred_check
    _
  $region67: #{uni3d_forward.2} parent=0 // pred_check_branch
    %57 = sbr.rel (0) target = $region69
  $region68: #{uni3d_forward.2} parent=0 // pred_region
    _
  $region69: #{uni3d_forward.2} parent=0 // pred_fallthru
    _
  // Predicated region
  $region70: #{uni3d_forward.2} parent=0 // pred_check
    _
  $region71: #{uni3d_forward.2} parent=0 // pred_check_branch
    %59 = sbr.rel (0) target = $region73
  $region72: #{uni3d_forward.2} parent=0 // pred_region
    _
  $region73: #{uni3d_forward.2} parent=0 // pred_fallthru
    _
  // Predicated region
  $region74: #{uni3d_forward.2} parent=0 // pred_check
    _
  $region75: #{uni3d_forward.2} parent=0 // pred_check_branch
    %61 = sbr.rel (0) target = $region77
  $region76: #{uni3d_forward.2} parent=0 // pred_region
    _
  $region77: #{uni3d_forward.2} parent=0 // pred_fallthru
    _
  %v63 = vld [vmem:[%s0] sm:$0xff]
  %v64 = vld [vmem:[%s0 + $0x8] sm:$0xff]
  %v65 = vld [vmem:[%s0 + $0x10] sm:$0xff]
  %v66 = vld [vmem:[%s0 + $0x18] sm:$0xff]
  %v67 = vld [vmem:[%s0 + $0x20] sm:$0xff]
  %v68 = vld [vmem:[%s0 + $0x28] sm:$0xff]
  %v69 = vld [vmem:[%s0 + $0x30] sm:$0xff]
  %v70 = vld [vmem:[%s0 + $0x38] sm:$0xff]
  %v71 = vld [vmem:[%s0 + $0x40] sm:$0xff]
  %v72 = vld [vmem:[%s0 + $0x48] sm:$0xff]
  %v73 = vld [vmem:[%s0 + $0x50] sm:$0xff]
  %v74 = vld [vmem:[%s0 + $0x58] sm:$0xff]
  %v75 = vld [vmem:[%s0 + $0x60] sm:$0xff]
  %v76 = vld [vmem:[%s0 + $0x68] sm:$0xff]
  %v77 = vld [vmem:[%s0 + $0x70] sm:$0xff]
  %v78 = vld [vmem:[%s0 + $0x78] sm:$0xff]
  %v79 = vld [vmem:[%s0 + $0x80] sm:$0xff]
  %v80 = vld [vmem:[%s0 + $0x88] sm:$0xff]
  %v81 = vld [vmem:[%s0 + $0x90] sm:$0xff]
  %v82 = vld [vmem:[%s0 + $0x98] sm:$0xff]
  %v83 = vld [vmem:[%s0 + $0xa0] sm:$0xff]
  %v84 = vld [vmem:[%s0 + $0xa8] sm:$0xff]
  %v85 = vld [vmem:[%s0 + $0xb0] sm:$0xff]
  %v86 = vld [vmem:[%s0 + $0xb8] sm:$0xff]
  %v87 = vld [vmem:[%s0 + $0xc0] sm:$0xff]
  %v88 = vld [vmem:[%s0 + $0xc8] sm:$0xff]
  %v89 = vld [vmem:[%s0 + $0xd0] sm:$0xff]
  %v90 = vld [vmem:[%s0 + $0xd8] sm:$0xff]
  %v91 = vld [vmem:[%s0 + $0xe0] sm:$0xff]
  %v92 = vld [vmem:[%s0 + $0xe8] sm:$0xff]
  %v93 = vld [vmem:[%s0 + $0xf0] sm:$0xff]
  %v94 = vld [vmem:[%s0 + $0xf8] sm:$0xff]
  %v95 = vld [vmem:[%s3] sm:$0x1]
  %v96 = vld [vmem:[%s2] sm:$0x1]
  %98 = vset.pattern.permute.xlu0 0
  %99 = vperm.xlu0 %98, %v63
  %v100 = vpop.permute.xlu0 %99
  %103 = vset.pattern.permute.xlu0 0
  %104 = vperm.xlu0 %103, %v64
  %v105 = vpop.permute.xlu0 %104
  %108 = vset.pattern.permute.xlu0 0
  %109 = vperm.xlu0 %108, %v65
  %v110 = vpop.permute.xlu0 %109
  %113 = vset.pattern.permute.xlu0 0
  %114 = vperm.xlu0 %113, %v66
  %v115 = vpop.permute.xlu0 %114
  %118 = vset.pattern.permute.xlu0 0
  %119 = vperm.xlu0 %118, %v67
  %v120 = vpop.permute.xlu0 %119
  %123 = vset.pattern.permute.xlu0 0
  %124 = vperm.xlu0 %123, %v68
  %v125 = vpop.permute.xlu0 %124
  %128 = vset.pattern.permute.xlu0 0
  %129 = vperm.xlu0 %128, %v69
  %v130 = vpop.permute.xlu0 %129
  %133 = vset.pattern.permute.xlu0 0
  %134 = vperm.xlu0 %133, %v70
  %v135 = vpop.permute.xlu0 %134
  %138 = vset.pattern.permute.xlu0 0
  %139 = vperm.xlu0 %138, %v71
  %v140 = vpop.permute.xlu0 %139
  %143 = vset.pattern.permute.xlu0 0
  %144 = vperm.xlu0 %143, %v72
  %v145 = vpop.permute.xlu0 %144
  %148 = vset.pattern.permute.xlu0 0
  %149 = vperm.xlu0 %148, %v73
  %v150 = vpop.permute.xlu0 %149
  %153 = vset.pattern.permute.xlu0 0
  %154 = vperm.xlu0 %153, %v74
  %v155 = vpop.permute.xlu0 %154
  %158 = vset.pattern.permute.xlu0 0
  %159 = vperm.xlu0 %158, %v75
  %v160 = vpop.permute.xlu0 %159
  %163 = vset.pattern.permute.xlu0 0
  %164 = vperm.xlu0 %163, %v76
  %v165 = vpop.permute.xlu0 %164
  %168 = vset.pattern.permute.xlu0 0
  %169 = vperm.xlu0 %168, %v77
  %v170 = vpop.permute.xlu0 %169
  %173 = vset.pattern.permute.xlu0 0
  %174 = vperm.xlu0 %173, %v78
  %v175 = vpop.permute.xlu0 %174
  %178 = vset.pattern.permute.xlu0 0
  %179 = vperm.xlu0 %178, %v79
  %v180 = vpop.permute.xlu0 %179
  %183 = vset.pattern.permute.xlu0 0
  %184 = vperm.xlu0 %183, %v80
  %v185 = vpop.permute.xlu0 %184
  %188 = vset.pattern.permute.xlu0 0
  %189 = vperm.xlu0 %188, %v81
  %v190 = vpop.permute.xlu0 %189
  %193 = vset.pattern.permute.xlu0 0
  %194 = vperm.xlu0 %193, %v82
  %v195 = vpop.permute.xlu0 %194
  %198 = vset.pattern.permute.xlu0 0
  %199 = vperm.xlu0 %198, %v83
  %v200 = vpop.permute.xlu0 %199
  %203 = vset.pattern.permute.xlu0 0
  %204 = vperm.xlu0 %203, %v84
  %v205 = vpop.permute.xlu0 %204
  %208 = vset.pattern.permute.xlu0 0
  %209 = vperm.xlu0 %208, %v85
  %v210 = vpop.permute.xlu0 %209
  %213 = vset.pattern.permute.xlu0 0
  %214 = vperm.xlu0 %213, %v86
  %v215 = vpop.permute.xlu0 %214
  %218 = vset.pattern.permute.xlu0 0
  %219 = vperm.xlu0 %218, %v87
  %v220 = vpop.permute.xlu0 %219
  %223 = vset.pattern.permute.xlu0 0
  %224 = vperm.xlu0 %223, %v88
  %v225 = vpop.permute.xlu0 %224
  %228 = vset.pattern.permute.xlu0 0
  %229 = vperm.xlu0 %228, %v89
  %v230 = vpop.permute.xlu0 %229
  %233 = vset.pattern.permute.xlu0 0
  %234 = vperm.xlu0 %233, %v90
  %v235 = vpop.permute.xlu0 %234
  %238 = vset.pattern.permute.xlu0 0
  %239 = vperm.xlu0 %238, %v91
  %v240 = vpop.permute.xlu0 %239
  %243 = vset.pattern.permute.xlu0 0
  %244 = vperm.xlu0 %243, %v92
  %v245 = vpop.permute.xlu0 %244
  %248 = vset.pattern.permute.xlu0 0
  %249 = vperm.xlu0 %248, %v93
  %v250 = vpop.permute.xlu0 %249
  %253 = vset.pattern.permute.xlu0 0
  %254 = vperm.xlu0 %253, %v94
  %v255 = vpop.permute.xlu0 %254
  %v257 = vlaneseq
  %v258 = vshrl.u32 %v257, 7
  %v259 = vsub.s32 0, %v258
  %v260 = vrot.slane %v96, %v259
  %v261 = vmul.f32 %v100, %v260
  %v262 = vmul.f32 %v105, %v260
  %v263 = vmul.f32 %v110, %v260
  %v264 = vmul.f32 %v115, %v260
  %v265 = vmul.f32 %v120, %v260
  %v266 = vmul.f32 %v125, %v260
  %v267 = vmul.f32 %v130, %v260
  %v268 = vmul.f32 %v135, %v260
  %v269 = vmul.f32 %v140, %v260
  %v270 = vmul.f32 %v145, %v260
  %v271 = vmul.f32 %v150, %v260
  %v272 = vmul.f32 %v155, %v260
  %v273 = vmul.f32 %v160, %v260
  %v274 = vmul.f32 %v165, %v260
  %v275 = vmul.f32 %v170, %v260
  %v276 = vmul.f32 %v175, %v260
  %v277 = vmul.f32 %v180, %v260
  %v278 = vmul.f32 %v185, %v260
  %v279 = vmul.f32 %v190, %v260
  %v280 = vmul.f32 %v195, %v260
  %v281 = vmul.f32 %v200, %v260
  %v282 = vmul.f32 %v205, %v260
  %v283 = vmul.f32 %v210, %v260
  %v284 = vmul.f32 %v215, %v260
  %v285 = vmul.f32 %v220, %v260
  %v286 = vmul.f32 %v225, %v260
  %v287 = vmul.f32 %v230, %v260
  %v288 = vmul.f32 %v235, %v260
  %v289 = vmul.f32 %v240, %v260
  %v290 = vmul.f32 %v245, %v260
  %v291 = vmul.f32 %v250, %v260
  %v292 = vmul.f32 %v255, %v260
  %v294 = vlaneseq
  %v295 = vshrl.u32 %v294, 7
  %v296 = vsub.s32 0, %v295
  %v297 = vrot.slane %v95, %v296
  %v299 = vadd.f32 %v297, %v261
  %v300 = vadd.f32 %v297, %v262
  %v301 = vadd.f32 %v297, %v263
  %v302 = vadd.f32 %v297, %v264
  %v303 = vadd.f32 %v297, %v265
  %v304 = vadd.f32 %v297, %v266
  %v305 = vadd.f32 %v297, %v267
  %v306 = vadd.f32 %v297, %v268
  %v307 = vadd.f32 %v297, %v269
  %v308 = vadd.f32 %v297, %v270
  %v309 = vadd.f32 %v297, %v271
  %v310 = vadd.f32 %v297, %v272
  %v311 = vadd.f32 %v297, %v273
  %v312 = vadd.f32 %v297, %v274
  %v313 = vadd.f32 %v297, %v275
  %v314 = vadd.f32 %v297, %v276
  %v315 = vadd.f32 %v297, %v277
  %v316 = vadd.f32 %v297, %v278
  %v317 = vadd.f32 %v297, %v279
  %v318 = vadd.f32 %v297, %v280
  %v319 = vadd.f32 %v297, %v281
  %v320 = vadd.f32 %v297, %v282
  %v321 = vadd.f32 %v297, %v283
  %v322 = vadd.f32 %v297, %v284
  %v323 = vadd.f32 %v297, %v285
  %v324 = vadd.f32 %v297, %v286
  %v325 = vadd.f32 %v297, %v287
  %v326 = vadd.f32 %v297, %v288
  %v327 = vadd.f32 %v297, %v289
  %v328 = vadd.f32 %v297, %v290
  %v329 = vadd.f32 %v297, %v291
  %v330 = vadd.f32 %v297, %v292
  %v331 = vld [vmem:[%s2 + $0x1] sm:$0x1]
  %332 = vset.pattern.permute.xlu0 1
  %333 = vperm.xlu0 %332, %v63
  %v334 = vpop.permute.xlu0 %333
  %336 = vset.pattern.permute.xlu0 1
  %337 = vperm.xlu0 %336, %v64
  %v338 = vpop.permute.xlu0 %337
  %340 = vset.pattern.permute.xlu0 1
  %341 = vperm.xlu0 %340, %v65
  %v342 = vpop.permute.xlu0 %341
  %344 = vset.pattern.permute.xlu0 1
  %345 = vperm.xlu0 %344, %v66
  %v346 = vpop.permute.xlu0 %345
  %348 = vset.pattern.permute.xlu0 1
  %349 = vperm.xlu0 %348, %v67
  %v350 = vpop.permute.xlu0 %349
  %352 = vset.pattern.permute.xlu0 1
  %353 = vperm.xlu0 %352, %v68
  %v354 = vpop.permute.xlu0 %353
  %356 = vset.pattern.permute.xlu0 1
  %357 = vperm.xlu0 %356, %v69
  %v358 = vpop.permute.xlu0 %357
  %360 = vset.pattern.permute.xlu0 1
  %361 = vperm.xlu0 %360, %v70
  %v362 = vpop.permute.xlu0 %361
  %364 = vset.pattern.permute.xlu0 1
  %365 = vperm.xlu0 %364, %v71
  %v366 = vpop.permute.xlu0 %365
  %368 = vset.pattern.permute.xlu0 1
  %369 = vperm.xlu0 %368, %v72
  %v370 = vpop.permute.xlu0 %369
  %372 = vset.pattern.permute.xlu0 1
  %373 = vperm.xlu0 %372, %v73
  %v374 = vpop.permute.xlu0 %373
  %376 = vset.pattern.permute.xlu0 1
  %377 = vperm.xlu0 %376, %v74
  %v378 = vpop.permute.xlu0 %377
  %380 = vset.pattern.permute.xlu0 1
  %381 = vperm.xlu0 %380, %v75
  %v382 = vpop.permute.xlu0 %381
  %384 = vset.pattern.permute.xlu0 1
  %385 = vperm.xlu0 %384, %v76
  %v386 = vpop.permute.xlu0 %385
  %388 = vset.pattern.permute.xlu0 1
  %389 = vperm.xlu0 %388, %v77
  %v390 = vpop.permute.xlu0 %389
  %392 = vset.pattern.permute.xlu0 1
  %393 = vperm.xlu0 %392, %v78
  %v394 = vpop.permute.xlu0 %393
  %396 = vset.pattern.permute.xlu0 1
  %397 = vperm.xlu0 %396, %v79
  %v398 = vpop.permute.xlu0 %397
  %400 = vset.pattern.permute.xlu0 1
  %401 = vperm.xlu0 %400, %v80
  %v402 = vpop.permute.xlu0 %401
  %404 = vset.pattern.permute.xlu0 1
  %405 = vperm.xlu0 %404, %v81
  %v406 = vpop.permute.xlu0 %405
  %408 = vset.pattern.permute.xlu0 1
  %409 = vperm.xlu0 %408, %v82
  %v410 = vpop.permute.xlu0 %409
  %412 = vset.pattern.permute.xlu0 1
  %413 = vperm.xlu0 %412, %v83
  %v414 = vpop.permute.xlu0 %413
  %416 = vset.pattern.permute.xlu0 1
  %417 = vperm.xlu0 %416, %v84
  %v418 = vpop.permute.xlu0 %417
  %420 = vset.pattern.permute.xlu0 1
  %421 = vperm.xlu0 %420, %v85
  %v422 = vpop.permute.xlu0 %421
  %424 = vset.pattern.permute.xlu0 1
  %425 = vperm.xlu0 %424, %v86
  %v426 = vpop.permute.xlu0 %425
  %428 = vset.pattern.permute.xlu0 1
  %429 = vperm.xlu0 %428, %v87
  %v430 = vpop.permute.xlu0 %429
  %432 = vset.pattern.permute.xlu0 1
  %433 = vperm.xlu0 %432, %v88
  %v434 = vpop.permute.xlu0 %433
  %436 = vset.pattern.permute.xlu0 1
  %437 = vperm.xlu0 %436, %v89
  %v438 = vpop.permute.xlu0 %437
  %440 = vset.pattern.permute.xlu0 1
  %441 = vperm.xlu0 %440, %v90
  %v442 = vpop.permute.xlu0 %441
  %444 = vset.pattern.permute.xlu0 1
  %445 = vperm.xlu0 %444, %v91
  %v446 = vpop.permute.xlu0 %445
  %448 = vset.pattern.permute.xlu0 1
  %449 = vperm.xlu0 %448, %v92
  %v450 = vpop.permute.xlu0 %449
  %452 = vset.pattern.permute.xlu0 1
  %453 = vperm.xlu0 %452, %v93
  %v454 = vpop.permute.xlu0 %453
  %456 = vset.pattern.permute.xlu0 1
  %457 = vperm.xlu0 %456, %v94
  %v458 = vpop.permute.xlu0 %457
  %v460 = vlaneseq
  %v461 = vshrl.u32 %v460, 7
  %v462 = vsub.s32 0, %v461
  %v463 = vrot.slane %v331, %v462
  %v464 = vmul.f32 %v334, %v463
  %v465 = vmul.f32 %v338, %v463
  %v466 = vmul.f32 %v342, %v463
  %v467 = vmul.f32 %v346, %v463
  %v468 = vmul.f32 %v350, %v463
  %v469 = vmul.f32 %v354, %v463
  %v470 = vmul.f32 %v358, %v463
  %v471 = vmul.f32 %v362, %v463
  %v472 = vmul.f32 %v366, %v463
  %v473 = vmul.f32 %v370, %v463
  %v474 = vmul.f32 %v374, %v463
  %v475 = vmul.f32 %v378, %v463
  %v476 = vmul.f32 %v382, %v463
  %v477 = vmul.f32 %v386, %v463
  %v478 = vmul.f32 %v390, %v463
  %v479 = vmul.f32 %v394, %v463
  %v480 = vmul.f32 %v398, %v463
  %v481 = vmul.f32 %v402, %v463
  %v482 = vmul.f32 %v406, %v463
  %v483 = vmul.f32 %v410, %v463
  %v484 = vmul.f32 %v414, %v463
  %v485 = vmul.f32 %v418, %v463
  %v486 = vmul.f32 %v422, %v463
  %v487 = vmul.f32 %v426, %v463
  %v488 = vmul.f32 %v430, %v463
  %v489 = vmul.f32 %v434, %v463
  %v490 = vmul.f32 %v438, %v463
  %v491 = vmul.f32 %v442, %v463
  %v492 = vmul.f32 %v446, %v463
  %v493 = vmul.f32 %v450, %v463
  %v494 = vmul.f32 %v454, %v463
  %v495 = vmul.f32 %v458, %v463
  %v496 = vadd.f32 %v299, %v464
  %v497 = vadd.f32 %v300, %v465
  %v498 = vadd.f32 %v301, %v466
  %v499 = vadd.f32 %v302, %v467
  %v500 = vadd.f32 %v303, %v468
  %v501 = vadd.f32 %v304, %v469
  %v502 = vadd.f32 %v305, %v470
  %v503 = vadd.f32 %v306, %v471
  %v504 = vadd.f32 %v307, %v472
  %v505 = vadd.f32 %v308, %v473
  %v506 = vadd.f32 %v309, %v474
  %v507 = vadd.f32 %v310, %v475
  %v508 = vadd.f32 %v311, %v476
  %v509 = vadd.f32 %v312, %v477
  %v510 = vadd.f32 %v313, %v478
  %v511 = vadd.f32 %v314, %v479
  %v512 = vadd.f32 %v315, %v480
  %v513 = vadd.f32 %v316, %v481
  %v514 = vadd.f32 %v317, %v482
  %v515 = vadd.f32 %v318, %v483
  %v516 = vadd.f32 %v319, %v484
  %v517 = vadd.f32 %v320, %v485
  %v518 = vadd.f32 %v321, %v486
  %v519 = vadd.f32 %v322, %v487
  %v520 = vadd.f32 %v323, %v488
  %v521 = vadd.f32 %v324, %v489
  %v522 = vadd.f32 %v325, %v490
  %v523 = vadd.f32 %v326, %v491
  %v524 = vadd.f32 %v327, %v492
  %v525 = vadd.f32 %v328, %v493
  %v526 = vadd.f32 %v329, %v494
  %v527 = vadd.f32 %v330, %v495
  %v528 = vld [vmem:[%s2 + $0x2] sm:$0x1]
  %529 = vset.pattern.permute.xlu0 2
  %530 = vperm.xlu0 %529, %v63
  %v531 = vpop.permute.xlu0 %530
  %533 = vset.pattern.permute.xlu0 2
  %534 = vperm.xlu0 %533, %v64
  %v535 = vpop.permute.xlu0 %534
  %537 = vset.pattern.permute.xlu0 2
  %538 = vperm.xlu0 %537, %v65
  %v539 = vpop.permute.xlu0 %538
  %541 = vset.pattern.permute.xlu0 2
  %542 = vperm.xlu0 %541, %v66
  %v543 = vpop.permute.xlu0 %542
  %545 = vset.pattern.permute.xlu0 2
  %546 = vperm.xlu0 %545, %v67
  %v547 = vpop.permute.xlu0 %546
  %549 = vset.pattern.permute.xlu0 2
  %550 = vperm.xlu0 %549, %v68
  %v551 = vpop.permute.xlu0 %550
  %553 = vset.pattern.permute.xlu0 2
  %554 = vperm.xlu0 %553, %v69
  %v555 = vpop.permute.xlu0 %554
  %557 = vset.pattern.permute.xlu0 2
  %558 = vperm.xlu0 %557, %v70
  %v559 = vpop.permute.xlu0 %558
  %561 = vset.pattern.permute.xlu0 2
  %562 = vperm.xlu0 %561, %v71
  %v563 = vpop.permute.xlu0 %562
  %565 = vset.pattern.permute.xlu0 2
  %566 = vperm.xlu0 %565, %v72
  %v567 = vpop.permute.xlu0 %566
  %569 = vset.pattern.permute.xlu0 2
  %570 = vperm.xlu0 %569, %v73
  %v571 = vpop.permute.xlu0 %570
  %573 = vset.pattern.permute.xlu0 2
  %574 = vperm.xlu0 %573, %v74
  %v575 = vpop.permute.xlu0 %574
  %577 = vset.pattern.permute.xlu0 2
  %578 = vperm.xlu0 %577, %v75
  %v579 = vpop.permute.xlu0 %578
  %581 = vset.pattern.permute.xlu0 2
  %582 = vperm.xlu0 %581, %v76
  %v583 = vpop.permute.xlu0 %582
  %585 = vset.pattern.permute.xlu0 2
  %586 = vperm.xlu0 %585, %v77
  %v587 = vpop.permute.xlu0 %586
  %589 = vset.pattern.permute.xlu0 2
  %590 = vperm.xlu0 %589, %v78
  %v591 = vpop.permute.xlu0 %590
  %593 = vset.pattern.permute.xlu0 2
  %594 = vperm.xlu0 %593, %v79
  %v595 = vpop.permute.xlu0 %594
  %597 = vset.pattern.permute.xlu0 2
  %598 = vperm.xlu0 %597, %v80
  %v599 = vpop.permute.xlu0 %598
  %601 = vset.pattern.permute.xlu0 2
  %602 = vperm.xlu0 %601, %v81
  %v603 = vpop.permute.xlu0 %602
  %605 = vset.pattern.permute.xlu0 2
  %606 = vperm.xlu0 %605, %v82
  %v607 = vpop.permute.xlu0 %606
  %609 = vset.pattern.permute.xlu0 2
  %610 = vperm.xlu0 %609, %v83
  %v611 = vpop.permute.xlu0 %610
  %613 = vset.pattern.permute.xlu0 2
  %614 = vperm.xlu0 %613, %v84
  %v615 = vpop.permute.xlu0 %614
  %617 = vset.pattern.permute.xlu0 2
  %618 = vperm.xlu0 %617, %v85
  %v619 = vpop.permute.xlu0 %618
  %621 = vset.pattern.permute.xlu0 2
  %622 = vperm.xlu0 %621, %v86
  %v623 = vpop.permute.xlu0 %622
  %625 = vset.pattern.permute.xlu0 2
  %626 = vperm.xlu0 %625, %v87
  %v627 = vpop.permute.xlu0 %626
  %629 = vset.pattern.permute.xlu0 2
  %630 = vperm.xlu0 %629, %v88
  %v631 = vpop.permute.xlu0 %630
  %633 = vset.pattern.permute.xlu0 2
  %634 = vperm.xlu0 %633, %v89
  %v635 = vpop.permute.xlu0 %634
  %637 = vset.pattern.permute.xlu0 2
  %638 = vperm.xlu0 %637, %v90
  %v639 = vpop.permute.xlu0 %638
  %641 = vset.pattern.permute.xlu0 2
  %642 = vperm.xlu0 %641, %v91
  %v643 = vpop.permute.xlu0 %642
  %645 = vset.pattern.permute.xlu0 2
  %646 = vperm.xlu0 %645, %v92
  %v647 = vpop.permute.xlu0 %646
  %649 = vset.pattern.permute.xlu0 2
  %650 = vperm.xlu0 %649, %v93
  %v651 = vpop.permute.xlu0 %650
  %653 = vset.pattern.permute.xlu0 2
  %654 = vperm.xlu0 %653, %v94
  %v655 = vpop.permute.xlu0 %654
  %v657 = vlaneseq
  %v658 = vshrl.u32 %v657, 7
  %v659 = vsub.s32 0, %v658
  %v660 = vrot.slane %v528, %v659
  %v661 = vmul.f32 %v531, %v660
  %v662 = vmul.f32 %v535, %v660
  %v663 = vmul.f32 %v539, %v660
  %v664 = vmul.f32 %v543, %v660
  %v665 = vmul.f32 %v547, %v660
  %v666 = vmul.f32 %v551, %v660
  %v667 = vmul.f32 %v555, %v660
  %v668 = vmul.f32 %v559, %v660
  %v669 = vmul.f32 %v563, %v660
  %v670 = vmul.f32 %v567, %v660
  %v671 = vmul.f32 %v571, %v660
  %v672 = vmul.f32 %v575, %v660
  %v673 = vmul.f32 %v579, %v660
  %v674 = vmul.f32 %v583, %v660
  %v675 = vmul.f32 %v587, %v660
  %v676 = vmul.f32 %v591, %v660
  %v677 = vmul.f32 %v595, %v660
  %v678 = vmul.f32 %v599, %v660
  %v679 = vmul.f32 %v603, %v660
  %v680 = vmul.f32 %v607, %v660
  %v681 = vmul.f32 %v611, %v660
  %v682 = vmul.f32 %v615, %v660
  %v683 = vmul.f32 %v619, %v660
  %v684 = vmul.f32 %v623, %v660
  %v685 = vmul.f32 %v627, %v660
  %v686 = vmul.f32 %v631, %v660
  %v687 = vmul.f32 %v635, %v660
  %v688 = vmul.f32 %v639, %v660
  %v689 = vmul.f32 %v643, %v660
  %v690 = vmul.f32 %v647, %v660
  %v691 = vmul.f32 %v651, %v660
  %v692 = vmul.f32 %v655, %v660
  %v693 = vadd.f32 %v496, %v661
  %v694 = vadd.f32 %v497, %v662
  %v695 = vadd.f32 %v498, %v663
  %v696 = vadd.f32 %v499, %v664
  %v697 = vadd.f32 %v500, %v665
  %v698 = vadd.f32 %v501, %v666
  %v699 = vadd.f32 %v502, %v667
  %v700 = vadd.f32 %v503, %v668
  %v701 = vadd.f32 %v504, %v669
  %v702 = vadd.f32 %v505, %v670
  %v703 = vadd.f32 %v506, %v671
  %v704 = vadd.f32 %v507, %v672
  %v705 = vadd.f32 %v508, %v673
  %v706 = vadd.f32 %v509, %v674
  %v707 = vadd.f32 %v510, %v675
  %v708 = vadd.f32 %v511, %v676
  %v709 = vadd.f32 %v512, %v677
  %v710 = vadd.f32 %v513, %v678
  %v711 = vadd.f32 %v514, %v679
  %v712 = vadd.f32 %v515, %v680
  %v713 = vadd.f32 %v516, %v681
  %v714 = vadd.f32 %v517, %v682
  %v715 = vadd.f32 %v518, %v683
  %v716 = vadd.f32 %v519, %v684
  %v717 = vadd.f32 %v520, %v685
  %v718 = vadd.f32 %v521, %v686
  %v719 = vadd.f32 %v522, %v687
  %v720 = vadd.f32 %v523, %v688
  %v721 = vadd.f32 %v524, %v689
  %v722 = vadd.f32 %v525, %v690
  %v723 = vadd.f32 %v526, %v691
  %v724 = vadd.f32 %v527, %v692
  %v725 = vld [vmem:[%s2 + $0x3] sm:$0x1]
  %726 = vset.pattern.permute.xlu0 3
  %727 = vperm.xlu0 %726, %v63
  %v728 = vpop.permute.xlu0 %727
  %730 = vset.pattern.permute.xlu0 3
  %731 = vperm.xlu0 %730, %v64
  %v732 = vpop.permute.xlu0 %731
  %734 = vset.pattern.permute.xlu0 3
  %735 = vperm.xlu0 %734, %v65
  %v736 = vpop.permute.xlu0 %735
  %738 = vset.pattern.permute.xlu0 3
  %739 = vperm.xlu0 %738, %v66
  %v740 = vpop.permute.xlu0 %739
  %742 = vset.pattern.permute.xlu0 3
  %743 = vperm.xlu0 %742, %v67
  %v744 = vpop.permute.xlu0 %743
  %746 = vset.pattern.permute.xlu0 3
  %747 = vperm.xlu0 %746, %v68
  %v748 = vpop.permute.xlu0 %747
  %750 = vset.pattern.permute.xlu0 3
  %751 = vperm.xlu0 %750, %v69
  %v752 = vpop.permute.xlu0 %751
  %754 = vset.pattern.permute.xlu0 3
  %755 = vperm.xlu0 %754, %v70
  %v756 = vpop.permute.xlu0 %755
  %758 = vset.pattern.permute.xlu0 3
  %759 = vperm.xlu0 %758, %v71
  %v760 = vpop.permute.xlu0 %759
  %762 = vset.pattern.permute.xlu0 3
  %763 = vperm.xlu0 %762, %v72
  %v764 = vpop.permute.xlu0 %763
  %766 = vset.pattern.permute.xlu0 3
  %767 = vperm.xlu0 %766, %v73
  %v768 = vpop.permute.xlu0 %767
  %770 = vset.pattern.permute.xlu0 3
  %771 = vperm.xlu0 %770, %v74
  %v772 = vpop.permute.xlu0 %771
  %774 = vset.pattern.permute.xlu0 3
  %775 = vperm.xlu0 %774, %v75
  %v776 = vpop.permute.xlu0 %775
  %778 = vset.pattern.permute.xlu0 3
  %779 = vperm.xlu0 %778, %v76
  %v780 = vpop.permute.xlu0 %779
  %782 = vset.pattern.permute.xlu0 3
  %783 = vperm.xlu0 %782, %v77
  %v784 = vpop.permute.xlu0 %783
  %786 = vset.pattern.permute.xlu0 3
  %787 = vperm.xlu0 %786, %v78
  %v788 = vpop.permute.xlu0 %787
  %790 = vset.pattern.permute.xlu0 3
  %791 = vperm.xlu0 %790, %v79
  %v792 = vpop.permute.xlu0 %791
  %794 = vset.pattern.permute.xlu0 3
  %795 = vperm.xlu0 %794, %v80
  %v796 = vpop.permute.xlu0 %795
  %798 = vset.pattern.permute.xlu0 3
  %799 = vperm.xlu0 %798, %v81
  %v800 = vpop.permute.xlu0 %799
  %802 = vset.pattern.permute.xlu0 3
  %803 = vperm.xlu0 %802, %v82
  %v804 = vpop.permute.xlu0 %803
  %806 = vset.pattern.permute.xlu0 3
  %807 = vperm.xlu0 %806, %v83
  %v808 = vpop.permute.xlu0 %807
  %810 = vset.pattern.permute.xlu0 3
  %811 = vperm.xlu0 %810, %v84
  %v812 = vpop.permute.xlu0 %811
  %814 = vset.pattern.permute.xlu0 3
  %815 = vperm.xlu0 %814, %v85
  %v816 = vpop.permute.xlu0 %815
  %818 = vset.pattern.permute.xlu0 3
  %819 = vperm.xlu0 %818, %v86
  %v820 = vpop.permute.xlu0 %819
  %822 = vset.pattern.permute.xlu0 3
  %823 = vperm.xlu0 %822, %v87
  %v824 = vpop.permute.xlu0 %823
  %826 = vset.pattern.permute.xlu0 3
  %827 = vperm.xlu0 %826, %v88
  %v828 = vpop.permute.xlu0 %827
  %830 = vset.pattern.permute.xlu0 3
  %831 = vperm.xlu0 %830, %v89
  %v832 = vpop.permute.xlu0 %831
  %834 = vset.pattern.permute.xlu0 3
  %835 = vperm.xlu0 %834, %v90
  %v836 = vpop.permute.xlu0 %835
  %838 = vset.pattern.permute.xlu0 3
  %839 = vperm.xlu0 %838, %v91
  %v840 = vpop.permute.xlu0 %839
  %842 = vset.pattern.permute.xlu0 3
  %843 = vperm.xlu0 %842, %v92
  %v844 = vpop.permute.xlu0 %843
  %846 = vset.pattern.permute.xlu0 3
  %847 = vperm.xlu0 %846, %v93
  %v848 = vpop.permute.xlu0 %847
  %850 = vset.pattern.permute.xlu0 3
  %851 = vperm.xlu0 %850, %v94
  %v852 = vpop.permute.xlu0 %851
  %v854 = vlaneseq
  %v855 = vshrl.u32 %v854, 7
  %v856 = vsub.s32 0, %v855
  %v857 = vrot.slane %v725, %v856
  %v858 = vmul.f32 %v728, %v857
  %v859 = vmul.f32 %v732, %v857
  %v860 = vmul.f32 %v736, %v857
  %v861 = vmul.f32 %v740, %v857
  %v862 = vmul.f32 %v744, %v857
  %v863 = vmul.f32 %v748, %v857
  %v864 = vmul.f32 %v752, %v857
  %v865 = vmul.f32 %v756, %v857
  %v866 = vmul.f32 %v760, %v857
  %v867 = vmul.f32 %v764, %v857
  %v868 = vmul.f32 %v768, %v857
  %v869 = vmul.f32 %v772, %v857
  %v870 = vmul.f32 %v776, %v857
  %v871 = vmul.f32 %v780, %v857
  %v872 = vmul.f32 %v784, %v857
  %v873 = vmul.f32 %v788, %v857
  %v874 = vmul.f32 %v792, %v857
  %v875 = vmul.f32 %v796, %v857
  %v876 = vmul.f32 %v800, %v857
  %v877 = vmul.f32 %v804, %v857
  %v878 = vmul.f32 %v808, %v857
  %v879 = vmul.f32 %v812, %v857
  %v880 = vmul.f32 %v816, %v857
  %v881 = vmul.f32 %v820, %v857
  %v882 = vmul.f32 %v824, %v857
  %v883 = vmul.f32 %v828, %v857
  %v884 = vmul.f32 %v832, %v857
  %v885 = vmul.f32 %v836, %v857
  %v886 = vmul.f32 %v840, %v857
  %v887 = vmul.f32 %v844, %v857
  %v888 = vmul.f32 %v848, %v857
  %v889 = vmul.f32 %v852, %v857
  %v890 = vadd.f32 %v693, %v858
  %v891 = vadd.f32 %v694, %v859
  %v892 = vadd.f32 %v695, %v860
  %v893 = vadd.f32 %v696, %v861
  %v894 = vadd.f32 %v697, %v862
  %v895 = vadd.f32 %v698, %v863
  %v896 = vadd.f32 %v699, %v864
  %v897 = vadd.f32 %v700, %v865
  %v898 = vadd.f32 %v701, %v866
  %v899 = vadd.f32 %v702, %v867
  %v900 = vadd.f32 %v703, %v868
  %v901 = vadd.f32 %v704, %v869
  %v902 = vadd.f32 %v705, %v870
  %v903 = vadd.f32 %v706, %v871
  %v904 = vadd.f32 %v707, %v872
  %v905 = vadd.f32 %v708, %v873
  %v906 = vadd.f32 %v709, %v874
  %v907 = vadd.f32 %v710, %v875
  %v908 = vadd.f32 %v711, %v876
  %v909 = vadd.f32 %v712, %v877
  %v910 = vadd.f32 %v713, %v878
  %v911 = vadd.f32 %v714, %v879
  %v912 = vadd.f32 %v715, %v880
  %v913 = vadd.f32 %v716, %v881
  %v914 = vadd.f32 %v717, %v882
  %v915 = vadd.f32 %v718, %v883
  %v916 = vadd.f32 %v719, %v884
  %v917 = vadd.f32 %v720, %v885
  %v918 = vadd.f32 %v721, %v886
  %v919 = vadd.f32 %v722, %v887
  %v920 = vadd.f32 %v723, %v888
  %v921 = vadd.f32 %v724, %v889
  %v922 = vld [vmem:[%s2 + $0x4] sm:$0x1]
  %923 = vset.pattern.permute.xlu0 4
  %924 = vperm.xlu0 %923, %v63
  %v925 = vpop.permute.xlu0 %924
  %927 = vset.pattern.permute.xlu0 4
  %928 = vperm.xlu0 %927, %v64
  %v929 = vpop.permute.xlu0 %928
  %931 = vset.pattern.permute.xlu0 4
  %932 = vperm.xlu0 %931, %v65
  %v933 = vpop.permute.xlu0 %932
  %935 = vset.pattern.permute.xlu0 4
  %936 = vperm.xlu0 %935, %v66
  %v937 = vpop.permute.xlu0 %936
  %939 = vset.pattern.permute.xlu0 4
  %940 = vperm.xlu0 %939, %v67
  %v941 = vpop.permute.xlu0 %940
  %943 = vset.pattern.permute.xlu0 4
  %944 = vperm.xlu0 %943, %v68
  %v945 = vpop.permute.xlu0 %944
  %947 = vset.pattern.permute.xlu0 4
  %948 = vperm.xlu0 %947, %v69
  %v949 = vpop.permute.xlu0 %948
  %951 = vset.pattern.permute.xlu0 4
  %952 = vperm.xlu0 %951, %v70
  %v953 = vpop.permute.xlu0 %952
  %955 = vset.pattern.permute.xlu0 4
  %956 = vperm.xlu0 %955, %v71
  %v957 = vpop.permute.xlu0 %956
  %959 = vset.pattern.permute.xlu0 4
  %960 = vperm.xlu0 %959, %v72
  %v961 = vpop.permute.xlu0 %960
  %963 = vset.pattern.permute.xlu0 4
  %964 = vperm.xlu0 %963, %v73
  %v965 = vpop.permute.xlu0 %964
  %967 = vset.pattern.permute.xlu0 4
  %968 = vperm.xlu0 %967, %v74
  %v969 = vpop.permute.xlu0 %968
  %971 = vset.pattern.permute.xlu0 4
  %972 = vperm.xlu0 %971, %v75
  %v973 = vpop.permute.xlu0 %972
  %975 = vset.pattern.permute.xlu0 4
  %976 = vperm.xlu0 %975, %v76
  %v977 = vpop.permute.xlu0 %976
  %979 = vset.pattern.permute.xlu0 4
  %980 = vperm.xlu0 %979, %v77
  %v981 = vpop.permute.xlu0 %980
  %983 = vset.pattern.permute.xlu0 4
  %984 = vperm.xlu0 %983, %v78
  %v985 = vpop.permute.xlu0 %984
  %987 = vset.pattern.permute.xlu0 4
  %988 = vperm.xlu0 %987, %v79
  %v989 = vpop.permute.xlu0 %988
  %991 = vset.pattern.permute.xlu0 4
  %992 = vperm.xlu0 %991, %v80
  %v993 = vpop.permute.xlu0 %992
  %995 = vset.pattern.permute.xlu0 4
  %996 = vperm.xlu0 %995, %v81
  %v997 = vpop.permute.xlu0 %996
  %999 = vset.pattern.permute.xlu0 4
  %1000 = vperm.xlu0 %999, %v82
  %v1001 = vpop.permute.xlu0 %1000
  %1003 = vset.pattern.permute.xlu0 4
  %1004 = vperm.xlu0 %1003, %v83
  %v1005 = vpop.permute.xlu0 %1004
  %1007 = vset.pattern.permute.xlu0 4
  %1008 = vperm.xlu0 %1007, %v84
  %v1009 = vpop.permute.xlu0 %1008
  %1011 = vset.pattern.permute.xlu0 4
  %1012 = vperm.xlu0 %1011, %v85
  %v1013 = vpop.permute.xlu0 %1012
  %1015 = vset.pattern.permute.xlu0 4
  %1016 = vperm.xlu0 %1015, %v86
  %v1017 = vpop.permute.xlu0 %1016
  %1019 = vset.pattern.permute.xlu0 4
  %1020 = vperm.xlu0 %1019, %v87
  %v1021 = vpop.permute.xlu0 %1020
  %1023 = vset.pattern.permute.xlu0 4
  %1024 = vperm.xlu0 %1023, %v88
  %v1025 = vpop.permute.xlu0 %1024
  %1027 = vset.pattern.permute.xlu0 4
  %1028 = vperm.xlu0 %1027, %v89
  %v1029 = vpop.permute.xlu0 %1028
  %1031 = vset.pattern.permute.xlu0 4
  %1032 = vperm.xlu0 %1031, %v90
  %v1033 = vpop.permute.xlu0 %1032
  %1035 = vset.pattern.permute.xlu0 4
  %1036 = vperm.xlu0 %1035, %v91
  %v1037 = vpop.permute.xlu0 %1036
  %1039 = vset.pattern.permute.xlu0 4
  %1040 = vperm.xlu0 %1039, %v92
  %v1041 = vpop.permute.xlu0 %1040
  %1043 = vset.pattern.permute.xlu0 4
  %1044 = vperm.xlu0 %1043, %v93
  %v1045 = vpop.permute.xlu0 %1044
  %1047 = vset.pattern.permute.xlu0 4
  %1048 = vperm.xlu0 %1047, %v94
  %v1049 = vpop.permute.xlu0 %1048
  %v1051 = vlaneseq
  %v1052 = vshrl.u32 %v1051, 7
  %v1053 = vsub.s32 0, %v1052
  %v1054 = vrot.slane %v922, %v1053
  %v1055 = vmul.f32 %v925, %v1054
  %v1056 = vmul.f32 %v929, %v1054
  %v1057 = vmul.f32 %v933, %v1054
  %v1058 = vmul.f32 %v937, %v1054
  %v1059 = vmul.f32 %v941, %v1054
  %v1060 = vmul.f32 %v945, %v1054
  %v1061 = vmul.f32 %v949, %v1054
  %v1062 = vmul.f32 %v953, %v1054
  %v1063 = vmul.f32 %v957, %v1054
  %v1064 = vmul.f32 %v961, %v1054
  %v1065 = vmul.f32 %v965, %v1054
  %v1066 = vmul.f32 %v969, %v1054
  %v1067 = vmul.f32 %v973, %v1054
  %v1068 = vmul.f32 %v977, %v1054
  %v1069 = vmul.f32 %v981, %v1054
  %v1070 = vmul.f32 %v985, %v1054
  %v1071 = vmul.f32 %v989, %v1054
  %v1072 = vmul.f32 %v993, %v1054
  %v1073 = vmul.f32 %v997, %v1054
  %v1074 = vmul.f32 %v1001, %v1054
  %v1075 = vmul.f32 %v1005, %v1054
  %v1076 = vmul.f32 %v1009, %v1054
  %v1077 = vmul.f32 %v1013, %v1054
  %v1078 = vmul.f32 %v1017, %v1054
  %v1079 = vmul.f32 %v1021, %v1054
  %v1080 = vmul.f32 %v1025, %v1054
  %v1081 = vmul.f32 %v1029, %v1054
  %v1082 = vmul.f32 %v1033, %v1054
  %v1083 = vmul.f32 %v1037, %v1054
  %v1084 = vmul.f32 %v1041, %v1054
  %v1085 = vmul.f32 %v1045, %v1054
  %v1086 = vmul.f32 %v1049, %v1054
  %v1087 = vadd.f32 %v890, %v1055
  %v1088 = vadd.f32 %v891, %v1056
  %v1089 = vadd.f32 %v892, %v1057
  %v1090 = vadd.f32 %v893, %v1058
  %v1091 = vadd.f32 %v894, %v1059
  %v1092 = vadd.f32 %v895, %v1060
  %v1093 = vadd.f32 %v896, %v1061
  %v1094 = vadd.f32 %v897, %v1062
  %v1095 = vadd.f32 %v898, %v1063
  %v1096 = vadd.f32 %v899, %v1064
  %v1097 = vadd.f32 %v900, %v1065
  %v1098 = vadd.f32 %v901, %v1066
  %v1099 = vadd.f32 %v902, %v1067
  %v1100 = vadd.f32 %v903, %v1068
  %v1101 = vadd.f32 %v904, %v1069
  %v1102 = vadd.f32 %v905, %v1070
  %v1103 = vadd.f32 %v906, %v1071
  %v1104 = vadd.f32 %v907, %v1072
  %v1105 = vadd.f32 %v908, %v1073
  %v1106 = vadd.f32 %v909, %v1074
  %v1107 = vadd.f32 %v910, %v1075
  %v1108 = vadd.f32 %v911, %v1076
  %v1109 = vadd.f32 %v912, %v1077
  %v1110 = vadd.f32 %v913, %v1078
  %v1111 = vadd.f32 %v914, %v1079
  %v1112 = vadd.f32 %v915, %v1080
  %v1113 = vadd.f32 %v916, %v1081
  %v1114 = vadd.f32 %v917, %v1082
  %v1115 = vadd.f32 %v918, %v1083
  %v1116 = vadd.f32 %v919, %v1084
  %v1117 = vadd.f32 %v920, %v1085
  %v1118 = vadd.f32 %v921, %v1086
  %v1119 = vld [vmem:[%s2 + $0x5] sm:$0x1]
  %1120 = vset.pattern.permute.xlu0 5
  %1121 = vperm.xlu0 %1120, %v63
  %v1122 = vpop.permute.xlu0 %1121
  %1124 = vset.pattern.permute.xlu0 5
  %1125 = vperm.xlu0 %1124, %v64
  %v1126 = vpop.permute.xlu0 %1125
  %1128 = vset.pattern.permute.xlu0 5
  %1129 = vperm.xlu0 %1128, %v65
  %v1130 = vpop.permute.xlu0 %1129
  %1132 = vset.pattern.permute.xlu0 5
  %1133 = vperm.xlu0 %1132, %v66
  %v1134 = vpop.permute.xlu0 %1133
  %1136 = vset.pattern.permute.xlu0 5
  %1137 = vperm.xlu0 %1136, %v67
  %v1138 = vpop.permute.xlu0 %1137
  %1140 = vset.pattern.permute.xlu0 5
  %1141 = vperm.xlu0 %1140, %v68
  %v1142 = vpop.permute.xlu0 %1141
  %1144 = vset.pattern.permute.xlu0 5
  %1145 = vperm.xlu0 %1144, %v69
  %v1146 = vpop.permute.xlu0 %1145
  %1148 = vset.pattern.permute.xlu0 5
  %1149 = vperm.xlu0 %1148, %v70
  %v1150 = vpop.permute.xlu0 %1149
  %1152 = vset.pattern.permute.xlu0 5
  %1153 = vperm.xlu0 %1152, %v71
  %v1154 = vpop.permute.xlu0 %1153
  %1156 = vset.pattern.permute.xlu0 5
  %1157 = vperm.xlu0 %1156, %v72
  %v1158 = vpop.permute.xlu0 %1157
  %1160 = vset.pattern.permute.xlu0 5
  %1161 = vperm.xlu0 %1160, %v73
  %v1162 = vpop.permute.xlu0 %1161
  %1164 = vset.pattern.permute.xlu0 5
  %1165 = vperm.xlu0 %1164, %v74
  %v1166 = vpop.permute.xlu0 %1165
  %1168 = vset.pattern.permute.xlu0 5
  %1169 = vperm.xlu0 %1168, %v75
  %v1170 = vpop.permute.xlu0 %1169
  %1172 = vset.pattern.permute.xlu0 5
  %1173 = vperm.xlu0 %1172, %v76
  %v1174 = vpop.permute.xlu0 %1173
  %1176 = vset.pattern.permute.xlu0 5
  %1177 = vperm.xlu0 %1176, %v77
  %v1178 = vpop.permute.xlu0 %1177
  %1180 = vset.pattern.permute.xlu0 5
  %1181 = vperm.xlu0 %1180, %v78
  %v1182 = vpop.permute.xlu0 %1181
  %1184 = vset.pattern.permute.xlu0 5
  %1185 = vperm.xlu0 %1184, %v79
  %v1186 = vpop.permute.xlu0 %1185
  %1188 = vset.pattern.permute.xlu0 5
  %1189 = vperm.xlu0 %1188, %v80
  %v1190 = vpop.permute.xlu0 %1189
  %1192 = vset.pattern.permute.xlu0 5
  %1193 = vperm.xlu0 %1192, %v81
  %v1194 = vpop.permute.xlu0 %1193
  %1196 = vset.pattern.permute.xlu0 5
  %1197 = vperm.xlu0 %1196, %v82
  %v1198 = vpop.permute.xlu0 %1197
  %1200 = vset.pattern.permute.xlu0 5
  %1201 = vperm.xlu0 %1200, %v83
  %v1202 = vpop.permute.xlu0 %1201
  %1204 = vset.pattern.permute.xlu0 5
  %1205 = vperm.xlu0 %1204, %v84
  %v1206 = vpop.permute.xlu0 %1205
  %1208 = vset.pattern.permute.xlu0 5
  %1209 = vperm.xlu0 %1208, %v85
  %v1210 = vpop.permute.xlu0 %1209
  %1212 = vset.pattern.permute.xlu0 5
  %1213 = vperm.xlu0 %1212, %v86
  %v1214 = vpop.permute.xlu0 %1213
  %1216 = vset.pattern.permute.xlu0 5
  %1217 = vperm.xlu0 %1216, %v87
  %v1218 = vpop.permute.xlu0 %1217
  %1220 = vset.pattern.permute.xlu0 5
  %1221 = vperm.xlu0 %1220, %v88
  %v1222 = vpop.permute.xlu0 %1221
  %1224 = vset.pattern.permute.xlu0 5
  %1225 = vperm.xlu0 %1224, %v89
  %v1226 = vpop.permute.xlu0 %1225
  %1228 = vset.pattern.permute.xlu0 5
  %1229 = vperm.xlu0 %1228, %v90
  %v1230 = vpop.permute.xlu0 %1229
  %1232 = vset.pattern.permute.xlu0 5
  %1233 = vperm.xlu0 %1232, %v91
  %v1234 = vpop.permute.xlu0 %1233
  %1236 = vset.pattern.permute.xlu0 5
  %1237 = vperm.xlu0 %1236, %v92
  %v1238 = vpop.permute.xlu0 %1237
  %1240 = vset.pattern.permute.xlu0 5
  %1241 = vperm.xlu0 %1240, %v93
  %v1242 = vpop.permute.xlu0 %1241
  %1244 = vset.pattern.permute.xlu0 5
  %1245 = vperm.xlu0 %1244, %v94
  %v1246 = vpop.permute.xlu0 %1245
  %v1248 = vlaneseq
  %v1249 = vshrl.u32 %v1248, 7
  %v1250 = vsub.s32 0, %v1249
  %v1251 = vrot.slane %v1119, %v1250
  %v1252 = vmul.f32 %v1122, %v1251
  %v1253 = vmul.f32 %v1126, %v1251
  %v1254 = vmul.f32 %v1130, %v1251
  %v1255 = vmul.f32 %v1134, %v1251
  %v1256 = vmul.f32 %v1138, %v1251
  %v1257 = vmul.f32 %v1142, %v1251
  %v1258 = vmul.f32 %v1146, %v1251
  %v1259 = vmul.f32 %v1150, %v1251
  %v1260 = vmul.f32 %v1154, %v1251
  %v1261 = vmul.f32 %v1158, %v1251
  %v1262 = vmul.f32 %v1162, %v1251
  %v1263 = vmul.f32 %v1166, %v1251
  %v1264 = vmul.f32 %v1170, %v1251
  %v1265 = vmul.f32 %v1174, %v1251
  %v1266 = vmul.f32 %v1178, %v1251
  %v1267 = vmul.f32 %v1182, %v1251
  %v1268 = vmul.f32 %v1186, %v1251
  %v1269 = vmul.f32 %v1190, %v1251
  %v1270 = vmul.f32 %v1194, %v1251
  %v1271 = vmul.f32 %v1198, %v1251
  %v1272 = vmul.f32 %v1202, %v1251
  %v1273 = vmul.f32 %v1206, %v1251
  %v1274 = vmul.f32 %v1210, %v1251
  %v1275 = vmul.f32 %v1214, %v1251
  %v1276 = vmul.f32 %v1218, %v1251
  %v1277 = vmul.f32 %v1222, %v1251
  %v1278 = vmul.f32 %v1226, %v1251
  %v1279 = vmul.f32 %v1230, %v1251
  %v1280 = vmul.f32 %v1234, %v1251
  %v1281 = vmul.f32 %v1238, %v1251
  %v1282 = vmul.f32 %v1242, %v1251
  %v1283 = vmul.f32 %v1246, %v1251
  %v1284 = vadd.f32 %v1087, %v1252
  %v1285 = vadd.f32 %v1088, %v1253
  %v1286 = vadd.f32 %v1089, %v1254
  %v1287 = vadd.f32 %v1090, %v1255
  %v1288 = vadd.f32 %v1091, %v1256
  %v1289 = vadd.f32 %v1092, %v1257
  %v1290 = vadd.f32 %v1093, %v1258
  %v1291 = vadd.f32 %v1094, %v1259
  %v1292 = vadd.f32 %v1095, %v1260
  %v1293 = vadd.f32 %v1096, %v1261
  %v1294 = vadd.f32 %v1097, %v1262
  %v1295 = vadd.f32 %v1098, %v1263
  %v1296 = vadd.f32 %v1099, %v1264
  %v1297 = vadd.f32 %v1100, %v1265
  %v1298 = vadd.f32 %v1101, %v1266
  %v1299 = vadd.f32 %v1102, %v1267
  %v1300 = vadd.f32 %v1103, %v1268
  %v1301 = vadd.f32 %v1104, %v1269
  %v1302 = vadd.f32 %v1105, %v1270
  %v1303 = vadd.f32 %v1106, %v1271
  %v1304 = vadd.f32 %v1107, %v1272
  %v1305 = vadd.f32 %v1108, %v1273
  %v1306 = vadd.f32 %v1109, %v1274
  %v1307 = vadd.f32 %v1110, %v1275
  %v1308 = vadd.f32 %v1111, %v1276
  %v1309 = vadd.f32 %v1112, %v1277
  %v1310 = vadd.f32 %v1113, %v1278
  %v1311 = vadd.f32 %v1114, %v1279
  %v1312 = vadd.f32 %v1115, %v1280
  %v1313 = vadd.f32 %v1116, %v1281
  %v1314 = vadd.f32 %v1117, %v1282
  %v1315 = vadd.f32 %v1118, %v1283
  %v1316 = vld [vmem:[%s4] sm:$0x1]
  %v1318 = vlaneseq
  %v1319 = vshrl.u32 %v1318, 7
  %v1320 = vsub.s32 0, %v1319
  %v1321 = vrot.slane %v1316, %v1320
  %v1323 = vmul.f32 %v1284, %v1321
  %v1324 = vmul.f32 %v1285, %v1321
  %v1325 = vmul.f32 %v1286, %v1321
  %v1326 = vmul.f32 %v1287, %v1321
  %v1327 = vmul.f32 %v1288, %v1321
  %v1328 = vmul.f32 %v1289, %v1321
  %v1329 = vmul.f32 %v1290, %v1321
  %v1330 = vmul.f32 %v1291, %v1321
  %v1331 = vmul.f32 %v1292, %v1321
  %v1332 = vmul.f32 %v1293, %v1321
  %v1333 = vmul.f32 %v1294, %v1321
  %v1334 = vmul.f32 %v1295, %v1321
  %v1335 = vmul.f32 %v1296, %v1321
  %v1336 = vmul.f32 %v1297, %v1321
  %v1337 = vmul.f32 %v1298, %v1321
  %v1338 = vmul.f32 %v1299, %v1321
  %v1339 = vmul.f32 %v1300, %v1321
  %v1340 = vmul.f32 %v1301, %v1321
  %v1341 = vmul.f32 %v1302, %v1321
  %v1342 = vmul.f32 %v1303, %v1321
  %v1343 = vmul.f32 %v1304, %v1321
  %v1344 = vmul.f32 %v1305, %v1321
  %v1345 = vmul.f32 %v1306, %v1321
  %v1346 = vmul.f32 %v1307, %v1321
  %v1347 = vmul.f32 %v1308, %v1321
  %v1348 = vmul.f32 %v1309, %v1321
  %v1349 = vmul.f32 %v1310, %v1321
  %v1350 = vmul.f32 %v1311, %v1321
  %v1351 = vmul.f32 %v1312, %v1321
  %v1352 = vmul.f32 %v1313, %v1321
  %v1353 = vmul.f32 %v1314, %v1321
  %v1354 = vmul.f32 %v1315, %v1321
  %v1355 = vld [vmem:[%s5] sm:$0x1]
  %v1357 = vlaneseq
  %v1358 = vshrl.u32 %v1357, 7
  %v1359 = vsub.s32 0, %v1358
  %v1360 = vrot.slane %v1355, %v1359
  %v1362 = vadd.f32 %v1323, %v1360
  %v1363 = vadd.f32 %v1324, %v1360
  %v1364 = vadd.f32 %v1325, %v1360
  %v1365 = vadd.f32 %v1326, %v1360
  %v1366 = vadd.f32 %v1327, %v1360
  %v1367 = vadd.f32 %v1328, %v1360
  %v1368 = vadd.f32 %v1329, %v1360
  %v1369 = vadd.f32 %v1330, %v1360
  %v1370 = vadd.f32 %v1331, %v1360
  %v1371 = vadd.f32 %v1332, %v1360
  %v1372 = vadd.f32 %v1333, %v1360
  %v1373 = vadd.f32 %v1334, %v1360
  %v1374 = vadd.f32 %v1335, %v1360
  %v1375 = vadd.f32 %v1336, %v1360
  %v1376 = vadd.f32 %v1337, %v1360
  %v1377 = vadd.f32 %v1338, %v1360
  %v1378 = vadd.f32 %v1339, %v1360
  %v1379 = vadd.f32 %v1340, %v1360
  %v1380 = vadd.f32 %v1341, %v1360
  %v1381 = vadd.f32 %v1342, %v1360
  %v1382 = vadd.f32 %v1343, %v1360
  %v1383 = vadd.f32 %v1344, %v1360
  %v1384 = vadd.f32 %v1345, %v1360
  %v1385 = vadd.f32 %v1346, %v1360
  %v1386 = vadd.f32 %v1347, %v1360
  %v1387 = vadd.f32 %v1348, %v1360
  %v1388 = vadd.f32 %v1349, %v1360
  %v1389 = vadd.f32 %v1350, %v1360
  %v1390 = vadd.f32 %v1351, %v1360
  %v1391 = vadd.f32 %v1352, %v1360
  %v1392 = vadd.f32 %v1353, %v1360
  %v1393 = vadd.f32 %v1354, %v1360
  %v1394 = vmax.f32 %v1362, 0.0
  %v1395 = vmax.f32 %v1363, 0.0
  %v1396 = vmax.f32 %v1364, 0.0
  %v1397 = vmax.f32 %v1365, 0.0
  %v1398 = vmax.f32 %v1366, 0.0
  %v1399 = vmax.f32 %v1367, 0.0
  %v1400 = vmax.f32 %v1368, 0.0
  %v1401 = vmax.f32 %v1369, 0.0
  %v1402 = vmax.f32 %v1370, 0.0
  %v1403 = vmax.f32 %v1371, 0.0
  %v1404 = vmax.f32 %v1372, 0.0
  %v1405 = vmax.f32 %v1373, 0.0
  %v1406 = vmax.f32 %v1374, 0.0
  %v1407 = vmax.f32 %v1375, 0.0
  %v1408 = vmax.f32 %v1376, 0.0
  %v1409 = vmax.f32 %v1377, 0.0
  %v1410 = vmax.f32 %v1378, 0.0
  %v1411 = vmax.f32 %v1379, 0.0
  %v1412 = vmax.f32 %v1380, 0.0
  %v1413 = vmax.f32 %v1381, 0.0
  %v1414 = vmax.f32 %v1382, 0.0
  %v1415 = vmax.f32 %v1383, 0.0
  %v1416 = vmax.f32 %v1384, 0.0
  %v1417 = vmax.f32 %v1385, 0.0
  %v1418 = vmax.f32 %v1386, 0.0
  %v1419 = vmax.f32 %v1387, 0.0
  %v1420 = vmax.f32 %v1388, 0.0
  %v1421 = vmax.f32 %v1389, 0.0
  %v1422 = vmax.f32 %v1390, 0.0
  %v1423 = vmax.f32 %v1391, 0.0
  %v1424 = vmax.f32 %v1392, 0.0
  %v1425 = vmax.f32 %v1393, 0.0
  %v1426 = vpack.c.bf16 %v1395, %v1394
  %v1427 = vpack.c.bf16 %v1397, %v1396
  %v1428 = vpack.c.bf16 %v1399, %v1398
  %v1429 = vpack.c.bf16 %v1401, %v1400
  %v1430 = vpack.c.bf16 %v1403, %v1402
  %v1431 = vpack.c.bf16 %v1405, %v1404
  %v1432 = vpack.c.bf16 %v1407, %v1406
  %v1433 = vpack.c.bf16 %v1409, %v1408
  %v1434 = vpack.c.bf16 %v1411, %v1410
  %v1435 = vpack.c.bf16 %v1413, %v1412
  %v1436 = vpack.c.bf16 %v1415, %v1414
  %v1437 = vpack.c.bf16 %v1417, %v1416
  %v1438 = vpack.c.bf16 %v1419, %v1418
  %v1439 = vpack.c.bf16 %v1421, %v1420
  %v1440 = vpack.c.bf16 %v1423, %v1422
  %v1441 = vpack.c.bf16 %v1425, %v1424
  %v1442 = vld [vmem:[%s6] sm:$0xff]
  %v1443 = vld [vmem:[%s6 + $0x8] sm:$0xff]
  %v1444 = vld [vmem:[%s6 + $0x10] sm:$0xff]
  %v1445 = vld [vmem:[%s6 + $0x18] sm:$0xff]
  %v1446 = vld [vmem:[%s6 + $0x20] sm:$0xff]
  %v1447 = vld [vmem:[%s6 + $0x28] sm:$0xff]
  %v1448 = vld [vmem:[%s6 + $0x30] sm:$0xff]
  %v1449 = vld [vmem:[%s6 + $0x38] sm:$0xff]
  %v1450 = vld [vmem:[%s6 + $0x40] sm:$0xff]
  %v1451 = vld [vmem:[%s6 + $0x48] sm:$0xff]
  %v1452 = vld [vmem:[%s6 + $0x50] sm:$0xff]
  %v1453 = vld [vmem:[%s6 + $0x58] sm:$0xff]
  %v1454 = vld [vmem:[%s6 + $0x60] sm:$0xff]
  %v1455 = vld [vmem:[%s6 + $0x68] sm:$0xff]
  %v1456 = vld [vmem:[%s6 + $0x70] sm:$0xff]
  %v1457 = vld [vmem:[%s6 + $0x78] sm:$0xff]
  %v1458 = vld [vmem:[%s7] sm:$0x3]
  %v1460 = vlaneseq
  %v1461 = vshrl.u32 %v1460, 7
  %v1462 = vsub.s32 0, %v1461
  %v1463 = vrot.slane %v1458, %v1462
  %v1464 = vlaneseq
  %v1465 = vshrl.u32 %v1464, 7
  %v1466 = vsub.s32 1, %v1465
  %v1467 = vrot.slane %v1458, %v1466
  %v1486 = vunpack.c.l.b16 %v1442
  %v1487 = vunpack.c.h.b16 %v1442
  %v1488 = vunpack.c.l.b16 %v1443
  %v1489 = vunpack.c.h.b16 %v1443
  %v1490 = vunpack.c.l.b16 %v1444
  %v1491 = vunpack.c.h.b16 %v1444
  %v1492 = vunpack.c.l.b16 %v1445
  %v1493 = vunpack.c.h.b16 %v1445
  %v1494 = vunpack.c.l.b16 %v1446
  %v1495 = vunpack.c.h.b16 %v1446
  %v1496 = vunpack.c.l.b16 %v1447
  %v1497 = vunpack.c.h.b16 %v1447
  %v1498 = vunpack.c.l.b16 %v1448
  %v1499 = vunpack.c.h.b16 %v1448
  %v1500 = vunpack.c.l.b16 %v1449
  %v1501 = vunpack.c.h.b16 %v1449
  %v1502 = vunpack.c.l.b16 %v1450
  %v1503 = vunpack.c.h.b16 %v1450
  %v1504 = vunpack.c.l.b16 %v1451
  %v1505 = vunpack.c.h.b16 %v1451
  %v1506 = vunpack.c.l.b16 %v1452
  %v1507 = vunpack.c.h.b16 %v1452
  %v1508 = vunpack.c.l.b16 %v1453
  %v1509 = vunpack.c.h.b16 %v1453
  %v1510 = vunpack.c.l.b16 %v1454
  %v1511 = vunpack.c.h.b16 %v1454
  %v1512 = vunpack.c.l.b16 %v1455
  %v1513 = vunpack.c.h.b16 %v1455
  %v1514 = vunpack.c.l.b16 %v1456
  %v1515 = vunpack.c.h.b16 %v1456
  %v1516 = vunpack.c.l.b16 %v1457
  %v1517 = vunpack.c.h.b16 %v1457
  %v1518 = vpack.c.b16 %v1488, %v1486
  %v1519 = vpack.c.b16 %v1489, %v1487
  %v1520 = vpack.c.b16 %v1492, %v1490
  %v1521 = vpack.c.b16 %v1493, %v1491
  %v1522 = vpack.c.b16 %v1496, %v1494
  %v1523 = vpack.c.b16 %v1497, %v1495
  %v1524 = vpack.c.b16 %v1500, %v1498
  %v1525 = vpack.c.b16 %v1501, %v1499
  %v1526 = vpack.c.b16 %v1504, %v1502
  %v1527 = vpack.c.b16 %v1505, %v1503
  %v1528 = vpack.c.b16 %v1508, %v1506
  %v1529 = vpack.c.b16 %v1509, %v1507
  %v1530 = vpack.c.b16 %v1512, %v1510
  %v1531 = vpack.c.b16 %v1513, %v1511
  %v1532 = vpack.c.b16 %v1516, %v1514
  %v1533 = vpack.c.b16 %v1517, %v1515
  %1550 = vmatprep.subr.bf16.mxu0 %v1533
  %1551 = vmatpush1.bf16.msra.mxu0 %v1532
  %1552 = vmatprep.subr.bf16.mxu0 %v1531
  %1553 = vmatpush1.bf16.msra.mxu0 %v1530
  %1554 = vmatprep.subr.bf16.mxu0 %v1529
  %1555 = vmatpush1.bf16.msra.mxu0 %v1528
  %1556 = vmatprep.subr.bf16.mxu0 %v1527
  %1557 = vmatpush1.bf16.msra.mxu0 %v1526
  %1558 = vmatprep.subr.bf16.mxu0 %v1525
  %1559 = vmatpush1.bf16.msra.mxu0 %v1524
  %1560 = vmatprep.subr.bf16.mxu0 %v1523
  %1561 = vmatpush1.bf16.msra.mxu0 %v1522
  %1562 = vmatprep.subr.bf16.mxu0 %v1521
  %1563 = vmatpush1.bf16.msra.mxu0 %v1520
  %1564 = vmatprep.subr.bf16.mxu0 %v1519
  %1565 = vmatpush1.bf16.msra.mxu0 %v1518
  %1566 = vmatprep.subr.bf16.mxu0 0
  %1567 = vmatpush2.bf16.msra.mxu0 0
  %1568 = vmatprep.subr.bf16.mxu0 0
  %1569 = vmatpush2.bf16.msra.mxu0 0
  %1570 = vmatprep.subr.bf16.mxu0 0
  %1571 = vmatpush2.bf16.msra.mxu0 0
  %1572 = vmatprep.subr.bf16.mxu0 0
  %1573 = vmatpush2.bf16.msra.mxu0 0
  %1574 = vmatprep.subr.bf16.mxu0 0
  %1575 = vmatpush2.bf16.msra.mxu0 0
  %1576 = vmatprep.subr.bf16.mxu0 0
  %1577 = vmatpush2.bf16.msra.mxu0 0
  %1578 = vmatprep.subr.bf16.mxu0 0
  %1579 = vmatpush2.bf16.msra.mxu0 0
  %1580 = vmatprep.subr.bf16.mxu0 0
  %1581 = vmatpush2.bf16.msra.mxu0 0
  %1582 = vmatprep.mubr.bf16.mxu0 0
  %1583 = vmatmul.mubr.bf16.gmra.mxu0 %v1426
  %v1584 = vpop.f32.mrf.mxu0
  %v1585 = vadd.f32 %v1463, %v1584
  %v1586 = vpop.f32.mrf.mxu0
  %v1587 = vadd.f32 %v1467, %v1586
  %v1588 = vpop.f32.mrf.mxu0
  %v1589 = vadd.f32 %v1463, %v1588
  %v1590 = vpop.f32.mrf.mxu0
  %v1591 = vadd.f32 %v1467, %v1590
  %1592 = vmatprep.mubr.bf16.mxu0 0
  %1593 = vmatmul.mubr.bf16.gmra.mxu0 %v1427
  %v1594 = vpop.f32.mrf.mxu0
  %v1595 = vadd.f32 %v1463, %v1594
  %v1596 = vpop.f32.mrf.mxu0
  %v1597 = vadd.f32 %v1467, %v1596
  %v1598 = vpop.f32.mrf.mxu0
  %v1599 = vadd.f32 %v1463, %v1598
  %v1600 = vpop.f32.mrf.mxu0
  %v1601 = vadd.f32 %v1467, %v1600
  %1602 = vmatprep.mubr.bf16.mxu0 0
  %1603 = vmatmul.mubr.bf16.gmra.mxu0 %v1428
  %v1604 = vpop.f32.mrf.mxu0
  %v1605 = vadd.f32 %v1463, %v1604
  %v1606 = vpop.f32.mrf.mxu0
  %v1607 = vadd.f32 %v1467, %v1606
  %v1608 = vpop.f32.mrf.mxu0
  %v1609 = vadd.f32 %v1463, %v1608
  %v1610 = vpop.f32.mrf.mxu0
  %v1611 = vadd.f32 %v1467, %v1610
  %1612 = vmatprep.mubr.bf16.mxu0 0
  %1613 = vmatmul.mubr.bf16.gmra.mxu0 %v1429
  %v1614 = vpop.f32.mrf.mxu0
  %v1615 = vadd.f32 %v1463, %v1614
  %v1616 = vpop.f32.mrf.mxu0
  %v1617 = vadd.f32 %v1467, %v1616
  %v1618 = vpop.f32.mrf.mxu0
  %v1619 = vadd.f32 %v1463, %v1618
  %v1620 = vpop.f32.mrf.mxu0
  %v1621 = vadd.f32 %v1467, %v1620
  %1622 = vmatprep.mubr.bf16.mxu0 0
  %1623 = vmatmul.mubr.bf16.gmra.mxu0 %v1430
  %v1624 = vpop.f32.mrf.mxu0
  %v1625 = vadd.f32 %v1463, %v1624
  %v1626 = vpop.f32.mrf.mxu0
  %v1627 = vadd.f32 %v1467, %v1626
  %v1628 = vpop.f32.mrf.mxu0
  %v1629 = vadd.f32 %v1463, %v1628
  %v1630 = vpop.f32.mrf.mxu0
  %v1631 = vadd.f32 %v1467, %v1630
  %1632 = vmatprep.mubr.bf16.mxu0 0
  %1633 = vmatmul.mubr.bf16.gmra.mxu0 %v1431
  %v1634 = vpop.f32.mrf.mxu0
  %v1635 = vadd.f32 %v1463, %v1634
  %v1636 = vpop.f32.mrf.mxu0
  %v1637 = vadd.f32 %v1467, %v1636
  %v1638 = vpop.f32.mrf.mxu0
  %v1639 = vadd.f32 %v1463, %v1638
  %v1640 = vpop.f32.mrf.mxu0
  %v1641 = vadd.f32 %v1467, %v1640
  %1642 = vmatprep.mubr.bf16.mxu0 0
  %1643 = vmatmul.mubr.bf16.gmra.mxu0 %v1432
  %v1644 = vpop.f32.mrf.mxu0
  %v1645 = vadd.f32 %v1463, %v1644
  %v1646 = vpop.f32.mrf.mxu0
  %v1647 = vadd.f32 %v1467, %v1646
  %v1648 = vpop.f32.mrf.mxu0
  %v1649 = vadd.f32 %v1463, %v1648
  %v1650 = vpop.f32.mrf.mxu0
  %v1651 = vadd.f32 %v1467, %v1650
  %1652 = vmatprep.mubr.bf16.mxu0 0
  %1653 = vmatmul.mubr.bf16.gmra.mxu0 %v1433
  %v1654 = vpop.f32.mrf.mxu0
  %v1655 = vadd.f32 %v1463, %v1654
  %v1656 = vpop.f32.mrf.mxu0
  %v1657 = vadd.f32 %v1467, %v1656
  %v1658 = vpop.f32.mrf.mxu0
  %v1659 = vadd.f32 %v1463, %v1658
  %v1660 = vpop.f32.mrf.mxu0
  %v1661 = vadd.f32 %v1467, %v1660
  %1662 = vmatprep.mubr.bf16.mxu0 0
  %1663 = vmatmul.mubr.bf16.gmra.mxu0 %v1434
  %v1664 = vpop.f32.mrf.mxu0
  %v1665 = vadd.f32 %v1463, %v1664
  %v1666 = vpop.f32.mrf.mxu0
  %v1667 = vadd.f32 %v1467, %v1666
  %v1668 = vpop.f32.mrf.mxu0
  %v1669 = vadd.f32 %v1463, %v1668
  %v1670 = vpop.f32.mrf.mxu0
  %v1671 = vadd.f32 %v1467, %v1670
  %1672 = vmatprep.mubr.bf16.mxu0 0
  %1673 = vmatmul.mubr.bf16.gmra.mxu0 %v1435
  %v1674 = vpop.f32.mrf.mxu0
  %v1675 = vadd.f32 %v1463, %v1674
  %v1676 = vpop.f32.mrf.mxu0
  %v1677 = vadd.f32 %v1467, %v1676
  %v1678 = vpop.f32.mrf.mxu0
  %v1679 = vadd.f32 %v1463, %v1678
  %v1680 = vpop.f32.mrf.mxu0
  %v1681 = vadd.f32 %v1467, %v1680
  %1682 = vmatprep.mubr.bf16.mxu0 0
  %1683 = vmatmul.mubr.bf16.gmra.mxu0 %v1436
  %v1684 = vpop.f32.mrf.mxu0
  %v1685 = vadd.f32 %v1463, %v1684
  %v1686 = vpop.f32.mrf.mxu0
  %v1687 = vadd.f32 %v1467, %v1686
  %v1688 = vpop.f32.mrf.mxu0
  %v1689 = vadd.f32 %v1463, %v1688
  %v1690 = vpop.f32.mrf.mxu0
  %v1691 = vadd.f32 %v1467, %v1690
  %1692 = vmatprep.mubr.bf16.mxu0 0
  %1693 = vmatmul.mubr.bf16.gmra.mxu0 %v1437
  %v1694 = vpop.f32.mrf.mxu0
  %v1695 = vadd.f32 %v1463, %v1694
  %v1696 = vpop.f32.mrf.mxu0
  %v1697 = vadd.f32 %v1467, %v1696
  %v1698 = vpop.f32.mrf.mxu0
  %v1699 = vadd.f32 %v1463, %v1698
  %v1700 = vpop.f32.mrf.mxu0
  %v1701 = vadd.f32 %v1467, %v1700
  %1702 = vmatprep.mubr.bf16.mxu0 0
  %1703 = vmatmul.mubr.bf16.gmra.mxu0 %v1438
  %v1704 = vpop.f32.mrf.mxu0
  %v1705 = vadd.f32 %v1463, %v1704
  %v1706 = vpop.f32.mrf.mxu0
  %v1707 = vadd.f32 %v1467, %v1706
  %v1708 = vpop.f32.mrf.mxu0
  %v1709 = vadd.f32 %v1463, %v1708
  %v1710 = vpop.f32.mrf.mxu0
  %v1711 = vadd.f32 %v1467, %v1710
  %1712 = vmatprep.mubr.bf16.mxu0 0
  %1713 = vmatmul.mubr.bf16.gmra.mxu0 %v1439
  %v1714 = vpop.f32.mrf.mxu0
  %v1715 = vadd.f32 %v1463, %v1714
  %v1716 = vpop.f32.mrf.mxu0
  %v1717 = vadd.f32 %v1467, %v1716
  %v1718 = vpop.f32.mrf.mxu0
  %v1719 = vadd.f32 %v1463, %v1718
  %v1720 = vpop.f32.mrf.mxu0
  %v1721 = vadd.f32 %v1467, %v1720
  %1722 = vmatprep.mubr.bf16.mxu0 0
  %1723 = vmatmul.mubr.bf16.gmra.mxu0 %v1440
  %v1724 = vpop.f32.mrf.mxu0
  %v1725 = vadd.f32 %v1463, %v1724
  %v1726 = vpop.f32.mrf.mxu0
  %v1727 = vadd.f32 %v1467, %v1726
  %v1728 = vpop.f32.mrf.mxu0
  %v1729 = vadd.f32 %v1463, %v1728
  %v1730 = vpop.f32.mrf.mxu0
  %v1731 = vadd.f32 %v1467, %v1730
  %1732 = vmatprep.mubr.bf16.mxu0 0
  %1733 = vmatmul.mubr.bf16.gmra.mxu0 %v1441
  %v1734 = vpop.f32.mrf.mxu0
  %v1735 = vadd.f32 %v1463, %v1734
  %v1736 = vpop.f32.mrf.mxu0
  %v1737 = vadd.f32 %v1467, %v1736
  %v1738 = vpop.f32.mrf.mxu0
  %v1739 = vadd.f32 %v1463, %v1738
  %v1740 = vpop.f32.mrf.mxu0
  %v1741 = vadd.f32 %v1467, %v1740
  %1742 = vdwg.mxu0
  %v1743 = vrot.slane %v1585, 4
  %v1744 = vmax.f32 %v1585, %v1743
  %v1745 = vrot.slane %v1744, 2
  %v1746 = vmax.f32 %v1744, %v1745
  %v1747 = vrot.slane %v1746, 1
  %v1748 = vmax.f32 %v1746, %v1747
  %v1749 = vrot.slane %v1587, 4
  %v1750 = vmax.f32 %v1587, %v1749
  %v1751 = vrot.slane %v1750, 2
  %v1752 = vmax.f32 %v1750, %v1751
  %v1753 = vrot.slane %v1752, 1
  %v1754 = vmax.f32 %v1752, %v1753
  %v1755 = vrot.slane %v1589, 4
  %v1756 = vmax.f32 %v1589, %v1755
  %v1757 = vrot.slane %v1756, 2
  %v1758 = vmax.f32 %v1756, %v1757
  %v1759 = vrot.slane %v1758, 1
  %v1760 = vmax.f32 %v1758, %v1759
  %v1761 = vrot.slane %v1591, 4
  %v1762 = vmax.f32 %v1591, %v1761
  %v1763 = vrot.slane %v1762, 2
  %v1764 = vmax.f32 %v1762, %v1763
  %v1765 = vrot.slane %v1764, 1
  %v1766 = vmax.f32 %v1764, %v1765
  %v1767 = vrot.slane %v1595, 4
  %v1768 = vmax.f32 %v1595, %v1767
  %v1769 = vrot.slane %v1768, 2
  %v1770 = vmax.f32 %v1768, %v1769
  %v1771 = vrot.slane %v1770, 1
  %v1772 = vmax.f32 %v1770, %v1771
  %v1773 = vrot.slane %v1597, 4
  %v1774 = vmax.f32 %v1597, %v1773
  %v1775 = vrot.slane %v1774, 2
  %v1776 = vmax.f32 %v1774, %v1775
  %v1777 = vrot.slane %v1776, 1
  %v1778 = vmax.f32 %v1776, %v1777
  %v1779 = vrot.slane %v1599, 4
  %v1780 = vmax.f32 %v1599, %v1779
  %v1781 = vrot.slane %v1780, 2
  %v1782 = vmax.f32 %v1780, %v1781
  %v1783 = vrot.slane %v1782, 1
  %v1784 = vmax.f32 %v1782, %v1783
  %v1785 = vrot.slane %v1601, 4
  %v1786 = vmax.f32 %v1601, %v1785
  %v1787 = vrot.slane %v1786, 2
  %v1788 = vmax.f32 %v1786, %v1787
  %v1789 = vrot.slane %v1788, 1
  %v1790 = vmax.f32 %v1788, %v1789
  %v1791 = vrot.slane %v1605, 4
  %v1792 = vmax.f32 %v1605, %v1791
  %v1793 = vrot.slane %v1792, 2
  %v1794 = vmax.f32 %v1792, %v1793
  %v1795 = vrot.slane %v1794, 1
  %v1796 = vmax.f32 %v1794, %v1795
  %v1797 = vrot.slane %v1607, 4
  %v1798 = vmax.f32 %v1607, %v1797
  %v1799 = vrot.slane %v1798, 2
  %v1800 = vmax.f32 %v1798, %v1799
  %v1801 = vrot.slane %v1800, 1
  %v1802 = vmax.f32 %v1800, %v1801
  %v1803 = vrot.slane %v1609, 4
  %v1804 = vmax.f32 %v1609, %v1803
  %v1805 = vrot.slane %v1804, 2
  %v1806 = vmax.f32 %v1804, %v1805
  %v1807 = vrot.slane %v1806, 1
  %v1808 = vmax.f32 %v1806, %v1807
  %v1809 = vrot.slane %v1611, 4
  %v1810 = vmax.f32 %v1611, %v1809
  %v1811 = vrot.slane %v1810, 2
  %v1812 = vmax.f32 %v1810, %v1811
  %v1813 = vrot.slane %v1812, 1
  %v1814 = vmax.f32 %v1812, %v1813
  %v1815 = vrot.slane %v1615, 4
  %v1816 = vmax.f32 %v1615, %v1815
  %v1817 = vrot.slane %v1816, 2
  %v1818 = vmax.f32 %v1816, %v1817
  %v1819 = vrot.slane %v1818, 1
  %v1820 = vmax.f32 %v1818, %v1819
  %v1821 = vrot.slane %v1617, 4
  %v1822 = vmax.f32 %v1617, %v1821
  %v1823 = vrot.slane %v1822, 2
  %v1824 = vmax.f32 %v1822, %v1823
  %v1825 = vrot.slane %v1824, 1
  %v1826 = vmax.f32 %v1824, %v1825
  %v1827 = vrot.slane %v1619, 4
  %v1828 = vmax.f32 %v1619, %v1827
  %v1829 = vrot.slane %v1828, 2
  %v1830 = vmax.f32 %v1828, %v1829
  %v1831 = vrot.slane %v1830, 1
  %v1832 = vmax.f32 %v1830, %v1831
  %v1833 = vrot.slane %v1621, 4
  %v1834 = vmax.f32 %v1621, %v1833
  %v1835 = vrot.slane %v1834, 2
  %v1836 = vmax.f32 %v1834, %v1835
  %v1837 = vrot.slane %v1836, 1
  %v1838 = vmax.f32 %v1836, %v1837
  %v1839 = vrot.slane %v1625, 4
  %v1840 = vmax.f32 %v1625, %v1839
  %v1841 = vrot.slane %v1840, 2
  %v1842 = vmax.f32 %v1840, %v1841
  %v1843 = vrot.slane %v1842, 1
  %v1844 = vmax.f32 %v1842, %v1843
  %v1845 = vrot.slane %v1627, 4
  %v1846 = vmax.f32 %v1627, %v1845
  %v1847 = vrot.slane %v1846, 2
  %v1848 = vmax.f32 %v1846, %v1847
  %v1849 = vrot.slane %v1848, 1
  %v1850 = vmax.f32 %v1848, %v1849
  %v1851 = vrot.slane %v1629, 4
  %v1852 = vmax.f32 %v1629, %v1851
  %v1853 = vrot.slane %v1852, 2
  %v1854 = vmax.f32 %v1852, %v1853
  %v1855 = vrot.slane %v1854, 1
  %v1856 = vmax.f32 %v1854, %v1855
  %v1857 = vrot.slane %v1631, 4
  %v1858 = vmax.f32 %v1631, %v1857
  %v1859 = vrot.slane %v1858, 2
  %v1860 = vmax.f32 %v1858, %v1859
  %v1861 = vrot.slane %v1860, 1
  %v1862 = vmax.f32 %v1860, %v1861
  %v1863 = vrot.slane %v1635, 4
  %v1864 = vmax.f32 %v1635, %v1863
  %v1865 = vrot.slane %v1864, 2
  %v1866 = vmax.f32 %v1864, %v1865
  %v1867 = vrot.slane %v1866, 1
  %v1868 = vmax.f32 %v1866, %v1867
  %v1869 = vrot.slane %v1637, 4
  %v1870 = vmax.f32 %v1637, %v1869
  %v1871 = vrot.slane %v1870, 2
  %v1872 = vmax.f32 %v1870, %v1871
  %v1873 = vrot.slane %v1872, 1
  %v1874 = vmax.f32 %v1872, %v1873
  %v1875 = vrot.slane %v1639, 4
  %v1876 = vmax.f32 %v1639, %v1875
  %v1877 = vrot.slane %v1876, 2
  %v1878 = vmax.f32 %v1876, %v1877
  %v1879 = vrot.slane %v1878, 1
  %v1880 = vmax.f32 %v1878, %v1879
  %v1881 = vrot.slane %v1641, 4
  %v1882 = vmax.f32 %v1641, %v1881
  %v1883 = vrot.slane %v1882, 2
  %v1884 = vmax.f32 %v1882, %v1883
  %v1885 = vrot.slane %v1884, 1
  %v1886 = vmax.f32 %v1884, %v1885
  %v1887 = vrot.slane %v1645, 4
  %v1888 = vmax.f32 %v1645, %v1887
  %v1889 = vrot.slane %v1888, 2
  %v1890 = vmax.f32 %v1888, %v1889
  %v1891 = vrot.slane %v1890, 1
  %v1892 = vmax.f32 %v1890, %v1891
  %v1893 = vrot.slane %v1647, 4
  %v1894 = vmax.f32 %v1647, %v1893
  %v1895 = vrot.slane %v1894, 2
  %v1896 = vmax.f32 %v1894, %v1895
  %v1897 = vrot.slane %v1896, 1
  %v1898 = vmax.f32 %v1896, %v1897
  %v1899 = vrot.slane %v1649, 4
  %v1900 = vmax.f32 %v1649, %v1899
  %v1901 = vrot.slane %v1900, 2
  %v1902 = vmax.f32 %v1900, %v1901
  %v1903 = vrot.slane %v1902, 1
  %v1904 = vmax.f32 %v1902, %v1903
  %v1905 = vrot.slane %v1651, 4
  %v1906 = vmax.f32 %v1651, %v1905
  %v1907 = vrot.slane %v1906, 2
  %v1908 = vmax.f32 %v1906, %v1907
  %v1909 = vrot.slane %v1908, 1
  %v1910 = vmax.f32 %v1908, %v1909
  %v1911 = vrot.slane %v1655, 4
  %v1912 = vmax.f32 %v1655, %v1911
  %v1913 = vrot.slane %v1912, 2
  %v1914 = vmax.f32 %v1912, %v1913
  %v1915 = vrot.slane %v1914, 1
  %v1916 = vmax.f32 %v1914, %v1915
  %v1917 = vrot.slane %v1657, 4
  %v1918 = vmax.f32 %v1657, %v1917
  %v1919 = vrot.slane %v1918, 2
  %v1920 = vmax.f32 %v1918, %v1919
  %v1921 = vrot.slane %v1920, 1
  %v1922 = vmax.f32 %v1920, %v1921
  %v1923 = vrot.slane %v1659, 4
  %v1924 = vmax.f32 %v1659, %v1923
  %v1925 = vrot.slane %v1924, 2
  %v1926 = vmax.f32 %v1924, %v1925
  %v1927 = vrot.slane %v1926, 1
  %v1928 = vmax.f32 %v1926, %v1927
  %v1929 = vrot.slane %v1661, 4
  %v1930 = vmax.f32 %v1661, %v1929
  %v1931 = vrot.slane %v1930, 2
  %v1932 = vmax.f32 %v1930, %v1931
  %v1933 = vrot.slane %v1932, 1
  %v1934 = vmax.f32 %v1932, %v1933
  %v1935 = vrot.slane %v1665, 4
  %v1936 = vmax.f32 %v1665, %v1935
  %v1937 = vrot.slane %v1936, 2
  %v1938 = vmax.f32 %v1936, %v1937
  %v1939 = vrot.slane %v1938, 1
  %v1940 = vmax.f32 %v1938, %v1939
  %v1941 = vrot.slane %v1667, 4
  %v1942 = vmax.f32 %v1667, %v1941
  %v1943 = vrot.slane %v1942, 2
  %v1944 = vmax.f32 %v1942, %v1943
  %v1945 = vrot.slane %v1944, 1
  %v1946 = vmax.f32 %v1944, %v1945
  %v1947 = vrot.slane %v1669, 4
  %v1948 = vmax.f32 %v1669, %v1947
  %v1949 = vrot.slane %v1948, 2
  %v1950 = vmax.f32 %v1948, %v1949
  %v1951 = vrot.slane %v1950, 1
  %v1952 = vmax.f32 %v1950, %v1951
  %v1953 = vrot.slane %v1671, 4
  %v1954 = vmax.f32 %v1671, %v1953
  %v1955 = vrot.slane %v1954, 2
  %v1956 = vmax.f32 %v1954, %v1955
  %v1957 = vrot.slane %v1956, 1
  %v1958 = vmax.f32 %v1956, %v1957
  %v1959 = vrot.slane %v1675, 4
  %v1960 = vmax.f32 %v1675, %v1959
  %v1961 = vrot.slane %v1960, 2
  %v1962 = vmax.f32 %v1960, %v1961
  %v1963 = vrot.slane %v1962, 1
  %v1964 = vmax.f32 %v1962, %v1963
  %v1965 = vrot.slane %v1677, 4
  %v1966 = vmax.f32 %v1677, %v1965
  %v1967 = vrot.slane %v1966, 2
  %v1968 = vmax.f32 %v1966, %v1967
  %v1969 = vrot.slane %v1968, 1
  %v1970 = vmax.f32 %v1968, %v1969
  %v1971 = vrot.slane %v1679, 4
  %v1972 = vmax.f32 %v1679, %v1971
  %v1973 = vrot.slane %v1972, 2
  %v1974 = vmax.f32 %v1972, %v1973
  %v1975 = vrot.slane %v1974, 1
  %v1976 = vmax.f32 %v1974, %v1975
  %v1977 = vrot.slane %v1681, 4
  %v1978 = vmax.f32 %v1681, %v1977
  %v1979 = vrot.slane %v1978, 2
  %v1980 = vmax.f32 %v1978, %v1979
  %v1981 = vrot.slane %v1980, 1
  %v1982 = vmax.f32 %v1980, %v1981
  %v1983 = vrot.slane %v1685, 4
  %v1984 = vmax.f32 %v1685, %v1983
  %v1985 = vrot.slane %v1984, 2
  %v1986 = vmax.f32 %v1984, %v1985
  %v1987 = vrot.slane %v1986, 1
  %v1988 = vmax.f32 %v1986, %v1987
  %v1989 = vrot.slane %v1687, 4
  %v1990 = vmax.f32 %v1687, %v1989
  %v1991 = vrot.slane %v1990, 2
  %v1992 = vmax.f32 %v1990, %v1991
  %v1993 = vrot.slane %v1992, 1
  %v1994 = vmax.f32 %v1992, %v1993
  %v1995 = vrot.slane %v1689, 4
  %v1996 = vmax.f32 %v1689, %v1995
  %v1997 = vrot.slane %v1996, 2
  %v1998 = vmax.f32 %v1996, %v1997
  %v1999 = vrot.slane %v1998, 1
  %v2000 = vmax.f32 %v1998, %v1999
  %v2001 = vrot.slane %v1691, 4
  %v2002 = vmax.f32 %v1691, %v2001
  %v2003 = vrot.slane %v2002, 2
  %v2004 = vmax.f32 %v2002, %v2003
  %v2005 = vrot.slane %v2004, 1
  %v2006 = vmax.f32 %v2004, %v2005
  %v2007 = vrot.slane %v1695, 4
  %v2008 = vmax.f32 %v1695, %v2007
  %v2009 = vrot.slane %v2008, 2
  %v2010 = vmax.f32 %v2008, %v2009
  %v2011 = vrot.slane %v2010, 1
  %v2012 = vmax.f32 %v2010, %v2011
  %v2013 = vrot.slane %v1697, 4
  %v2014 = vmax.f32 %v1697, %v2013
  %v2015 = vrot.slane %v2014, 2
  %v2016 = vmax.f32 %v2014, %v2015
  %v2017 = vrot.slane %v2016, 1
  %v2018 = vmax.f32 %v2016, %v2017
  %v2019 = vrot.slane %v1699, 4
  %v2020 = vmax.f32 %v1699, %v2019
  %v2021 = vrot.slane %v2020, 2
  %v2022 = vmax.f32 %v2020, %v2021
  %v2023 = vrot.slane %v2022, 1
  %v2024 = vmax.f32 %v2022, %v2023
  %v2025 = vrot.slane %v1701, 4
  %v2026 = vmax.f32 %v1701, %v2025
  %v2027 = vrot.slane %v2026, 2
  %v2028 = vmax.f32 %v2026, %v2027
  %v2029 = vrot.slane %v2028, 1
  %v2030 = vmax.f32 %v2028, %v2029
  %v2031 = vrot.slane %v1705, 4
  %v2032 = vmax.f32 %v1705, %v2031
  %v2033 = vrot.slane %v2032, 2
  %v2034 = vmax.f32 %v2032, %v2033
  %v2035 = vrot.slane %v2034, 1
  %v2036 = vmax.f32 %v2034, %v2035
  %v2037 = vrot.slane %v1707, 4
  %v2038 = vmax.f32 %v1707, %v2037
  %v2039 = vrot.slane %v2038, 2
  %v2040 = vmax.f32 %v2038, %v2039
  %v2041 = vrot.slane %v2040, 1
  %v2042 = vmax.f32 %v2040, %v2041
  %v2043 = vrot.slane %v1709, 4
  %v2044 = vmax.f32 %v1709, %v2043
  %v2045 = vrot.slane %v2044, 2
  %v2046 = vmax.f32 %v2044, %v2045
  %v2047 = vrot.slane %v2046, 1
  %v2048 = vmax.f32 %v2046, %v2047
  %v2049 = vrot.slane %v1711, 4
  %v2050 = vmax.f32 %v1711, %v2049
  %v2051 = vrot.slane %v2050, 2
  %v2052 = vmax.f32 %v2050, %v2051
  %v2053 = vrot.slane %v2052, 1
  %v2054 = vmax.f32 %v2052, %v2053
  %v2055 = vrot.slane %v1715, 4
  %v2056 = vmax.f32 %v1715, %v2055
  %v2057 = vrot.slane %v2056, 2
  %v2058 = vmax.f32 %v2056, %v2057
  %v2059 = vrot.slane %v2058, 1
  %v2060 = vmax.f32 %v2058, %v2059
  %v2061 = vrot.slane %v1717, 4
  %v2062 = vmax.f32 %v1717, %v2061
  %v2063 = vrot.slane %v2062, 2
  %v2064 = vmax.f32 %v2062, %v2063
  %v2065 = vrot.slane %v2064, 1
  %v2066 = vmax.f32 %v2064, %v2065
  %v2067 = vrot.slane %v1719, 4
  %v2068 = vmax.f32 %v1719, %v2067
  %v2069 = vrot.slane %v2068, 2
  %v2070 = vmax.f32 %v2068, %v2069
  %v2071 = vrot.slane %v2070, 1
  %v2072 = vmax.f32 %v2070, %v2071
  %v2073 = vrot.slane %v1721, 4
  %v2074 = vmax.f32 %v1721, %v2073
  %v2075 = vrot.slane %v2074, 2
  %v2076 = vmax.f32 %v2074, %v2075
  %v2077 = vrot.slane %v2076, 1
  %v2078 = vmax.f32 %v2076, %v2077
  %v2079 = vrot.slane %v1725, 4
  %v2080 = vmax.f32 %v1725, %v2079
  %v2081 = vrot.slane %v2080, 2
  %v2082 = vmax.f32 %v2080, %v2081
  %v2083 = vrot.slane %v2082, 1
  %v2084 = vmax.f32 %v2082, %v2083
  %v2085 = vrot.slane %v1727, 4
  %v2086 = vmax.f32 %v1727, %v2085
  %v2087 = vrot.slane %v2086, 2
  %v2088 = vmax.f32 %v2086, %v2087
  %v2089 = vrot.slane %v2088, 1
  %v2090 = vmax.f32 %v2088, %v2089
  %v2091 = vrot.slane %v1729, 4
  %v2092 = vmax.f32 %v1729, %v2091
  %v2093 = vrot.slane %v2092, 2
  %v2094 = vmax.f32 %v2092, %v2093
  %v2095 = vrot.slane %v2094, 1
  %v2096 = vmax.f32 %v2094, %v2095
  %v2097 = vrot.slane %v1731, 4
  %v2098 = vmax.f32 %v1731, %v2097
  %v2099 = vrot.slane %v2098, 2
  %v2100 = vmax.f32 %v2098, %v2099
  %v2101 = vrot.slane %v2100, 1
  %v2102 = vmax.f32 %v2100, %v2101
  %v2103 = vrot.slane %v1735, 4
  %v2104 = vmax.f32 %v1735, %v2103
  %v2105 = vrot.slane %v2104, 2
  %v2106 = vmax.f32 %v2104, %v2105
  %v2107 = vrot.slane %v2106, 1
  %v2108 = vmax.f32 %v2106, %v2107
  %v2109 = vrot.slane %v1737, 4
  %v2110 = vmax.f32 %v1737, %v2109
  %v2111 = vrot.slane %v2110, 2
  %v2112 = vmax.f32 %v2110, %v2111
  %v2113 = vrot.slane %v2112, 1
  %v2114 = vmax.f32 %v2112, %v2113
  %v2115 = vrot.slane %v1739, 4
  %v2116 = vmax.f32 %v1739, %v2115
  %v2117 = vrot.slane %v2116, 2
  %v2118 = vmax.f32 %v2116, %v2117
  %v2119 = vrot.slane %v2118, 1
  %v2120 = vmax.f32 %v2118, %v2119
  %v2121 = vrot.slane %v1741, 4
  %v2122 = vmax.f32 %v1741, %v2121
  %v2123 = vrot.slane %v2122, 2
  %v2124 = vmax.f32 %v2122, %v2123
  %v2125 = vrot.slane %v2124, 1
  %v2126 = vmax.f32 %v2124, %v2125
  %v2127 = vpack.c.bf16 %v1589, %v1585
  %v2128 = vpack.c.bf16 %v1591, %v1587
  %v2129 = vpack.c.bf16 %v1599, %v1595
  %v2130 = vpack.c.bf16 %v1601, %v1597
  %v2131 = vpack.c.bf16 %v1609, %v1605
  %v2132 = vpack.c.bf16 %v1611, %v1607
  %v2133 = vpack.c.bf16 %v1619, %v1615
  %v2134 = vpack.c.bf16 %v1621, %v1617
  %v2135 = vpack.c.bf16 %v1629, %v1625
  %v2136 = vpack.c.bf16 %v1631, %v1627
  %v2137 = vpack.c.bf16 %v1639, %v1635
  %v2138 = vpack.c.bf16 %v1641, %v1637
  %v2139 = vpack.c.bf16 %v1649, %v1645
  %v2140 = vpack.c.bf16 %v1651, %v1647
  %v2141 = vpack.c.bf16 %v1659, %v1655
  %v2142 = vpack.c.bf16 %v1661, %v1657
  %v2143 = vpack.c.bf16 %v1669, %v1665
  %v2144 = vpack.c.bf16 %v1671, %v1667
  %v2145 = vpack.c.bf16 %v1679, %v1675
  %v2146 = vpack.c.bf16 %v1681, %v1677
  %v2147 = vpack.c.bf16 %v1689, %v1685
  %v2148 = vpack.c.bf16 %v1691, %v1687
  %v2149 = vpack.c.bf16 %v1699, %v1695
  %v2150 = vpack.c.bf16 %v1701, %v1697
  %v2151 = vpack.c.bf16 %v1709, %v1705
  %v2152 = vpack.c.bf16 %v1711, %v1707
  %v2153 = vpack.c.bf16 %v1719, %v1715
  %v2154 = vpack.c.bf16 %v1721, %v1717
  %v2155 = vpack.c.bf16 %v1729, %v1725
  %v2156 = vpack.c.bf16 %v1731, %v1727
  %v2157 = vpack.c.bf16 %v1739, %v1735
  %v2158 = vpack.c.bf16 %v1741, %v1737
  %v2159 = vld [vmem:[%s9] sm:$0xff]
  %v2160 = vld [vmem:[%s9 + $0x8] sm:$0xff]
  %v2161 = vld [vmem:[%s9 + $0x10] sm:$0xff]
  %v2162 = vld [vmem:[%s9 + $0x18] sm:$0xff]
  %v2163 = vld [vmem:[%s9 + $0x20] sm:$0xff]
  %v2164 = vld [vmem:[%s9 + $0x28] sm:$0xff]
  %v2165 = vld [vmem:[%s9 + $0x30] sm:$0xff]
  %v2166 = vld [vmem:[%s9 + $0x38] sm:$0xff]
  %v2167 = vld [vmem:[%s9 + $0x40] sm:$0xff]
  %v2168 = vld [vmem:[%s9 + $0x48] sm:$0xff]
  %v2169 = vld [vmem:[%s9 + $0x50] sm:$0xff]
  %v2170 = vld [vmem:[%s9 + $0x58] sm:$0xff]
  %v2171 = vld [vmem:[%s9 + $0x60] sm:$0xff]
  %v2172 = vld [vmem:[%s9 + $0x68] sm:$0xff]
  %v2173 = vld [vmem:[%s9 + $0x70] sm:$0xff]
  %v2174 = vld [vmem:[%s9 + $0x78] sm:$0xff]
  %v2175 = vld [vmem:[%s9 + $0x80] sm:$0xff]
  %v2176 = vld [vmem:[%s9 + $0x88] sm:$0xff]
  %v2177 = vld [vmem:[%s9 + $0x90] sm:$0xff]
  %v2178 = vld [vmem:[%s9 + $0x98] sm:$0xff]
  %v2179 = vld [vmem:[%s9 + $0xa0] sm:$0xff]
  %v2180 = vld [vmem:[%s9 + $0xa8] sm:$0xff]
  %v2181 = vld [vmem:[%s9 + $0xb0] sm:$0xff]
  %v2182 = vld [vmem:[%s9 + $0xb8] sm:$0xff]
  %v2183 = vld [vmem:[%s9 + $0xc0] sm:$0xff]
  %v2184 = vld [vmem:[%s9 + $0xc8] sm:$0xff]
  %v2185 = vld [vmem:[%s9 + $0xd0] sm:$0xff]
  %v2186 = vld [vmem:[%s9 + $0xd8] sm:$0xff]
  %v2187 = vld [vmem:[%s9 + $0xe0] sm:$0xff]
  %v2188 = vld [vmem:[%s9 + $0xe8] sm:$0xff]
  %v2189 = vld [vmem:[%s9 + $0xf0] sm:$0xff]
  %v2190 = vld [vmem:[%s9 + $0xf8] sm:$0xff]
  %v2191 = vld [vmem:[%s9 + $0x100] sm:$0xff]
  %v2192 = vld [vmem:[%s9 + $0x108] sm:$0xff]
  %v2193 = vld [vmem:[%s9 + $0x110] sm:$0xff]
  %v2194 = vld [vmem:[%s9 + $0x118] sm:$0xff]
  %v2195 = vld [vmem:[%s9 + $0x120] sm:$0xff]
  %v2196 = vld [vmem:[%s9 + $0x128] sm:$0xff]
  %v2197 = vld [vmem:[%s9 + $0x130] sm:$0xff]
  %v2198 = vld [vmem:[%s9 + $0x138] sm:$0xff]
  %v2199 = vld [vmem:[%s9 + $0x140] sm:$0xff]
  %v2200 = vld [vmem:[%s9 + $0x148] sm:$0xff]
  %v2201 = vld [vmem:[%s9 + $0x150] sm:$0xff]
  %v2202 = vld [vmem:[%s9 + $0x158] sm:$0xff]
  %v2203 = vld [vmem:[%s9 + $0x160] sm:$0xff]
  %v2204 = vld [vmem:[%s9 + $0x168] sm:$0xff]
  %v2205 = vld [vmem:[%s9 + $0x170] sm:$0xff]
  %v2206 = vld [vmem:[%s9 + $0x178] sm:$0xff]
  %v2207 = vld [vmem:[%s9 + $0x180] sm:$0xff]
  %v2208 = vld [vmem:[%s9 + $0x188] sm:$0xff]
  %v2209 = vld [vmem:[%s9 + $0x190] sm:$0xff]
  %v2210 = vld [vmem:[%s9 + $0x198] sm:$0xff]
  %v2211 = vld [vmem:[%s9 + $0x1a0] sm:$0xff]
  %v2212 = vld [vmem:[%s9 + $0x1a8] sm:$0xff]
  %v2213 = vld [vmem:[%s9 + $0x1b0] sm:$0xff]
  %v2214 = vld [vmem:[%s9 + $0x1b8] sm:$0xff]
  %v2215 = vld [vmem:[%s9 + $0x1c0] sm:$0xff]
  %v2216 = vld [vmem:[%s9 + $0x1c8] sm:$0xff]
  %v2217 = vld [vmem:[%s9 + $0x1d0] sm:$0xff]
  %v2218 = vld [vmem:[%s9 + $0x1d8] sm:$0xff]
  %v2219 = vld [vmem:[%s9 + $0x1e0] sm:$0xff]
  %v2220 = vld [vmem:[%s9 + $0x1e8] sm:$0xff]
  %v2221 = vld [vmem:[%s9 + $0x1f0] sm:$0xff]
  %v2222 = vld [vmem:[%s9 + $0x1f8] sm:$0xff]
  %v2287 = vunpack.c.l.b16 %v2159
  %v2288 = vunpack.c.h.b16 %v2159
  %v2289 = vunpack.c.l.b16 %v2160
  %v2290 = vunpack.c.h.b16 %v2160
  %v2291 = vunpack.c.l.b16 %v2161
  %v2292 = vunpack.c.h.b16 %v2161
  %v2293 = vunpack.c.l.b16 %v2162
  %v2294 = vunpack.c.h.b16 %v2162
  %v2295 = vunpack.c.l.b16 %v2163
  %v2296 = vunpack.c.h.b16 %v2163
  %v2297 = vunpack.c.l.b16 %v2164
  %v2298 = vunpack.c.h.b16 %v2164
  %v2299 = vunpack.c.l.b16 %v2165
  %v2300 = vunpack.c.h.b16 %v2165
  %v2301 = vunpack.c.l.b16 %v2166
  %v2302 = vunpack.c.h.b16 %v2166
  %v2303 = vunpack.c.l.b16 %v2167
  %v2304 = vunpack.c.h.b16 %v2167
  %v2305 = vunpack.c.l.b16 %v2168
  %v2306 = vunpack.c.h.b16 %v2168
  %v2307 = vunpack.c.l.b16 %v2169
  %v2308 = vunpack.c.h.b16 %v2169
  %v2309 = vunpack.c.l.b16 %v2170
  %v2310 = vunpack.c.h.b16 %v2170
  %v2311 = vunpack.c.l.b16 %v2171
  %v2312 = vunpack.c.h.b16 %v2171
  %v2313 = vunpack.c.l.b16 %v2172
  %v2314 = vunpack.c.h.b16 %v2172
  %v2315 = vunpack.c.l.b16 %v2173
  %v2316 = vunpack.c.h.b16 %v2173
  %v2317 = vunpack.c.l.b16 %v2174
  %v2318 = vunpack.c.h.b16 %v2174
  %v2319 = vunpack.c.l.b16 %v2175
  %v2320 = vunpack.c.h.b16 %v2175
  %v2321 = vunpack.c.l.b16 %v2176
  %v2322 = vunpack.c.h.b16 %v2176
  %v2323 = vunpack.c.l.b16 %v2177
  %v2324 = vunpack.c.h.b16 %v2177
  %v2325 = vunpack.c.l.b16 %v2178
  %v2326 = vunpack.c.h.b16 %v2178
  %v2327 = vunpack.c.l.b16 %v2179
  %v2328 = vunpack.c.h.b16 %v2179
  %v2329 = vunpack.c.l.b16 %v2180
  %v2330 = vunpack.c.h.b16 %v2180
  %v2331 = vunpack.c.l.b16 %v2181
  %v2332 = vunpack.c.h.b16 %v2181
  %v2333 = vunpack.c.l.b16 %v2182
  %v2334 = vunpack.c.h.b16 %v2182
  %v2335 = vunpack.c.l.b16 %v2183
  %v2336 = vunpack.c.h.b16 %v2183
  %v2337 = vunpack.c.l.b16 %v2184
  %v2338 = vunpack.c.h.b16 %v2184
  %v2339 = vunpack.c.l.b16 %v2185
  %v2340 = vunpack.c.h.b16 %v2185
  %v2341 = vunpack.c.l.b16 %v2186
  %v2342 = vunpack.c.h.b16 %v2186
  %v2343 = vunpack.c.l.b16 %v2187
  %v2344 = vunpack.c.h.b16 %v2187
  %v2345 = vunpack.c.l.b16 %v2188
  %v2346 = vunpack.c.h.b16 %v2188
  %v2347 = vunpack.c.l.b16 %v2189
  %v2348 = vunpack.c.h.b16 %v2189
  %v2349 = vunpack.c.l.b16 %v2190
  %v2350 = vunpack.c.h.b16 %v2190
  %v2351 = vunpack.c.l.b16 %v2191
  %v2352 = vunpack.c.h.b16 %v2191
  %v2353 = vunpack.c.l.b16 %v2192
  %v2354 = vunpack.c.h.b16 %v2192
  %v2355 = vunpack.c.l.b16 %v2193
  %v2356 = vunpack.c.h.b16 %v2193
  %v2357 = vunpack.c.l.b16 %v2194
  %v2358 = vunpack.c.h.b16 %v2194
  %v2359 = vunpack.c.l.b16 %v2195
  %v2360 = vunpack.c.h.b16 %v2195
  %v2361 = vunpack.c.l.b16 %v2196
  %v2362 = vunpack.c.h.b16 %v2196
  %v2363 = vunpack.c.l.b16 %v2197
  %v2364 = vunpack.c.h.b16 %v2197
  %v2365 = vunpack.c.l.b16 %v2198
  %v2366 = vunpack.c.h.b16 %v2198
  %v2367 = vunpack.c.l.b16 %v2199
  %v2368 = vunpack.c.h.b16 %v2199
  %v2369 = vunpack.c.l.b16 %v2200
  %v2370 = vunpack.c.h.b16 %v2200
  %v2371 = vunpack.c.l.b16 %v2201
  %v2372 = vunpack.c.h.b16 %v2201
  %v2373 = vunpack.c.l.b16 %v2202
  %v2374 = vunpack.c.h.b16 %v2202
  %v2375 = vunpack.c.l.b16 %v2203
  %v2376 = vunpack.c.h.b16 %v2203
  %v2377 = vunpack.c.l.b16 %v2204
  %v2378 = vunpack.c.h.b16 %v2204
  %v2379 = vunpack.c.l.b16 %v2205
  %v2380 = vunpack.c.h.b16 %v2205
  %v2381 = vunpack.c.l.b16 %v2206
  %v2382 = vunpack.c.h.b16 %v2206
  %v2383 = vunpack.c.l.b16 %v2207
  %v2384 = vunpack.c.h.b16 %v2207
  %v2385 = vunpack.c.l.b16 %v2208
  %v2386 = vunpack.c.h.b16 %v2208
  %v2387 = vunpack.c.l.b16 %v2209
  %v2388 = vunpack.c.h.b16 %v2209
  %v2389 = vunpack.c.l.b16 %v2210
  %v2390 = vunpack.c.h.b16 %v2210
  %v2391 = vunpack.c.l.b16 %v2211
  %v2392 = vunpack.c.h.b16 %v2211
  %v2393 = vunpack.c.l.b16 %v2212
  %v2394 = vunpack.c.h.b16 %v2212
  %v2395 = vunpack.c.l.b16 %v2213
  %v2396 = vunpack.c.h.b16 %v2213
  %v2397 = vunpack.c.l.b16 %v2214
  %v2398 = vunpack.c.h.b16 %v2214
  %v2399 = vunpack.c.l.b16 %v2215
  %v2400 = vunpack.c.h.b16 %v2215
  %v2401 = vunpack.c.l.b16 %v2216
  %v2402 = vunpack.c.h.b16 %v2216
  %v2403 = vunpack.c.l.b16 %v2217
  %v2404 = vunpack.c.h.b16 %v2217
  %v2405 = vunpack.c.l.b16 %v2218
  %v2406 = vunpack.c.h.b16 %v2218
  %v2407 = vunpack.c.l.b16 %v2219
  %v2408 = vunpack.c.h.b16 %v2219
  %v2409 = vunpack.c.l.b16 %v2220
  %v2410 = vunpack.c.h.b16 %v2220
  %v2411 = vunpack.c.l.b16 %v2221
  %v2412 = vunpack.c.h.b16 %v2221
  %v2413 = vunpack.c.l.b16 %v2222
  %v2414 = vunpack.c.h.b16 %v2222
  %v2415 = vpack.c.b16 %v2291, %v2287
  %v2416 = vpack.c.b16 %v2292, %v2288
  %v2417 = vpack.c.b16 %v2293, %v2289
  %v2418 = vpack.c.b16 %v2294, %v2290
  %v2419 = vpack.c.b16 %v2299, %v2295
  %v2420 = vpack.c.b16 %v2300, %v2296
  %v2421 = vpack.c.b16 %v2301, %v2297
  %v2422 = vpack.c.b16 %v2302, %v2298
  %v2423 = vpack.c.b16 %v2307, %v2303
  %v2424 = vpack.c.b16 %v2308, %v2304
  %v2425 = vpack.c.b16 %v2309, %v2305
  %v2426 = vpack.c.b16 %v2310, %v2306
  %v2427 = vpack.c.b16 %v2315, %v2311
  %v2428 = vpack.c.b16 %v2316, %v2312
  %v2429 = vpack.c.b16 %v2317, %v2313
  %v2430 = vpack.c.b16 %v2318, %v2314
  %v2431 = vpack.c.b16 %v2323, %v2319
  %v2432 = vpack.c.b16 %v2324, %v2320
  %v2433 = vpack.c.b16 %v2325, %v2321
  %v2434 = vpack.c.b16 %v2326, %v2322
  %v2435 = vpack.c.b16 %v2331, %v2327
  %v2436 = vpack.c.b16 %v2332, %v2328
  %v2437 = vpack.c.b16 %v2333, %v2329
  %v2438 = vpack.c.b16 %v2334, %v2330
  %v2439 = vpack.c.b16 %v2339, %v2335
  %v2440 = vpack.c.b16 %v2340, %v2336
  %v2441 = vpack.c.b16 %v2341, %v2337
  %v2442 = vpack.c.b16 %v2342, %v2338
  %v2443 = vpack.c.b16 %v2347, %v2343
  %v2444 = vpack.c.b16 %v2348, %v2344
  %v2445 = vpack.c.b16 %v2349, %v2345
  %v2446 = vpack.c.b16 %v2350, %v2346
  %v2447 = vpack.c.b16 %v2355, %v2351
  %v2448 = vpack.c.b16 %v2356, %v2352
  %v2449 = vpack.c.b16 %v2357, %v2353
  %v2450 = vpack.c.b16 %v2358, %v2354
  %v2451 = vpack.c.b16 %v2363, %v2359
  %v2452 = vpack.c.b16 %v2364, %v2360
  %v2453 = vpack.c.b16 %v2365, %v2361
  %v2454 = vpack.c.b16 %v2366, %v2362
  %v2455 = vpack.c.b16 %v2371, %v2367
  %v2456 = vpack.c.b16 %v2372, %v2368
  %v2457 = vpack.c.b16 %v2373, %v2369
  %v2458 = vpack.c.b16 %v2374, %v2370
  %v2459 = vpack.c.b16 %v2379, %v2375
  %v2460 = vpack.c.b16 %v2380, %v2376
  %v2461 = vpack.c.b16 %v2381, %v2377
  %v2462 = vpack.c.b16 %v2382, %v2378
  %v2463 = vpack.c.b16 %v2387, %v2383
  %v2464 = vpack.c.b16 %v2388, %v2384
  %v2465 = vpack.c.b16 %v2389, %v2385
  %v2466 = vpack.c.b16 %v2390, %v2386
  %v2467 = vpack.c.b16 %v2395, %v2391
  %v2468 = vpack.c.b16 %v2396, %v2392
  %v2469 = vpack.c.b16 %v2397, %v2393
  %v2470 = vpack.c.b16 %v2398, %v2394
  %v2471 = vpack.c.b16 %v2403, %v2399
  %v2472 = vpack.c.b16 %v2404, %v2400
  %v2473 = vpack.c.b16 %v2405, %v2401
  %v2474 = vpack.c.b16 %v2406, %v2402
  %v2475 = vpack.c.b16 %v2411, %v2407
  %v2476 = vpack.c.b16 %v2412, %v2408
  %v2477 = vpack.c.b16 %v2413, %v2409
  %v2478 = vpack.c.b16 %v2414, %v2410
  %2543 = vmatprep.subr.bf16.mxu0 %v2444
  %2544 = vmatpush1.bf16.msra.mxu0 %v2443
  %2545 = vmatprep.subr.bf16.mxu0 %v2440
  %2546 = vmatpush1.bf16.msra.mxu0 %v2439
  %2547 = vmatprep.subr.bf16.mxu0 %v2436
  %2548 = vmatpush1.bf16.msra.mxu0 %v2435
  %2549 = vmatprep.subr.bf16.mxu0 %v2432
  %2550 = vmatpush1.bf16.msra.mxu0 %v2431
  %2551 = vmatprep.subr.bf16.mxu0 %v2428
  %2552 = vmatpush1.bf16.msra.mxu0 %v2427
  %2553 = vmatprep.subr.bf16.mxu0 %v2424
  %2554 = vmatpush1.bf16.msra.mxu0 %v2423
  %2555 = vmatprep.subr.bf16.mxu0 %v2420
  %2556 = vmatpush1.bf16.msra.mxu0 %v2419
  %2557 = vmatprep.subr.bf16.mxu0 %v2416
  %2558 = vmatpush1.bf16.msra.mxu0 %v2415
  %2559 = vmatprep.subr.bf16.mxu0 %v2476
  %2560 = vmatpush2.bf16.msra.mxu0 %v2475
  %2561 = vmatprep.subr.bf16.mxu0 %v2472
  %2562 = vmatpush2.bf16.msra.mxu0 %v2471
  %2563 = vmatprep.subr.bf16.mxu0 %v2468
  %2564 = vmatpush2.bf16.msra.mxu0 %v2467
  %2565 = vmatprep.subr.bf16.mxu0 %v2464
  %2566 = vmatpush2.bf16.msra.mxu0 %v2463
  %2567 = vmatprep.subr.bf16.mxu0 %v2460
  %2568 = vmatpush2.bf16.msra.mxu0 %v2459
  %2569 = vmatprep.subr.bf16.mxu0 %v2456
  %2570 = vmatpush2.bf16.msra.mxu0 %v2455
  %2571 = vmatprep.subr.bf16.mxu0 %v2452
  %2572 = vmatpush2.bf16.msra.mxu0 %v2451
  %2573 = vmatprep.subr.bf16.mxu0 %v2448
  %2574 = vmatpush2.bf16.msra.mxu0 %v2447
  %2575 = vmatprep.mubr.bf16.mxu0 %v2128
  %2576 = vmatmul.mubr.bf16.gmra.mxu0 %v2127
  %v2577 = vpop.f32.mrf.mxu0
  %v2578 = vadd.f32 0.0, %v2577
  %v2579 = vpop.f32.mrf.mxu0
  %v2580 = vadd.f32 0.0, %v2579
  %v2581 = vpop.f32.mrf.mxu0
  %v2582 = vadd.f32 0.0, %v2581
  %v2583 = vpop.f32.mrf.mxu0
  %v2584 = vadd.f32 0.0, %v2583
  %2585 = vmatprep.mubr.bf16.mxu0 %v2130
  %2586 = vmatmul.mubr.bf16.gmra.mxu0 %v2129
  %v2587 = vpop.f32.mrf.mxu0
  %v2588 = vadd.f32 0.0, %v2587
  %v2589 = vpop.f32.mrf.mxu0
  %v2590 = vadd.f32 0.0, %v2589
  %v2591 = vpop.f32.mrf.mxu0
  %v2592 = vadd.f32 0.0, %v2591
  %v2593 = vpop.f32.mrf.mxu0
  %v2594 = vadd.f32 0.0, %v2593
  %2595 = vmatprep.mubr.bf16.mxu0 %v2132
  %2596 = vmatmul.mubr.bf16.gmra.mxu0 %v2131
  %v2597 = vpop.f32.mrf.mxu0
  %v2598 = vadd.f32 0.0, %v2597
  %v2599 = vpop.f32.mrf.mxu0
  %v2600 = vadd.f32 0.0, %v2599
  %v2601 = vpop.f32.mrf.mxu0
  %v2602 = vadd.f32 0.0, %v2601
  %v2603 = vpop.f32.mrf.mxu0
  %v2604 = vadd.f32 0.0, %v2603
  %2605 = vmatprep.mubr.bf16.mxu0 %v2134
  %2606 = vmatmul.mubr.bf16.gmra.mxu0 %v2133
  %v2607 = vpop.f32.mrf.mxu0
  %v2608 = vadd.f32 0.0, %v2607
  %v2609 = vpop.f32.mrf.mxu0
  %v2610 = vadd.f32 0.0, %v2609
  %v2611 = vpop.f32.mrf.mxu0
  %v2612 = vadd.f32 0.0, %v2611
  %v2613 = vpop.f32.mrf.mxu0
  %v2614 = vadd.f32 0.0, %v2613
  %2615 = vmatprep.mubr.bf16.mxu0 %v2136
  %2616 = vmatmul.mubr.bf16.gmra.mxu0 %v2135
  %v2617 = vpop.f32.mrf.mxu0
  %v2618 = vadd.f32 0.0, %v2617
  %v2619 = vpop.f32.mrf.mxu0
  %v2620 = vadd.f32 0.0, %v2619
  %v2621 = vpop.f32.mrf.mxu0
  %v2622 = vadd.f32 0.0, %v2621
  %v2623 = vpop.f32.mrf.mxu0
  %v2624 = vadd.f32 0.0, %v2623
  %2625 = vmatprep.mubr.bf16.mxu0 %v2138
  %2626 = vmatmul.mubr.bf16.gmra.mxu0 %v2137
  %v2627 = vpop.f32.mrf.mxu0
  %v2628 = vadd.f32 0.0, %v2627
  %v2629 = vpop.f32.mrf.mxu0
  %v2630 = vadd.f32 0.0, %v2629
  %v2631 = vpop.f32.mrf.mxu0
  %v2632 = vadd.f32 0.0, %v2631
  %v2633 = vpop.f32.mrf.mxu0
  %v2634 = vadd.f32 0.0, %v2633
  %2635 = vmatprep.mubr.bf16.mxu0 %v2140
  %2636 = vmatmul.mubr.bf16.gmra.mxu0 %v2139
  %v2637 = vpop.f32.mrf.mxu0
  %v2638 = vadd.f32 0.0, %v2637
  %v2639 = vpop.f32.mrf.mxu0
  %v2640 = vadd.f32 0.0, %v2639
  %v2641 = vpop.f32.mrf.mxu0
  %v2642 = vadd.f32 0.0, %v2641
  %v2643 = vpop.f32.mrf.mxu0
  %v2644 = vadd.f32 0.0, %v2643
  %2645 = vmatprep.mubr.bf16.mxu0 %v2142
  %2646 = vmatmul.mubr.bf16.gmra.mxu0 %v2141
  %v2647 = vpop.f32.mrf.mxu0
  %v2648 = vadd.f32 0.0, %v2647
  %v2649 = vpop.f32.mrf.mxu0
  %v2650 = vadd.f32 0.0, %v2649
  %v2651 = vpop.f32.mrf.mxu0
  %v2652 = vadd.f32 0.0, %v2651
  %v2653 = vpop.f32.mrf.mxu0
  %v2654 = vadd.f32 0.0, %v2653
  %2655 = vmatprep.mubr.bf16.mxu0 %v2144
  %2656 = vmatmul.mubr.bf16.gmra.mxu0 %v2143
  %v2657 = vpop.f32.mrf.mxu0
  %v2658 = vadd.f32 0.0, %v2657
  %v2659 = vpop.f32.mrf.mxu0
  %v2660 = vadd.f32 0.0, %v2659
  %v2661 = vpop.f32.mrf.mxu0
  %v2662 = vadd.f32 0.0, %v2661
  %v2663 = vpop.f32.mrf.mxu0
  %v2664 = vadd.f32 0.0, %v2663
  %2665 = vmatprep.mubr.bf16.mxu0 %v2146
  %2666 = vmatmul.mubr.bf16.gmra.mxu0 %v2145
  %v2667 = vpop.f32.mrf.mxu0
  %v2668 = vadd.f32 0.0, %v2667
  %v2669 = vpop.f32.mrf.mxu0
  %v2670 = vadd.f32 0.0, %v2669
  %v2671 = vpop.f32.mrf.mxu0
  %v2672 = vadd.f32 0.0, %v2671
  %v2673 = vpop.f32.mrf.mxu0
  %v2674 = vadd.f32 0.0, %v2673
  %2675 = vmatprep.mubr.bf16.mxu0 %v2148
  %2676 = vmatmul.mubr.bf16.gmra.mxu0 %v2147
  %v2677 = vpop.f32.mrf.mxu0
  %v2678 = vadd.f32 0.0, %v2677
  %v2679 = vpop.f32.mrf.mxu0
  %v2680 = vadd.f32 0.0, %v2679
  %v2681 = vpop.f32.mrf.mxu0
  %v2682 = vadd.f32 0.0, %v2681
  %v2683 = vpop.f32.mrf.mxu0
  %v2684 = vadd.f32 0.0, %v2683
  %2685 = vmatprep.mubr.bf16.mxu0 %v2150
  %2686 = vmatmul.mubr.bf16.gmra.mxu0 %v2149
  %v2687 = vpop.f32.mrf.mxu0
  %v2688 = vadd.f32 0.0, %v2687
  %v2689 = vpop.f32.mrf.mxu0
  %v2690 = vadd.f32 0.0, %v2689
  %v2691 = vpop.f32.mrf.mxu0
  %v2692 = vadd.f32 0.0, %v2691
  %v2693 = vpop.f32.mrf.mxu0
  %v2694 = vadd.f32 0.0, %v2693
  %2695 = vmatprep.mubr.bf16.mxu0 %v2152
  %2696 = vmatmul.mubr.bf16.gmra.mxu0 %v2151
  %v2697 = vpop.f32.mrf.mxu0
  %v2698 = vadd.f32 0.0, %v2697
  %v2699 = vpop.f32.mrf.mxu0
  %v2700 = vadd.f32 0.0, %v2699
  %v2701 = vpop.f32.mrf.mxu0
  %v2702 = vadd.f32 0.0, %v2701
  %v2703 = vpop.f32.mrf.mxu0
  %v2704 = vadd.f32 0.0, %v2703
  %2705 = vmatprep.mubr.bf16.mxu0 %v2154
  %2706 = vmatmul.mubr.bf16.gmra.mxu0 %v2153
  %v2707 = vpop.f32.mrf.mxu0
  %v2708 = vadd.f32 0.0, %v2707
  %v2709 = vpop.f32.mrf.mxu0
  %v2710 = vadd.f32 0.0, %v2709
  %v2711 = vpop.f32.mrf.mxu0
  %v2712 = vadd.f32 0.0, %v2711
  %v2713 = vpop.f32.mrf.mxu0
  %v2714 = vadd.f32 0.0, %v2713
  %2715 = vmatprep.mubr.bf16.mxu0 %v2156
  %2716 = vmatmul.mubr.bf16.gmra.mxu0 %v2155
  %v2717 = vpop.f32.mrf.mxu0
  %v2718 = vadd.f32 0.0, %v2717
  %v2719 = vpop.f32.mrf.mxu0
  %v2720 = vadd.f32 0.0, %v2719
  %v2721 = vpop.f32.mrf.mxu0
  %v2722 = vadd.f32 0.0, %v2721
  %v2723 = vpop.f32.mrf.mxu0
  %v2724 = vadd.f32 0.0, %v2723
  %2725 = vmatprep.mubr.bf16.mxu0 %v2158
  %2726 = vmatmul.mubr.bf16.gmra.mxu0 %v2157
  %v2727 = vpop.f32.mrf.mxu0
  %v2728 = vadd.f32 0.0, %v2727
  %v2729 = vpop.f32.mrf.mxu0
  %v2730 = vadd.f32 0.0, %v2729
  %v2731 = vpop.f32.mrf.mxu0
  %v2732 = vadd.f32 0.0, %v2731
  %v2733 = vpop.f32.mrf.mxu0
  %v2734 = vadd.f32 0.0, %v2733
  %2735 = vdwg.mxu0
  %2736 = vmatprep.subr.bf16.mxu0 %v2446
  %2737 = vmatpush1.bf16.msra.mxu0 %v2445
  %2738 = vmatprep.subr.bf16.mxu0 %v2442
  %2739 = vmatpush1.bf16.msra.mxu0 %v2441
  %2740 = vmatprep.subr.bf16.mxu0 %v2438
  %2741 = vmatpush1.bf16.msra.mxu0 %v2437
  %2742 = vmatprep.subr.bf16.mxu0 %v2434
  %2743 = vmatpush1.bf16.msra.mxu0 %v2433
  %2744 = vmatprep.subr.bf16.mxu0 %v2430
  %2745 = vmatpush1.bf16.msra.mxu0 %v2429
  %2746 = vmatprep.subr.bf16.mxu0 %v2426
  %2747 = vmatpush1.bf16.msra.mxu0 %v2425
  %2748 = vmatprep.subr.bf16.mxu0 %v2422
  %2749 = vmatpush1.bf16.msra.mxu0 %v2421
  %2750 = vmatprep.subr.bf16.mxu0 %v2418
  %2751 = vmatpush1.bf16.msra.mxu0 %v2417
  %2752 = vmatprep.subr.bf16.mxu0 %v2478
  %2753 = vmatpush2.bf16.msra.mxu0 %v2477
  %2754 = vmatprep.subr.bf16.mxu0 %v2474
  %2755 = vmatpush2.bf16.msra.mxu0 %v2473
  %2756 = vmatprep.subr.bf16.mxu0 %v2470
  %2757 = vmatpush2.bf16.msra.mxu0 %v2469
  %2758 = vmatprep.subr.bf16.mxu0 %v2466
  %2759 = vmatpush2.bf16.msra.mxu0 %v2465
  %2760 = vmatprep.subr.bf16.mxu0 %v2462
  %2761 = vmatpush2.bf16.msra.mxu0 %v2461
  %2762 = vmatprep.subr.bf16.mxu0 %v2458
  %2763 = vmatpush2.bf16.msra.mxu0 %v2457
  %2764 = vmatprep.subr.bf16.mxu0 %v2454
  %2765 = vmatpush2.bf16.msra.mxu0 %v2453
  %2766 = vmatprep.subr.bf16.mxu0 %v2450
  %2767 = vmatpush2.bf16.msra.mxu0 %v2449
  %2768 = vmatprep.mubr.bf16.mxu0 %v2128
  %2769 = vmatmul.mubr.bf16.gmra.mxu0 %v2127
  %v2770 = vpop.f32.mrf.mxu0
  %v2771 = vadd.f32 0.0, %v2770
  %v2772 = vpop.f32.mrf.mxu0
  %v2773 = vadd.f32 0.0, %v2772
  %v2774 = vpop.f32.mrf.mxu0
  %v2775 = vadd.f32 0.0, %v2774
  %v2776 = vpop.f32.mrf.mxu0
  %v2777 = vadd.f32 0.0, %v2776
  %2778 = vmatprep.mubr.bf16.mxu0 %v2130
  %2779 = vmatmul.mubr.bf16.gmra.mxu0 %v2129
  %v2780 = vpop.f32.mrf.mxu0
  %v2781 = vadd.f32 0.0, %v2780
  %v2782 = vpop.f32.mrf.mxu0
  %v2783 = vadd.f32 0.0, %v2782
  %v2784 = vpop.f32.mrf.mxu0
  %v2785 = vadd.f32 0.0, %v2784
  %v2786 = vpop.f32.mrf.mxu0
  %v2787 = vadd.f32 0.0, %v2786
  %2788 = vmatprep.mubr.bf16.mxu0 %v2132
  %2789 = vmatmul.mubr.bf16.gmra.mxu0 %v2131
  %v2790 = vpop.f32.mrf.mxu0
  %v2791 = vadd.f32 0.0, %v2790
  %v2792 = vpop.f32.mrf.mxu0
  %v2793 = vadd.f32 0.0, %v2792
  %v2794 = vpop.f32.mrf.mxu0
  %v2795 = vadd.f32 0.0, %v2794
  %v2796 = vpop.f32.mrf.mxu0
  %v2797 = vadd.f32 0.0, %v2796
  %2798 = vmatprep.mubr.bf16.mxu0 %v2134
  %2799 = vmatmul.mubr.bf16.gmra.mxu0 %v2133
  %v2800 = vpop.f32.mrf.mxu0
  %v2801 = vadd.f32 0.0, %v2800
  %v2802 = vpop.f32.mrf.mxu0
  %v2803 = vadd.f32 0.0, %v2802
  %v2804 = vpop.f32.mrf.mxu0
  %v2805 = vadd.f32 0.0, %v2804
  %v2806 = vpop.f32.mrf.mxu0
  %v2807 = vadd.f32 0.0, %v2806
  %2808 = vmatprep.mubr.bf16.mxu0 %v2136
  %2809 = vmatmul.mubr.bf16.gmra.mxu0 %v2135
  %v2810 = vpop.f32.mrf.mxu0
  %v2811 = vadd.f32 0.0, %v2810
  %v2812 = vpop.f32.mrf.mxu0
  %v2813 = vadd.f32 0.0, %v2812
  %v2814 = vpop.f32.mrf.mxu0
  %v2815 = vadd.f32 0.0, %v2814
  %v2816 = vpop.f32.mrf.mxu0
  %v2817 = vadd.f32 0.0, %v2816
  %2818 = vmatprep.mubr.bf16.mxu0 %v2138
  %2819 = vmatmul.mubr.bf16.gmra.mxu0 %v2137
  %v2820 = vpop.f32.mrf.mxu0
  %v2821 = vadd.f32 0.0, %v2820
  %v2822 = vpop.f32.mrf.mxu0
  %v2823 = vadd.f32 0.0, %v2822
  %v2824 = vpop.f32.mrf.mxu0
  %v2825 = vadd.f32 0.0, %v2824
  %v2826 = vpop.f32.mrf.mxu0
  %v2827 = vadd.f32 0.0, %v2826
  %2828 = vmatprep.mubr.bf16.mxu0 %v2140
  %2829 = vmatmul.mubr.bf16.gmra.mxu0 %v2139
  %v2830 = vpop.f32.mrf.mxu0
  %v2831 = vadd.f32 0.0, %v2830
  %v2832 = vpop.f32.mrf.mxu0
  %v2833 = vadd.f32 0.0, %v2832
  %v2834 = vpop.f32.mrf.mxu0
  %v2835 = vadd.f32 0.0, %v2834
  %v2836 = vpop.f32.mrf.mxu0
  %v2837 = vadd.f32 0.0, %v2836
  %2838 = vmatprep.mubr.bf16.mxu0 %v2142
  %2839 = vmatmul.mubr.bf16.gmra.mxu0 %v2141
  %v2840 = vpop.f32.mrf.mxu0
  %v2841 = vadd.f32 0.0, %v2840
  %v2842 = vpop.f32.mrf.mxu0
  %v2843 = vadd.f32 0.0, %v2842
  %v2844 = vpop.f32.mrf.mxu0
  %v2845 = vadd.f32 0.0, %v2844
  %v2846 = vpop.f32.mrf.mxu0
  %v2847 = vadd.f32 0.0, %v2846
  %2848 = vmatprep.mubr.bf16.mxu0 %v2144
  %2849 = vmatmul.mubr.bf16.gmra.mxu0 %v2143
  %v2850 = vpop.f32.mrf.mxu0
  %v2851 = vadd.f32 0.0, %v2850
  %v2852 = vpop.f32.mrf.mxu0
  %v2853 = vadd.f32 0.0, %v2852
  %v2854 = vpop.f32.mrf.mxu0
  %v2855 = vadd.f32 0.0, %v2854
  %v2856 = vpop.f32.mrf.mxu0
  %v2857 = vadd.f32 0.0, %v2856
  %2858 = vmatprep.mubr.bf16.mxu0 %v2146
  %2859 = vmatmul.mubr.bf16.gmra.mxu0 %v2145
  %v2860 = vpop.f32.mrf.mxu0
  %v2861 = vadd.f32 0.0, %v2860
  %v2862 = vpop.f32.mrf.mxu0
  %v2863 = vadd.f32 0.0, %v2862
  %v2864 = vpop.f32.mrf.mxu0
  %v2865 = vadd.f32 0.0, %v2864
  %v2866 = vpop.f32.mrf.mxu0
  %v2867 = vadd.f32 0.0, %v2866
  %2868 = vmatprep.mubr.bf16.mxu0 %v2148
  %2869 = vmatmul.mubr.bf16.gmra.mxu0 %v2147
  %v2870 = vpop.f32.mrf.mxu0
  %v2871 = vadd.f32 0.0, %v2870
  %v2872 = vpop.f32.mrf.mxu0
  %v2873 = vadd.f32 0.0, %v2872
  %v2874 = vpop.f32.mrf.mxu0
  %v2875 = vadd.f32 0.0, %v2874
  %v2876 = vpop.f32.mrf.mxu0
  %v2877 = vadd.f32 0.0, %v2876
  %2878 = vmatprep.mubr.bf16.mxu0 %v2150
  %2879 = vmatmul.mubr.bf16.gmra.mxu0 %v2149
  %v2880 = vpop.f32.mrf.mxu0
  %v2881 = vadd.f32 0.0, %v2880
  %v2882 = vpop.f32.mrf.mxu0
  %v2883 = vadd.f32 0.0, %v2882
  %v2884 = vpop.f32.mrf.mxu0
  %v2885 = vadd.f32 0.0, %v2884
  %v2886 = vpop.f32.mrf.mxu0
  %v2887 = vadd.f32 0.0, %v2886
  %2888 = vmatprep.mubr.bf16.mxu0 %v2152
  %2889 = vmatmul.mubr.bf16.gmra.mxu0 %v2151
  %v2890 = vpop.f32.mrf.mxu0
  %v2891 = vadd.f32 0.0, %v2890
  %v2892 = vpop.f32.mrf.mxu0
  %v2893 = vadd.f32 0.0, %v2892
  %v2894 = vpop.f32.mrf.mxu0
  %v2895 = vadd.f32 0.0, %v2894
  %v2896 = vpop.f32.mrf.mxu0
  %v2897 = vadd.f32 0.0, %v2896
  %2898 = vmatprep.mubr.bf16.mxu0 %v2154
  %2899 = vmatmul.mubr.bf16.gmra.mxu0 %v2153
  %v2900 = vpop.f32.mrf.mxu0
  %v2901 = vadd.f32 0.0, %v2900
  %v2902 = vpop.f32.mrf.mxu0
  %v2903 = vadd.f32 0.0, %v2902
  %v2904 = vpop.f32.mrf.mxu0
  %v2905 = vadd.f32 0.0, %v2904
  %v2906 = vpop.f32.mrf.mxu0
  %v2907 = vadd.f32 0.0, %v2906
  %2908 = vmatprep.mubr.bf16.mxu0 %v2156
  %2909 = vmatmul.mubr.bf16.gmra.mxu0 %v2155
  %v2910 = vpop.f32.mrf.mxu0
  %v2911 = vadd.f32 0.0, %v2910
  %v2912 = vpop.f32.mrf.mxu0
  %v2913 = vadd.f32 0.0, %v2912
  %v2914 = vpop.f32.mrf.mxu0
  %v2915 = vadd.f32 0.0, %v2914
  %v2916 = vpop.f32.mrf.mxu0
  %v2917 = vadd.f32 0.0, %v2916
  %2918 = vmatprep.mubr.bf16.mxu0 %v2158
  %2919 = vmatmul.mubr.bf16.gmra.mxu0 %v2157
  %v2920 = vpop.f32.mrf.mxu0
  %v2921 = vadd.f32 0.0, %v2920
  %v2922 = vpop.f32.mrf.mxu0
  %v2923 = vadd.f32 0.0, %v2922
  %v2924 = vpop.f32.mrf.mxu0
  %v2925 = vadd.f32 0.0, %v2924
  %v2926 = vpop.f32.mrf.mxu0
  %v2927 = vadd.f32 0.0, %v2926
  %2928 = vdwg.mxu0
  %v2929 = vpack.c.bf16 %v1748, %v1748
  %v2930 = vpack.c.bf16 %v1754, %v1754
  %v2931 = vpack.c.bf16 %v1760, %v1760
  %v2932 = vpack.c.bf16 %v1766, %v1766
  %v2933 = vpack.c.bf16 %v1772, %v1772
  %v2934 = vpack.c.bf16 %v1778, %v1778
  %v2935 = vpack.c.bf16 %v1784, %v1784
  %v2936 = vpack.c.bf16 %v1790, %v1790
  %v2937 = vpack.c.bf16 %v1796, %v1796
  %v2938 = vpack.c.bf16 %v1802, %v1802
  %v2939 = vpack.c.bf16 %v1808, %v1808
  %v2940 = vpack.c.bf16 %v1814, %v1814
  %v2941 = vpack.c.bf16 %v1820, %v1820
  %v2942 = vpack.c.bf16 %v1826, %v1826
  %v2943 = vpack.c.bf16 %v1832, %v1832
  %v2944 = vpack.c.bf16 %v1838, %v1838
  %v2945 = vpack.c.bf16 %v1844, %v1844
  %v2946 = vpack.c.bf16 %v1850, %v1850
  %v2947 = vpack.c.bf16 %v1856, %v1856
  %v2948 = vpack.c.bf16 %v1862, %v1862
  %v2949 = vpack.c.bf16 %v1868, %v1868
  %v2950 = vpack.c.bf16 %v1874, %v1874
  %v2951 = vpack.c.bf16 %v1880, %v1880
  %v2952 = vpack.c.bf16 %v1886, %v1886
  %v2953 = vpack.c.bf16 %v1892, %v1892
  %v2954 = vpack.c.bf16 %v1898, %v1898
  %v2955 = vpack.c.bf16 %v1904, %v1904
  %v2956 = vpack.c.bf16 %v1910, %v1910
  %v2957 = vpack.c.bf16 %v1916, %v1916
  %v2958 = vpack.c.bf16 %v1922, %v1922
  %v2959 = vpack.c.bf16 %v1928, %v1928
  %v2960 = vpack.c.bf16 %v1934, %v1934
  %v2961 = vpack.c.bf16 %v1940, %v1940
  %v2962 = vpack.c.bf16 %v1946, %v1946
  %v2963 = vpack.c.bf16 %v1952, %v1952
  %v2964 = vpack.c.bf16 %v1958, %v1958
  %v2965 = vpack.c.bf16 %v1964, %v1964
  %v2966 = vpack.c.bf16 %v1970, %v1970
  %v2967 = vpack.c.bf16 %v1976, %v1976
  %v2968 = vpack.c.bf16 %v1982, %v1982
  %v2969 = vpack.c.bf16 %v1988, %v1988
  %v2970 = vpack.c.bf16 %v1994, %v1994
  %v2971 = vpack.c.bf16 %v2000, %v2000
  %v2972 = vpack.c.bf16 %v2006, %v2006
  %v2973 = vpack.c.bf16 %v2012, %v2012
  %v2974 = vpack.c.bf16 %v2018, %v2018
  %v2975 = vpack.c.bf16 %v2024, %v2024
  %v2976 = vpack.c.bf16 %v2030, %v2030
  %v2977 = vpack.c.bf16 %v2036, %v2036
  %v2978 = vpack.c.bf16 %v2042, %v2042
  %v2979 = vpack.c.bf16 %v2048, %v2048
  %v2980 = vpack.c.bf16 %v2054, %v2054
  %v2981 = vpack.c.bf16 %v2060, %v2060
  %v2982 = vpack.c.bf16 %v2066, %v2066
  %v2983 = vpack.c.bf16 %v2072, %v2072
  %v2984 = vpack.c.bf16 %v2078, %v2078
  %v2985 = vpack.c.bf16 %v2084, %v2084
  %v2986 = vpack.c.bf16 %v2090, %v2090
  %v2987 = vpack.c.bf16 %v2096, %v2096
  %v2988 = vpack.c.bf16 %v2102, %v2102
  %v2989 = vpack.c.bf16 %v2108, %v2108
  %v2990 = vpack.c.bf16 %v2114, %v2114
  %v2991 = vpack.c.bf16 %v2120, %v2120
  %v2992 = vpack.c.bf16 %v2126, %v2126
  %v2993 = vld [vmem:[%s8] sm:$0xff]
  %v2994 = vld [vmem:[%s8 + $0x8] sm:$0xff]
  %v2995 = vld [vmem:[%s8 + $0x10] sm:$0xff]
  %v2996 = vld [vmem:[%s8 + $0x18] sm:$0xff]
  %v2997 = vld [vmem:[%s8 + $0x20] sm:$0xff]
  %v2998 = vld [vmem:[%s8 + $0x28] sm:$0xff]
  %v2999 = vld [vmem:[%s8 + $0x30] sm:$0xff]
  %v3000 = vld [vmem:[%s8 + $0x38] sm:$0xff]
  %v3001 = vld [vmem:[%s8 + $0x40] sm:$0xff]
  %v3002 = vld [vmem:[%s8 + $0x48] sm:$0xff]
  %v3003 = vld [vmem:[%s8 + $0x50] sm:$0xff]
  %v3004 = vld [vmem:[%s8 + $0x58] sm:$0xff]
  %v3005 = vld [vmem:[%s8 + $0x60] sm:$0xff]
  %v3006 = vld [vmem:[%s8 + $0x68] sm:$0xff]
  %v3007 = vld [vmem:[%s8 + $0x70] sm:$0xff]
  %v3008 = vld [vmem:[%s8 + $0x78] sm:$0xff]
  %v3009 = vld [vmem:[%s8 + $0x80] sm:$0xff]
  %v3010 = vld [vmem:[%s8 + $0x88] sm:$0xff]
  %v3011 = vld [vmem:[%s8 + $0x90] sm:$0xff]
  %v3012 = vld [vmem:[%s8 + $0x98] sm:$0xff]
  %v3013 = vld [vmem:[%s8 + $0xa0] sm:$0xff]
  %v3014 = vld [vmem:[%s8 + $0xa8] sm:$0xff]
  %v3015 = vld [vmem:[%s8 + $0xb0] sm:$0xff]
  %v3016 = vld [vmem:[%s8 + $0xb8] sm:$0xff]
  %v3017 = vld [vmem:[%s8 + $0xc0] sm:$0xff]
  %v3018 = vld [vmem:[%s8 + $0xc8] sm:$0xff]
  %v3019 = vld [vmem:[%s8 + $0xd0] sm:$0xff]
  %v3020 = vld [vmem:[%s8 + $0xd8] sm:$0xff]
  %v3021 = vld [vmem:[%s8 + $0xe0] sm:$0xff]
  %v3022 = vld [vmem:[%s8 + $0xe8] sm:$0xff]
  %v3023 = vld [vmem:[%s8 + $0xf0] sm:$0xff]
  %v3024 = vld [vmem:[%s8 + $0xf8] sm:$0xff]
  %v3025 = vld [vmem:[%s8 + $0x100] sm:$0xff]
  %v3026 = vld [vmem:[%s8 + $0x108] sm:$0xff]
  %v3027 = vld [vmem:[%s8 + $0x110] sm:$0xff]
  %v3028 = vld [vmem:[%s8 + $0x118] sm:$0xff]
  %v3029 = vld [vmem:[%s8 + $0x120] sm:$0xff]
  %v3030 = vld [vmem:[%s8 + $0x128] sm:$0xff]
  %v3031 = vld [vmem:[%s8 + $0x130] sm:$0xff]
  %v3032 = vld [vmem:[%s8 + $0x138] sm:$0xff]
  %v3033 = vld [vmem:[%s8 + $0x140] sm:$0xff]
  %v3034 = vld [vmem:[%s8 + $0x148] sm:$0xff]
  %v3035 = vld [vmem:[%s8 + $0x150] sm:$0xff]
  %v3036 = vld [vmem:[%s8 + $0x158] sm:$0xff]
  %v3037 = vld [vmem:[%s8 + $0x160] sm:$0xff]
  %v3038 = vld [vmem:[%s8 + $0x168] sm:$0xff]
  %v3039 = vld [vmem:[%s8 + $0x170] sm:$0xff]
  %v3040 = vld [vmem:[%s8 + $0x178] sm:$0xff]
  %v3041 = vld [vmem:[%s8 + $0x180] sm:$0xff]
  %v3042 = vld [vmem:[%s8 + $0x188] sm:$0xff]
  %v3043 = vld [vmem:[%s8 + $0x190] sm:$0xff]
  %v3044 = vld [vmem:[%s8 + $0x198] sm:$0xff]
  %v3045 = vld [vmem:[%s8 + $0x1a0] sm:$0xff]
  %v3046 = vld [vmem:[%s8 + $0x1a8] sm:$0xff]
  %v3047 = vld [vmem:[%s8 + $0x1b0] sm:$0xff]
  %v3048 = vld [vmem:[%s8 + $0x1b8] sm:$0xff]
  %v3049 = vld [vmem:[%s8 + $0x1c0] sm:$0xff]
  %v3050 = vld [vmem:[%s8 + $0x1c8] sm:$0xff]
  %v3051 = vld [vmem:[%s8 + $0x1d0] sm:$0xff]
  %v3052 = vld [vmem:[%s8 + $0x1d8] sm:$0xff]
  %v3053 = vld [vmem:[%s8 + $0x1e0] sm:$0xff]
  %v3054 = vld [vmem:[%s8 + $0x1e8] sm:$0xff]
  %v3055 = vld [vmem:[%s8 + $0x1f0] sm:$0xff]
  %v3056 = vld [vmem:[%s8 + $0x1f8] sm:$0xff]
  %v3057 = vld [vmem:[%s10] sm:$0xf]
  %v3059 = vlaneseq
  %v3060 = vshrl.u32 %v3059, 7
  %v3061 = vsub.s32 0, %v3060
  %v3062 = vrot.slane %v3057, %v3061
  %v3063 = vlaneseq
  %v3064 = vshrl.u32 %v3063, 7
  %v3065 = vsub.s32 1, %v3064
  %v3066 = vrot.slane %v3057, %v3065
  %v3067 = vlaneseq
  %v3068 = vshrl.u32 %v3067, 7
  %v3069 = vsub.s32 2, %v3068
  %v3070 = vrot.slane %v3057, %v3069
  %v3071 = vlaneseq
  %v3072 = vshrl.u32 %v3071, 7
  %v3073 = vsub.s32 3, %v3072
  %v3074 = vrot.slane %v3057, %v3073
  %v3143 = vunpack.c.l.b16 %v2929
  %v3144 = vunpack.c.l.b16 %v2930
  %v3145 = vunpack.c.l.b16 %v2931
  %v3146 = vunpack.c.l.b16 %v2932
  %v3147 = vunpack.c.l.b16 %v2933
  %v3148 = vunpack.c.l.b16 %v2934
  %v3149 = vunpack.c.l.b16 %v2935
  %v3150 = vunpack.c.l.b16 %v2936
  %v3151 = vunpack.c.l.b16 %v2937
  %v3152 = vunpack.c.l.b16 %v2938
  %v3153 = vunpack.c.l.b16 %v2939
  %v3154 = vunpack.c.l.b16 %v2940
  %v3155 = vunpack.c.l.b16 %v2941
  %v3156 = vunpack.c.l.b16 %v2942
  %v3157 = vunpack.c.l.b16 %v2943
  %v3158 = vunpack.c.l.b16 %v2944
  %v3159 = vunpack.c.l.b16 %v2945
  %v3160 = vunpack.c.l.b16 %v2946
  %v3161 = vunpack.c.l.b16 %v2947
  %v3162 = vunpack.c.l.b16 %v2948
  %v3163 = vunpack.c.l.b16 %v2949
  %v3164 = vunpack.c.l.b16 %v2950
  %v3165 = vunpack.c.l.b16 %v2951
  %v3166 = vunpack.c.l.b16 %v2952
  %v3167 = vunpack.c.l.b16 %v2953
  %v3168 = vunpack.c.l.b16 %v2954
  %v3169 = vunpack.c.l.b16 %v2955
  %v3170 = vunpack.c.l.b16 %v2956
  %v3171 = vunpack.c.l.b16 %v2957
  %v3172 = vunpack.c.l.b16 %v2958
  %v3173 = vunpack.c.l.b16 %v2959
  %v3174 = vunpack.c.l.b16 %v2960
  %v3175 = vunpack.c.l.b16 %v2961
  %v3176 = vunpack.c.l.b16 %v2962
  %v3177 = vunpack.c.l.b16 %v2963
  %v3178 = vunpack.c.l.b16 %v2964
  %v3179 = vunpack.c.l.b16 %v2965
  %v3180 = vunpack.c.l.b16 %v2966
  %v3181 = vunpack.c.l.b16 %v2967
  %v3182 = vunpack.c.l.b16 %v2968
  %v3183 = vunpack.c.l.b16 %v2969
  %v3184 = vunpack.c.l.b16 %v2970
  %v3185 = vunpack.c.l.b16 %v2971
  %v3186 = vunpack.c.l.b16 %v2972
  %v3187 = vunpack.c.l.b16 %v2973
  %v3188 = vunpack.c.l.b16 %v2974
  %v3189 = vunpack.c.l.b16 %v2975
  %v3190 = vunpack.c.l.b16 %v2976
  %v3191 = vunpack.c.l.b16 %v2977
  %v3192 = vunpack.c.l.b16 %v2978
  %v3193 = vunpack.c.l.b16 %v2979
  %v3194 = vunpack.c.l.b16 %v2980
  %v3195 = vunpack.c.l.b16 %v2981
  %v3196 = vunpack.c.l.b16 %v2982
  %v3197 = vunpack.c.l.b16 %v2983
  %v3198 = vunpack.c.l.b16 %v2984
  %v3199 = vunpack.c.l.b16 %v2985
  %v3200 = vunpack.c.l.b16 %v2986
  %v3201 = vunpack.c.l.b16 %v2987
  %v3202 = vunpack.c.l.b16 %v2988
  %v3203 = vunpack.c.l.b16 %v2989
  %v3204 = vunpack.c.l.b16 %v2990
  %v3205 = vunpack.c.l.b16 %v2991
  %v3206 = vunpack.c.l.b16 %v2992
  %vm3207 = vcmask 1041409
  %v3208 = vsel %vm3207, %v3145, %v3143
  %vm3209 = vcmask 1042434
  %v3210 = vsel %vm3209, %v3147, %v3208
  %vm3211 = vcmask 1043459
  %v3212 = vsel %vm3211, %v3149, %v3210
  %vm3213 = vcmask 1044484
  %v3214 = vsel %vm3213, %v3151, %v3212
  %vm3215 = vcmask 1045509
  %v3216 = vsel %vm3215, %v3153, %v3214
  %vm3217 = vcmask 1046534
  %v3218 = vsel %vm3217, %v3155, %v3216
  %vm3219 = vcmask 1047559
  %v3220 = vsel %vm3219, %v3157, %v3218
  %v3221 = vsel %vm3207, %v3146, %v3144
  %v3222 = vsel %vm3209, %v3148, %v3221
  %v3223 = vsel %vm3211, %v3150, %v3222
  %v3224 = vsel %vm3213, %v3152, %v3223
  %v3225 = vsel %vm3215, %v3154, %v3224
  %v3226 = vsel %vm3217, %v3156, %v3225
  %v3227 = vsel %vm3219, %v3158, %v3226
  %v3228 = vsel %vm3207, %v3161, %v3159
  %v3229 = vsel %vm3209, %v3163, %v3228
  %v3230 = vsel %vm3211, %v3165, %v3229
  %v3231 = vsel %vm3213, %v3167, %v3230
  %v3232 = vsel %vm3215, %v3169, %v3231
  %v3233 = vsel %vm3217, %v3171, %v3232
  %v3234 = vsel %vm3219, %v3173, %v3233
  %v3235 = vsel %vm3207, %v3162, %v3160
  %v3236 = vsel %vm3209, %v3164, %v3235
  %v3237 = vsel %vm3211, %v3166, %v3236
  %v3238 = vsel %vm3213, %v3168, %v3237
  %v3239 = vsel %vm3215, %v3170, %v3238
  %v3240 = vsel %vm3217, %v3172, %v3239
  %v3241 = vsel %vm3219, %v3174, %v3240
  %v3242 = vsel %vm3207, %v3177, %v3175
  %v3243 = vsel %vm3209, %v3179, %v3242
  %v3244 = vsel %vm3211, %v3181, %v3243
  %v3245 = vsel %vm3213, %v3183, %v3244
  %v3246 = vsel %vm3215, %v3185, %v3245
  %v3247 = vsel %vm3217, %v3187, %v3246
  %v3248 = vsel %vm3219, %v3189, %v3247
  %v3249 = vsel %vm3207, %v3178, %v3176
  %v3250 = vsel %vm3209, %v3180, %v3249
  %v3251 = vsel %vm3211, %v3182, %v3250
  %v3252 = vsel %vm3213, %v3184, %v3251
  %v3253 = vsel %vm3215, %v3186, %v3252
  %v3254 = vsel %vm3217, %v3188, %v3253
  %v3255 = vsel %vm3219, %v3190, %v3254
  %v3256 = vsel %vm3207, %v3193, %v3191
  %v3257 = vsel %vm3209, %v3195, %v3256
  %v3258 = vsel %vm3211, %v3197, %v3257
  %v3259 = vsel %vm3213, %v3199, %v3258
  %v3260 = vsel %vm3215, %v3201, %v3259
  %v3261 = vsel %vm3217, %v3203, %v3260
  %v3262 = vsel %vm3219, %v3205, %v3261
  %v3263 = vsel %vm3207, %v3194, %v3192
  %v3264 = vsel %vm3209, %v3196, %v3263
  %v3265 = vsel %vm3211, %v3198, %v3264
  %v3266 = vsel %vm3213, %v3200, %v3265
  %v3267 = vsel %vm3215, %v3202, %v3266
  %v3268 = vsel %vm3217, %v3204, %v3267
  %v3269 = vsel %vm3219, %v3206, %v3268
  %v3270 = vpack.c.b16 %v3234, %v3220
  %v3271 = vpack.c.b16 %v3241, %v3227
  %v3272 = vpack.c.b16 %v3262, %v3248
  %v3273 = vpack.c.b16 %v3269, %v3255
  %v3342 = vunpack.c.l.b16 %v2993
  %v3343 = vunpack.c.h.b16 %v2993
  %v3344 = vunpack.c.l.b16 %v2994
  %v3345 = vunpack.c.h.b16 %v2994
  %v3346 = vunpack.c.l.b16 %v2995
  %v3347 = vunpack.c.h.b16 %v2995
  %v3348 = vunpack.c.l.b16 %v2996
  %v3349 = vunpack.c.h.b16 %v2996
  %v3350 = vunpack.c.l.b16 %v2997
  %v3351 = vunpack.c.h.b16 %v2997
  %v3352 = vunpack.c.l.b16 %v2998
  %v3353 = vunpack.c.h.b16 %v2998
  %v3354 = vunpack.c.l.b16 %v2999
  %v3355 = vunpack.c.h.b16 %v2999
  %v3356 = vunpack.c.l.b16 %v3000
  %v3357 = vunpack.c.h.b16 %v3000
  %v3358 = vunpack.c.l.b16 %v3001
  %v3359 = vunpack.c.h.b16 %v3001
  %v3360 = vunpack.c.l.b16 %v3002
  %v3361 = vunpack.c.h.b16 %v3002
  %v3362 = vunpack.c.l.b16 %v3003
  %v3363 = vunpack.c.h.b16 %v3003
  %v3364 = vunpack.c.l.b16 %v3004
  %v3365 = vunpack.c.h.b16 %v3004
  %v3366 = vunpack.c.l.b16 %v3005
  %v3367 = vunpack.c.h.b16 %v3005
  %v3368 = vunpack.c.l.b16 %v3006
  %v3369 = vunpack.c.h.b16 %v3006
  %v3370 = vunpack.c.l.b16 %v3007
  %v3371 = vunpack.c.h.b16 %v3007
  %v3372 = vunpack.c.l.b16 %v3008
  %v3373 = vunpack.c.h.b16 %v3008
  %v3374 = vunpack.c.l.b16 %v3009
  %v3375 = vunpack.c.h.b16 %v3009
  %v3376 = vunpack.c.l.b16 %v3010
  %v3377 = vunpack.c.h.b16 %v3010
  %v3378 = vunpack.c.l.b16 %v3011
  %v3379 = vunpack.c.h.b16 %v3011
  %v3380 = vunpack.c.l.b16 %v3012
  %v3381 = vunpack.c.h.b16 %v3012
  %v3382 = vunpack.c.l.b16 %v3013
  %v3383 = vunpack.c.h.b16 %v3013
  %v3384 = vunpack.c.l.b16 %v3014
  %v3385 = vunpack.c.h.b16 %v3014
  %v3386 = vunpack.c.l.b16 %v3015
  %v3387 = vunpack.c.h.b16 %v3015
  %v3388 = vunpack.c.l.b16 %v3016
  %v3389 = vunpack.c.h.b16 %v3016
  %v3390 = vunpack.c.l.b16 %v3017
  %v3391 = vunpack.c.h.b16 %v3017
  %v3392 = vunpack.c.l.b16 %v3018
  %v3393 = vunpack.c.h.b16 %v3018
  %v3394 = vunpack.c.l.b16 %v3019
  %v3395 = vunpack.c.h.b16 %v3019
  %v3396 = vunpack.c.l.b16 %v3020
  %v3397 = vunpack.c.h.b16 %v3020
  %v3398 = vunpack.c.l.b16 %v3021
  %v3399 = vunpack.c.h.b16 %v3021
  %v3400 = vunpack.c.l.b16 %v3022
  %v3401 = vunpack.c.h.b16 %v3022
  %v3402 = vunpack.c.l.b16 %v3023
  %v3403 = vunpack.c.h.b16 %v3023
  %v3404 = vunpack.c.l.b16 %v3024
  %v3405 = vunpack.c.h.b16 %v3024
  %v3406 = vunpack.c.l.b16 %v3025
  %v3407 = vunpack.c.h.b16 %v3025
  %v3408 = vunpack.c.l.b16 %v3026
  %v3409 = vunpack.c.h.b16 %v3026
  %v3410 = vunpack.c.l.b16 %v3027
  %v3411 = vunpack.c.h.b16 %v3027
  %v3412 = vunpack.c.l.b16 %v3028
  %v3413 = vunpack.c.h.b16 %v3028
  %v3414 = vunpack.c.l.b16 %v3029
  %v3415 = vunpack.c.h.b16 %v3029
  %v3416 = vunpack.c.l.b16 %v3030
  %v3417 = vunpack.c.h.b16 %v3030
  %v3418 = vunpack.c.l.b16 %v3031
  %v3419 = vunpack.c.h.b16 %v3031
  %v3420 = vunpack.c.l.b16 %v3032
  %v3421 = vunpack.c.h.b16 %v3032
  %v3422 = vunpack.c.l.b16 %v3033
  %v3423 = vunpack.c.h.b16 %v3033
  %v3424 = vunpack.c.l.b16 %v3034
  %v3425 = vunpack.c.h.b16 %v3034
  %v3426 = vunpack.c.l.b16 %v3035
  %v3427 = vunpack.c.h.b16 %v3035
  %v3428 = vunpack.c.l.b16 %v3036
  %v3429 = vunpack.c.h.b16 %v3036
  %v3430 = vunpack.c.l.b16 %v3037
  %v3431 = vunpack.c.h.b16 %v3037
  %v3432 = vunpack.c.l.b16 %v3038
  %v3433 = vunpack.c.h.b16 %v3038
  %v3434 = vunpack.c.l.b16 %v3039
  %v3435 = vunpack.c.h.b16 %v3039
  %v3436 = vunpack.c.l.b16 %v3040
  %v3437 = vunpack.c.h.b16 %v3040
  %v3438 = vunpack.c.l.b16 %v3041
  %v3439 = vunpack.c.h.b16 %v3041
  %v3440 = vunpack.c.l.b16 %v3042
  %v3441 = vunpack.c.h.b16 %v3042
  %v3442 = vunpack.c.l.b16 %v3043
  %v3443 = vunpack.c.h.b16 %v3043
  %v3444 = vunpack.c.l.b16 %v3044
  %v3445 = vunpack.c.h.b16 %v3044
  %v3446 = vunpack.c.l.b16 %v3045
  %v3447 = vunpack.c.h.b16 %v3045
  %v3448 = vunpack.c.l.b16 %v3046
  %v3449 = vunpack.c.h.b16 %v3046
  %v3450 = vunpack.c.l.b16 %v3047
  %v3451 = vunpack.c.h.b16 %v3047
  %v3452 = vunpack.c.l.b16 %v3048
  %v3453 = vunpack.c.h.b16 %v3048
  %v3454 = vunpack.c.l.b16 %v3049
  %v3455 = vunpack.c.h.b16 %v3049
  %v3456 = vunpack.c.l.b16 %v3050
  %v3457 = vunpack.c.h.b16 %v3050
  %v3458 = vunpack.c.l.b16 %v3051
  %v3459 = vunpack.c.h.b16 %v3051
  %v3460 = vunpack.c.l.b16 %v3052
  %v3461 = vunpack.c.h.b16 %v3052
  %v3462 = vunpack.c.l.b16 %v3053
  %v3463 = vunpack.c.h.b16 %v3053
  %v3464 = vunpack.c.l.b16 %v3054
  %v3465 = vunpack.c.h.b16 %v3054
  %v3466 = vunpack.c.l.b16 %v3055
  %v3467 = vunpack.c.h.b16 %v3055
  %v3468 = vunpack.c.l.b16 %v3056
  %v3469 = vunpack.c.h.b16 %v3056
  %v3470 = vpack.c.b16 %v3346, %v3342
  %v3471 = vpack.c.b16 %v3347, %v3343
  %v3472 = vpack.c.b16 %v3348, %v3344
  %v3473 = vpack.c.b16 %v3349, %v3345
  %v3474 = vpack.c.b16 %v3354, %v3350
  %v3475 = vpack.c.b16 %v3355, %v3351
  %v3476 = vpack.c.b16 %v3356, %v3352
  %v3477 = vpack.c.b16 %v3357, %v3353
  %v3478 = vpack.c.b16 %v3362, %v3358
  %v3479 = vpack.c.b16 %v3363, %v3359
  %v3480 = vpack.c.b16 %v3364, %v3360
  %v3481 = vpack.c.b16 %v3365, %v3361
  %v3482 = vpack.c.b16 %v3370, %v3366
  %v3483 = vpack.c.b16 %v3371, %v3367
  %v3484 = vpack.c.b16 %v3372, %v3368
  %v3485 = vpack.c.b16 %v3373, %v3369
  %v3486 = vpack.c.b16 %v3378, %v3374
  %v3487 = vpack.c.b16 %v3379, %v3375
  %v3488 = vpack.c.b16 %v3380, %v3376
  %v3489 = vpack.c.b16 %v3381, %v3377
  %v3490 = vpack.c.b16 %v3386, %v3382
  %v3491 = vpack.c.b16 %v3387, %v3383
  %v3492 = vpack.c.b16 %v3388, %v3384
  %v3493 = vpack.c.b16 %v3389, %v3385
  %v3494 = vpack.c.b16 %v3394, %v3390
  %v3495 = vpack.c.b16 %v3395, %v3391
  %v3496 = vpack.c.b16 %v3396, %v3392
  %v3497 = vpack.c.b16 %v3397, %v3393
  %v3498 = vpack.c.b16 %v3402, %v3398
  %v3499 = vpack.c.b16 %v3403, %v3399
  %v3500 = vpack.c.b16 %v3404, %v3400
  %v3501 = vpack.c.b16 %v3405, %v3401
  %v3502 = vpack.c.b16 %v3410, %v3406
  %v3503 = vpack.c.b16 %v3411, %v3407
  %v3504 = vpack.c.b16 %v3412, %v3408
  %v3505 = vpack.c.b16 %v3413, %v3409
  %v3506 = vpack.c.b16 %v3418, %v3414
  %v3507 = vpack.c.b16 %v3419, %v3415
  %v3508 = vpack.c.b16 %v3420, %v3416
  %v3509 = vpack.c.b16 %v3421, %v3417
  %v3510 = vpack.c.b16 %v3426, %v3422
  %v3511 = vpack.c.b16 %v3427, %v3423
  %v3512 = vpack.c.b16 %v3428, %v3424
  %v3513 = vpack.c.b16 %v3429, %v3425
  %v3514 = vpack.c.b16 %v3434, %v3430
  %v3515 = vpack.c.b16 %v3435, %v3431
  %v3516 = vpack.c.b16 %v3436, %v3432
  %v3517 = vpack.c.b16 %v3437, %v3433
  %v3518 = vpack.c.b16 %v3442, %v3438
  %v3519 = vpack.c.b16 %v3443, %v3439
  %v3520 = vpack.c.b16 %v3444, %v3440
  %v3521 = vpack.c.b16 %v3445, %v3441
  %v3522 = vpack.c.b16 %v3450, %v3446
  %v3523 = vpack.c.b16 %v3451, %v3447
  %v3524 = vpack.c.b16 %v3452, %v3448
  %v3525 = vpack.c.b16 %v3453, %v3449
  %v3526 = vpack.c.b16 %v3458, %v3454
  %v3527 = vpack.c.b16 %v3459, %v3455
  %v3528 = vpack.c.b16 %v3460, %v3456
  %v3529 = vpack.c.b16 %v3461, %v3457
  %v3530 = vpack.c.b16 %v3466, %v3462
  %v3531 = vpack.c.b16 %v3467, %v3463
  %v3532 = vpack.c.b16 %v3468, %v3464
  %v3533 = vpack.c.b16 %v3469, %v3465
  %3598 = vmatprep.subr.bf16.mxu0 %v3499
  %3599 = vmatpush1.bf16.msra.mxu0 %v3498
  %3600 = vmatprep.subr.bf16.mxu0 %v3495
  %3601 = vmatpush1.bf16.msra.mxu0 %v3494
  %3602 = vmatprep.subr.bf16.mxu0 %v3491
  %3603 = vmatpush1.bf16.msra.mxu0 %v3490
  %3604 = vmatprep.subr.bf16.mxu0 %v3487
  %3605 = vmatpush1.bf16.msra.mxu0 %v3486
  %3606 = vmatprep.subr.bf16.mxu0 %v3483
  %3607 = vmatpush1.bf16.msra.mxu0 %v3482
  %3608 = vmatprep.subr.bf16.mxu0 %v3479
  %3609 = vmatpush1.bf16.msra.mxu0 %v3478
  %3610 = vmatprep.subr.bf16.mxu0 %v3475
  %3611 = vmatpush1.bf16.msra.mxu0 %v3474
  %3612 = vmatprep.subr.bf16.mxu0 %v3471
  %3613 = vmatpush1.bf16.msra.mxu0 %v3470
  %3614 = vmatprep.subr.bf16.mxu0 %v3531
  %3615 = vmatpush2.bf16.msra.mxu0 %v3530
  %3616 = vmatprep.subr.bf16.mxu0 %v3527
  %3617 = vmatpush2.bf16.msra.mxu0 %v3526
  %3618 = vmatprep.subr.bf16.mxu0 %v3523
  %3619 = vmatpush2.bf16.msra.mxu0 %v3522
  %3620 = vmatprep.subr.bf16.mxu0 %v3519
  %3621 = vmatpush2.bf16.msra.mxu0 %v3518
  %3622 = vmatprep.subr.bf16.mxu0 %v3515
  %3623 = vmatpush2.bf16.msra.mxu0 %v3514
  %3624 = vmatprep.subr.bf16.mxu0 %v3511
  %3625 = vmatpush2.bf16.msra.mxu0 %v3510
  %3626 = vmatprep.subr.bf16.mxu0 %v3507
  %3627 = vmatpush2.bf16.msra.mxu0 %v3506
  %3628 = vmatprep.subr.bf16.mxu0 %v3503
  %3629 = vmatpush2.bf16.msra.mxu0 %v3502
  %3630 = vmatprep.mubr.bf16.mxu0 %v3271
  %3631 = vmatmul.mubr.bf16.gmra.mxu0 %v3270
  %v3632 = vpop.f32.mrf.mxu0
  %v3633 = vadd.f32 %v3062, %v3632
  %v3634 = vpop.f32.mrf.mxu0
  %v3635 = vadd.f32 %v3066, %v3634
  %v3636 = vpop.f32.mrf.mxu0
  %v3637 = vadd.f32 %v3062, %v3636
  %v3638 = vpop.f32.mrf.mxu0
  %v3639 = vadd.f32 %v3066, %v3638
  %3640 = vmatprep.mubr.bf16.mxu0 %v3273
  %3641 = vmatmul.mubr.bf16.gmra.mxu0 %v3272
  %v3642 = vpop.f32.mrf.mxu0
  %v3643 = vadd.f32 %v3062, %v3642
  %v3644 = vpop.f32.mrf.mxu0
  %v3645 = vadd.f32 %v3066, %v3644
  %v3646 = vpop.f32.mrf.mxu0
  %v3647 = vadd.f32 %v3062, %v3646
  %v3648 = vpop.f32.mrf.mxu0
  %v3649 = vadd.f32 %v3066, %v3648
  %3650 = vdwg.mxu0
  %3651 = vmatprep.subr.bf16.mxu0 %v3501
  %3652 = vmatpush1.bf16.msra.mxu0 %v3500
  %3653 = vmatprep.subr.bf16.mxu0 %v3497
  %3654 = vmatpush1.bf16.msra.mxu0 %v3496
  %3655 = vmatprep.subr.bf16.mxu0 %v3493
  %3656 = vmatpush1.bf16.msra.mxu0 %v3492
  %3657 = vmatprep.subr.bf16.mxu0 %v3489
  %3658 = vmatpush1.bf16.msra.mxu0 %v3488
  %3659 = vmatprep.subr.bf16.mxu0 %v3485
  %3660 = vmatpush1.bf16.msra.mxu0 %v3484
  %3661 = vmatprep.subr.bf16.mxu0 %v3481
  %3662 = vmatpush1.bf16.msra.mxu0 %v3480
  %3663 = vmatprep.subr.bf16.mxu0 %v3477
  %3664 = vmatpush1.bf16.msra.mxu0 %v3476
  %3665 = vmatprep.subr.bf16.mxu0 %v3473
  %3666 = vmatpush1.bf16.msra.mxu0 %v3472
  %3667 = vmatprep.subr.bf16.mxu0 %v3533
  %3668 = vmatpush2.bf16.msra.mxu0 %v3532
  %3669 = vmatprep.subr.bf16.mxu0 %v3529
  %3670 = vmatpush2.bf16.msra.mxu0 %v3528
  %3671 = vmatprep.subr.bf16.mxu0 %v3525
  %3672 = vmatpush2.bf16.msra.mxu0 %v3524
  %3673 = vmatprep.subr.bf16.mxu0 %v3521
  %3674 = vmatpush2.bf16.msra.mxu0 %v3520
  %3675 = vmatprep.subr.bf16.mxu0 %v3517
  %3676 = vmatpush2.bf16.msra.mxu0 %v3516
  %3677 = vmatprep.subr.bf16.mxu0 %v3513
  %3678 = vmatpush2.bf16.msra.mxu0 %v3512
  %3679 = vmatprep.subr.bf16.mxu0 %v3509
  %3680 = vmatpush2.bf16.msra.mxu0 %v3508
  %3681 = vmatprep.subr.bf16.mxu0 %v3505
  %3682 = vmatpush2.bf16.msra.mxu0 %v3504
  %3683 = vmatprep.mubr.bf16.mxu0 %v3271
  %3684 = vmatmul.mubr.bf16.gmra.mxu0 %v3270
  %v3685 = vpop.f32.mrf.mxu0
  %v3686 = vadd.f32 %v3070, %v3685
  %v3687 = vpop.f32.mrf.mxu0
  %v3688 = vadd.f32 %v3074, %v3687
  %v3689 = vpop.f32.mrf.mxu0
  %v3690 = vadd.f32 %v3070, %v3689
  %v3691 = vpop.f32.mrf.mxu0
  %v3692 = vadd.f32 %v3074, %v3691
  %3693 = vmatprep.mubr.bf16.mxu0 %v3273
  %3694 = vmatmul.mubr.bf16.gmra.mxu0 %v3272
  %v3695 = vpop.f32.mrf.mxu0
  %v3696 = vadd.f32 %v3070, %v3695
  %v3697 = vpop.f32.mrf.mxu0
  %v3698 = vadd.f32 %v3074, %v3697
  %v3699 = vpop.f32.mrf.mxu0
  %v3700 = vadd.f32 %v3070, %v3699
  %v3701 = vpop.f32.mrf.mxu0
  %v3702 = vadd.f32 %v3074, %v3701
  %3703 = vdwg.mxu0
  %v3720 = vcombine.low %v3633, %v3635
  %v3721 = vcombine.high %v3633, %v3635
  %v3722 = vcombine.low %v3686, %v3688
  %v3723 = vcombine.high %v3686, %v3688
  %v3725 = vunpack.c.l.s4 1966171168
  %v3726 = vunpack.c.0.s8 %v3725
  %v3727 = vlaneseq
  %v3728 = vshrl.u32 %v3727, 7
  %v3729 = vsub.s32 %v3726, %v3728
  %v3730 = vrot.slane %v3720, %v3729
  %v3732 = vunpack.c.l.s4 1966171168
  %v3733 = vunpack.c.0.s8 %v3732
  %v3734 = vlaneseq
  %v3735 = vshrl.u32 %v3734, 7
  %v3736 = vsub.s32 %v3733, %v3735
  %v3737 = vrot.slane %v3721, %v3736
  %v3739 = vunpack.c.l.s4 1966171168
  %v3740 = vunpack.c.0.s8 %v3739
  %v3741 = vlaneseq
  %v3742 = vshrl.u32 %v3741, 7
  %v3743 = vsub.s32 %v3740, %v3742
  %v3744 = vrot.slane %v3722, %v3743
  %v3746 = vunpack.c.l.s4 1966171168
  %v3747 = vunpack.c.0.s8 %v3746
  %v3748 = vlaneseq
  %v3749 = vshrl.u32 %v3748, 7
  %v3750 = vsub.s32 %v3747, %v3749
  %v3751 = vrot.slane %v3723, %v3750
  %v3752 = vcombine.low %v3730, %v3744
  %v3753 = vcombine.high %v3730, %v3744
  %v3754 = vcombine.low %v3737, %v3751
  %v3755 = vcombine.high %v3737, %v3751
  %v3757 = vunpack.c.l.s4 1966171168
  %v3758 = vunpack.c.0.s8 %v3757
  %v3759 = vlaneseq
  %v3760 = vshrl.u32 %v3759, 7
  %v3761 = vsub.s32 %v3758, %v3760
  %v3762 = vrot.slane %v3752, %v3761
  %v3764 = vunpack.c.l.s4 1966171168
  %v3765 = vunpack.c.0.s8 %v3764
  %v3766 = vlaneseq
  %v3767 = vshrl.u32 %v3766, 7
  %v3768 = vsub.s32 %v3765, %v3767
  %v3769 = vrot.slane %v3754, %v3768
  %v3771 = vunpack.c.l.s4 1966171168
  %v3772 = vunpack.c.0.s8 %v3771
  %v3773 = vlaneseq
  %v3774 = vshrl.u32 %v3773, 7
  %v3775 = vsub.s32 %v3772, %v3774
  %v3776 = vrot.slane %v3753, %v3775
  %v3778 = vunpack.c.l.s4 1966171168
  %v3779 = vunpack.c.0.s8 %v3778
  %v3780 = vlaneseq
  %v3781 = vshrl.u32 %v3780, 7
  %v3782 = vsub.s32 %v3779, %v3781
  %v3783 = vrot.slane %v3755, %v3782
  %v3784 = vcombine.high %v3762, %v3762
  %v3785 = vcombine.high %v3769, %v3769
  %v3786 = vcombine.high %v3776, %v3776
  %v3787 = vcombine.high %v3783, %v3783
  %v3788 = vcombine.low %v3637, %v3639
  %v3789 = vcombine.high %v3637, %v3639
  %v3790 = vcombine.low %v3690, %v3692
  %v3791 = vcombine.high %v3690, %v3692
  %v3793 = vunpack.c.l.s4 1966171168
  %v3794 = vunpack.c.0.s8 %v3793
  %v3795 = vlaneseq
  %v3796 = vshrl.u32 %v3795, 7
  %v3797 = vsub.s32 %v3794, %v3796
  %v3798 = vrot.slane %v3788, %v3797
  %v3800 = vunpack.c.l.s4 1966171168
  %v3801 = vunpack.c.0.s8 %v3800
  %v3802 = vlaneseq
  %v3803 = vshrl.u32 %v3802, 7
  %v3804 = vsub.s32 %v3801, %v3803
  %v3805 = vrot.slane %v3789, %v3804
  %v3807 = vunpack.c.l.s4 1966171168
  %v3808 = vunpack.c.0.s8 %v3807
  %v3809 = vlaneseq
  %v3810 = vshrl.u32 %v3809, 7
  %v3811 = vsub.s32 %v3808, %v3810
  %v3812 = vrot.slane %v3790, %v3811
  %v3814 = vunpack.c.l.s4 1966171168
  %v3815 = vunpack.c.0.s8 %v3814
  %v3816 = vlaneseq
  %v3817 = vshrl.u32 %v3816, 7
  %v3818 = vsub.s32 %v3815, %v3817
  %v3819 = vrot.slane %v3791, %v3818
  %v3820 = vcombine.low %v3798, %v3812
  %v3821 = vcombine.high %v3798, %v3812
  %v3822 = vcombine.low %v3805, %v3819
  %v3823 = vcombine.high %v3805, %v3819
  %v3825 = vunpack.c.l.s4 1966171168
  %v3826 = vunpack.c.0.s8 %v3825
  %v3827 = vlaneseq
  %v3828 = vshrl.u32 %v3827, 7
  %v3829 = vsub.s32 %v3826, %v3828
  %v3830 = vrot.slane %v3820, %v3829
  %v3832 = vunpack.c.l.s4 1966171168
  %v3833 = vunpack.c.0.s8 %v3832
  %v3834 = vlaneseq
  %v3835 = vshrl.u32 %v3834, 7
  %v3836 = vsub.s32 %v3833, %v3835
  %v3837 = vrot.slane %v3822, %v3836
  %v3839 = vunpack.c.l.s4 1966171168
  %v3840 = vunpack.c.0.s8 %v3839
  %v3841 = vlaneseq
  %v3842 = vshrl.u32 %v3841, 7
  %v3843 = vsub.s32 %v3840, %v3842
  %v3844 = vrot.slane %v3821, %v3843
  %v3846 = vunpack.c.l.s4 1966171168
  %v3847 = vunpack.c.0.s8 %v3846
  %v3848 = vlaneseq
  %v3849 = vshrl.u32 %v3848, 7
  %v3850 = vsub.s32 %v3847, %v3849
  %v3851 = vrot.slane %v3823, %v3850
  %v3852 = vcombine.high %v3830, %v3830
  %v3853 = vcombine.high %v3837, %v3837
  %v3854 = vcombine.high %v3844, %v3844
  %v3855 = vcombine.high %v3851, %v3851
  %v3856 = vcombine.low %v3643, %v3645
  %v3857 = vcombine.high %v3643, %v3645
  %v3858 = vcombine.low %v3696, %v3698
  %v3859 = vcombine.high %v3696, %v3698
  %v3861 = vunpack.c.l.s4 1966171168
  %v3862 = vunpack.c.0.s8 %v3861
  %v3863 = vlaneseq
  %v3864 = vshrl.u32 %v3863, 7
  %v3865 = vsub.s32 %v3862, %v3864
  %v3866 = vrot.slane %v3856, %v3865
  %v3868 = vunpack.c.l.s4 1966171168
  %v3869 = vunpack.c.0.s8 %v3868
  %v3870 = vlaneseq
  %v3871 = vshrl.u32 %v3870, 7
  %v3872 = vsub.s32 %v3869, %v3871
  %v3873 = vrot.slane %v3857, %v3872
  %v3875 = vunpack.c.l.s4 1966171168
  %v3876 = vunpack.c.0.s8 %v3875
  %v3877 = vlaneseq
  %v3878 = vshrl.u32 %v3877, 7
  %v3879 = vsub.s32 %v3876, %v3878
  %v3880 = vrot.slane %v3858, %v3879
  %v3882 = vunpack.c.l.s4 1966171168
  %v3883 = vunpack.c.0.s8 %v3882
  %v3884 = vlaneseq
  %v3885 = vshrl.u32 %v3884, 7
  %v3886 = vsub.s32 %v3883, %v3885
  %v3887 = vrot.slane %v3859, %v3886
  %v3888 = vcombine.low %v3866, %v3880
  %v3889 = vcombine.high %v3866, %v3880
  %v3890 = vcombine.low %v3873, %v3887
  %v3891 = vcombine.high %v3873, %v3887
  %v3893 = vunpack.c.l.s4 1966171168
  %v3894 = vunpack.c.0.s8 %v3893
  %v3895 = vlaneseq
  %v3896 = vshrl.u32 %v3895, 7
  %v3897 = vsub.s32 %v3894, %v3896
  %v3898 = vrot.slane %v3888, %v3897
  %v3900 = vunpack.c.l.s4 1966171168
  %v3901 = vunpack.c.0.s8 %v3900
  %v3902 = vlaneseq
  %v3903 = vshrl.u32 %v3902, 7
  %v3904 = vsub.s32 %v3901, %v3903
  %v3905 = vrot.slane %v3890, %v3904
  %v3907 = vunpack.c.l.s4 1966171168
  %v3908 = vunpack.c.0.s8 %v3907
  %v3909 = vlaneseq
  %v3910 = vshrl.u32 %v3909, 7
  %v3911 = vsub.s32 %v3908, %v3910
  %v3912 = vrot.slane %v3889, %v3911
  %v3914 = vunpack.c.l.s4 1966171168
  %v3915 = vunpack.c.0.s8 %v3914
  %v3916 = vlaneseq
  %v3917 = vshrl.u32 %v3916, 7
  %v3918 = vsub.s32 %v3915, %v3917
  %v3919 = vrot.slane %v3891, %v3918
  %v3920 = vcombine.high %v3898, %v3898
  %v3921 = vcombine.high %v3905, %v3905
  %v3922 = vcombine.high %v3912, %v3912
  %v3923 = vcombine.high %v3919, %v3919
  %v3924 = vcombine.low %v3647, %v3649
  %v3925 = vcombine.high %v3647, %v3649
  %v3926 = vcombine.low %v3700, %v3702
  %v3927 = vcombine.high %v3700, %v3702
  %v3929 = vunpack.c.l.s4 1966171168
  %v3930 = vunpack.c.0.s8 %v3929
  %v3931 = vlaneseq
  %v3932 = vshrl.u32 %v3931, 7
  %v3933 = vsub.s32 %v3930, %v3932
  %v3934 = vrot.slane %v3924, %v3933
  %v3936 = vunpack.c.l.s4 1966171168
  %v3937 = vunpack.c.0.s8 %v3936
  %v3938 = vlaneseq
  %v3939 = vshrl.u32 %v3938, 7
  %v3940 = vsub.s32 %v3937, %v3939
  %v3941 = vrot.slane %v3925, %v3940
  %v3943 = vunpack.c.l.s4 1966171168
  %v3944 = vunpack.c.0.s8 %v3943
  %v3945 = vlaneseq
  %v3946 = vshrl.u32 %v3945, 7
  %v3947 = vsub.s32 %v3944, %v3946
  %v3948 = vrot.slane %v3926, %v3947
  %v3950 = vunpack.c.l.s4 1966171168
  %v3951 = vunpack.c.0.s8 %v3950
  %v3952 = vlaneseq
  %v3953 = vshrl.u32 %v3952, 7
  %v3954 = vsub.s32 %v3951, %v3953
  %v3955 = vrot.slane %v3927, %v3954
  %v3956 = vcombine.low %v3934, %v3948
  %v3957 = vcombine.high %v3934, %v3948
  %v3958 = vcombine.low %v3941, %v3955
  %v3959 = vcombine.high %v3941, %v3955
  %v3961 = vunpack.c.l.s4 1966171168
  %v3962 = vunpack.c.0.s8 %v3961
  %v3963 = vlaneseq
  %v3964 = vshrl.u32 %v3963, 7
  %v3965 = vsub.s32 %v3962, %v3964
  %v3966 = vrot.slane %v3956, %v3965
  %v3968 = vunpack.c.l.s4 1966171168
  %v3969 = vunpack.c.0.s8 %v3968
  %v3970 = vlaneseq
  %v3971 = vshrl.u32 %v3970, 7
  %v3972 = vsub.s32 %v3969, %v3971
  %v3973 = vrot.slane %v3958, %v3972
  %v3975 = vunpack.c.l.s4 1966171168
  %v3976 = vunpack.c.0.s8 %v3975
  %v3977 = vlaneseq
  %v3978 = vshrl.u32 %v3977, 7
  %v3979 = vsub.s32 %v3976, %v3978
  %v3980 = vrot.slane %v3957, %v3979
  %v3982 = vunpack.c.l.s4 1966171168
  %v3983 = vunpack.c.0.s8 %v3982
  %v3984 = vlaneseq
  %v3985 = vshrl.u32 %v3984, 7
  %v3986 = vsub.s32 %v3983, %v3985
  %v3987 = vrot.slane %v3959, %v3986
  %v3988 = vcombine.high %v3966, %v3966
  %v3989 = vcombine.high %v3973, %v3973
  %v3990 = vcombine.high %v3980, %v3980
  %v3991 = vcombine.high %v3987, %v3987
  %v3992 = vlaneseq
  %v3993 = vshrl.u32 %v3992, 7
  %v3994 = vsub.s32 0, %v3993
  %v3995 = vrot.slane %v3762, %v3994
  %v3996 = vlaneseq
  %v3997 = vshrl.u32 %v3996, 7
  %v3998 = vsub.s32 1, %v3997
  %v3999 = vrot.slane %v3762, %v3998
  %v4000 = vlaneseq
  %v4001 = vshrl.u32 %v4000, 7
  %v4002 = vsub.s32 2, %v4001
  %v4003 = vrot.slane %v3762, %v4002
  %v4004 = vlaneseq
  %v4005 = vshrl.u32 %v4004, 7
  %v4006 = vsub.s32 3, %v4005
  %v4007 = vrot.slane %v3762, %v4006
  %v4008 = vlaneseq
  %v4009 = vshrl.u32 %v4008, 7
  %v4010 = vsub.s32 0, %v4009
  %v4011 = vrot.slane %v3776, %v4010
  %v4012 = vlaneseq
  %v4013 = vshrl.u32 %v4012, 7
  %v4014 = vsub.s32 1, %v4013
  %v4015 = vrot.slane %v3776, %v4014
  %v4016 = vlaneseq
  %v4017 = vshrl.u32 %v4016, 7
  %v4018 = vsub.s32 2, %v4017
  %v4019 = vrot.slane %v3776, %v4018
  %v4020 = vlaneseq
  %v4021 = vshrl.u32 %v4020, 7
  %v4022 = vsub.s32 3, %v4021
  %v4023 = vrot.slane %v3776, %v4022
  %v4024 = vlaneseq
  %v4025 = vshrl.u32 %v4024, 7
  %v4026 = vsub.s32 0, %v4025
  %v4027 = vrot.slane %v3784, %v4026
  %v4028 = vlaneseq
  %v4029 = vshrl.u32 %v4028, 7
  %v4030 = vsub.s32 1, %v4029
  %v4031 = vrot.slane %v3784, %v4030
  %v4032 = vlaneseq
  %v4033 = vshrl.u32 %v4032, 7
  %v4034 = vsub.s32 2, %v4033
  %v4035 = vrot.slane %v3784, %v4034
  %v4036 = vlaneseq
  %v4037 = vshrl.u32 %v4036, 7
  %v4038 = vsub.s32 3, %v4037
  %v4039 = vrot.slane %v3784, %v4038
  %v4040 = vlaneseq
  %v4041 = vshrl.u32 %v4040, 7
  %v4042 = vsub.s32 0, %v4041
  %v4043 = vrot.slane %v3786, %v4042
  %v4044 = vlaneseq
  %v4045 = vshrl.u32 %v4044, 7
  %v4046 = vsub.s32 1, %v4045
  %v4047 = vrot.slane %v3786, %v4046
  %v4048 = vlaneseq
  %v4049 = vshrl.u32 %v4048, 7
  %v4050 = vsub.s32 2, %v4049
  %v4051 = vrot.slane %v3786, %v4050
  %v4052 = vlaneseq
  %v4053 = vshrl.u32 %v4052, 7
  %v4054 = vsub.s32 3, %v4053
  %v4055 = vrot.slane %v3786, %v4054
  %v4056 = vlaneseq
  %v4057 = vshrl.u32 %v4056, 7
  %v4058 = vsub.s32 0, %v4057
  %v4059 = vrot.slane %v3769, %v4058
  %v4060 = vlaneseq
  %v4061 = vshrl.u32 %v4060, 7
  %v4062 = vsub.s32 1, %v4061
  %v4063 = vrot.slane %v3769, %v4062
  %v4064 = vlaneseq
  %v4065 = vshrl.u32 %v4064, 7
  %v4066 = vsub.s32 2, %v4065
  %v4067 = vrot.slane %v3769, %v4066
  %v4068 = vlaneseq
  %v4069 = vshrl.u32 %v4068, 7
  %v4070 = vsub.s32 3, %v4069
  %v4071 = vrot.slane %v3769, %v4070
  %v4072 = vlaneseq
  %v4073 = vshrl.u32 %v4072, 7
  %v4074 = vsub.s32 0, %v4073
  %v4075 = vrot.slane %v3783, %v4074
  %v4076 = vlaneseq
  %v4077 = vshrl.u32 %v4076, 7
  %v4078 = vsub.s32 1, %v4077
  %v4079 = vrot.slane %v3783, %v4078
  %v4080 = vlaneseq
  %v4081 = vshrl.u32 %v4080, 7
  %v4082 = vsub.s32 2, %v4081
  %v4083 = vrot.slane %v3783, %v4082
  %v4084 = vlaneseq
  %v4085 = vshrl.u32 %v4084, 7
  %v4086 = vsub.s32 3, %v4085
  %v4087 = vrot.slane %v3783, %v4086
  %v4088 = vlaneseq
  %v4089 = vshrl.u32 %v4088, 7
  %v4090 = vsub.s32 0, %v4089
  %v4091 = vrot.slane %v3785, %v4090
  %v4092 = vlaneseq
  %v4093 = vshrl.u32 %v4092, 7
  %v4094 = vsub.s32 1, %v4093
  %v4095 = vrot.slane %v3785, %v4094
  %v4096 = vlaneseq
  %v4097 = vshrl.u32 %v4096, 7
  %v4098 = vsub.s32 2, %v4097
  %v4099 = vrot.slane %v3785, %v4098
  %v4100 = vlaneseq
  %v4101 = vshrl.u32 %v4100, 7
  %v4102 = vsub.s32 3, %v4101
  %v4103 = vrot.slane %v3785, %v4102
  %v4104 = vlaneseq
  %v4105 = vshrl.u32 %v4104, 7
  %v4106 = vsub.s32 0, %v4105
  %v4107 = vrot.slane %v3787, %v4106
  %v4108 = vlaneseq
  %v4109 = vshrl.u32 %v4108, 7
  %v4110 = vsub.s32 1, %v4109
  %v4111 = vrot.slane %v3787, %v4110
  %v4112 = vlaneseq
  %v4113 = vshrl.u32 %v4112, 7
  %v4114 = vsub.s32 2, %v4113
  %v4115 = vrot.slane %v3787, %v4114
  %v4116 = vlaneseq
  %v4117 = vshrl.u32 %v4116, 7
  %v4118 = vsub.s32 3, %v4117
  %v4119 = vrot.slane %v3787, %v4118
  %v4120 = vlaneseq
  %v4121 = vshrl.u32 %v4120, 7
  %v4122 = vsub.s32 0, %v4121
  %v4123 = vrot.slane %v3830, %v4122
  %v4124 = vlaneseq
  %v4125 = vshrl.u32 %v4124, 7
  %v4126 = vsub.s32 1, %v4125
  %v4127 = vrot.slane %v3830, %v4126
  %v4128 = vlaneseq
  %v4129 = vshrl.u32 %v4128, 7
  %v4130 = vsub.s32 2, %v4129
  %v4131 = vrot.slane %v3830, %v4130
  %v4132 = vlaneseq
  %v4133 = vshrl.u32 %v4132, 7
  %v4134 = vsub.s32 3, %v4133
  %v4135 = vrot.slane %v3830, %v4134
  %v4136 = vlaneseq
  %v4137 = vshrl.u32 %v4136, 7
  %v4138 = vsub.s32 0, %v4137
  %v4139 = vrot.slane %v3844, %v4138
  %v4140 = vlaneseq
  %v4141 = vshrl.u32 %v4140, 7
  %v4142 = vsub.s32 1, %v4141
  %v4143 = vrot.slane %v3844, %v4142
  %v4144 = vlaneseq
  %v4145 = vshrl.u32 %v4144, 7
  %v4146 = vsub.s32 2, %v4145
  %v4147 = vrot.slane %v3844, %v4146
  %v4148 = vlaneseq
  %v4149 = vshrl.u32 %v4148, 7
  %v4150 = vsub.s32 3, %v4149
  %v4151 = vrot.slane %v3844, %v4150
  %v4152 = vlaneseq
  %v4153 = vshrl.u32 %v4152, 7
  %v4154 = vsub.s32 0, %v4153
  %v4155 = vrot.slane %v3852, %v4154
  %v4156 = vlaneseq
  %v4157 = vshrl.u32 %v4156, 7
  %v4158 = vsub.s32 1, %v4157
  %v4159 = vrot.slane %v3852, %v4158
  %v4160 = vlaneseq
  %v4161 = vshrl.u32 %v4160, 7
  %v4162 = vsub.s32 2, %v4161
  %v4163 = vrot.slane %v3852, %v4162
  %v4164 = vlaneseq
  %v4165 = vshrl.u32 %v4164, 7
  %v4166 = vsub.s32 3, %v4165
  %v4167 = vrot.slane %v3852, %v4166
  %v4168 = vlaneseq
  %v4169 = vshrl.u32 %v4168, 7
  %v4170 = vsub.s32 0, %v4169
  %v4171 = vrot.slane %v3854, %v4170
  %v4172 = vlaneseq
  %v4173 = vshrl.u32 %v4172, 7
  %v4174 = vsub.s32 1, %v4173
  %v4175 = vrot.slane %v3854, %v4174
  %v4176 = vlaneseq
  %v4177 = vshrl.u32 %v4176, 7
  %v4178 = vsub.s32 2, %v4177
  %v4179 = vrot.slane %v3854, %v4178
  %v4180 = vlaneseq
  %v4181 = vshrl.u32 %v4180, 7
  %v4182 = vsub.s32 3, %v4181
  %v4183 = vrot.slane %v3854, %v4182
  %v4184 = vlaneseq
  %v4185 = vshrl.u32 %v4184, 7
  %v4186 = vsub.s32 0, %v4185
  %v4187 = vrot.slane %v3837, %v4186
  %v4188 = vlaneseq
  %v4189 = vshrl.u32 %v4188, 7
  %v4190 = vsub.s32 1, %v4189
  %v4191 = vrot.slane %v3837, %v4190
  %v4192 = vlaneseq
  %v4193 = vshrl.u32 %v4192, 7
  %v4194 = vsub.s32 2, %v4193
  %v4195 = vrot.slane %v3837, %v4194
  %v4196 = vlaneseq
  %v4197 = vshrl.u32 %v4196, 7
  %v4198 = vsub.s32 3, %v4197
  %v4199 = vrot.slane %v3837, %v4198
  %v4200 = vlaneseq
  %v4201 = vshrl.u32 %v4200, 7
  %v4202 = vsub.s32 0, %v4201
  %v4203 = vrot.slane %v3851, %v4202
  %v4204 = vlaneseq
  %v4205 = vshrl.u32 %v4204, 7
  %v4206 = vsub.s32 1, %v4205
  %v4207 = vrot.slane %v3851, %v4206
  %v4208 = vlaneseq
  %v4209 = vshrl.u32 %v4208, 7
  %v4210 = vsub.s32 2, %v4209
  %v4211 = vrot.slane %v3851, %v4210
  %v4212 = vlaneseq
  %v4213 = vshrl.u32 %v4212, 7
  %v4214 = vsub.s32 3, %v4213
  %v4215 = vrot.slane %v3851, %v4214
  %v4216 = vlaneseq
  %v4217 = vshrl.u32 %v4216, 7
  %v4218 = vsub.s32 0, %v4217
  %v4219 = vrot.slane %v3853, %v4218
  %v4220 = vlaneseq
  %v4221 = vshrl.u32 %v4220, 7
  %v4222 = vsub.s32 1, %v4221
  %v4223 = vrot.slane %v3853, %v4222
  %v4224 = vlaneseq
  %v4225 = vshrl.u32 %v4224, 7
  %v4226 = vsub.s32 2, %v4225
  %v4227 = vrot.slane %v3853, %v4226
  %v4228 = vlaneseq
  %v4229 = vshrl.u32 %v4228, 7
  %v4230 = vsub.s32 3, %v4229
  %v4231 = vrot.slane %v3853, %v4230
  %v4232 = vlaneseq
  %v4233 = vshrl.u32 %v4232, 7
  %v4234 = vsub.s32 0, %v4233
  %v4235 = vrot.slane %v3855, %v4234
  %v4236 = vlaneseq
  %v4237 = vshrl.u32 %v4236, 7
  %v4238 = vsub.s32 1, %v4237
  %v4239 = vrot.slane %v3855, %v4238
  %v4240 = vlaneseq
  %v4241 = vshrl.u32 %v4240, 7
  %v4242 = vsub.s32 2, %v4241
  %v4243 = vrot.slane %v3855, %v4242
  %v4244 = vlaneseq
  %v4245 = vshrl.u32 %v4244, 7
  %v4246 = vsub.s32 3, %v4245
  %v4247 = vrot.slane %v3855, %v4246
  %v4248 = vlaneseq
  %v4249 = vshrl.u32 %v4248, 7
  %v4250 = vsub.s32 0, %v4249
  %v4251 = vrot.slane %v3898, %v4250
  %v4252 = vlaneseq
  %v4253 = vshrl.u32 %v4252, 7
  %v4254 = vsub.s32 1, %v4253
  %v4255 = vrot.slane %v3898, %v4254
  %v4256 = vlaneseq
  %v4257 = vshrl.u32 %v4256, 7
  %v4258 = vsub.s32 2, %v4257
  %v4259 = vrot.slane %v3898, %v4258
  %v4260 = vlaneseq
  %v4261 = vshrl.u32 %v4260, 7
  %v4262 = vsub.s32 3, %v4261
  %v4263 = vrot.slane %v3898, %v4262
  %v4264 = vlaneseq
  %v4265 = vshrl.u32 %v4264, 7
  %v4266 = vsub.s32 0, %v4265
  %v4267 = vrot.slane %v3912, %v4266
  %v4268 = vlaneseq
  %v4269 = vshrl.u32 %v4268, 7
  %v4270 = vsub.s32 1, %v4269
  %v4271 = vrot.slane %v3912, %v4270
  %v4272 = vlaneseq
  %v4273 = vshrl.u32 %v4272, 7
  %v4274 = vsub.s32 2, %v4273
  %v4275 = vrot.slane %v3912, %v4274
  %v4276 = vlaneseq
  %v4277 = vshrl.u32 %v4276, 7
  %v4278 = vsub.s32 3, %v4277
  %v4279 = vrot.slane %v3912, %v4278
  %v4280 = vlaneseq
  %v4281 = vshrl.u32 %v4280, 7
  %v4282 = vsub.s32 0, %v4281
  %v4283 = vrot.slane %v3920, %v4282
  %v4284 = vlaneseq
  %v4285 = vshrl.u32 %v4284, 7
  %v4286 = vsub.s32 1, %v4285
  %v4287 = vrot.slane %v3920, %v4286
  %v4288 = vlaneseq
  %v4289 = vshrl.u32 %v4288, 7
  %v4290 = vsub.s32 2, %v4289
  %v4291 = vrot.slane %v3920, %v4290
  %v4292 = vlaneseq
  %v4293 = vshrl.u32 %v4292, 7
  %v4294 = vsub.s32 3, %v4293
  %v4295 = vrot.slane %v3920, %v4294
  %v4296 = vlaneseq
  %v4297 = vshrl.u32 %v4296, 7
  %v4298 = vsub.s32 0, %v4297
  %v4299 = vrot.slane %v3922, %v4298
  %v4300 = vlaneseq
  %v4301 = vshrl.u32 %v4300, 7
  %v4302 = vsub.s32 1, %v4301
  %v4303 = vrot.slane %v3922, %v4302
  %v4304 = vlaneseq
  %v4305 = vshrl.u32 %v4304, 7
  %v4306 = vsub.s32 2, %v4305
  %v4307 = vrot.slane %v3922, %v4306
  %v4308 = vlaneseq
  %v4309 = vshrl.u32 %v4308, 7
  %v4310 = vsub.s32 3, %v4309
  %v4311 = vrot.slane %v3922, %v4310
  %v4312 = vlaneseq
  %v4313 = vshrl.u32 %v4312, 7
  %v4314 = vsub.s32 0, %v4313
  %v4315 = vrot.slane %v3905, %v4314
  %v4316 = vlaneseq
  %v4317 = vshrl.u32 %v4316, 7
  %v4318 = vsub.s32 1, %v4317
  %v4319 = vrot.slane %v3905, %v4318
  %v4320 = vlaneseq
  %v4321 = vshrl.u32 %v4320, 7
  %v4322 = vsub.s32 2, %v4321
  %v4323 = vrot.slane %v3905, %v4322
  %v4324 = vlaneseq
  %v4325 = vshrl.u32 %v4324, 7
  %v4326 = vsub.s32 3, %v4325
  %v4327 = vrot.slane %v3905, %v4326
  %v4328 = vlaneseq
  %v4329 = vshrl.u32 %v4328, 7
  %v4330 = vsub.s32 0, %v4329
  %v4331 = vrot.slane %v3919, %v4330
  %v4332 = vlaneseq
  %v4333 = vshrl.u32 %v4332, 7
  %v4334 = vsub.s32 1, %v4333
  %v4335 = vrot.slane %v3919, %v4334
  %v4336 = vlaneseq
  %v4337 = vshrl.u32 %v4336, 7
  %v4338 = vsub.s32 2, %v4337
  %v4339 = vrot.slane %v3919, %v4338
  %v4340 = vlaneseq
  %v4341 = vshrl.u32 %v4340, 7
  %v4342 = vsub.s32 3, %v4341
  %v4343 = vrot.slane %v3919, %v4342
  %v4344 = vlaneseq
  %v4345 = vshrl.u32 %v4344, 7
  %v4346 = vsub.s32 0, %v4345
  %v4347 = vrot.slane %v3921, %v4346
  %v4348 = vlaneseq
  %v4349 = vshrl.u32 %v4348, 7
  %v4350 = vsub.s32 1, %v4349
  %v4351 = vrot.slane %v3921, %v4350
  %v4352 = vlaneseq
  %v4353 = vshrl.u32 %v4352, 7
  %v4354 = vsub.s32 2, %v4353
  %v4355 = vrot.slane %v3921, %v4354
  %v4356 = vlaneseq
  %v4357 = vshrl.u32 %v4356, 7
  %v4358 = vsub.s32 3, %v4357
  %v4359 = vrot.slane %v3921, %v4358
  %v4360 = vlaneseq
  %v4361 = vshrl.u32 %v4360, 7
  %v4362 = vsub.s32 0, %v4361
  %v4363 = vrot.slane %v3923, %v4362
  %v4364 = vlaneseq
  %v4365 = vshrl.u32 %v4364, 7
  %v4366 = vsub.s32 1, %v4365
  %v4367 = vrot.slane %v3923, %v4366
  %v4368 = vlaneseq
  %v4369 = vshrl.u32 %v4368, 7
  %v4370 = vsub.s32 2, %v4369
  %v4371 = vrot.slane %v3923, %v4370
  %v4372 = vlaneseq
  %v4373 = vshrl.u32 %v4372, 7
  %v4374 = vsub.s32 3, %v4373
  %v4375 = vrot.slane %v3923, %v4374
  %v4376 = vlaneseq
  %v4377 = vshrl.u32 %v4376, 7
  %v4378 = vsub.s32 0, %v4377
  %v4379 = vrot.slane %v3966, %v4378
  %v4380 = vlaneseq
  %v4381 = vshrl.u32 %v4380, 7
  %v4382 = vsub.s32 1, %v4381
  %v4383 = vrot.slane %v3966, %v4382
  %v4384 = vlaneseq
  %v4385 = vshrl.u32 %v4384, 7
  %v4386 = vsub.s32 2, %v4385
  %v4387 = vrot.slane %v3966, %v4386
  %v4388 = vlaneseq
  %v4389 = vshrl.u32 %v4388, 7
  %v4390 = vsub.s32 3, %v4389
  %v4391 = vrot.slane %v3966, %v4390
  %v4392 = vlaneseq
  %v4393 = vshrl.u32 %v4392, 7
  %v4394 = vsub.s32 0, %v4393
  %v4395 = vrot.slane %v3980, %v4394
  %v4396 = vlaneseq
  %v4397 = vshrl.u32 %v4396, 7
  %v4398 = vsub.s32 1, %v4397
  %v4399 = vrot.slane %v3980, %v4398
  %v4400 = vlaneseq
  %v4401 = vshrl.u32 %v4400, 7
  %v4402 = vsub.s32 2, %v4401
  %v4403 = vrot.slane %v3980, %v4402
  %v4404 = vlaneseq
  %v4405 = vshrl.u32 %v4404, 7
  %v4406 = vsub.s32 3, %v4405
  %v4407 = vrot.slane %v3980, %v4406
  %v4408 = vlaneseq
  %v4409 = vshrl.u32 %v4408, 7
  %v4410 = vsub.s32 0, %v4409
  %v4411 = vrot.slane %v3988, %v4410
  %v4412 = vlaneseq
  %v4413 = vshrl.u32 %v4412, 7
  %v4414 = vsub.s32 1, %v4413
  %v4415 = vrot.slane %v3988, %v4414
  %v4416 = vlaneseq
  %v4417 = vshrl.u32 %v4416, 7
  %v4418 = vsub.s32 2, %v4417
  %v4419 = vrot.slane %v3988, %v4418
  %v4420 = vlaneseq
  %v4421 = vshrl.u32 %v4420, 7
  %v4422 = vsub.s32 3, %v4421
  %v4423 = vrot.slane %v3988, %v4422
  %v4424 = vlaneseq
  %v4425 = vshrl.u32 %v4424, 7
  %v4426 = vsub.s32 0, %v4425
  %v4427 = vrot.slane %v3990, %v4426
  %v4428 = vlaneseq
  %v4429 = vshrl.u32 %v4428, 7
  %v4430 = vsub.s32 1, %v4429
  %v4431 = vrot.slane %v3990, %v4430
  %v4432 = vlaneseq
  %v4433 = vshrl.u32 %v4432, 7
  %v4434 = vsub.s32 2, %v4433
  %v4435 = vrot.slane %v3990, %v4434
  %v4436 = vlaneseq
  %v4437 = vshrl.u32 %v4436, 7
  %v4438 = vsub.s32 3, %v4437
  %v4439 = vrot.slane %v3990, %v4438
  %v4440 = vlaneseq
  %v4441 = vshrl.u32 %v4440, 7
  %v4442 = vsub.s32 0, %v4441
  %v4443 = vrot.slane %v3973, %v4442
  %v4444 = vlaneseq
  %v4445 = vshrl.u32 %v4444, 7
  %v4446 = vsub.s32 1, %v4445
  %v4447 = vrot.slane %v3973, %v4446
  %v4448 = vlaneseq
  %v4449 = vshrl.u32 %v4448, 7
  %v4450 = vsub.s32 2, %v4449
  %v4451 = vrot.slane %v3973, %v4450
  %v4452 = vlaneseq
  %v4453 = vshrl.u32 %v4452, 7
  %v4454 = vsub.s32 3, %v4453
  %v4455 = vrot.slane %v3973, %v4454
  %v4456 = vlaneseq
  %v4457 = vshrl.u32 %v4456, 7
  %v4458 = vsub.s32 0, %v4457
  %v4459 = vrot.slane %v3987, %v4458
  %v4460 = vlaneseq
  %v4461 = vshrl.u32 %v4460, 7
  %v4462 = vsub.s32 1, %v4461
  %v4463 = vrot.slane %v3987, %v4462
  %v4464 = vlaneseq
  %v4465 = vshrl.u32 %v4464, 7
  %v4466 = vsub.s32 2, %v4465
  %v4467 = vrot.slane %v3987, %v4466
  %v4468 = vlaneseq
  %v4469 = vshrl.u32 %v4468, 7
  %v4470 = vsub.s32 3, %v4469
  %v4471 = vrot.slane %v3987, %v4470
  %v4472 = vlaneseq
  %v4473 = vshrl.u32 %v4472, 7
  %v4474 = vsub.s32 0, %v4473
  %v4475 = vrot.slane %v3989, %v4474
  %v4476 = vlaneseq
  %v4477 = vshrl.u32 %v4476, 7
  %v4478 = vsub.s32 1, %v4477
  %v4479 = vrot.slane %v3989, %v4478
  %v4480 = vlaneseq
  %v4481 = vshrl.u32 %v4480, 7
  %v4482 = vsub.s32 2, %v4481
  %v4483 = vrot.slane %v3989, %v4482
  %v4484 = vlaneseq
  %v4485 = vshrl.u32 %v4484, 7
  %v4486 = vsub.s32 3, %v4485
  %v4487 = vrot.slane %v3989, %v4486
  %v4488 = vlaneseq
  %v4489 = vshrl.u32 %v4488, 7
  %v4490 = vsub.s32 0, %v4489
  %v4491 = vrot.slane %v3991, %v4490
  %v4492 = vlaneseq
  %v4493 = vshrl.u32 %v4492, 7
  %v4494 = vsub.s32 1, %v4493
  %v4495 = vrot.slane %v3991, %v4494
  %v4496 = vlaneseq
  %v4497 = vshrl.u32 %v4496, 7
  %v4498 = vsub.s32 2, %v4497
  %v4499 = vrot.slane %v3991, %v4498
  %v4500 = vlaneseq
  %v4501 = vshrl.u32 %v4500, 7
  %v4502 = vsub.s32 3, %v4501
  %v4503 = vrot.slane %v3991, %v4502
  %v4632 = vadd.f32 %v2578, %v3995
  %v4633 = vadd.f32 %v2580, %v3999
  %v4634 = vadd.f32 %v2771, %v4003
  %v4635 = vadd.f32 %v2773, %v4007
  %v4636 = vadd.f32 %v2582, %v4011
  %v4637 = vadd.f32 %v2584, %v4015
  %v4638 = vadd.f32 %v2775, %v4019
  %v4639 = vadd.f32 %v2777, %v4023
  %v4640 = vadd.f32 %v2588, %v4027
  %v4641 = vadd.f32 %v2590, %v4031
  %v4642 = vadd.f32 %v2781, %v4035
  %v4643 = vadd.f32 %v2783, %v4039
  %v4644 = vadd.f32 %v2592, %v4043
  %v4645 = vadd.f32 %v2594, %v4047
  %v4646 = vadd.f32 %v2785, %v4051
  %v4647 = vadd.f32 %v2787, %v4055
  %v4648 = vadd.f32 %v2598, %v4059
  %v4649 = vadd.f32 %v2600, %v4063
  %v4650 = vadd.f32 %v2791, %v4067
  %v4651 = vadd.f32 %v2793, %v4071
  %v4652 = vadd.f32 %v2602, %v4075
  %v4653 = vadd.f32 %v2604, %v4079
  %v4654 = vadd.f32 %v2795, %v4083
  %v4655 = vadd.f32 %v2797, %v4087
  %v4656 = vadd.f32 %v2608, %v4091
  %v4657 = vadd.f32 %v2610, %v4095
  %v4658 = vadd.f32 %v2801, %v4099
  %v4659 = vadd.f32 %v2803, %v4103
  %v4660 = vadd.f32 %v2612, %v4107
  %v4661 = vadd.f32 %v2614, %v4111
  %v4662 = vadd.f32 %v2805, %v4115
  %v4663 = vadd.f32 %v2807, %v4119
  %v4664 = vadd.f32 %v2618, %v4123
  %v4665 = vadd.f32 %v2620, %v4127
  %v4666 = vadd.f32 %v2811, %v4131
  %v4667 = vadd.f32 %v2813, %v4135
  %v4668 = vadd.f32 %v2622, %v4139
  %v4669 = vadd.f32 %v2624, %v4143
  %v4670 = vadd.f32 %v2815, %v4147
  %v4671 = vadd.f32 %v2817, %v4151
  %v4672 = vadd.f32 %v2628, %v4155
  %v4673 = vadd.f32 %v2630, %v4159
  %v4674 = vadd.f32 %v2821, %v4163
  %v4675 = vadd.f32 %v2823, %v4167
  %v4676 = vadd.f32 %v2632, %v4171
  %v4677 = vadd.f32 %v2634, %v4175
  %v4678 = vadd.f32 %v2825, %v4179
  %v4679 = vadd.f32 %v2827, %v4183
  %v4680 = vadd.f32 %v2638, %v4187
  %v4681 = vadd.f32 %v2640, %v4191
  %v4682 = vadd.f32 %v2831, %v4195
  %v4683 = vadd.f32 %v2833, %v4199
  %v4684 = vadd.f32 %v2642, %v4203
  %v4685 = vadd.f32 %v2644, %v4207
  %v4686 = vadd.f32 %v2835, %v4211
  %v4687 = vadd.f32 %v2837, %v4215
  %v4688 = vadd.f32 %v2648, %v4219
  %v4689 = vadd.f32 %v2650, %v4223
  %v4690 = vadd.f32 %v2841, %v4227
  %v4691 = vadd.f32 %v2843, %v4231
  %v4692 = vadd.f32 %v2652, %v4235
  %v4693 = vadd.f32 %v2654, %v4239
  %v4694 = vadd.f32 %v2845, %v4243
  %v4695 = vadd.f32 %v2847, %v4247
  %v4696 = vadd.f32 %v2658, %v4251
  %v4697 = vadd.f32 %v2660, %v4255
  %v4698 = vadd.f32 %v2851, %v4259
  %v4699 = vadd.f32 %v2853, %v4263
  %v4700 = vadd.f32 %v2662, %v4267
  %v4701 = vadd.f32 %v2664, %v4271
  %v4702 = vadd.f32 %v2855, %v4275
  %v4703 = vadd.f32 %v2857, %v4279
  %v4704 = vadd.f32 %v2668, %v4283
  %v4705 = vadd.f32 %v2670, %v4287
  %v4706 = vadd.f32 %v2861, %v4291
  %v4707 = vadd.f32 %v2863, %v4295
  %v4708 = vadd.f32 %v2672, %v4299
  %v4709 = vadd.f32 %v2674, %v4303
  %v4710 = vadd.f32 %v2865, %v4307
  %v4711 = vadd.f32 %v2867, %v4311
  %v4712 = vadd.f32 %v2678, %v4315
  %v4713 = vadd.f32 %v2680, %v4319
  %v4714 = vadd.f32 %v2871, %v4323
  %v4715 = vadd.f32 %v2873, %v4327
  %v4716 = vadd.f32 %v2682, %v4331
  %v4717 = vadd.f32 %v2684, %v4335
  %v4718 = vadd.f32 %v2875, %v4339
  %v4719 = vadd.f32 %v2877, %v4343
  %v4720 = vadd.f32 %v2688, %v4347
  %v4721 = vadd.f32 %v2690, %v4351
  %v4722 = vadd.f32 %v2881, %v4355
  %v4723 = vadd.f32 %v2883, %v4359
  %v4724 = vadd.f32 %v2692, %v4363
  %v4725 = vadd.f32 %v2694, %v4367
  %v4726 = vadd.f32 %v2885, %v4371
  %v4727 = vadd.f32 %v2887, %v4375
  %v4728 = vadd.f32 %v2698, %v4379
  %v4729 = vadd.f32 %v2700, %v4383
  %v4730 = vadd.f32 %v2891, %v4387
  %v4731 = vadd.f32 %v2893, %v4391
  %v4732 = vadd.f32 %v2702, %v4395
  %v4733 = vadd.f32 %v2704, %v4399
  %v4734 = vadd.f32 %v2895, %v4403
  %v4735 = vadd.f32 %v2897, %v4407
  %v4736 = vadd.f32 %v2708, %v4411
  %v4737 = vadd.f32 %v2710, %v4415
  %v4738 = vadd.f32 %v2901, %v4419
  %v4739 = vadd.f32 %v2903, %v4423
  %v4740 = vadd.f32 %v2712, %v4427
  %v4741 = vadd.f32 %v2714, %v4431
  %v4742 = vadd.f32 %v2905, %v4435
  %v4743 = vadd.f32 %v2907, %v4439
  %v4744 = vadd.f32 %v2718, %v4443
  %v4745 = vadd.f32 %v2720, %v4447
  %v4746 = vadd.f32 %v2911, %v4451
  %v4747 = vadd.f32 %v2913, %v4455
  %v4748 = vadd.f32 %v2722, %v4459
  %v4749 = vadd.f32 %v2724, %v4463
  %v4750 = vadd.f32 %v2915, %v4467
  %v4751 = vadd.f32 %v2917, %v4471
  %v4752 = vadd.f32 %v2728, %v4475
  %v4753 = vadd.f32 %v2730, %v4479
  %v4754 = vadd.f32 %v2921, %v4483
  %v4755 = vadd.f32 %v2923, %v4487
  %v4756 = vadd.f32 %v2732, %v4491
  %v4757 = vadd.f32 %v2734, %v4495
  %v4758 = vadd.f32 %v2925, %v4499
  %v4759 = vadd.f32 %v2927, %v4503
  %v4760 = vld [vmem:[%s11] sm:$0xf]
  %v4762 = vlaneseq
  %v4763 = vshrl.u32 %v4762, 7
  %v4764 = vsub.s32 0, %v4763
  %v4765 = vrot.slane %v4760, %v4764
  %v4766 = vlaneseq
  %v4767 = vshrl.u32 %v4766, 7
  %v4768 = vsub.s32 1, %v4767
  %v4769 = vrot.slane %v4760, %v4768
  %v4770 = vlaneseq
  %v4771 = vshrl.u32 %v4770, 7
  %v4772 = vsub.s32 2, %v4771
  %v4773 = vrot.slane %v4760, %v4772
  %v4774 = vlaneseq
  %v4775 = vshrl.u32 %v4774, 7
  %v4776 = vsub.s32 3, %v4775
  %v4777 = vrot.slane %v4760, %v4776
  %v4782 = vmul.f32 %v4632, %v4765
  %v4783 = vmul.f32 %v4633, %v4769
  %v4784 = vmul.f32 %v4634, %v4773
  %v4785 = vmul.f32 %v4635, %v4777
  %v4786 = vmul.f32 %v4636, %v4765
  %v4787 = vmul.f32 %v4637, %v4769
  %v4788 = vmul.f32 %v4638, %v4773
  %v4789 = vmul.f32 %v4639, %v4777
  %v4790 = vmul.f32 %v4640, %v4765
  %v4791 = vmul.f32 %v4641, %v4769
  %v4792 = vmul.f32 %v4642, %v4773
  %v4793 = vmul.f32 %v4643, %v4777
  %v4794 = vmul.f32 %v4644, %v4765
  %v4795 = vmul.f32 %v4645, %v4769
  %v4796 = vmul.f32 %v4646, %v4773
  %v4797 = vmul.f32 %v4647, %v4777
  %v4798 = vmul.f32 %v4648, %v4765
  %v4799 = vmul.f32 %v4649, %v4769
  %v4800 = vmul.f32 %v4650, %v4773
  %v4801 = vmul.f32 %v4651, %v4777
  %v4802 = vmul.f32 %v4652, %v4765
  %v4803 = vmul.f32 %v4653, %v4769
  %v4804 = vmul.f32 %v4654, %v4773
  %v4805 = vmul.f32 %v4655, %v4777
  %v4806 = vmul.f32 %v4656, %v4765
  %v4807 = vmul.f32 %v4657, %v4769
  %v4808 = vmul.f32 %v4658, %v4773
  %v4809 = vmul.f32 %v4659, %v4777
  %v4810 = vmul.f32 %v4660, %v4765
  %v4811 = vmul.f32 %v4661, %v4769
  %v4812 = vmul.f32 %v4662, %v4773
  %v4813 = vmul.f32 %v4663, %v4777
  %v4814 = vmul.f32 %v4664, %v4765
  %v4815 = vmul.f32 %v4665, %v4769
  %v4816 = vmul.f32 %v4666, %v4773
  %v4817 = vmul.f32 %v4667, %v4777
  %v4818 = vmul.f32 %v4668, %v4765
  %v4819 = vmul.f32 %v4669, %v4769
  %v4820 = vmul.f32 %v4670, %v4773
  %v4821 = vmul.f32 %v4671, %v4777
  %v4822 = vmul.f32 %v4672, %v4765
  %v4823 = vmul.f32 %v4673, %v4769
  %v4824 = vmul.f32 %v4674, %v4773
  %v4825 = vmul.f32 %v4675, %v4777
  %v4826 = vmul.f32 %v4676, %v4765
  %v4827 = vmul.f32 %v4677, %v4769
  %v4828 = vmul.f32 %v4678, %v4773
  %v4829 = vmul.f32 %v4679, %v4777
  %v4830 = vmul.f32 %v4680, %v4765
  %v4831 = vmul.f32 %v4681, %v4769
  %v4832 = vmul.f32 %v4682, %v4773
  %v4833 = vmul.f32 %v4683, %v4777
  %v4834 = vmul.f32 %v4684, %v4765
  %v4835 = vmul.f32 %v4685, %v4769
  %v4836 = vmul.f32 %v4686, %v4773
  %v4837 = vmul.f32 %v4687, %v4777
  %v4838 = vmul.f32 %v4688, %v4765
  %v4839 = vmul.f32 %v4689, %v4769
  %v4840 = vmul.f32 %v4690, %v4773
  %v4841 = vmul.f32 %v4691, %v4777
  %v4842 = vmul.f32 %v4692, %v4765
  %v4843 = vmul.f32 %v4693, %v4769
  %v4844 = vmul.f32 %v4694, %v4773
  %v4845 = vmul.f32 %v4695, %v4777
  %v4846 = vmul.f32 %v4696, %v4765
  %v4847 = vmul.f32 %v4697, %v4769
  %v4848 = vmul.f32 %v4698, %v4773
  %v4849 = vmul.f32 %v4699, %v4777
  %v4850 = vmul.f32 %v4700, %v4765
  %v4851 = vmul.f32 %v4701, %v4769
  %v4852 = vmul.f32 %v4702, %v4773
  %v4853 = vmul.f32 %v4703, %v4777
  %v4854 = vmul.f32 %v4704, %v4765
  %v4855 = vmul.f32 %v4705, %v4769
  %v4856 = vmul.f32 %v4706, %v4773
  %v4857 = vmul.f32 %v4707, %v4777
  %v4858 = vmul.f32 %v4708, %v4765
  %v4859 = vmul.f32 %v4709, %v4769
  %v4860 = vmul.f32 %v4710, %v4773
  %v4861 = vmul.f32 %v4711, %v4777
  %v4862 = vmul.f32 %v4712, %v4765
  %v4863 = vmul.f32 %v4713, %v4769
  %v4864 = vmul.f32 %v4714, %v4773
  %v4865 = vmul.f32 %v4715, %v4777
  %v4866 = vmul.f32 %v4716, %v4765
  %v4867 = vmul.f32 %v4717, %v4769
  %v4868 = vmul.f32 %v4718, %v4773
  %v4869 = vmul.f32 %v4719, %v4777
  %v4870 = vmul.f32 %v4720, %v4765
  %v4871 = vmul.f32 %v4721, %v4769
  %v4872 = vmul.f32 %v4722, %v4773
  %v4873 = vmul.f32 %v4723, %v4777
  %v4874 = vmul.f32 %v4724, %v4765
  %v4875 = vmul.f32 %v4725, %v4769
  %v4876 = vmul.f32 %v4726, %v4773
  %v4877 = vmul.f32 %v4727, %v4777
  %v4878 = vmul.f32 %v4728, %v4765
  %v4879 = vmul.f32 %v4729, %v4769
  %v4880 = vmul.f32 %v4730, %v4773
  %v4881 = vmul.f32 %v4731, %v4777
  %v4882 = vmul.f32 %v4732, %v4765
  %v4883 = vmul.f32 %v4733, %v4769
  %v4884 = vmul.f32 %v4734, %v4773
  %v4885 = vmul.f32 %v4735, %v4777
  %v4886 = vmul.f32 %v4736, %v4765
  %v4887 = vmul.f32 %v4737, %v4769
  %v4888 = vmul.f32 %v4738, %v4773
  %v4889 = vmul.f32 %v4739, %v4777
  %v4890 = vmul.f32 %v4740, %v4765
  %v4891 = vmul.f32 %v4741, %v4769
  %v4892 = vmul.f32 %v4742, %v4773
  %v4893 = vmul.f32 %v4743, %v4777
  %v4894 = vmul.f32 %v4744, %v4765
  %v4895 = vmul.f32 %v4745, %v4769
  %v4896 = vmul.f32 %v4746, %v4773
  %v4897 = vmul.f32 %v4747, %v4777
  %v4898 = vmul.f32 %v4748, %v4765
  %v4899 = vmul.f32 %v4749, %v4769
  %v4900 = vmul.f32 %v4750, %v4773
  %v4901 = vmul.f32 %v4751, %v4777
  %v4902 = vmul.f32 %v4752, %v4765
  %v4903 = vmul.f32 %v4753, %v4769
  %v4904 = vmul.f32 %v4754, %v4773
  %v4905 = vmul.f32 %v4755, %v4777
  %v4906 = vmul.f32 %v4756, %v4765
  %v4907 = vmul.f32 %v4757, %v4769
  %v4908 = vmul.f32 %v4758, %v4773
  %v4909 = vmul.f32 %v4759, %v4777
  %v4910 = vld [vmem:[%s12] sm:$0xf]
  %v4912 = vlaneseq
  %v4913 = vshrl.u32 %v4912, 7
  %v4914 = vsub.s32 0, %v4913
  %v4915 = vrot.slane %v4910, %v4914
  %v4916 = vlaneseq
  %v4917 = vshrl.u32 %v4916, 7
  %v4918 = vsub.s32 1, %v4917
  %v4919 = vrot.slane %v4910, %v4918
  %v4920 = vlaneseq
  %v4921 = vshrl.u32 %v4920, 7
  %v4922 = vsub.s32 2, %v4921
  %v4923 = vrot.slane %v4910, %v4922
  %v4924 = vlaneseq
  %v4925 = vshrl.u32 %v4924, 7
  %v4926 = vsub.s32 3, %v4925
  %v4927 = vrot.slane %v4910, %v4926
  %v4932 = vadd.f32 %v4782, %v4915
  %v4933 = vadd.f32 %v4783, %v4919
  %v4934 = vadd.f32 %v4784, %v4923
  %v4935 = vadd.f32 %v4785, %v4927
  %v4936 = vadd.f32 %v4786, %v4915
  %v4937 = vadd.f32 %v4787, %v4919
  %v4938 = vadd.f32 %v4788, %v4923
  %v4939 = vadd.f32 %v4789, %v4927
  %v4940 = vadd.f32 %v4790, %v4915
  %v4941 = vadd.f32 %v4791, %v4919
  %v4942 = vadd.f32 %v4792, %v4923
  %v4943 = vadd.f32 %v4793, %v4927
  %v4944 = vadd.f32 %v4794, %v4915
  %v4945 = vadd.f32 %v4795, %v4919
  %v4946 = vadd.f32 %v4796, %v4923
  %v4947 = vadd.f32 %v4797, %v4927
  %v4948 = vadd.f32 %v4798, %v4915
  %v4949 = vadd.f32 %v4799, %v4919
  %v4950 = vadd.f32 %v4800, %v4923
  %v4951 = vadd.f32 %v4801, %v4927
  %v4952 = vadd.f32 %v4802, %v4915
  %v4953 = vadd.f32 %v4803, %v4919
  %v4954 = vadd.f32 %v4804, %v4923
  %v4955 = vadd.f32 %v4805, %v4927
  %v4956 = vadd.f32 %v4806, %v4915
  %v4957 = vadd.f32 %v4807, %v4919
  %v4958 = vadd.f32 %v4808, %v4923
  %v4959 = vadd.f32 %v4809, %v4927
  %v4960 = vadd.f32 %v4810, %v4915
  %v4961 = vadd.f32 %v4811, %v4919
  %v4962 = vadd.f32 %v4812, %v4923
  %v4963 = vadd.f32 %v4813, %v4927
  %v4964 = vadd.f32 %v4814, %v4915
  %v4965 = vadd.f32 %v4815, %v4919
  %v4966 = vadd.f32 %v4816, %v4923
  %v4967 = vadd.f32 %v4817, %v4927
  %v4968 = vadd.f32 %v4818, %v4915
  %v4969 = vadd.f32 %v4819, %v4919
  %v4970 = vadd.f32 %v4820, %v4923
  %v4971 = vadd.f32 %v4821, %v4927
  %v4972 = vadd.f32 %v4822, %v4915
  %v4973 = vadd.f32 %v4823, %v4919
  %v4974 = vadd.f32 %v4824, %v4923
  %v4975 = vadd.f32 %v4825, %v4927
  %v4976 = vadd.f32 %v4826, %v4915
  %v4977 = vadd.f32 %v4827, %v4919
  %v4978 = vadd.f32 %v4828, %v4923
  %v4979 = vadd.f32 %v4829, %v4927
  %v4980 = vadd.f32 %v4830, %v4915
  %v4981 = vadd.f32 %v4831, %v4919
  %v4982 = vadd.f32 %v4832, %v4923
  %v4983 = vadd.f32 %v4833, %v4927
  %v4984 = vadd.f32 %v4834, %v4915
  %v4985 = vadd.f32 %v4835, %v4919
  %v4986 = vadd.f32 %v4836, %v4923
  %v4987 = vadd.f32 %v4837, %v4927
  %v4988 = vadd.f32 %v4838, %v4915
  %v4989 = vadd.f32 %v4839, %v4919
  %v4990 = vadd.f32 %v4840, %v4923
  %v4991 = vadd.f32 %v4841, %v4927
  %v4992 = vadd.f32 %v4842, %v4915
  %v4993 = vadd.f32 %v4843, %v4919
  %v4994 = vadd.f32 %v4844, %v4923
  %v4995 = vadd.f32 %v4845, %v4927
  %v4996 = vadd.f32 %v4846, %v4915
  %v4997 = vadd.f32 %v4847, %v4919
  %v4998 = vadd.f32 %v4848, %v4923
  %v4999 = vadd.f32 %v4849, %v4927
  %v5000 = vadd.f32 %v4850, %v4915
  %v5001 = vadd.f32 %v4851, %v4919
  %v5002 = vadd.f32 %v4852, %v4923
  %v5003 = vadd.f32 %v4853, %v4927
  %v5004 = vadd.f32 %v4854, %v4915
  %v5005 = vadd.f32 %v4855, %v4919
  %v5006 = vadd.f32 %v4856, %v4923
  %v5007 = vadd.f32 %v4857, %v4927
  %v5008 = vadd.f32 %v4858, %v4915
  %v5009 = vadd.f32 %v4859, %v4919
  %v5010 = vadd.f32 %v4860, %v4923
  %v5011 = vadd.f32 %v4861, %v4927
  %v5012 = vadd.f32 %v4862, %v4915
  %v5013 = vadd.f32 %v4863, %v4919
  %v5014 = vadd.f32 %v4864, %v4923
  %v5015 = vadd.f32 %v4865, %v4927
  %v5016 = vadd.f32 %v4866, %v4915
  %v5017 = vadd.f32 %v4867, %v4919
  %v5018 = vadd.f32 %v4868, %v4923
  %v5019 = vadd.f32 %v4869, %v4927
  %v5020 = vadd.f32 %v4870, %v4915
  %v5021 = vadd.f32 %v4871, %v4919
  %v5022 = vadd.f32 %v4872, %v4923
  %v5023 = vadd.f32 %v4873, %v4927
  %v5024 = vadd.f32 %v4874, %v4915
  %v5025 = vadd.f32 %v4875, %v4919
  %v5026 = vadd.f32 %v4876, %v4923
  %v5027 = vadd.f32 %v4877, %v4927
  %v5028 = vadd.f32 %v4878, %v4915
  %v5029 = vadd.f32 %v4879, %v4919
  %v5030 = vadd.f32 %v4880, %v4923
  %v5031 = vadd.f32 %v4881, %v4927
  %v5032 = vadd.f32 %v4882, %v4915
  %v5033 = vadd.f32 %v4883, %v4919
  %v5034 = vadd.f32 %v4884, %v4923
  %v5035 = vadd.f32 %v4885, %v4927
  %v5036 = vadd.f32 %v4886, %v4915
  %v5037 = vadd.f32 %v4887, %v4919
  %v5038 = vadd.f32 %v4888, %v4923
  %v5039 = vadd.f32 %v4889, %v4927
  %v5040 = vadd.f32 %v4890, %v4915
  %v5041 = vadd.f32 %v4891, %v4919
  %v5042 = vadd.f32 %v4892, %v4923
  %v5043 = vadd.f32 %v4893, %v4927
  %v5044 = vadd.f32 %v4894, %v4915
  %v5045 = vadd.f32 %v4895, %v4919
  %v5046 = vadd.f32 %v4896, %v4923
  %v5047 = vadd.f32 %v4897, %v4927
  %v5048 = vadd.f32 %v4898, %v4915
  %v5049 = vadd.f32 %v4899, %v4919
  %v5050 = vadd.f32 %v4900, %v4923
  %v5051 = vadd.f32 %v4901, %v4927
  %v5052 = vadd.f32 %v4902, %v4915
  %v5053 = vadd.f32 %v4903, %v4919
  %v5054 = vadd.f32 %v4904, %v4923
  %v5055 = vadd.f32 %v4905, %v4927
  %v5056 = vadd.f32 %v4906, %v4915
  %v5057 = vadd.f32 %v4907, %v4919
  %v5058 = vadd.f32 %v4908, %v4923
  %v5059 = vadd.f32 %v4909, %v4927
  %v5060 = vmax.f32 %v4932, 0.0
  %v5061 = vmax.f32 %v4933, 0.0
  %v5062 = vmax.f32 %v4934, 0.0
  %v5063 = vmax.f32 %v4935, 0.0
  %v5064 = vmax.f32 %v4936, 0.0
  %v5065 = vmax.f32 %v4937, 0.0
  %v5066 = vmax.f32 %v4938, 0.0
  %v5067 = vmax.f32 %v4939, 0.0
  %v5068 = vmax.f32 %v4940, 0.0
  %v5069 = vmax.f32 %v4941, 0.0
  %v5070 = vmax.f32 %v4942, 0.0
  %v5071 = vmax.f32 %v4943, 0.0
  %v5072 = vmax.f32 %v4944, 0.0
  %v5073 = vmax.f32 %v4945, 0.0
  %v5074 = vmax.f32 %v4946, 0.0
  %v5075 = vmax.f32 %v4947, 0.0
  %v5076 = vmax.f32 %v4948, 0.0
  %v5077 = vmax.f32 %v4949, 0.0
  %v5078 = vmax.f32 %v4950, 0.0
  %v5079 = vmax.f32 %v4951, 0.0
  %v5080 = vmax.f32 %v4952, 0.0
  %v5081 = vmax.f32 %v4953, 0.0
  %v5082 = vmax.f32 %v4954, 0.0
  %v5083 = vmax.f32 %v4955, 0.0
  %v5084 = vmax.f32 %v4956, 0.0
  %v5085 = vmax.f32 %v4957, 0.0
  %v5086 = vmax.f32 %v4958, 0.0
  %v5087 = vmax.f32 %v4959, 0.0
  %v5088 = vmax.f32 %v4960, 0.0
  %v5089 = vmax.f32 %v4961, 0.0
  %v5090 = vmax.f32 %v4962, 0.0
  %v5091 = vmax.f32 %v4963, 0.0
  %v5092 = vmax.f32 %v4964, 0.0
  %v5093 = vmax.f32 %v4965, 0.0
  %v5094 = vmax.f32 %v4966, 0.0
  %v5095 = vmax.f32 %v4967, 0.0
  %v5096 = vmax.f32 %v4968, 0.0
  %v5097 = vmax.f32 %v4969, 0.0
  %v5098 = vmax.f32 %v4970, 0.0
  %v5099 = vmax.f32 %v4971, 0.0
  %v5100 = vmax.f32 %v4972, 0.0
  %v5101 = vmax.f32 %v4973, 0.0
  %v5102 = vmax.f32 %v4974, 0.0
  %v5103 = vmax.f32 %v4975, 0.0
  %v5104 = vmax.f32 %v4976, 0.0
  %v5105 = vmax.f32 %v4977, 0.0
  %v5106 = vmax.f32 %v4978, 0.0
  %v5107 = vmax.f32 %v4979, 0.0
  %v5108 = vmax.f32 %v4980, 0.0
  %v5109 = vmax.f32 %v4981, 0.0
  %v5110 = vmax.f32 %v4982, 0.0
  %v5111 = vmax.f32 %v4983, 0.0
  %v5112 = vmax.f32 %v4984, 0.0
  %v5113 = vmax.f32 %v4985, 0.0
  %v5114 = vmax.f32 %v4986, 0.0
  %v5115 = vmax.f32 %v4987, 0.0
  %v5116 = vmax.f32 %v4988, 0.0
  %v5117 = vmax.f32 %v4989, 0.0
  %v5118 = vmax.f32 %v4990, 0.0
  %v5119 = vmax.f32 %v4991, 0.0
  %v5120 = vmax.f32 %v4992, 0.0
  %v5121 = vmax.f32 %v4993, 0.0
  %v5122 = vmax.f32 %v4994, 0.0
  %v5123 = vmax.f32 %v4995, 0.0
  %v5124 = vmax.f32 %v4996, 0.0
  %v5125 = vmax.f32 %v4997, 0.0
  %v5126 = vmax.f32 %v4998, 0.0
  %v5127 = vmax.f32 %v4999, 0.0
  %v5128 = vmax.f32 %v5000, 0.0
  %v5129 = vmax.f32 %v5001, 0.0
  %v5130 = vmax.f32 %v5002, 0.0
  %v5131 = vmax.f32 %v5003, 0.0
  %v5132 = vmax.f32 %v5004, 0.0
  %v5133 = vmax.f32 %v5005, 0.0
  %v5134 = vmax.f32 %v5006, 0.0
  %v5135 = vmax.f32 %v5007, 0.0
  %v5136 = vmax.f32 %v5008, 0.0
  %v5137 = vmax.f32 %v5009, 0.0
  %v5138 = vmax.f32 %v5010, 0.0
  %v5139 = vmax.f32 %v5011, 0.0
  %v5140 = vmax.f32 %v5012, 0.0
  %v5141 = vmax.f32 %v5013, 0.0
  %v5142 = vmax.f32 %v5014, 0.0
  %v5143 = vmax.f32 %v5015, 0.0
  %v5144 = vmax.f32 %v5016, 0.0
  %v5145 = vmax.f32 %v5017, 0.0
  %v5146 = vmax.f32 %v5018, 0.0
  %v5147 = vmax.f32 %v5019, 0.0
  %v5148 = vmax.f32 %v5020, 0.0
  %v5149 = vmax.f32 %v5021, 0.0
  %v5150 = vmax.f32 %v5022, 0.0
  %v5151 = vmax.f32 %v5023, 0.0
  %v5152 = vmax.f32 %v5024, 0.0
  %v5153 = vmax.f32 %v5025, 0.0
  %v5154 = vmax.f32 %v5026, 0.0
  %v5155 = vmax.f32 %v5027, 0.0
  %v5156 = vmax.f32 %v5028, 0.0
  %v5157 = vmax.f32 %v5029, 0.0
  %v5158 = vmax.f32 %v5030, 0.0
  %v5159 = vmax.f32 %v5031, 0.0
  %v5160 = vmax.f32 %v5032, 0.0
  %v5161 = vmax.f32 %v5033, 0.0
  %v5162 = vmax.f32 %v5034, 0.0
  %v5163 = vmax.f32 %v5035, 0.0
  %v5164 = vmax.f32 %v5036, 0.0
  %v5165 = vmax.f32 %v5037, 0.0
  %v5166 = vmax.f32 %v5038, 0.0
  %v5167 = vmax.f32 %v5039, 0.0
  %v5168 = vmax.f32 %v5040, 0.0
  %v5169 = vmax.f32 %v5041, 0.0
  %v5170 = vmax.f32 %v5042, 0.0
  %v5171 = vmax.f32 %v5043, 0.0
  %v5172 = vmax.f32 %v5044, 0.0
  %v5173 = vmax.f32 %v5045, 0.0
  %v5174 = vmax.f32 %v5046, 0.0
  %v5175 = vmax.f32 %v5047, 0.0
  %v5176 = vmax.f32 %v5048, 0.0
  %v5177 = vmax.f32 %v5049, 0.0
  %v5178 = vmax.f32 %v5050, 0.0
  %v5179 = vmax.f32 %v5051, 0.0
  %v5180 = vmax.f32 %v5052, 0.0
  %v5181 = vmax.f32 %v5053, 0.0
  %v5182 = vmax.f32 %v5054, 0.0
  %v5183 = vmax.f32 %v5055, 0.0
  %v5184 = vmax.f32 %v5056, 0.0
  %v5185 = vmax.f32 %v5057, 0.0
  %v5186 = vmax.f32 %v5058, 0.0
  %v5187 = vmax.f32 %v5059, 0.0
  %v5188 = vpack.c.bf16 %v5064, %v5060
  %v5189 = vpack.c.bf16 %v5065, %v5061
  %v5190 = vpack.c.bf16 %v5066, %v5062
  %v5191 = vpack.c.bf16 %v5067, %v5063
  %v5192 = vpack.c.bf16 %v5072, %v5068
  %v5193 = vpack.c.bf16 %v5073, %v5069
  %v5194 = vpack.c.bf16 %v5074, %v5070
  %v5195 = vpack.c.bf16 %v5075, %v5071
  %v5196 = vpack.c.bf16 %v5080, %v5076
  %v5197 = vpack.c.bf16 %v5081, %v5077
  %v5198 = vpack.c.bf16 %v5082, %v5078
  %v5199 = vpack.c.bf16 %v5083, %v5079
  %v5200 = vpack.c.bf16 %v5088, %v5084
  %v5201 = vpack.c.bf16 %v5089, %v5085
  %v5202 = vpack.c.bf16 %v5090, %v5086
  %v5203 = vpack.c.bf16 %v5091, %v5087
  %v5204 = vpack.c.bf16 %v5096, %v5092
  %v5205 = vpack.c.bf16 %v5097, %v5093
  %v5206 = vpack.c.bf16 %v5098, %v5094
  %v5207 = vpack.c.bf16 %v5099, %v5095
  %v5208 = vpack.c.bf16 %v5104, %v5100
  %v5209 = vpack.c.bf16 %v5105, %v5101
  %v5210 = vpack.c.bf16 %v5106, %v5102
  %v5211 = vpack.c.bf16 %v5107, %v5103
  %v5212 = vpack.c.bf16 %v5112, %v5108
  %v5213 = vpack.c.bf16 %v5113, %v5109
  %v5214 = vpack.c.bf16 %v5114, %v5110
  %v5215 = vpack.c.bf16 %v5115, %v5111
  %v5216 = vpack.c.bf16 %v5120, %v5116
  %v5217 = vpack.c.bf16 %v5121, %v5117
  %v5218 = vpack.c.bf16 %v5122, %v5118
  %v5219 = vpack.c.bf16 %v5123, %v5119
  %v5220 = vpack.c.bf16 %v5128, %v5124
  %v5221 = vpack.c.bf16 %v5129, %v5125
  %v5222 = vpack.c.bf16 %v5130, %v5126
  %v5223 = vpack.c.bf16 %v5131, %v5127
  %v5224 = vpack.c.bf16 %v5136, %v5132
  %v5225 = vpack.c.bf16 %v5137, %v5133
  %v5226 = vpack.c.bf16 %v5138, %v5134
  %v5227 = vpack.c.bf16 %v5139, %v5135
  %v5228 = vpack.c.bf16 %v5144, %v5140
  %v5229 = vpack.c.bf16 %v5145, %v5141
  %v5230 = vpack.c.bf16 %v5146, %v5142
  %v5231 = vpack.c.bf16 %v5147, %v5143
  %v5232 = vpack.c.bf16 %v5152, %v5148
  %v5233 = vpack.c.bf16 %v5153, %v5149
  %v5234 = vpack.c.bf16 %v5154, %v5150
  %v5235 = vpack.c.bf16 %v5155, %v5151
  %v5236 = vpack.c.bf16 %v5160, %v5156
  %v5237 = vpack.c.bf16 %v5161, %v5157
  %v5238 = vpack.c.bf16 %v5162, %v5158
  %v5239 = vpack.c.bf16 %v5163, %v5159
  %v5240 = vpack.c.bf16 %v5168, %v5164
  %v5241 = vpack.c.bf16 %v5169, %v5165
  %v5242 = vpack.c.bf16 %v5170, %v5166
  %v5243 = vpack.c.bf16 %v5171, %v5167
  %v5244 = vpack.c.bf16 %v5176, %v5172
  %v5245 = vpack.c.bf16 %v5177, %v5173
  %v5246 = vpack.c.bf16 %v5178, %v5174
  %v5247 = vpack.c.bf16 %v5179, %v5175
  %v5248 = vpack.c.bf16 %v5184, %v5180
  %v5249 = vpack.c.bf16 %v5185, %v5181
  %v5250 = vpack.c.bf16 %v5186, %v5182
  %v5251 = vpack.c.bf16 %v5187, %v5183
  %v5252 = vld [vmem:[%s13] sm:$0xf]
  %v5253 = vld [vmem:[%s13 + $0x4] sm:$0xf]
  %v5254 = vld [vmem:[%s13 + $0x8] sm:$0xf]
  %v5255 = vld [vmem:[%s13 + $0xc] sm:$0xf]
  %v5256 = vld [vmem:[%s13 + $0x10] sm:$0xf]
  %v5257 = vld [vmem:[%s13 + $0x14] sm:$0xf]
  %v5258 = vld [vmem:[%s13 + $0x18] sm:$0xf]
  %v5259 = vld [vmem:[%s13 + $0x1c] sm:$0xf]
  %v5260 = vld [vmem:[%s13 + $0x20] sm:$0xf]
  %v5261 = vld [vmem:[%s13 + $0x24] sm:$0xf]
  %v5262 = vld [vmem:[%s13 + $0x28] sm:$0xf]
  %v5263 = vld [vmem:[%s13 + $0x2c] sm:$0xf]
  %v5264 = vld [vmem:[%s13 + $0x30] sm:$0xf]
  %v5265 = vld [vmem:[%s13 + $0x34] sm:$0xf]
  %v5266 = vld [vmem:[%s13 + $0x38] sm:$0xf]
  %v5267 = vld [vmem:[%s13 + $0x3c] sm:$0xf]
  %v5268 = vld [vmem:[%s13 + $0x40] sm:$0xf]
  %v5269 = vld [vmem:[%s13 + $0x44] sm:$0xf]
  %v5270 = vld [vmem:[%s13 + $0x48] sm:$0xf]
  %v5271 = vld [vmem:[%s13 + $0x4c] sm:$0xf]
  %v5272 = vld [vmem:[%s13 + $0x50] sm:$0xf]
  %v5273 = vld [vmem:[%s13 + $0x54] sm:$0xf]
  %v5274 = vld [vmem:[%s13 + $0x58] sm:$0xf]
  %v5275 = vld [vmem:[%s13 + $0x5c] sm:$0xf]
  %v5276 = vld [vmem:[%s13 + $0x60] sm:$0xf]
  %v5277 = vld [vmem:[%s13 + $0x64] sm:$0xf]
  %v5278 = vld [vmem:[%s13 + $0x68] sm:$0xf]
  %v5279 = vld [vmem:[%s13 + $0x6c] sm:$0xf]
  %v5280 = vld [vmem:[%s13 + $0x70] sm:$0xf]
  %v5281 = vld [vmem:[%s13 + $0x74] sm:$0xf]
  %v5282 = vld [vmem:[%s13 + $0x78] sm:$0xf]
  %v5283 = vld [vmem:[%s13 + $0x7c] sm:$0xf]
  %v5284 = vld [vmem:[%s13 + $0x80] sm:$0xf]
  %v5285 = vld [vmem:[%s13 + $0x84] sm:$0xf]
  %v5286 = vld [vmem:[%s13 + $0x88] sm:$0xf]
  %v5287 = vld [vmem:[%s13 + $0x8c] sm:$0xf]
  %v5288 = vld [vmem:[%s13 + $0x90] sm:$0xf]
  %v5289 = vld [vmem:[%s13 + $0x94] sm:$0xf]
  %v5290 = vld [vmem:[%s13 + $0x98] sm:$0xf]
  %v5291 = vld [vmem:[%s13 + $0x9c] sm:$0xf]
  %v5292 = vld [vmem:[%s13 + $0xa0] sm:$0xf]
  %v5293 = vld [vmem:[%s13 + $0xa4] sm:$0xf]
  %v5294 = vld [vmem:[%s13 + $0xa8] sm:$0xf]
  %v5295 = vld [vmem:[%s13 + $0xac] sm:$0xf]
  %v5296 = vld [vmem:[%s13 + $0xb0] sm:$0xf]
  %v5297 = vld [vmem:[%s13 + $0xb4] sm:$0xf]
  %v5298 = vld [vmem:[%s13 + $0xb8] sm:$0xf]
  %v5299 = vld [vmem:[%s13 + $0xbc] sm:$0xf]
  %v5300 = vld [vmem:[%s13 + $0xc0] sm:$0xf]
  %v5301 = vld [vmem:[%s13 + $0xc4] sm:$0xf]
  %v5302 = vld [vmem:[%s13 + $0xc8] sm:$0xf]
  %v5303 = vld [vmem:[%s13 + $0xcc] sm:$0xf]
  %v5304 = vld [vmem:[%s13 + $0xd0] sm:$0xf]
  %v5305 = vld [vmem:[%s13 + $0xd4] sm:$0xf]
  %v5306 = vld [vmem:[%s13 + $0xd8] sm:$0xf]
  %v5307 = vld [vmem:[%s13 + $0xdc] sm:$0xf]
  %v5308 = vld [vmem:[%s13 + $0xe0] sm:$0xf]
  %v5309 = vld [vmem:[%s13 + $0xe4] sm:$0xf]
  %v5310 = vld [vmem:[%s13 + $0xe8] sm:$0xf]
  %v5311 = vld [vmem:[%s13 + $0xec] sm:$0xf]
  %v5312 = vld [vmem:[%s13 + $0xf0] sm:$0xf]
  %v5313 = vld [vmem:[%s13 + $0xf4] sm:$0xf]
  %v5314 = vld [vmem:[%s13 + $0xf8] sm:$0xf]
  %v5315 = vld [vmem:[%s13 + $0xfc] sm:$0xf]
  %v5316 = vld [vmem:[%s14] sm:$0x1]
  %v5318 = vlaneseq
  %v5319 = vshrl.u32 %v5318, 7
  %v5320 = vsub.s32 0, %v5319
  %v5321 = vrot.slane %v5316, %v5320
  %v5387 = vunpack.c.l.b16 %v5252
  %v5388 = vunpack.c.l.b16 %v5253
  %v5389 = vunpack.c.l.b16 %v5254
  %v5390 = vunpack.c.l.b16 %v5255
  %v5391 = vunpack.c.l.b16 %v5256
  %v5392 = vunpack.c.l.b16 %v5257
  %v5393 = vunpack.c.l.b16 %v5258
  %v5394 = vunpack.c.l.b16 %v5259
  %v5395 = vunpack.c.l.b16 %v5260
  %v5396 = vunpack.c.l.b16 %v5261
  %v5397 = vunpack.c.l.b16 %v5262
  %v5398 = vunpack.c.l.b16 %v5263
  %v5399 = vunpack.c.l.b16 %v5264
  %v5400 = vunpack.c.l.b16 %v5265
  %v5401 = vunpack.c.l.b16 %v5266
  %v5402 = vunpack.c.l.b16 %v5267
  %v5403 = vunpack.c.l.b16 %v5268
  %v5404 = vunpack.c.l.b16 %v5269
  %v5405 = vunpack.c.l.b16 %v5270
  %v5406 = vunpack.c.l.b16 %v5271
  %v5407 = vunpack.c.l.b16 %v5272
  %v5408 = vunpack.c.l.b16 %v5273
  %v5409 = vunpack.c.l.b16 %v5274
  %v5410 = vunpack.c.l.b16 %v5275
  %v5411 = vunpack.c.l.b16 %v5276
  %v5412 = vunpack.c.l.b16 %v5277
  %v5413 = vunpack.c.l.b16 %v5278
  %v5414 = vunpack.c.l.b16 %v5279
  %v5415 = vunpack.c.l.b16 %v5280
  %v5416 = vunpack.c.l.b16 %v5281
  %v5417 = vunpack.c.l.b16 %v5282
  %v5418 = vunpack.c.l.b16 %v5283
  %v5419 = vunpack.c.l.b16 %v5284
  %v5420 = vunpack.c.l.b16 %v5285
  %v5421 = vunpack.c.l.b16 %v5286
  %v5422 = vunpack.c.l.b16 %v5287
  %v5423 = vunpack.c.l.b16 %v5288
  %v5424 = vunpack.c.l.b16 %v5289
  %v5425 = vunpack.c.l.b16 %v5290
  %v5426 = vunpack.c.l.b16 %v5291
  %v5427 = vunpack.c.l.b16 %v5292
  %v5428 = vunpack.c.l.b16 %v5293
  %v5429 = vunpack.c.l.b16 %v5294
  %v5430 = vunpack.c.l.b16 %v5295
  %v5431 = vunpack.c.l.b16 %v5296
  %v5432 = vunpack.c.l.b16 %v5297
  %v5433 = vunpack.c.l.b16 %v5298
  %v5434 = vunpack.c.l.b16 %v5299
  %v5435 = vunpack.c.l.b16 %v5300
  %v5436 = vunpack.c.l.b16 %v5301
  %v5437 = vunpack.c.l.b16 %v5302
  %v5438 = vunpack.c.l.b16 %v5303
  %v5439 = vunpack.c.l.b16 %v5304
  %v5440 = vunpack.c.l.b16 %v5305
  %v5441 = vunpack.c.l.b16 %v5306
  %v5442 = vunpack.c.l.b16 %v5307
  %v5443 = vunpack.c.l.b16 %v5308
  %v5444 = vunpack.c.l.b16 %v5309
  %v5445 = vunpack.c.l.b16 %v5310
  %v5446 = vunpack.c.l.b16 %v5311
  %v5447 = vunpack.c.l.b16 %v5312
  %v5448 = vunpack.c.l.b16 %v5313
  %v5449 = vunpack.c.l.b16 %v5314
  %v5450 = vunpack.c.l.b16 %v5315
  %v5451 = vpack.c.b16 %v5388, %v5387
  %v5452 = vpack.c.b16 %v5390, %v5389
  %v5453 = vpack.c.b16 %v5392, %v5391
  %v5454 = vpack.c.b16 %v5394, %v5393
  %v5455 = vpack.c.b16 %v5396, %v5395
  %v5456 = vpack.c.b16 %v5398, %v5397
  %v5457 = vpack.c.b16 %v5400, %v5399
  %v5458 = vpack.c.b16 %v5402, %v5401
  %v5459 = vpack.c.b16 %v5404, %v5403
  %v5460 = vpack.c.b16 %v5406, %v5405
  %v5461 = vpack.c.b16 %v5408, %v5407
  %v5462 = vpack.c.b16 %v5410, %v5409
  %v5463 = vpack.c.b16 %v5412, %v5411
  %v5464 = vpack.c.b16 %v5414, %v5413
  %v5465 = vpack.c.b16 %v5416, %v5415
  %v5466 = vpack.c.b16 %v5418, %v5417
  %v5467 = vpack.c.b16 %v5420, %v5419
  %v5468 = vpack.c.b16 %v5422, %v5421
  %v5469 = vpack.c.b16 %v5424, %v5423
  %v5470 = vpack.c.b16 %v5426, %v5425
  %v5471 = vpack.c.b16 %v5428, %v5427
  %v5472 = vpack.c.b16 %v5430, %v5429
  %v5473 = vpack.c.b16 %v5432, %v5431
  %v5474 = vpack.c.b16 %v5434, %v5433
  %v5475 = vpack.c.b16 %v5436, %v5435
  %v5476 = vpack.c.b16 %v5438, %v5437
  %v5477 = vpack.c.b16 %v5440, %v5439
  %v5478 = vpack.c.b16 %v5442, %v5441
  %v5479 = vpack.c.b16 %v5444, %v5443
  %v5480 = vpack.c.b16 %v5446, %v5445
  %v5481 = vpack.c.b16 %v5448, %v5447
  %v5482 = vpack.c.b16 %v5450, %v5449
  %5515 = vmatprep.subr.bf16.mxu0 0
  %5516 = vmatpush1.bf16.msra.mxu0 %v5458
  %5517 = vmatprep.subr.bf16.mxu0 0
  %5518 = vmatpush1.bf16.msra.mxu0 %v5457
  %5519 = vmatprep.subr.bf16.mxu0 0
  %5520 = vmatpush1.bf16.msra.mxu0 %v5456
  %5521 = vmatprep.subr.bf16.mxu0 0
  %5522 = vmatpush1.bf16.msra.mxu0 %v5455
  %5523 = vmatprep.subr.bf16.mxu0 0
  %5524 = vmatpush1.bf16.msra.mxu0 %v5454
  %5525 = vmatprep.subr.bf16.mxu0 0
  %5526 = vmatpush1.bf16.msra.mxu0 %v5453
  %5527 = vmatprep.subr.bf16.mxu0 0
  %5528 = vmatpush1.bf16.msra.mxu0 %v5452
  %5529 = vmatprep.subr.bf16.mxu0 0
  %5530 = vmatpush1.bf16.msra.mxu0 %v5451
  %5531 = vmatprep.subr.bf16.mxu0 0
  %5532 = vmatpush2.bf16.msra.mxu0 %v5466
  %5533 = vmatprep.subr.bf16.mxu0 0
  %5534 = vmatpush2.bf16.msra.mxu0 %v5465
  %5535 = vmatprep.subr.bf16.mxu0 0
  %5536 = vmatpush2.bf16.msra.mxu0 %v5464
  %5537 = vmatprep.subr.bf16.mxu0 0
  %5538 = vmatpush2.bf16.msra.mxu0 %v5463
  %5539 = vmatprep.subr.bf16.mxu0 0
  %5540 = vmatpush2.bf16.msra.mxu0 %v5462
  %5541 = vmatprep.subr.bf16.mxu0 0
  %5542 = vmatpush2.bf16.msra.mxu0 %v5461
  %5543 = vmatprep.subr.bf16.mxu0 0
  %5544 = vmatpush2.bf16.msra.mxu0 %v5460
  %5545 = vmatprep.subr.bf16.mxu0 0
  %5546 = vmatpush2.bf16.msra.mxu0 %v5459
  %5547 = vmatprep.mubr.bf16.mxu0 %v5189
  %5548 = vmatmul.mubr.bf16.gmra.mxu0 %v5188
  %v5549 = vpop.f32.mrf.mxu0
  %v5550 = vadd.f32 %v5321, %v5549
  %v5551 = vpop.f32.mrf.mxu0
  %v5552 = vpop.f32.mrf.mxu0
  %v5553 = vadd.f32 %v5321, %v5552
  %v5554 = vpop.f32.mrf.mxu0
  %5555 = vmatprep.mubr.bf16.mxu0 %v5193
  %5556 = vmatmul.mubr.bf16.gmra.mxu0 %v5192
  %v5557 = vpop.f32.mrf.mxu0
  %v5558 = vadd.f32 %v5321, %v5557
  %v5559 = vpop.f32.mrf.mxu0
  %v5560 = vpop.f32.mrf.mxu0
  %v5561 = vadd.f32 %v5321, %v5560
  %v5562 = vpop.f32.mrf.mxu0
  %5563 = vmatprep.mubr.bf16.mxu0 %v5197
  %5564 = vmatmul.mubr.bf16.gmra.mxu0 %v5196
  %v5565 = vpop.f32.mrf.mxu0
  %v5566 = vadd.f32 %v5321, %v5565
  %v5567 = vpop.f32.mrf.mxu0
  %v5568 = vpop.f32.mrf.mxu0
  %v5569 = vadd.f32 %v5321, %v5568
  %v5570 = vpop.f32.mrf.mxu0
  %5571 = vmatprep.mubr.bf16.mxu0 %v5201
  %5572 = vmatmul.mubr.bf16.gmra.mxu0 %v5200
  %v5573 = vpop.f32.mrf.mxu0
  %v5574 = vadd.f32 %v5321, %v5573
  %v5575 = vpop.f32.mrf.mxu0
  %v5576 = vpop.f32.mrf.mxu0
  %v5577 = vadd.f32 %v5321, %v5576
  %v5578 = vpop.f32.mrf.mxu0
  %5579 = vmatprep.mubr.bf16.mxu0 %v5205
  %5580 = vmatmul.mubr.bf16.gmra.mxu0 %v5204
  %v5581 = vpop.f32.mrf.mxu0
  %v5582 = vadd.f32 %v5321, %v5581
  %v5583 = vpop.f32.mrf.mxu0
  %v5584 = vpop.f32.mrf.mxu0
  %v5585 = vadd.f32 %v5321, %v5584
  %v5586 = vpop.f32.mrf.mxu0
  %5587 = vmatprep.mubr.bf16.mxu0 %v5209
  %5588 = vmatmul.mubr.bf16.gmra.mxu0 %v5208
  %v5589 = vpop.f32.mrf.mxu0
  %v5590 = vadd.f32 %v5321, %v5589
  %v5591 = vpop.f32.mrf.mxu0
  %v5592 = vpop.f32.mrf.mxu0
  %v5593 = vadd.f32 %v5321, %v5592
  %v5594 = vpop.f32.mrf.mxu0
  %5595 = vmatprep.mubr.bf16.mxu0 %v5213
  %5596 = vmatmul.mubr.bf16.gmra.mxu0 %v5212
  %v5597 = vpop.f32.mrf.mxu0
  %v5598 = vadd.f32 %v5321, %v5597
  %v5599 = vpop.f32.mrf.mxu0
  %v5600 = vpop.f32.mrf.mxu0
  %v5601 = vadd.f32 %v5321, %v5600
  %v5602 = vpop.f32.mrf.mxu0
  %5603 = vmatprep.mubr.bf16.mxu0 %v5217
  %5604 = vmatmul.mubr.bf16.gmra.mxu0 %v5216
  %v5605 = vpop.f32.mrf.mxu0
  %v5606 = vadd.f32 %v5321, %v5605
  %v5607 = vpop.f32.mrf.mxu0
  %v5608 = vpop.f32.mrf.mxu0
  %v5609 = vadd.f32 %v5321, %v5608
  %v5610 = vpop.f32.mrf.mxu0
  %5611 = vmatprep.mubr.bf16.mxu0 %v5221
  %5612 = vmatmul.mubr.bf16.gmra.mxu0 %v5220
  %v5613 = vpop.f32.mrf.mxu0
  %v5614 = vadd.f32 %v5321, %v5613
  %v5615 = vpop.f32.mrf.mxu0
  %v5616 = vpop.f32.mrf.mxu0
  %v5617 = vadd.f32 %v5321, %v5616
  %v5618 = vpop.f32.mrf.mxu0
  %5619 = vmatprep.mubr.bf16.mxu0 %v5225
  %5620 = vmatmul.mubr.bf16.gmra.mxu0 %v5224
  %v5621 = vpop.f32.mrf.mxu0
  %v5622 = vadd.f32 %v5321, %v5621
  %v5623 = vpop.f32.mrf.mxu0
  %v5624 = vpop.f32.mrf.mxu0
  %v5625 = vadd.f32 %v5321, %v5624
  %v5626 = vpop.f32.mrf.mxu0
  %5627 = vmatprep.mubr.bf16.mxu0 %v5229
  %5628 = vmatmul.mubr.bf16.gmra.mxu0 %v5228
  %v5629 = vpop.f32.mrf.mxu0
  %v5630 = vadd.f32 %v5321, %v5629
  %v5631 = vpop.f32.mrf.mxu0
  %v5632 = vpop.f32.mrf.mxu0
  %v5633 = vadd.f32 %v5321, %v5632
  %v5634 = vpop.f32.mrf.mxu0
  %5635 = vmatprep.mubr.bf16.mxu0 %v5233
  %5636 = vmatmul.mubr.bf16.gmra.mxu0 %v5232
  %v5637 = vpop.f32.mrf.mxu0
  %v5638 = vadd.f32 %v5321, %v5637
  %v5639 = vpop.f32.mrf.mxu0
  %v5640 = vpop.f32.mrf.mxu0
  %v5641 = vadd.f32 %v5321, %v5640
  %v5642 = vpop.f32.mrf.mxu0
  %5643 = vmatprep.mubr.bf16.mxu0 %v5237
  %5644 = vmatmul.mubr.bf16.gmra.mxu0 %v5236
  %v5645 = vpop.f32.mrf.mxu0
  %v5646 = vadd.f32 %v5321, %v5645
  %v5647 = vpop.f32.mrf.mxu0
  %v5648 = vpop.f32.mrf.mxu0
  %v5649 = vadd.f32 %v5321, %v5648
  %v5650 = vpop.f32.mrf.mxu0
  %5651 = vmatprep.mubr.bf16.mxu0 %v5241
  %5652 = vmatmul.mubr.bf16.gmra.mxu0 %v5240
  %v5653 = vpop.f32.mrf.mxu0
  %v5654 = vadd.f32 %v5321, %v5653
  %v5655 = vpop.f32.mrf.mxu0
  %v5656 = vpop.f32.mrf.mxu0
  %v5657 = vadd.f32 %v5321, %v5656
  %v5658 = vpop.f32.mrf.mxu0
  %5659 = vmatprep.mubr.bf16.mxu0 %v5245
  %5660 = vmatmul.mubr.bf16.gmra.mxu0 %v5244
  %v5661 = vpop.f32.mrf.mxu0
  %v5662 = vadd.f32 %v5321, %v5661
  %v5663 = vpop.f32.mrf.mxu0
  %v5664 = vpop.f32.mrf.mxu0
  %v5665 = vadd.f32 %v5321, %v5664
  %v5666 = vpop.f32.mrf.mxu0
  %5667 = vmatprep.mubr.bf16.mxu0 %v5249
  %5668 = vmatmul.mubr.bf16.gmra.mxu0 %v5248
  %v5669 = vpop.f32.mrf.mxu0
  %v5670 = vadd.f32 %v5321, %v5669
  %v5671 = vpop.f32.mrf.mxu0
  %v5672 = vpop.f32.mrf.mxu0
  %v5673 = vadd.f32 %v5321, %v5672
  %v5674 = vpop.f32.mrf.mxu0
  %5675 = vdwg.mxu0
  %5676 = vmatprep.subr.bf16.mxu0 0
  %5677 = vmatpush1.bf16.msra.mxu0 %v5474
  %5678 = vmatprep.subr.bf16.mxu0 0
  %5679 = vmatpush1.bf16.msra.mxu0 %v5473
  %5680 = vmatprep.subr.bf16.mxu0 0
  %5681 = vmatpush1.bf16.msra.mxu0 %v5472
  %5682 = vmatprep.subr.bf16.mxu0 0
  %5683 = vmatpush1.bf16.msra.mxu0 %v5471
  %5684 = vmatprep.subr.bf16.mxu0 0
  %5685 = vmatpush1.bf16.msra.mxu0 %v5470
  %5686 = vmatprep.subr.bf16.mxu0 0
  %5687 = vmatpush1.bf16.msra.mxu0 %v5469
  %5688 = vmatprep.subr.bf16.mxu0 0
  %5689 = vmatpush1.bf16.msra.mxu0 %v5468
  %5690 = vmatprep.subr.bf16.mxu0 0
  %5691 = vmatpush1.bf16.msra.mxu0 %v5467
  %5692 = vmatprep.subr.bf16.mxu0 0
  %5693 = vmatpush2.bf16.msra.mxu0 %v5482
  %5694 = vmatprep.subr.bf16.mxu0 0
  %5695 = vmatpush2.bf16.msra.mxu0 %v5481
  %5696 = vmatprep.subr.bf16.mxu0 0
  %5697 = vmatpush2.bf16.msra.mxu0 %v5480
  %5698 = vmatprep.subr.bf16.mxu0 0
  %5699 = vmatpush2.bf16.msra.mxu0 %v5479
  %5700 = vmatprep.subr.bf16.mxu0 0
  %5701 = vmatpush2.bf16.msra.mxu0 %v5478
  %5702 = vmatprep.subr.bf16.mxu0 0
  %5703 = vmatpush2.bf16.msra.mxu0 %v5477
  %5704 = vmatprep.subr.bf16.mxu0 0
  %5705 = vmatpush2.bf16.msra.mxu0 %v5476
  %5706 = vmatprep.subr.bf16.mxu0 0
  %5707 = vmatpush2.bf16.msra.mxu0 %v5475
  %5708 = vmatprep.mubr.bf16.mxu0 %v5191
  %5709 = vmatmul.mubr.bf16.gmra.mxu0 %v5190
  %v5710 = vpop.f32.mrf.mxu0
  %v5711 = vadd.f32 %v5550, %v5710
  %v5712 = vpop.f32.mrf.mxu0
  %v5713 = vpop.f32.mrf.mxu0
  %v5714 = vadd.f32 %v5553, %v5713
  %v5715 = vpop.f32.mrf.mxu0
  %5716 = vmatprep.mubr.bf16.mxu0 %v5195
  %5717 = vmatmul.mubr.bf16.gmra.mxu0 %v5194
  %v5718 = vpop.f32.mrf.mxu0
  %v5719 = vadd.f32 %v5558, %v5718
  %v5720 = vpop.f32.mrf.mxu0
  %v5721 = vpop.f32.mrf.mxu0
  %v5722 = vadd.f32 %v5561, %v5721
  %v5723 = vpop.f32.mrf.mxu0
  %5724 = vmatprep.mubr.bf16.mxu0 %v5199
  %5725 = vmatmul.mubr.bf16.gmra.mxu0 %v5198
  %v5726 = vpop.f32.mrf.mxu0
  %v5727 = vadd.f32 %v5566, %v5726
  %v5728 = vpop.f32.mrf.mxu0
  %v5729 = vpop.f32.mrf.mxu0
  %v5730 = vadd.f32 %v5569, %v5729
  %v5731 = vpop.f32.mrf.mxu0
  %5732 = vmatprep.mubr.bf16.mxu0 %v5203
  %5733 = vmatmul.mubr.bf16.gmra.mxu0 %v5202
  %v5734 = vpop.f32.mrf.mxu0
  %v5735 = vadd.f32 %v5574, %v5734
  %v5736 = vpop.f32.mrf.mxu0
  %v5737 = vpop.f32.mrf.mxu0
  %v5738 = vadd.f32 %v5577, %v5737
  %v5739 = vpop.f32.mrf.mxu0
  %5740 = vmatprep.mubr.bf16.mxu0 %v5207
  %5741 = vmatmul.mubr.bf16.gmra.mxu0 %v5206
  %v5742 = vpop.f32.mrf.mxu0
  %v5743 = vadd.f32 %v5582, %v5742
  %v5744 = vpop.f32.mrf.mxu0
  %v5745 = vpop.f32.mrf.mxu0
  %v5746 = vadd.f32 %v5585, %v5745
  %v5747 = vpop.f32.mrf.mxu0
  %5748 = vmatprep.mubr.bf16.mxu0 %v5211
  %5749 = vmatmul.mubr.bf16.gmra.mxu0 %v5210
  %v5750 = vpop.f32.mrf.mxu0
  %v5751 = vadd.f32 %v5590, %v5750
  %v5752 = vpop.f32.mrf.mxu0
  %v5753 = vpop.f32.mrf.mxu0
  %v5754 = vadd.f32 %v5593, %v5753
  %v5755 = vpop.f32.mrf.mxu0
  %5756 = vmatprep.mubr.bf16.mxu0 %v5215
  %5757 = vmatmul.mubr.bf16.gmra.mxu0 %v5214
  %v5758 = vpop.f32.mrf.mxu0
  %v5759 = vadd.f32 %v5598, %v5758
  %v5760 = vpop.f32.mrf.mxu0
  %v5761 = vpop.f32.mrf.mxu0
  %v5762 = vadd.f32 %v5601, %v5761
  %v5763 = vpop.f32.mrf.mxu0
  %5764 = vmatprep.mubr.bf16.mxu0 %v5219
  %5765 = vmatmul.mubr.bf16.gmra.mxu0 %v5218
  %v5766 = vpop.f32.mrf.mxu0
  %v5767 = vadd.f32 %v5606, %v5766
  %v5768 = vpop.f32.mrf.mxu0
  %v5769 = vpop.f32.mrf.mxu0
  %v5770 = vadd.f32 %v5609, %v5769
  %v5771 = vpop.f32.mrf.mxu0
  %5772 = vmatprep.mubr.bf16.mxu0 %v5223
  %5773 = vmatmul.mubr.bf16.gmra.mxu0 %v5222
  %v5774 = vpop.f32.mrf.mxu0
  %v5775 = vadd.f32 %v5614, %v5774
  %v5776 = vpop.f32.mrf.mxu0
  %v5777 = vpop.f32.mrf.mxu0
  %v5778 = vadd.f32 %v5617, %v5777
  %v5779 = vpop.f32.mrf.mxu0
  %5780 = vmatprep.mubr.bf16.mxu0 %v5227
  %5781 = vmatmul.mubr.bf16.gmra.mxu0 %v5226
  %v5782 = vpop.f32.mrf.mxu0
  %v5783 = vadd.f32 %v5622, %v5782
  %v5784 = vpop.f32.mrf.mxu0
  %v5785 = vpop.f32.mrf.mxu0
  %v5786 = vadd.f32 %v5625, %v5785
  %v5787 = vpop.f32.mrf.mxu0
  %5788 = vmatprep.mubr.bf16.mxu0 %v5231
  %5789 = vmatmul.mubr.bf16.gmra.mxu0 %v5230
  %v5790 = vpop.f32.mrf.mxu0
  %v5791 = vadd.f32 %v5630, %v5790
  %v5792 = vpop.f32.mrf.mxu0
  %v5793 = vpop.f32.mrf.mxu0
  %v5794 = vadd.f32 %v5633, %v5793
  %v5795 = vpop.f32.mrf.mxu0
  %5796 = vmatprep.mubr.bf16.mxu0 %v5235
  %5797 = vmatmul.mubr.bf16.gmra.mxu0 %v5234
  %v5798 = vpop.f32.mrf.mxu0
  %v5799 = vadd.f32 %v5638, %v5798
  %v5800 = vpop.f32.mrf.mxu0
  %v5801 = vpop.f32.mrf.mxu0
  %v5802 = vadd.f32 %v5641, %v5801
  %v5803 = vpop.f32.mrf.mxu0
  %5804 = vmatprep.mubr.bf16.mxu0 %v5239
  %5805 = vmatmul.mubr.bf16.gmra.mxu0 %v5238
  %v5806 = vpop.f32.mrf.mxu0
  %v5807 = vadd.f32 %v5646, %v5806
  %v5808 = vpop.f32.mrf.mxu0
  %v5809 = vpop.f32.mrf.mxu0
  %v5810 = vadd.f32 %v5649, %v5809
  %v5811 = vpop.f32.mrf.mxu0
  %5812 = vmatprep.mubr.bf16.mxu0 %v5243
  %5813 = vmatmul.mubr.bf16.gmra.mxu0 %v5242
  %v5814 = vpop.f32.mrf.mxu0
  %v5815 = vadd.f32 %v5654, %v5814
  %v5816 = vpop.f32.mrf.mxu0
  %v5817 = vpop.f32.mrf.mxu0
  %v5818 = vadd.f32 %v5657, %v5817
  %v5819 = vpop.f32.mrf.mxu0
  %5820 = vmatprep.mubr.bf16.mxu0 %v5247
  %5821 = vmatmul.mubr.bf16.gmra.mxu0 %v5246
  %v5822 = vpop.f32.mrf.mxu0
  %v5823 = vadd.f32 %v5662, %v5822
  %v5824 = vpop.f32.mrf.mxu0
  %v5825 = vpop.f32.mrf.mxu0
  %v5826 = vadd.f32 %v5665, %v5825
  %v5827 = vpop.f32.mrf.mxu0
  %5828 = vmatprep.mubr.bf16.mxu0 %v5251
  %5829 = vmatmul.mubr.bf16.gmra.mxu0 %v5250
  %v5830 = vpop.f32.mrf.mxu0
  %v5831 = vadd.f32 %v5670, %v5830
  %v5832 = vpop.f32.mrf.mxu0
  %v5833 = vpop.f32.mrf.mxu0
  %v5834 = vadd.f32 %v5673, %v5833
  %v5835 = vpop.f32.mrf.mxu0
  %5836 = vdwg.mxu0
  %v5837 = vrot.slane %v5711, 4
  %v5838 = vmax.f32 %v5711, %v5837
  %v5839 = vrot.slane %v5838, 2
  %v5840 = vmax.f32 %v5838, %v5839
  %v5841 = vrot.slane %v5840, 1
  %v5842 = vmax.f32 %v5840, %v5841
  %v5843 = vrot.slane %v5714, 4
  %v5844 = vmax.f32 %v5714, %v5843
  %v5845 = vrot.slane %v5844, 2
  %v5846 = vmax.f32 %v5844, %v5845
  %v5847 = vrot.slane %v5846, 1
  %v5848 = vmax.f32 %v5846, %v5847
  %v5849 = vrot.slane %v5719, 4
  %v5850 = vmax.f32 %v5719, %v5849
  %v5851 = vrot.slane %v5850, 2
  %v5852 = vmax.f32 %v5850, %v5851
  %v5853 = vrot.slane %v5852, 1
  %v5854 = vmax.f32 %v5852, %v5853
  %v5855 = vrot.slane %v5722, 4
  %v5856 = vmax.f32 %v5722, %v5855
  %v5857 = vrot.slane %v5856, 2
  %v5858 = vmax.f32 %v5856, %v5857
  %v5859 = vrot.slane %v5858, 1
  %v5860 = vmax.f32 %v5858, %v5859
  %v5861 = vrot.slane %v5727, 4
  %v5862 = vmax.f32 %v5727, %v5861
  %v5863 = vrot.slane %v5862, 2
  %v5864 = vmax.f32 %v5862, %v5863
  %v5865 = vrot.slane %v5864, 1
  %v5866 = vmax.f32 %v5864, %v5865
  %v5867 = vrot.slane %v5730, 4
  %v5868 = vmax.f32 %v5730, %v5867
  %v5869 = vrot.slane %v5868, 2
  %v5870 = vmax.f32 %v5868, %v5869
  %v5871 = vrot.slane %v5870, 1
  %v5872 = vmax.f32 %v5870, %v5871
  %v5873 = vrot.slane %v5735, 4
  %v5874 = vmax.f32 %v5735, %v5873
  %v5875 = vrot.slane %v5874, 2
  %v5876 = vmax.f32 %v5874, %v5875
  %v5877 = vrot.slane %v5876, 1
  %v5878 = vmax.f32 %v5876, %v5877
  %v5879 = vrot.slane %v5738, 4
  %v5880 = vmax.f32 %v5738, %v5879
  %v5881 = vrot.slane %v5880, 2
  %v5882 = vmax.f32 %v5880, %v5881
  %v5883 = vrot.slane %v5882, 1
  %v5884 = vmax.f32 %v5882, %v5883
  %v5885 = vrot.slane %v5743, 4
  %v5886 = vmax.f32 %v5743, %v5885
  %v5887 = vrot.slane %v5886, 2
  %v5888 = vmax.f32 %v5886, %v5887
  %v5889 = vrot.slane %v5888, 1
  %v5890 = vmax.f32 %v5888, %v5889
  %v5891 = vrot.slane %v5746, 4
  %v5892 = vmax.f32 %v5746, %v5891
  %v5893 = vrot.slane %v5892, 2
  %v5894 = vmax.f32 %v5892, %v5893
  %v5895 = vrot.slane %v5894, 1
  %v5896 = vmax.f32 %v5894, %v5895
  %v5897 = vrot.slane %v5751, 4
  %v5898 = vmax.f32 %v5751, %v5897
  %v5899 = vrot.slane %v5898, 2
  %v5900 = vmax.f32 %v5898, %v5899
  %v5901 = vrot.slane %v5900, 1
  %v5902 = vmax.f32 %v5900, %v5901
  %v5903 = vrot.slane %v5754, 4
  %v5904 = vmax.f32 %v5754, %v5903
  %v5905 = vrot.slane %v5904, 2
  %v5906 = vmax.f32 %v5904, %v5905
  %v5907 = vrot.slane %v5906, 1
  %v5908 = vmax.f32 %v5906, %v5907
  %v5909 = vrot.slane %v5759, 4
  %v5910 = vmax.f32 %v5759, %v5909
  %v5911 = vrot.slane %v5910, 2
  %v5912 = vmax.f32 %v5910, %v5911
  %v5913 = vrot.slane %v5912, 1
  %v5914 = vmax.f32 %v5912, %v5913
  %v5915 = vrot.slane %v5762, 4
  %v5916 = vmax.f32 %v5762, %v5915
  %v5917 = vrot.slane %v5916, 2
  %v5918 = vmax.f32 %v5916, %v5917
  %v5919 = vrot.slane %v5918, 1
  %v5920 = vmax.f32 %v5918, %v5919
  %v5921 = vrot.slane %v5767, 4
  %v5922 = vmax.f32 %v5767, %v5921
  %v5923 = vrot.slane %v5922, 2
  %v5924 = vmax.f32 %v5922, %v5923
  %v5925 = vrot.slane %v5924, 1
  %v5926 = vmax.f32 %v5924, %v5925
  %v5927 = vrot.slane %v5770, 4
  %v5928 = vmax.f32 %v5770, %v5927
  %v5929 = vrot.slane %v5928, 2
  %v5930 = vmax.f32 %v5928, %v5929
  %v5931 = vrot.slane %v5930, 1
  %v5932 = vmax.f32 %v5930, %v5931
  %v5933 = vrot.slane %v5775, 4
  %v5934 = vmax.f32 %v5775, %v5933
  %v5935 = vrot.slane %v5934, 2
  %v5936 = vmax.f32 %v5934, %v5935
  %v5937 = vrot.slane %v5936, 1
  %v5938 = vmax.f32 %v5936, %v5937
  %v5939 = vrot.slane %v5778, 4
  %v5940 = vmax.f32 %v5778, %v5939
  %v5941 = vrot.slane %v5940, 2
  %v5942 = vmax.f32 %v5940, %v5941
  %v5943 = vrot.slane %v5942, 1
  %v5944 = vmax.f32 %v5942, %v5943
  %v5945 = vrot.slane %v5783, 4
  %v5946 = vmax.f32 %v5783, %v5945
  %v5947 = vrot.slane %v5946, 2
  %v5948 = vmax.f32 %v5946, %v5947
  %v5949 = vrot.slane %v5948, 1
  %v5950 = vmax.f32 %v5948, %v5949
  %v5951 = vrot.slane %v5786, 4
  %v5952 = vmax.f32 %v5786, %v5951
  %v5953 = vrot.slane %v5952, 2
  %v5954 = vmax.f32 %v5952, %v5953
  %v5955 = vrot.slane %v5954, 1
  %v5956 = vmax.f32 %v5954, %v5955
  %v5957 = vrot.slane %v5791, 4
  %v5958 = vmax.f32 %v5791, %v5957
  %v5959 = vrot.slane %v5958, 2
  %v5960 = vmax.f32 %v5958, %v5959
  %v5961 = vrot.slane %v5960, 1
  %v5962 = vmax.f32 %v5960, %v5961
  %v5963 = vrot.slane %v5794, 4
  %v5964 = vmax.f32 %v5794, %v5963
  %v5965 = vrot.slane %v5964, 2
  %v5966 = vmax.f32 %v5964, %v5965
  %v5967 = vrot.slane %v5966, 1
  %v5968 = vmax.f32 %v5966, %v5967
  %v5969 = vrot.slane %v5799, 4
  %v5970 = vmax.f32 %v5799, %v5969
  %v5971 = vrot.slane %v5970, 2
  %v5972 = vmax.f32 %v5970, %v5971
  %v5973 = vrot.slane %v5972, 1
  %v5974 = vmax.f32 %v5972, %v5973
  %v5975 = vrot.slane %v5802, 4
  %v5976 = vmax.f32 %v5802, %v5975
  %v5977 = vrot.slane %v5976, 2
  %v5978 = vmax.f32 %v5976, %v5977
  %v5979 = vrot.slane %v5978, 1
  %v5980 = vmax.f32 %v5978, %v5979
  %v5981 = vrot.slane %v5807, 4
  %v5982 = vmax.f32 %v5807, %v5981
  %v5983 = vrot.slane %v5982, 2
  %v5984 = vmax.f32 %v5982, %v5983
  %v5985 = vrot.slane %v5984, 1
  %v5986 = vmax.f32 %v5984, %v5985
  %v5987 = vrot.slane %v5810, 4
  %v5988 = vmax.f32 %v5810, %v5987
  %v5989 = vrot.slane %v5988, 2
  %v5990 = vmax.f32 %v5988, %v5989
  %v5991 = vrot.slane %v5990, 1
  %v5992 = vmax.f32 %v5990, %v5991
  %v5993 = vrot.slane %v5815, 4
  %v5994 = vmax.f32 %v5815, %v5993
  %v5995 = vrot.slane %v5994, 2
  %v5996 = vmax.f32 %v5994, %v5995
  %v5997 = vrot.slane %v5996, 1
  %v5998 = vmax.f32 %v5996, %v5997
  %v5999 = vrot.slane %v5818, 4
  %v6000 = vmax.f32 %v5818, %v5999
  %v6001 = vrot.slane %v6000, 2
  %v6002 = vmax.f32 %v6000, %v6001
  %v6003 = vrot.slane %v6002, 1
  %v6004 = vmax.f32 %v6002, %v6003
  %v6005 = vrot.slane %v5823, 4
  %v6006 = vmax.f32 %v5823, %v6005
  %v6007 = vrot.slane %v6006, 2
  %v6008 = vmax.f32 %v6006, %v6007
  %v6009 = vrot.slane %v6008, 1
  %v6010 = vmax.f32 %v6008, %v6009
  %v6011 = vrot.slane %v5826, 4
  %v6012 = vmax.f32 %v5826, %v6011
  %v6013 = vrot.slane %v6012, 2
  %v6014 = vmax.f32 %v6012, %v6013
  %v6015 = vrot.slane %v6014, 1
  %v6016 = vmax.f32 %v6014, %v6015
  %v6017 = vrot.slane %v5831, 4
  %v6018 = vmax.f32 %v5831, %v6017
  %v6019 = vrot.slane %v6018, 2
  %v6020 = vmax.f32 %v6018, %v6019
  %v6021 = vrot.slane %v6020, 1
  %v6022 = vmax.f32 %v6020, %v6021
  %v6023 = vrot.slane %v5834, 4
  %v6024 = vmax.f32 %v5834, %v6023
  %v6025 = vrot.slane %v6024, 2
  %v6026 = vmax.f32 %v6024, %v6025
  %v6027 = vrot.slane %v6026, 1
  %v6028 = vmax.f32 %v6026, %v6027
  %v6029 = vld [vmem:[%s1] sm:$0xff]
  %v6030 = vld [vmem:[%s1 + $0x8] sm:$0xff]
  %v6031 = vld [vmem:[%s1 + $0x10] sm:$0xff]
  %v6032 = vld [vmem:[%s1 + $0x18] sm:$0xff]
  %v6033 = vld [vmem:[%s18] sm:$0x1]
  %v6034 = vld [vmem:[%s17] sm:$0x1]
  %6036 = vset.pattern.permute.xlu0 0
  %6037 = vperm.xlu0 %6036, %v6029
  %v6038 = vpop.permute.xlu0 %6037
  %6041 = vset.pattern.permute.xlu0 0
  %6042 = vperm.xlu0 %6041, %v6030
  %v6043 = vpop.permute.xlu0 %6042
  %6046 = vset.pattern.permute.xlu0 0
  %6047 = vperm.xlu0 %6046, %v6031
  %v6048 = vpop.permute.xlu0 %6047
  %6051 = vset.pattern.permute.xlu0 0
  %6052 = vperm.xlu0 %6051, %v6032
  %v6053 = vpop.permute.xlu0 %6052
  %v6055 = vlaneseq
  %v6056 = vshrl.u32 %v6055, 7
  %v6057 = vsub.s32 0, %v6056
  %v6058 = vrot.slane %v6034, %v6057
  %v6059 = vmul.f32 %v6038, %v6058
  %v6060 = vmul.f32 %v6043, %v6058
  %v6061 = vmul.f32 %v6048, %v6058
  %v6062 = vmul.f32 %v6053, %v6058
  %v6064 = vlaneseq
  %v6065 = vshrl.u32 %v6064, 7
  %v6066 = vsub.s32 0, %v6065
  %v6067 = vrot.slane %v6033, %v6066
  %v6069 = vadd.f32 %v6067, %v6059
  %v6070 = vadd.f32 %v6067, %v6060
  %v6071 = vadd.f32 %v6067, %v6061
  %v6072 = vadd.f32 %v6067, %v6062
  %v6073 = vld [vmem:[%s17 + $0x1] sm:$0x1]
  %6074 = vset.pattern.permute.xlu0 1
  %6075 = vperm.xlu0 %6074, %v6029
  %v6076 = vpop.permute.xlu0 %6075
  %6078 = vset.pattern.permute.xlu0 1
  %6079 = vperm.xlu0 %6078, %v6030
  %v6080 = vpop.permute.xlu0 %6079
  %6082 = vset.pattern.permute.xlu0 1
  %6083 = vperm.xlu0 %6082, %v6031
  %v6084 = vpop.permute.xlu0 %6083
  %6086 = vset.pattern.permute.xlu0 1
  %6087 = vperm.xlu0 %6086, %v6032
  %v6088 = vpop.permute.xlu0 %6087
  %v6090 = vlaneseq
  %v6091 = vshrl.u32 %v6090, 7
  %v6092 = vsub.s32 0, %v6091
  %v6093 = vrot.slane %v6073, %v6092
  %v6094 = vmul.f32 %v6076, %v6093
  %v6095 = vmul.f32 %v6080, %v6093
  %v6096 = vmul.f32 %v6084, %v6093
  %v6097 = vmul.f32 %v6088, %v6093
  %v6098 = vadd.f32 %v6069, %v6094
  %v6099 = vadd.f32 %v6070, %v6095
  %v6100 = vadd.f32 %v6071, %v6096
  %v6101 = vadd.f32 %v6072, %v6097
  %v6102 = vld [vmem:[%s17 + $0x2] sm:$0x1]
  %6103 = vset.pattern.permute.xlu0 2
  %6104 = vperm.xlu0 %6103, %v6029
  %v6105 = vpop.permute.xlu0 %6104
  %6107 = vset.pattern.permute.xlu0 2
  %6108 = vperm.xlu0 %6107, %v6030
  %v6109 = vpop.permute.xlu0 %6108
  %6111 = vset.pattern.permute.xlu0 2
  %6112 = vperm.xlu0 %6111, %v6031
  %v6113 = vpop.permute.xlu0 %6112
  %6115 = vset.pattern.permute.xlu0 2
  %6116 = vperm.xlu0 %6115, %v6032
  %v6117 = vpop.permute.xlu0 %6116
  %v6119 = vlaneseq
  %v6120 = vshrl.u32 %v6119, 7
  %v6121 = vsub.s32 0, %v6120
  %v6122 = vrot.slane %v6102, %v6121
  %v6123 = vmul.f32 %v6105, %v6122
  %v6124 = vmul.f32 %v6109, %v6122
  %v6125 = vmul.f32 %v6113, %v6122
  %v6126 = vmul.f32 %v6117, %v6122
  %v6127 = vadd.f32 %v6098, %v6123
  %v6128 = vadd.f32 %v6099, %v6124
  %v6129 = vadd.f32 %v6100, %v6125
  %v6130 = vadd.f32 %v6101, %v6126
  %v6131 = vmul.f32 %v6127, %v6127
  %v6132 = vmul.f32 %v6128, %v6128
  %v6133 = vmul.f32 %v6129, %v6129
  %v6134 = vmul.f32 %v6130, %v6130
  %v6135 = vmul.f32 %v6127, %v6131
  %v6136 = vmul.f32 %v6128, %v6132
  %v6137 = vmul.f32 %v6129, %v6133
  %v6138 = vmul.f32 %v6130, %v6134
  %v6139 = vmul.f32 %v6135, 0.044715
  %v6140 = vmul.f32 %v6136, 0.044715
  %v6141 = vmul.f32 %v6137, 0.044715
  %v6142 = vmul.f32 %v6138, 0.044715
  %v6143 = vadd.f32 %v6127, %v6139
  %v6144 = vadd.f32 %v6128, %v6140
  %v6145 = vadd.f32 %v6129, %v6141
  %v6146 = vadd.f32 %v6130, %v6142
  %v6147 = vmul.f32 %v6143, 0.7978846
  %v6148 = vmul.f32 %v6144, 0.7978846
  %v6149 = vmul.f32 %v6145, 0.7978846
  %v6150 = vmul.f32 %v6146, 0.7978846
  %v6151 = vtanh.pop %v6147
  %v6152 = vtanh.pop %v6148
  %v6153 = vtanh.pop %v6149
  %v6154 = vtanh.pop %v6150
  %v6155 = vadd.f32 %v6151, 1.0
  %v6156 = vadd.f32 %v6152, 1.0
  %v6157 = vadd.f32 %v6153, 1.0
  %v6158 = vadd.f32 %v6154, 1.0
  %v6159 = vmul.f32 %v6155, 0.5
  %v6160 = vmul.f32 %v6156, 0.5
  %v6161 = vmul.f32 %v6157, 0.5
  %v6162 = vmul.f32 %v6158, 0.5
  %v6163 = vmul.f32 %v6127, %v6159
  %v6164 = vmul.f32 %v6128, %v6160
  %v6165 = vmul.f32 %v6129, %v6161
  %v6166 = vmul.f32 %v6130, %v6162
  %v6199 = vsel %vm3207, %v5848, %v5842
  %v6200 = vsel %vm3209, %v5854, %v6199
  %v6201 = vsel %vm3211, %v5860, %v6200
  %v6202 = vsel %vm3213, %v5866, %v6201
  %v6203 = vsel %vm3215, %v5872, %v6202
  %v6204 = vsel %vm3217, %v5878, %v6203
  %v6205 = vsel %vm3219, %v5884, %v6204
  %v6206 = vsel %vm3207, %v5896, %v5890
  %v6207 = vsel %vm3209, %v5902, %v6206
  %v6208 = vsel %vm3211, %v5908, %v6207
  %v6209 = vsel %vm3213, %v5914, %v6208
  %v6210 = vsel %vm3215, %v5920, %v6209
  %v6211 = vsel %vm3217, %v5926, %v6210
  %v6212 = vsel %vm3219, %v5932, %v6211
  %v6213 = vsel %vm3207, %v5944, %v5938
  %v6214 = vsel %vm3209, %v5950, %v6213
  %v6215 = vsel %vm3211, %v5956, %v6214
  %v6216 = vsel %vm3213, %v5962, %v6215
  %v6217 = vsel %vm3215, %v5968, %v6216
  %v6218 = vsel %vm3217, %v5974, %v6217
  %v6219 = vsel %vm3219, %v5980, %v6218
  %v6220 = vsel %vm3207, %v5992, %v5986
  %v6221 = vsel %vm3209, %v5998, %v6220
  %v6222 = vsel %vm3211, %v6004, %v6221
  %v6223 = vsel %vm3213, %v6010, %v6222
  %v6224 = vsel %vm3215, %v6016, %v6223
  %v6225 = vsel %vm3217, %v6022, %v6224
  %v6226 = vsel %vm3219, %v6028, %v6225
  %v6231 = vpack.c.bf16 %v6212, %v6205
  %v6232 = vpack.c.bf16 %v6164, %v6163
  %v6233 = vpack.c.bf16 %v6226, %v6219
  %v6234 = vpack.c.bf16 %v6166, %v6165
  %v6235 = vld [vmem:[%s15] sm:$0xf]
  %v6236 = vld [vmem:[%s15 + $0x4] sm:$0xf]
  %v6237 = vld [vmem:[%s15 + $0x8] sm:$0xf]
  %v6238 = vld [vmem:[%s15 + $0xc] sm:$0xf]
  %v6239 = vld [vmem:[%s15 + $0x10] sm:$0xf]
  %v6240 = vld [vmem:[%s15 + $0x14] sm:$0xf]
  %v6241 = vld [vmem:[%s15 + $0x18] sm:$0xf]
  %v6242 = vld [vmem:[%s15 + $0x1c] sm:$0xf]
  %v6243 = vld [vmem:[%s15 + $0x20] sm:$0xf]
  %v6244 = vld [vmem:[%s15 + $0x24] sm:$0xf]
  %v6245 = vld [vmem:[%s15 + $0x28] sm:$0xf]
  %v6246 = vld [vmem:[%s15 + $0x2c] sm:$0xf]
  %v6247 = vld [vmem:[%s15 + $0x30] sm:$0xf]
  %v6248 = vld [vmem:[%s15 + $0x34] sm:$0xf]
  %v6249 = vld [vmem:[%s15 + $0x38] sm:$0xf]
  %v6250 = vld [vmem:[%s15 + $0x3c] sm:$0xf]
  %v6251 = vld [vmem:[%s15 + $0x40] sm:$0xf]
  %v6252 = vld [vmem:[%s15 + $0x44] sm:$0xf]
  %v6253 = vld [vmem:[%s15 + $0x48] sm:$0xf]
  %v6254 = vld [vmem:[%s15 + $0x4c] sm:$0xf]
  %v6255 = vld [vmem:[%s15 + $0x50] sm:$0xf]
  %v6256 = vld [vmem:[%s15 + $0x54] sm:$0xf]
  %v6257 = vld [vmem:[%s15 + $0x58] sm:$0xf]
  %v6258 = vld [vmem:[%s15 + $0x5c] sm:$0xf]
  %v6259 = vld [vmem:[%s15 + $0x60] sm:$0xf]
  %v6260 = vld [vmem:[%s15 + $0x64] sm:$0xf]
  %v6261 = vld [vmem:[%s15 + $0x68] sm:$0xf]
  %v6262 = vld [vmem:[%s15 + $0x6c] sm:$0xf]
  %v6263 = vld [vmem:[%s15 + $0x70] sm:$0xf]
  %v6264 = vld [vmem:[%s15 + $0x74] sm:$0xf]
  %v6265 = vld [vmem:[%s15 + $0x78] sm:$0xf]
  %v6266 = vld [vmem:[%s15 + $0x7c] sm:$0xf]
  %v6267 = vld [vmem:[%s16] sm:$0x1]
  %v6269 = vlaneseq
  %v6270 = vshrl.u32 %v6269, 7
  %v6271 = vsub.s32 0, %v6270
  %v6272 = vrot.slane %v6267, %v6271
  %v6306 = vunpack.c.l.b16 %v6235
  %v6307 = vunpack.c.l.b16 %v6236
  %v6308 = vunpack.c.l.b16 %v6237
  %v6309 = vunpack.c.l.b16 %v6238
  %v6310 = vunpack.c.l.b16 %v6239
  %v6311 = vunpack.c.l.b16 %v6240
  %v6312 = vunpack.c.l.b16 %v6241
  %v6313 = vunpack.c.l.b16 %v6242
  %v6314 = vunpack.c.l.b16 %v6243
  %v6315 = vunpack.c.l.b16 %v6244
  %v6316 = vunpack.c.l.b16 %v6245
  %v6317 = vunpack.c.l.b16 %v6246
  %v6318 = vunpack.c.l.b16 %v6247
  %v6319 = vunpack.c.l.b16 %v6248
  %v6320 = vunpack.c.l.b16 %v6249
  %v6321 = vunpack.c.l.b16 %v6250
  %v6322 = vunpack.c.l.b16 %v6251
  %v6323 = vunpack.c.l.b16 %v6252
  %v6324 = vunpack.c.l.b16 %v6253
  %v6325 = vunpack.c.l.b16 %v6254
  %v6326 = vunpack.c.l.b16 %v6255
  %v6327 = vunpack.c.l.b16 %v6256
  %v6328 = vunpack.c.l.b16 %v6257
  %v6329 = vunpack.c.l.b16 %v6258
  %v6330 = vunpack.c.l.b16 %v6259
  %v6331 = vunpack.c.l.b16 %v6260
  %v6332 = vunpack.c.l.b16 %v6261
  %v6333 = vunpack.c.l.b16 %v6262
  %v6334 = vunpack.c.l.b16 %v6263
  %v6335 = vunpack.c.l.b16 %v6264
  %v6336 = vunpack.c.l.b16 %v6265
  %v6337 = vunpack.c.l.b16 %v6266
  %v6338 = vpack.c.b16 %v6307, %v6306
  %v6339 = vpack.c.b16 %v6309, %v6308
  %v6340 = vpack.c.b16 %v6311, %v6310
  %v6341 = vpack.c.b16 %v6313, %v6312
  %v6342 = vpack.c.b16 %v6315, %v6314
  %v6343 = vpack.c.b16 %v6317, %v6316
  %v6344 = vpack.c.b16 %v6319, %v6318
  %v6345 = vpack.c.b16 %v6321, %v6320
  %v6346 = vpack.c.b16 %v6323, %v6322
  %v6347 = vpack.c.b16 %v6325, %v6324
  %v6348 = vpack.c.b16 %v6327, %v6326
  %v6349 = vpack.c.b16 %v6329, %v6328
  %v6350 = vpack.c.b16 %v6331, %v6330
  %v6351 = vpack.c.b16 %v6333, %v6332
  %v6352 = vpack.c.b16 %v6335, %v6334
  %v6353 = vpack.c.b16 %v6337, %v6336
  %6370 = vmatprep.subr.bf16.mxu0 0
  %6371 = vmatpush1.bf16.msra.mxu0 %v6345
  %6372 = vmatprep.subr.bf16.mxu0 0
  %6373 = vmatpush1.bf16.msra.mxu0 %v6344
  %6374 = vmatprep.subr.bf16.mxu0 0
  %6375 = vmatpush1.bf16.msra.mxu0 %v6343
  %6376 = vmatprep.subr.bf16.mxu0 0
  %6377 = vmatpush1.bf16.msra.mxu0 %v6342
  %6378 = vmatprep.subr.bf16.mxu0 0
  %6379 = vmatpush1.bf16.msra.mxu0 %v6341
  %6380 = vmatprep.subr.bf16.mxu0 0
  %6381 = vmatpush1.bf16.msra.mxu0 %v6340
  %6382 = vmatprep.subr.bf16.mxu0 0
  %6383 = vmatpush1.bf16.msra.mxu0 %v6339
  %6384 = vmatprep.subr.bf16.mxu0 0
  %6385 = vmatpush1.bf16.msra.mxu0 %v6338
  %6386 = vmatprep.subr.bf16.mxu0 0
  %6387 = vmatpush2.bf16.msra.mxu0 %v6353
  %6388 = vmatprep.subr.bf16.mxu0 0
  %6389 = vmatpush2.bf16.msra.mxu0 %v6352
  %6390 = vmatprep.subr.bf16.mxu0 0
  %6391 = vmatpush2.bf16.msra.mxu0 %v6351
  %6392 = vmatprep.subr.bf16.mxu0 0
  %6393 = vmatpush2.bf16.msra.mxu0 %v6350
  %6394 = vmatprep.subr.bf16.mxu0 0
  %6395 = vmatpush2.bf16.msra.mxu0 %v6349
  %6396 = vmatprep.subr.bf16.mxu0 0
  %6397 = vmatpush2.bf16.msra.mxu0 %v6348
  %6398 = vmatprep.subr.bf16.mxu0 0
  %6399 = vmatpush2.bf16.msra.mxu0 %v6347
  %6400 = vmatprep.subr.bf16.mxu0 0
  %6401 = vmatpush2.bf16.msra.mxu0 %v6346
  %6402 = vmatprep.mubr.bf16.mxu0 %v6232
  %6403 = vmatmul.mubr.bf16.gmra.mxu0 %v6231
  %v6404 = vpop.f32.mrf.mxu0
  %v6405 = vadd.f32 %v6272, %v6404
  %v6406 = vpop.f32.mrf.mxu0
  %v6407 = vpop.f32.mrf.mxu0
  %v6408 = vadd.f32 %v6272, %v6407
  %v6409 = vpop.f32.mrf.mxu0
  %6410 = vmatprep.mubr.bf16.mxu0 %v6234
  %6411 = vmatmul.mubr.bf16.gmra.mxu0 %v6233
  %v6412 = vpop.f32.mrf.mxu0
  %v6413 = vadd.f32 %v6272, %v6412
  %v6414 = vpop.f32.mrf.mxu0
  %v6415 = vpop.f32.mrf.mxu0
  %v6416 = vadd.f32 %v6272, %v6415
  %v6417 = vpop.f32.mrf.mxu0
  %6418 = vdwg.mxu0
  %v6419 = vpack.c.bf16 %v6408, %v6405
  %v6420 = vpack.c.bf16 %v6416, %v6413
  %v6423 = vunpack.c.l.b16 %v6419
  %v6424 = vunpack.c.h.b16 %v6419
  %v6425 = vunpack.c.l.b16 %v6420
  %v6426 = vunpack.c.h.b16 %v6420
  %v6427 = vpack.c.b16 %v6423, %v6423
  %v6428 = vpack.c.b16 %v6424, %v6424
  %v6429 = vpack.c.b16 %v6425, %v6425
  %v6430 = vpack.c.b16 %v6426, %v6426
  %6435 = vst [vmem:[%s19] sm:$0xf] %v6427
  %6436 = vst [vmem:[%s19 + $0x4] sm:$0xf] %v6428
  %6437 = vst [vmem:[%s19 + $0x8] sm:$0xf] %v6429
  %6438 = vst [vmem:[%s19 + $0xc] sm:$0xf] %v6430
  // Predicated region
  $region78: #{uni3d_forward.2} parent=0 // pred_check
    _
  $region79: #{uni3d_forward.2} parent=0 // pred_check_branch
    %6440 = sbr.rel (0) target = $region81
  $region80: #{uni3d_forward.2} parent=0 // pred_region
    _
  $region81: #{uni3d_forward.2} parent=0 // pred_fallthru
    _
  // Predicated region
  $region82: #{uni3d_forward.2} parent=0 // pred_check
    _
  $region83: #{uni3d_forward.2} parent=0 // pred_check_branch
    %6442 = sbr.rel (0) target = $region85
  $region84: #{uni3d_forward.2} parent=0 // pred_region
    _
  $region85: #{uni3d_forward.2} parent=0 // pred_fallthru
    _

// kernel: uni3d_forward.3
$region0: #{uni3d_forward.3}
  #allocation0 [shape = 'u32[]', space=smem, size = 0x4, offset = 0x4, fixed_abs, tag = 'smem constant byte address 0x4 - core index']
  #allocation1 [shape = 'u32[144,128]{1,0:T(1,128)}', space=vmem, size = 0x12000, scoped, tag = 'internal scratch']
  #allocation2 [shape = 'f32[2,24,128]{2,1,0:T(8,128)}', space=vmem, size = 0x6000, scoped, tag = 'scratch operand']
  #allocation3 [shape = 'f32[96,24]{1,0:T(8,128)}', space=vmem, size = 0xc000, scoped, tag = 'scratch operand']
  #allocation4 [shape = 'f32[24,128]{1,0:T(8,128)}', space=vmem, size = 0x3000, scoped, tag = 'scratch operand']
  %s0 = inlined_call_operand.vmem [shape: bf16[2,24,128], index: 0, kind: input, shape index: {}]
  %s1 = inlined_call_operand.vmem [shape: f32[2,1,128], index: 1, kind: input, shape index: {}]
  %s2 = inlined_call_operand.vmem [shape: f32[2,1,128], index: 2, kind: input, shape index: {}]
  %s3 = inlined_call_operand.vmem [shape: bf16[2,128,384], index: 3, kind: input, shape index: {}]
  %s4 = inlined_call_operand.vmem [shape: f32[2,1,384], index: 4, kind: input, shape index: {}]
  %s5 = inlined_call_operand.vmem [shape: bf16[2,128,128], index: 5, kind: input, shape index: {}]
  %s6 = inlined_call_operand.vmem [shape: f32[2,1,128], index: 6, kind: input, shape index: {}]
  %s7 = inlined_call_operand.vmem [shape: f32[2,1,128], index: 7, kind: input, shape index: {}]
  %s8 = inlined_call_operand.vmem [shape: f32[2,1,128], index: 8, kind: input, shape index: {}]
  %s9 = inlined_call_operand.vmem [shape: bf16[2,128,512], index: 9, kind: input, shape index: {}]
  %s10 = inlined_call_operand.vmem [shape: f32[2,1,512], index: 10, kind: input, shape index: {}]
  %s11 = inlined_call_operand.vmem [shape: bf16[2,512,128], index: 11, kind: input, shape index: {}]
  %s12 = inlined_call_operand.vmem [shape: f32[2,1,128], index: 12, kind: input, shape index: {}]
  %s13 = inlined_call_operand.vmem [shape: f32[1,128], index: 13, kind: input, shape index: {}]
  %s14 = inlined_call_operand.vmem [shape: f32[1,128], index: 14, kind: input, shape index: {}]
  %s15 = inlined_call_operand.vmem [shape: f32[1,128], index: 15, kind: input, shape index: {}]
  %s16 = inlined_call_operand.vmem [shape: f32[1,128], index: 16, kind: input, shape index: {}]
  %s17 = inlined_call_operand.vmem [shape: bf16[128,128], index: 17, kind: input, shape index: {}]
  %s18 = inlined_call_operand.vmem [shape: f32[1,128], index: 18, kind: input, shape index: {}]
  %s19 = inlined_call_operand.hbm [shape: f32[2,128], index: 19, kind: output, shape index: {}]
  %s20 = sld [smem:[#allocation0]]
  $region117: #{uni3d_forward.3} parent=0
    _
  %s22 = ssub.s32 1, %s20
  %s23 = scalar_select 0, %s22, %s20
  $region1: #{uni3d_forward.3} parent=0
    #allocation5 [shape = 'u8[1024]{0}', space=vmem, size = 0x400, scoped, tag = 'output window, operand 0, single buffered']
    #allocation6 [shape = 's32[2]{0}', space=sflag, size = 0x8, scoped, tag = 'scoped memory for uni3d_forward.3']
    %24 = vsyncpa [#allocation6], 0
    loop: start=0, step=1, limit=4
    $region2: #{uni3d_forward.3} parent=1 // loop_pre_header
      _
    $region3: #{uni3d_forward.3} parent=1 // loop_header
      %s26 = sphi 0, %s30
      %p27 = scmp.ge.s32.totalorder %s26, 4
      %s34 = sphi 0, %s34
      %s36 = sphi 0, %s34
      %s37 = sphi 0, %s36
      %s51 = sphi 0, %s37
      %s57 = sphi 0, %s59
      %s60 = sphi 0, %s57
      %s61 = sphi 0, %s60
      %s77 = sphi 0, %s61
      %s83 = sphi 0, %s85
      %s86 = sphi 0, %s83
      %s87 = sphi 0, %s86
      %s103 = sphi 0, %s87
      %s109 = sphi 0, %s111
      %s112 = sphi 0, %s109
      %s113 = sphi 0, %s112
      %s129 = sphi 0, %s113
      %s135 = sphi 0, %s137
      %s138 = sphi 0, %s135
      %s139 = sphi 0, %s138
      %s155 = sphi 0, %s139
      %s161 = sphi 0, %s163
      %s164 = sphi 0, %s161
      %s165 = sphi 0, %s164
      %s181 = sphi 0, %s165
      %s187 = sphi 0, %s189
      %s190 = sphi 0, %s187
      %s191 = sphi 0, %s190
      %s207 = sphi 0, %s191
      %s213 = sphi 0, %s215
      %s216 = sphi 0, %s213
      %s217 = sphi 0, %s216
      %s233 = sphi 0, %s217
      %s239 = sphi 0, %s241
      %s242 = sphi 0, %s239
      %s243 = sphi 0, %s242
      %s259 = sphi 0, %s243
      %s265 = sphi 0, %s267
      %s268 = sphi 0, %s265
      %s269 = sphi 0, %s268
      %s285 = sphi 0, %s269
      %s291 = sphi 0, %s293
      %s294 = sphi 0, %s291
      %s295 = sphi 0, %s294
      %s311 = sphi 0, %s295
      %s317 = sphi 0, %s319
      %s320 = sphi 0, %s317
      %s321 = sphi 0, %s320
      %s337 = sphi 0, %s321
      %s343 = sphi 0, %s345
      %s346 = sphi 0, %s343
      %s347 = sphi 0, %s346
      %s363 = sphi 0, %s347
      %s367 = sphi 0, %s367
      %s369 = sphi 0, %s367
      %s370 = sphi 0, %s369
      %s384 = sphi 0, %s370
      %s388 = sphi 0, %s388
      %s390 = sphi 0, %s388
      %s391 = sphi 0, %s390
      %s405 = sphi 0, %s391
      %s409 = sphi 0, %s409
      %s411 = sphi 0, %s409
      %s412 = sphi 0, %s411
      %s426 = sphi 0, %s412
      %s430 = sphi 0, %s430
      %s432 = sphi 0, %s430
      %s433 = sphi 0, %s432
      %s447 = sphi 0, %s433
      %s451 = sphi 0, %s451
      %s453 = sphi 0, %s451
      %s454 = sphi 0, %s453
      %s468 = sphi 0, %s454
      %s472 = sphi 0, %s472
      %s474 = sphi 0, %s472
      %s475 = sphi 0, %s474
      %s489 = sphi 0, %s475
      %s493 = sphi 0, %s493
      %s495 = sphi 0, %s493
      %s496 = sphi 0, %s495
      %s510 = sphi 0, %s496
    $region4: #{uni3d_forward.3} parent=1 // loop_header_branch
      %29 = sbr.rel (%p27) target = $region8
    $region5: #{uni3d_forward.3} parent=1 // loop_body
      %s31 = ssub.s32 %s26, 1
      %s32 = ssub.s32 %s26, 2
      %s33 = sadd.s32 %s26, 1
      %s35 = sadd.s32 %s34, 1
      %p38 = scmp.eq.s32.totalorder %s26, 1
      %p39 = scmp.ne.s32.totalorder %s34, %s36
      %p40 = scmp.eq.s32.totalorder %s26, 0
      %p41 = por %p39, %p40
      %p42 = scmp.ne.s32.totalorder %s34, %s36
      %p43 = scmp.eq.s32.totalorder %s31, 1
      %p44 = por %p42, %p43
      %p45 = scmp.ne.s32.totalorder %s36, %s37
      %p46 = scmp.eq.s32.totalorder %s31, 0
      %p47 = por %p45, %p46
      %p48 = scmp.ne.s32.totalorder %s36, %s37
      %p49 = scmp.eq.s32.totalorder %s32, 1
      %p50 = por %p48, %p49
      %p52 = scmp.ne.s32.totalorder %s37, %s51
      %p53 = scmp.eq.s32.totalorder %s32, 0
      %p54 = por %p52, %p53
      %s55 = ssub.s32 %s26, %s33
      %p56 = scmp.eq.s32.totalorder %s55, 0
      %s58 = sadd.s32 %s57, 1
      %s59 = scalar_select %p56, %s57, %s58
      %p62 = pneg %p56
      %p63 = scmp.eq.s32.totalorder %s26, 1
      %p64 = por %p62, %p63
      %p65 = scmp.ne.s32.totalorder %s57, %s60
      %p66 = scmp.eq.s32.totalorder %s26, 0
      %p67 = por %p65, %p66
      %p68 = scmp.ne.s32.totalorder %s57, %s60
      %p69 = scmp.eq.s32.totalorder %s31, 1
      %p70 = por %p68, %p69
      %p71 = scmp.ne.s32.totalorder %s60, %s61
      %p72 = scmp.eq.s32.totalorder %s31, 0
      %p73 = por %p71, %p72
      %p74 = scmp.ne.s32.totalorder %s60, %s61
      %p75 = scmp.eq.s32.totalorder %s32, 1
      %p76 = por %p74, %p75
      %p78 = scmp.ne.s32.totalorder %s61, %s77
      %p79 = scmp.eq.s32.totalorder %s32, 0
      %p80 = por %p78, %p79
      %s81 = ssub.s32 %s26, %s33
      %p82 = scmp.eq.s32.totalorder %s81, 0
      %s84 = sadd.s32 %s83, 1
      %s85 = scalar_select %p82, %s83, %s84
      %p88 = pneg %p82
      %p89 = scmp.eq.s32.totalorder %s26, 1
      %p90 = por %p88, %p89
      %p91 = scmp.ne.s32.totalorder %s83, %s86
      %p92 = scmp.eq.s32.totalorder %s26, 0
      %p93 = por %p91, %p92
      %p94 = scmp.ne.s32.totalorder %s83, %s86
      %p95 = scmp.eq.s32.totalorder %s31, 1
      %p96 = por %p94, %p95
      %p97 = scmp.ne.s32.totalorder %s86, %s87
      %p98 = scmp.eq.s32.totalorder %s31, 0
      %p99 = por %p97, %p98
      %p100 = scmp.ne.s32.totalorder %s86, %s87
      %p101 = scmp.eq.s32.totalorder %s32, 1
      %p102 = por %p100, %p101
      %p104 = scmp.ne.s32.totalorder %s87, %s103
      %p105 = scmp.eq.s32.totalorder %s32, 0
      %p106 = por %p104, %p105
      %s107 = ssub.s32 %s26, %s33
      %p108 = scmp.eq.s32.totalorder %s107, 0
      %s110 = sadd.s32 %s109, 1
      %s111 = scalar_select %p108, %s109, %s110
      %p114 = pneg %p108
      %p115 = scmp.eq.s32.totalorder %s26, 1
      %p116 = por %p114, %p115
      %p117 = scmp.ne.s32.totalorder %s109, %s112
      %p118 = scmp.eq.s32.totalorder %s26, 0
      %p119 = por %p117, %p118
      %p120 = scmp.ne.s32.totalorder %s109, %s112
      %p121 = scmp.eq.s32.totalorder %s31, 1
      %p122 = por %p120, %p121
      %p123 = scmp.ne.s32.totalorder %s112, %s113
      %p124 = scmp.eq.s32.totalorder %s31, 0
      %p125 = por %p123, %p124
      %p126 = scmp.ne.s32.totalorder %s112, %s113
      %p127 = scmp.eq.s32.totalorder %s32, 1
      %p128 = por %p126, %p127
      %p130 = scmp.ne.s32.totalorder %s113, %s129
      %p131 = scmp.eq.s32.totalorder %s32, 0
      %p132 = por %p130, %p131
      %s133 = ssub.s32 %s26, %s33
      %p134 = scmp.eq.s32.totalorder %s133, 0
      %s136 = sadd.s32 %s135, 1
      %s137 = scalar_select %p134, %s135, %s136
      %p140 = pneg %p134
      %p141 = scmp.eq.s32.totalorder %s26, 1
      %p142 = por %p140, %p141
      %p143 = scmp.ne.s32.totalorder %s135, %s138
      %p144 = scmp.eq.s32.totalorder %s26, 0
      %p145 = por %p143, %p144
      %p146 = scmp.ne.s32.totalorder %s135, %s138
      %p147 = scmp.eq.s32.totalorder %s31, 1
      %p148 = por %p146, %p147
      %p149 = scmp.ne.s32.totalorder %s138, %s139
      %p150 = scmp.eq.s32.totalorder %s31, 0
      %p151 = por %p149, %p150
      %p152 = scmp.ne.s32.totalorder %s138, %s139
      %p153 = scmp.eq.s32.totalorder %s32, 1
      %p154 = por %p152, %p153
      %p156 = scmp.ne.s32.totalorder %s139, %s155
      %p157 = scmp.eq.s32.totalorder %s32, 0
      %p158 = por %p156, %p157
      %s159 = ssub.s32 %s26, %s33
      %p160 = scmp.eq.s32.totalorder %s159, 0
      %s162 = sadd.s32 %s161, 1
      %s163 = scalar_select %p160, %s161, %s162
      %p166 = pneg %p160
      %p167 = scmp.eq.s32.totalorder %s26, 1
      %p168 = por %p166, %p167
      %p169 = scmp.ne.s32.totalorder %s161, %s164
      %p170 = scmp.eq.s32.totalorder %s26, 0
      %p171 = por %p169, %p170
      %p172 = scmp.ne.s32.totalorder %s161, %s164
      %p173 = scmp.eq.s32.totalorder %s31, 1
      %p174 = por %p172, %p173
      %p175 = scmp.ne.s32.totalorder %s164, %s165
      %p176 = scmp.eq.s32.totalorder %s31, 0
      %p177 = por %p175, %p176
      %p178 = scmp.ne.s32.totalorder %s164, %s165
      %p179 = scmp.eq.s32.totalorder %s32, 1
      %p180 = por %p178, %p179
      %p182 = scmp.ne.s32.totalorder %s165, %s181
      %p183 = scmp.eq.s32.totalorder %s32, 0
      %p184 = por %p182, %p183
      %s185 = ssub.s32 %s26, %s33
      %p186 = scmp.eq.s32.totalorder %s185, 0
      %s188 = sadd.s32 %s187, 1
      %s189 = scalar_select %p186, %s187, %s188
      %p192 = pneg %p186
      %p193 = scmp.eq.s32.totalorder %s26, 1
      %p194 = por %p192, %p193
      %p195 = scmp.ne.s32.totalorder %s187, %s190
      %p196 = scmp.eq.s32.totalorder %s26, 0
      %p197 = por %p195, %p196
      %p198 = scmp.ne.s32.totalorder %s187, %s190
      %p199 = scmp.eq.s32.totalorder %s31, 1
      %p200 = por %p198, %p199
      %p201 = scmp.ne.s32.totalorder %s190, %s191
      %p202 = scmp.eq.s32.totalorder %s31, 0
      %p203 = por %p201, %p202
      %p204 = scmp.ne.s32.totalorder %s190, %s191
      %p205 = scmp.eq.s32.totalorder %s32, 1
      %p206 = por %p204, %p205
      %p208 = scmp.ne.s32.totalorder %s191, %s207
      %p209 = scmp.eq.s32.totalorder %s32, 0
      %p210 = por %p208, %p209
      %s211 = ssub.s32 %s26, %s33
      %p212 = scmp.eq.s32.totalorder %s211, 0
      %s214 = sadd.s32 %s213, 1
      %s215 = scalar_select %p212, %s213, %s214
      %p218 = pneg %p212
      %p219 = scmp.eq.s32.totalorder %s26, 1
      %p220 = por %p218, %p219
      %p221 = scmp.ne.s32.totalorder %s213, %s216
      %p222 = scmp.eq.s32.totalorder %s26, 0
      %p223 = por %p221, %p222
      %p224 = scmp.ne.s32.totalorder %s213, %s216
      %p225 = scmp.eq.s32.totalorder %s31, 1
      %p226 = por %p224, %p225
      %p227 = scmp.ne.s32.totalorder %s216, %s217
      %p228 = scmp.eq.s32.totalorder %s31, 0
      %p229 = por %p227, %p228
      %p230 = scmp.ne.s32.totalorder %s216, %s217
      %p231 = scmp.eq.s32.totalorder %s32, 1
      %p232 = por %p230, %p231
      %p234 = scmp.ne.s32.totalorder %s217, %s233
      %p235 = scmp.eq.s32.totalorder %s32, 0
      %p236 = por %p234, %p235
      %s237 = ssub.s32 %s26, %s33
      %p238 = scmp.eq.s32.totalorder %s237, 0
      %s240 = sadd.s32 %s239, 1
      %s241 = scalar_select %p238, %s239, %s240
      %p244 = pneg %p238
      %p245 = scmp.eq.s32.totalorder %s26, 1
      %p246 = por %p244, %p245
      %p247 = scmp.ne.s32.totalorder %s239, %s242
      %p248 = scmp.eq.s32.totalorder %s26, 0
      %p249 = por %p247, %p248
      %p250 = scmp.ne.s32.totalorder %s239, %s242
      %p251 = scmp.eq.s32.totalorder %s31, 1
      %p252 = por %p250, %p251
      %p253 = scmp.ne.s32.totalorder %s242, %s243
      %p254 = scmp.eq.s32.totalorder %s31, 0
      %p255 = por %p253, %p254
      %p256 = scmp.ne.s32.totalorder %s242, %s243
      %p257 = scmp.eq.s32.totalorder %s32, 1
      %p258 = por %p256, %p257
      %p260 = scmp.ne.s32.totalorder %s243, %s259
      %p261 = scmp.eq.s32.totalorder %s32, 0
      %p262 = por %p260, %p261
      %s263 = ssub.s32 %s26, %s33
      %p264 = scmp.eq.s32.totalorder %s263, 0
      %s266 = sadd.s32 %s265, 1
      %s267 = scalar_select %p264, %s265, %s266
      %p270 = pneg %p264
      %p271 = scmp.eq.s32.totalorder %s26, 1
      %p272 = por %p270, %p271
      %p273 = scmp.ne.s32.totalorder %s265, %s268
      %p274 = scmp.eq.s32.totalorder %s26, 0
      %p275 = por %p273, %p274
      %p276 = scmp.ne.s32.totalorder %s265, %s268
      %p277 = scmp.eq.s32.totalorder %s31, 1
      %p278 = por %p276, %p277
      %p279 = scmp.ne.s32.totalorder %s268, %s269
      %p280 = scmp.eq.s32.totalorder %s31, 0
      %p281 = por %p279, %p280
      %p282 = scmp.ne.s32.totalorder %s268, %s269
      %p283 = scmp.eq.s32.totalorder %s32, 1
      %p284 = por %p282, %p283
      %p286 = scmp.ne.s32.totalorder %s269, %s285
      %p287 = scmp.eq.s32.totalorder %s32, 0
      %p288 = por %p286, %p287
      %s289 = ssub.s32 %s26, %s33
      %p290 = scmp.eq.s32.totalorder %s289, 0
      %s292 = sadd.s32 %s291, 1
      %s293 = scalar_select %p290, %s291, %s292
      %p296 = pneg %p290
      %p297 = scmp.eq.s32.totalorder %s26, 1
      %p298 = por %p296, %p297
      %p299 = scmp.ne.s32.totalorder %s291, %s294
      %p300 = scmp.eq.s32.totalorder %s26, 0
      %p301 = por %p299, %p300
      %p302 = scmp.ne.s32.totalorder %s291, %s294
      %p303 = scmp.eq.s32.totalorder %s31, 1
      %p304 = por %p302, %p303
      %p305 = scmp.ne.s32.totalorder %s294, %s295
      %p306 = scmp.eq.s32.totalorder %s31, 0
      %p307 = por %p305, %p306
      %p308 = scmp.ne.s32.totalorder %s294, %s295
      %p309 = scmp.eq.s32.totalorder %s32, 1
      %p310 = por %p308, %p309
      %p312 = scmp.ne.s32.totalorder %s295, %s311
      %p313 = scmp.eq.s32.totalorder %s32, 0
      %p314 = por %p312, %p313
      %s315 = ssub.s32 %s26, %s33
      %p316 = scmp.eq.s32.totalorder %s315, 0
      %s318 = sadd.s32 %s317, 1
      %s319 = scalar_select %p316, %s317, %s318
      %p322 = pneg %p316
      %p323 = scmp.eq.s32.totalorder %s26, 1
      %p324 = por %p322, %p323
      %p325 = scmp.ne.s32.totalorder %s317, %s320
      %p326 = scmp.eq.s32.totalorder %s26, 0
      %p327 = por %p325, %p326
      %p328 = scmp.ne.s32.totalorder %s317, %s320
      %p329 = scmp.eq.s32.totalorder %s31, 1
      %p330 = por %p328, %p329
      %p331 = scmp.ne.s32.totalorder %s320, %s321
      %p332 = scmp.eq.s32.totalorder %s31, 0
      %p333 = por %p331, %p332
      %p334 = scmp.ne.s32.totalorder %s320, %s321
      %p335 = scmp.eq.s32.totalorder %s32, 1
      %p336 = por %p334, %p335
      %p338 = scmp.ne.s32.totalorder %s321, %s337
      %p339 = scmp.eq.s32.totalorder %s32, 0
      %p340 = por %p338, %p339
      %s341 = ssub.s32 %s26, %s33
      %p342 = scmp.eq.s32.totalorder %s341, 0
      %s344 = sadd.s32 %s343, 1
      %s345 = scalar_select %p342, %s343, %s344
      %p348 = pneg %p342
      %p349 = scmp.eq.s32.totalorder %s26, 1
      %p350 = por %p348, %p349
      %p351 = scmp.ne.s32.totalorder %s343, %s346
      %p352 = scmp.eq.s32.totalorder %s26, 0
      %p353 = por %p351, %p352
      %p354 = scmp.ne.s32.totalorder %s343, %s346
      %p355 = scmp.eq.s32.totalorder %s31, 1
      %p356 = por %p354, %p355
      %p357 = scmp.ne.s32.totalorder %s346, %s347
      %p358 = scmp.eq.s32.totalorder %s31, 0
      %p359 = por %p357, %p358
      %p360 = scmp.ne.s32.totalorder %s346, %s347
      %p361 = scmp.eq.s32.totalorder %s32, 1
      %p362 = por %p360, %p361
      %p364 = scmp.ne.s32.totalorder %s347, %s363
      %p365 = scmp.eq.s32.totalorder %s32, 0
      %p366 = por %p364, %p365
      %s368 = sadd.s32 %s367, 1
      %p371 = scmp.eq.s32.totalorder %s26, 1
      %p372 = scmp.ne.s32.totalorder %s367, %s369
      %p373 = scmp.eq.s32.totalorder %s26, 0
      %p374 = por %p372, %p373
      %p375 = scmp.ne.s32.totalorder %s367, %s369
      %p376 = scmp.eq.s32.totalorder %s31, 1
      %p377 = por %p375, %p376
      %p378 = scmp.ne.s32.totalorder %s369, %s370
      %p379 = scmp.eq.s32.totalorder %s31, 0
      %p380 = por %p378, %p379
      %p381 = scmp.ne.s32.totalorder %s369, %s370
      %p382 = scmp.eq.s32.totalorder %s32, 1
      %p383 = por %p381, %p382
      %p385 = scmp.ne.s32.totalorder %s370, %s384
      %p386 = scmp.eq.s32.totalorder %s32, 0
      %p387 = por %p385, %p386
      %s389 = sadd.s32 %s388, 1
      %p392 = scmp.eq.s32.totalorder %s26, 1
      %p393 = scmp.ne.s32.totalorder %s388, %s390
      %p394 = scmp.eq.s32.totalorder %s26, 0
      %p395 = por %p393, %p394
      %p396 = scmp.ne.s32.totalorder %s388, %s390
      %p397 = scmp.eq.s32.totalorder %s31, 1
      %p398 = por %p396, %p397
      %p399 = scmp.ne.s32.totalorder %s390, %s391
      %p400 = scmp.eq.s32.totalorder %s31, 0
      %p401 = por %p399, %p400
      %p402 = scmp.ne.s32.totalorder %s390, %s391
      %p403 = scmp.eq.s32.totalorder %s32, 1
      %p404 = por %p402, %p403
      %p406 = scmp.ne.s32.totalorder %s391, %s405
      %p407 = scmp.eq.s32.totalorder %s32, 0
      %p408 = por %p406, %p407
      %s410 = sadd.s32 %s409, 1
      %p413 = scmp.eq.s32.totalorder %s26, 1
      %p414 = scmp.ne.s32.totalorder %s409, %s411
      %p415 = scmp.eq.s32.totalorder %s26, 0
      %p416 = por %p414, %p415
      %p417 = scmp.ne.s32.totalorder %s409, %s411
      %p418 = scmp.eq.s32.totalorder %s31, 1
      %p419 = por %p417, %p418
      %p420 = scmp.ne.s32.totalorder %s411, %s412
      %p421 = scmp.eq.s32.totalorder %s31, 0
      %p422 = por %p420, %p421
      %p423 = scmp.ne.s32.totalorder %s411, %s412
      %p424 = scmp.eq.s32.totalorder %s32, 1
      %p425 = por %p423, %p424
      %p427 = scmp.ne.s32.totalorder %s412, %s426
      %p428 = scmp.eq.s32.totalorder %s32, 0
      %p429 = por %p427, %p428
      %s431 = sadd.s32 %s430, 1
      %p434 = scmp.eq.s32.totalorder %s26, 1
      %p435 = scmp.ne.s32.totalorder %s430, %s432
      %p436 = scmp.eq.s32.totalorder %s26, 0
      %p437 = por %p435, %p436
      %p438 = scmp.ne.s32.totalorder %s430, %s432
      %p439 = scmp.eq.s32.totalorder %s31, 1
      %p440 = por %p438, %p439
      %p441 = scmp.ne.s32.totalorder %s432, %s433
      %p442 = scmp.eq.s32.totalorder %s31, 0
      %p443 = por %p441, %p442
      %p444 = scmp.ne.s32.totalorder %s432, %s433
      %p445 = scmp.eq.s32.totalorder %s32, 1
      %p446 = por %p444, %p445
      %p448 = scmp.ne.s32.totalorder %s433, %s447
      %p449 = scmp.eq.s32.totalorder %s32, 0
      %p450 = por %p448, %p449
      %s452 = sadd.s32 %s451, 1
      %p455 = scmp.eq.s32.totalorder %s26, 1
      %p456 = scmp.ne.s32.totalorder %s451, %s453
      %p457 = scmp.eq.s32.totalorder %s26, 0
      %p458 = por %p456, %p457
      %p459 = scmp.ne.s32.totalorder %s451, %s453
      %p460 = scmp.eq.s32.totalorder %s31, 1
      %p461 = por %p459, %p460
      %p462 = scmp.ne.s32.totalorder %s453, %s454
      %p463 = scmp.eq.s32.totalorder %s31, 0
      %p464 = por %p462, %p463
      %p465 = scmp.ne.s32.totalorder %s453, %s454
      %p466 = scmp.eq.s32.totalorder %s32, 1
      %p467 = por %p465, %p466
      %p469 = scmp.ne.s32.totalorder %s454, %s468
      %p470 = scmp.eq.s32.totalorder %s32, 0
      %p471 = por %p469, %p470
      %s473 = sadd.s32 %s472, 1
      %p476 = scmp.eq.s32.totalorder %s26, 1
      %p477 = scmp.ne.s32.totalorder %s472, %s474
      %p478 = scmp.eq.s32.totalorder %s26, 0
      %p479 = por %p477, %p478
      %p480 = scmp.ne.s32.totalorder %s472, %s474
      %p481 = scmp.eq.s32.totalorder %s31, 1
      %p482 = por %p480, %p481
      %p483 = scmp.ne.s32.totalorder %s474, %s475
      %p484 = scmp.eq.s32.totalorder %s31, 0
      %p485 = por %p483, %p484
      %p486 = scmp.ne.s32.totalorder %s474, %s475
      %p487 = scmp.eq.s32.totalorder %s32, 1
      %p488 = por %p486, %p487
      %p490 = scmp.ne.s32.totalorder %s475, %s489
      %p491 = scmp.eq.s32.totalorder %s32, 0
      %p492 = por %p490, %p491
      %s494 = sadd.s32 %s493, 1
      %p497 = scmp.eq.s32.totalorder %s26, 1
      %p498 = scmp.ne.s32.totalorder %s493, %s495
      %p499 = scmp.eq.s32.totalorder %s26, 0
      %p500 = por %p498, %p499
      %p501 = scmp.ne.s32.totalorder %s493, %s495
      %p502 = scmp.eq.s32.totalorder %s31, 1
      %p503 = por %p501, %p502
      %p504 = scmp.ne.s32.totalorder %s495, %s496
      %p505 = scmp.eq.s32.totalorder %s31, 0
      %p506 = por %p504, %p505
      %p507 = scmp.ne.s32.totalorder %s495, %s496
      %p508 = scmp.eq.s32.totalorder %s32, 1
      %p509 = por %p507, %p508
      %p511 = scmp.ne.s32.totalorder %s496, %s510
      %p512 = scmp.eq.s32.totalorder %s32, 0
      %p513 = por %p511, %p512
      %p514 = scmp.le.s32.totalorder 1, %s26
      %p515 = scmp.lt.s32.totalorder %s26, 3
      %p516 = pnand %p514, %p515
      %p517 = pneg %p516
      // Predicated region
      $region9: #{uni3d_forward.3} parent=5 // pred_check
        _
      $region10: #{uni3d_forward.3} parent=5 // pred_check_branch
        %519 = sbr.rel (%p516) target = $region12
      $region11: #{uni3d_forward.3} parent=5 // pred_region
        %s520 = ssub.s32 %s26, 1
        // Predicated region
        $region13: #{uni3d_forward.3} parent=11 // pred_check
          %p521 = pneg %p47
        $region14: #{uni3d_forward.3} parent=11 // pred_check_branch
          %523 = sbr.rel (%p521) target = $region16
        $region15: #{uni3d_forward.3} parent=11 // pred_region
          _
        $region16: #{uni3d_forward.3} parent=11 // pred_fallthru
          _
        // Predicated region
        $region17: #{uni3d_forward.3} parent=11 // pred_check
          %p524 = pneg %p380
        $region18: #{uni3d_forward.3} parent=11 // pred_check_branch
          %526 = sbr.rel (%p524) target = $region20
        $region19: #{uni3d_forward.3} parent=11 // pred_region
          _
        $region20: #{uni3d_forward.3} parent=11 // pred_fallthru
          _
        // Predicated region
        $region21: #{uni3d_forward.3} parent=11 // pred_check
          %p527 = pneg %p401
        $region22: #{uni3d_forward.3} parent=11 // pred_check_branch
          %529 = sbr.rel (%p527) target = $region24
        $region23: #{uni3d_forward.3} parent=11 // pred_region
          _
        $region24: #{uni3d_forward.3} parent=11 // pred_fallthru
          _
        // Predicated region
        $region25: #{uni3d_forward.3} parent=11 // pred_check
          %p530 = pneg %p422
        $region26: #{uni3d_forward.3} parent=11 // pred_check_branch
          %532 = sbr.rel (%p530) target = $region28
        $region27: #{uni3d_forward.3} parent=11 // pred_region
          _
        $region28: #{uni3d_forward.3} parent=11 // pred_fallthru
          _
        // Predicated region
        $region29: #{uni3d_forward.3} parent=11 // pred_check
          %p533 = pneg %p443
        $region30: #{uni3d_forward.3} parent=11 // pred_check_branch
          %535 = sbr.rel (%p533) target = $region32
        $region31: #{uni3d_forward.3} parent=11 // pred_region
          _
        $region32: #{uni3d_forward.3} parent=11 // pred_fallthru
          _
        // Predicated region
        $region33: #{uni3d_forward.3} parent=11 // pred_check
          %p536 = pneg %p464
        $region34: #{uni3d_forward.3} parent=11 // pred_check_branch
          %538 = sbr.rel (%p536) target = $region36
        $region35: #{uni3d_forward.3} parent=11 // pred_region
          _
        $region36: #{uni3d_forward.3} parent=11 // pred_fallthru
          _
        // Predicated region
        $region37: #{uni3d_forward.3} parent=11 // pred_check
          %p539 = pneg %p485
        $region38: #{uni3d_forward.3} parent=11 // pred_check_branch
          %541 = sbr.rel (%p539) target = $region40
        $region39: #{uni3d_forward.3} parent=11 // pred_region
          _
        $region40: #{uni3d_forward.3} parent=11 // pred_fallthru
          _
      $region12: #{uni3d_forward.3} parent=5 // pred_fallthru
        _
      %p542 = scmp.lt.s32.totalorder %s26, 2
      // Predicated region
      $region41: #{uni3d_forward.3} parent=5 // pred_check
        %p543 = pneg %p542
      $region42: #{uni3d_forward.3} parent=5 // pred_check_branch
        %545 = sbr.rel (%p543) target = $region44
      $region43: #{uni3d_forward.3} parent=5 // pred_region
        // Predicated region
        $region45: #{uni3d_forward.3} parent=43 // pred_check
          %p546 = pneg %p67
        $region46: #{uni3d_forward.3} parent=43 // pred_check_branch
          %548 = sbr.rel (%p546) target = $region48
        $region47: #{uni3d_forward.3} parent=43 // pred_region
          %p549 = scmp.lt.s32.totalorder %s26, 1
          %s550 = scalar_select %p549, %s26, 1
          %s551 = scalar_lea.vmem %s1, %s550
        $region48: #{uni3d_forward.3} parent=43 // pred_fallthru
          _
        // Predicated region
        $region49: #{uni3d_forward.3} parent=43 // pred_check
          %p552 = pneg %p93
        $region50: #{uni3d_forward.3} parent=43 // pred_check_branch
          %554 = sbr.rel (%p552) target = $region52
        $region51: #{uni3d_forward.3} parent=43 // pred_region
          %p555 = scmp.lt.s32.totalorder %s26, 1
          %s556 = scalar_select %p555, %s26, 1
          %s557 = scalar_lea.vmem %s2, %s556
        $region52: #{uni3d_forward.3} parent=43 // pred_fallthru
          _
        // Predicated region
        $region53: #{uni3d_forward.3} parent=43 // pred_check
          %p558 = pneg %p119
        $region54: #{uni3d_forward.3} parent=43 // pred_check_branch
          %560 = sbr.rel (%p558) target = $region56
        $region55: #{uni3d_forward.3} parent=43 // pred_region
          %p561 = scmp.lt.s32.totalorder %s26, 1
          %s562 = scalar_select %p561, %s26, 1
          %s563 = smul.addr %s562, 48
          %s564 = smul.addr %s563, 4
          %s565 = scalar_lea.vmem %s3, %s564
        $region56: #{uni3d_forward.3} parent=43 // pred_fallthru
          _
        // Predicated region
        $region57: #{uni3d_forward.3} parent=43 // pred_check
          %p566 = pneg %p145
        $region58: #{uni3d_forward.3} parent=43 // pred_check_branch
          %568 = sbr.rel (%p566) target = $region60
        $region59: #{uni3d_forward.3} parent=43 // pred_region
          %p569 = scmp.lt.s32.totalorder %s26, 1
          %s570 = scalar_select %p569, %s26, 1
          %s571 = smul.addr %s570, 3
          %s572 = scalar_lea.vmem %s4, %s571
        $region60: #{uni3d_forward.3} parent=43 // pred_fallthru
          _
        // Predicated region
        $region61: #{uni3d_forward.3} parent=43 // pred_check
          %p573 = pneg %p171
        $region62: #{uni3d_forward.3} parent=43 // pred_check_branch
          %575 = sbr.rel (%p573) target = $region64
        $region63: #{uni3d_forward.3} parent=43 // pred_region
          %p576 = scmp.lt.s32.totalorder %s26, 1
          %s577 = scalar_select %p576, %s26, 1
          %s578 = smul.addr %s577, 16
          %s579 = smul.addr %s578, 4
          %s580 = scalar_lea.vmem %s5, %s579
        $region64: #{uni3d_forward.3} parent=43 // pred_fallthru
          _
        // Predicated region
        $region65: #{uni3d_forward.3} parent=43 // pred_check
          %p581 = pneg %p197
        $region66: #{uni3d_forward.3} parent=43 // pred_check_branch
          %583 = sbr.rel (%p581) target = $region68
        $region67: #{uni3d_forward.3} parent=43 // pred_region
          %p584 = scmp.lt.s32.totalorder %s26, 1
          %s585 = scalar_select %p584, %s26, 1
          %s586 = scalar_lea.vmem %s6, %s585
        $region68: #{uni3d_forward.3} parent=43 // pred_fallthru
          _
        // Predicated region
        $region69: #{uni3d_forward.3} parent=43 // pred_check
          %p587 = pneg %p223
        $region70: #{uni3d_forward.3} parent=43 // pred_check_branch
          %589 = sbr.rel (%p587) target = $region72
        $region71: #{uni3d_forward.3} parent=43 // pred_region
          %p590 = scmp.lt.s32.totalorder %s26, 1
          %s591 = scalar_select %p590, %s26, 1
          %s592 = scalar_lea.vmem %s7, %s591
        $region72: #{uni3d_forward.3} parent=43 // pred_fallthru
          _
        // Predicated region
        $region73: #{uni3d_forward.3} parent=43 // pred_check
          %p593 = pneg %p249
        $region74: #{uni3d_forward.3} parent=43 // pred_check_branch
          %595 = sbr.rel (%p593) target = $region76
        $region75: #{uni3d_forward.3} parent=43 // pred_region
          %p596 = scmp.lt.s32.totalorder %s26, 1
          %s597 = scalar_select %p596, %s26, 1
          %s598 = scalar_lea.vmem %s8, %s597
        $region76: #{uni3d_forward.3} parent=43 // pred_fallthru
          _
        // Predicated region
        $region77: #{uni3d_forward.3} parent=43 // pred_check
          %p599 = pneg %p275
        $region78: #{uni3d_forward.3} parent=43 // pred_check_branch
          %601 = sbr.rel (%p599) target = $region80
        $region79: #{uni3d_forward.3} parent=43 // pred_region
          %p602 = scmp.lt.s32.totalorder %s26, 1
          %s603 = scalar_select %p602, %s26, 1
          %s604 = smul.addr %s603, 64
          %s605 = smul.addr %s604, 4
          %s606 = scalar_lea.vmem %s9, %s605
        $region80: #{uni3d_forward.3} parent=43 // pred_fallthru
          _
        // Predicated region
        $region81: #{uni3d_forward.3} parent=43 // pred_check
          %p607 = pneg %p301
        $region82: #{uni3d_forward.3} parent=43 // pred_check_branch
          %609 = sbr.rel (%p607) target = $region84
        $region83: #{uni3d_forward.3} parent=43 // pred_region
          %p610 = scmp.lt.s32.totalorder %s26, 1
          %s611 = scalar_select %p610, %s26, 1
          %s612 = smul.addr %s611, 4
          %s613 = scalar_lea.vmem %s10, %s612
        $region84: #{uni3d_forward.3} parent=43 // pred_fallthru
          _
        // Predicated region
        $region85: #{uni3d_forward.3} parent=43 // pred_check
          %p614 = pneg %p327
        $region86: #{uni3d_forward.3} parent=43 // pred_check_branch
          %616 = sbr.rel (%p614) target = $region88
        $region87: #{uni3d_forward.3} parent=43 // pred_region
          %p617 = scmp.lt.s32.totalorder %s26, 1
          %s618 = scalar_select %p617, %s26, 1
          %s619 = smul.addr %s618, 64
          %s620 = smul.addr %s619, 4
          %s621 = scalar_lea.vmem %s11, %s620
        $region88: #{uni3d_forward.3} parent=43 // pred_fallthru
          _
        // Predicated region
        $region89: #{uni3d_forward.3} parent=43 // pred_check
          %p622 = pneg %p353
        $region90: #{uni3d_forward.3} parent=43 // pred_check_branch
          %624 = sbr.rel (%p622) target = $region92
        $region91: #{uni3d_forward.3} parent=43 // pred_region
          %p625 = scmp.lt.s32.totalorder %s26, 1
          %s626 = scalar_select %p625, %s26, 1
          %s627 = scalar_lea.vmem %s12, %s626
        $region92: #{uni3d_forward.3} parent=43 // pred_fallthru
          _
      $region44: #{uni3d_forward.3} parent=5 // pred_fallthru
        _
      %p628 = scmp.le.s32.totalorder 1, %s26
      %p629 = scmp.lt.s32.totalorder %s26, 3
      %p630 = pnand %p628, %p629
      %p631 = pneg %p630
      // Predicated region
      $region93: #{uni3d_forward.3} parent=5 // pred_check
        _
      $region94: #{uni3d_forward.3} parent=5 // pred_check_branch
        %633 = sbr.rel (%p630) target = $region96
      $region95: #{uni3d_forward.3} parent=5 // pred_region
        %s634 = ssub.s32 %s26, 1
        %p635 = pneg %p47
        %p636 = pneg %p44
        %p637 = scmp.lt.s32.totalorder %s31, 1
        %s638 = scalar_select %p637, %s31, 1
        %s639 = scalar_lea.vmem %s1, %s638
        %p640 = pneg %p73
        %p641 = pneg %p70
        %p642 = scmp.lt.s32.totalorder %s31, 1
        %s643 = scalar_select %p642, %s31, 1
        %s644 = scalar_lea.vmem %s2, %s643
        %p645 = pneg %p99
        %p646 = pneg %p96
        %p647 = scmp.lt.s32.totalorder %s31, 1
        %s648 = scalar_select %p647, %s31, 1
        %s649 = smul.addr %s648, 48
        %s650 = smul.addr %s649, 4
        %s651 = scalar_lea.vmem %s3, %s650
        %p652 = pneg %p125
        %p653 = pneg %p122
        %p654 = scmp.lt.s32.totalorder %s31, 1
        %s655 = scalar_select %p654, %s31, 1
        %s656 = smul.addr %s655, 3
        %s657 = scalar_lea.vmem %s4, %s656
        %p658 = pneg %p151
        %p659 = pneg %p148
        %p660 = scmp.lt.s32.totalorder %s31, 1
        %s661 = scalar_select %p660, %s31, 1
        %s662 = smul.addr %s661, 16
        %s663 = smul.addr %s662, 4
        %s664 = scalar_lea.vmem %s5, %s663
        %p665 = pneg %p177
        %p666 = pneg %p174
        %p667 = scmp.lt.s32.totalorder %s31, 1
        %s668 = scalar_select %p667, %s31, 1
        %s669 = scalar_lea.vmem %s6, %s668
        %p670 = pneg %p203
        %p671 = pneg %p200
        %p672 = scmp.lt.s32.totalorder %s31, 1
        %s673 = scalar_select %p672, %s31, 1
        %s674 = scalar_lea.vmem %s7, %s673
        %p675 = pneg %p229
        %p676 = pneg %p226
        %p677 = scmp.lt.s32.totalorder %s31, 1
        %s678 = scalar_select %p677, %s31, 1
        %s679 = scalar_lea.vmem %s8, %s678
        %p680 = pneg %p255
        %p681 = pneg %p252
        %p682 = scmp.lt.s32.totalorder %s31, 1
        %s683 = scalar_select %p682, %s31, 1
        %s684 = smul.addr %s683, 64
        %s685 = smul.addr %s684, 4
        %s686 = scalar_lea.vmem %s9, %s685
        %p687 = pneg %p281
        %p688 = pneg %p278
        %p689 = scmp.lt.s32.totalorder %s31, 1
        %s690 = scalar_select %p689, %s31, 1
        %s691 = smul.addr %s690, 4
        %s692 = scalar_lea.vmem %s10, %s691
        %p693 = pneg %p307
        %p694 = pneg %p304
        %p695 = scmp.lt.s32.totalorder %s31, 1
        %s696 = scalar_select %p695, %s31, 1
        %s697 = smul.addr %s696, 64
        %s698 = smul.addr %s697, 4
        %s699 = scalar_lea.vmem %s11, %s698
        %p700 = pneg %p333
        %p701 = pneg %p330
        %p702 = scmp.lt.s32.totalorder %s31, 1
        %s703 = scalar_select %p702, %s31, 1
        %s704 = scalar_lea.vmem %s12, %s703
        %p705 = pneg %p359
        %p706 = pneg %p356
        %p707 = pneg %p380
        %p708 = pneg %p377
        %p709 = pneg %p401
        %p710 = pneg %p398
        %p711 = pneg %p422
        %p712 = pneg %p419
        %p713 = pneg %p443
        %p714 = pneg %p440
        %p715 = pneg %p464
        %p716 = pneg %p461
        %p717 = pneg %p485
        %p718 = pneg %p482
        %p719 = pneg %p506
        %p720 = pneg %p503
        %p721 = scmp.lt.s32.totalorder %s31, 1
        %s722 = scalar_select %p721, %s31, 1
        %s723 = scalar_lea.vmem %s1, %s722
        %p724 = scmp.lt.s32.totalorder %s31, 1
        %s725 = scalar_select %p724, %s31, 1
        %s726 = scalar_lea.vmem %s2, %s725
        %p727 = scmp.lt.s32.totalorder %s31, 1
        %s728 = scalar_select %p727, %s31, 1
        %s729 = smul.addr %s728, 48
        %s730 = smul.addr %s729, 4
        %s731 = scalar_lea.vmem %s3, %s730
        %p732 = scmp.lt.s32.totalorder %s31, 1
        %s733 = scalar_select %p732, %s31, 1
        %s734 = smul.addr %s733, 3
        %s735 = scalar_lea.vmem %s4, %s734
        %p736 = scmp.lt.s32.totalorder %s31, 1
        %s737 = scalar_select %p736, %s31, 1
        %s738 = smul.addr %s737, 16
        %s739 = smul.addr %s738, 4
        %s740 = scalar_lea.vmem %s5, %s739
        %p741 = scmp.lt.s32.totalorder %s31, 1
        %s742 = scalar_select %p741, %s31, 1
        %s743 = scalar_lea.vmem %s6, %s742
        %p744 = scmp.lt.s32.totalorder %s31, 1
        %s745 = scalar_select %p744, %s31, 1
        %s746 = scalar_lea.vmem %s7, %s745
        %p747 = scmp.lt.s32.totalorder %s31, 1
        %s748 = scalar_select %p747, %s31, 1
        %s749 = scalar_lea.vmem %s8, %s748
        %p750 = scmp.lt.s32.totalorder %s31, 1
        %s751 = scalar_select %p750, %s31, 1
        %s752 = smul.addr %s751, 64
        %s753 = smul.addr %s752, 4
        %s754 = scalar_lea.vmem %s9, %s753
        %p755 = scmp.lt.s32.totalorder %s31, 1
        %s756 = scalar_select %p755, %s31, 1
        %s757 = smul.addr %s756, 4
        %s758 = scalar_lea.vmem %s10, %s757
        %p759 = scmp.lt.s32.totalorder %s31, 1
        %s760 = scalar_select %p759, %s31, 1
        %s761 = smul.addr %s760, 64
        %s762 = smul.addr %s761, 4
        %s763 = scalar_lea.vmem %s11, %s762
        %p764 = scmp.lt.s32.totalorder %s31, 1
        %s765 = scalar_select %p764, %s31, 1
        %s766 = scalar_lea.vmem %s12, %s765
        %p768 = scmp.eq.s32.totalorder %s31, 0
        // Predicated region
        $region97: #{uni3d_forward.3} parent=95 // pred_check
          %p769 = pneg %p768
        $region98: #{uni3d_forward.3} parent=95 // pred_check_branch
          %771 = sbr.rel (%p769) target = $region100
        $region99: #{uni3d_forward.3} parent=95 // pred_region
          %v772 = vld [vmem:[%s0] sm:$0xf]
          %v773 = vld [vmem:[%s0 + $0x4] sm:$0xf]
          %v774 = vld [vmem:[%s0 + $0x8] sm:$0xf]
          %v775 = vld [vmem:[%s0 + $0xc] sm:$0xf]
          %v776 = vld [vmem:[%s0 + $0x10] sm:$0xf]
          %v777 = vld [vmem:[%s0 + $0x14] sm:$0xf]
          %v778 = vunpack.c.l.bf16 %v772
          %v779 = vunpack.c.l.bf16 %v773
          %v780 = vunpack.c.l.bf16 %v774
          %v781 = vunpack.c.l.bf16 %v775
          %v782 = vunpack.c.l.bf16 %v776
          %v783 = vunpack.c.l.bf16 %v777
          %784 = vst [vmem:[#allocation2] sm:$0xff] %v778
          %785 = vst [vmem:[#allocation2 + $0x8] sm:$0xff] %v779
          %786 = vst [vmem:[#allocation2 + $0x10] sm:$0xff] %v780
          %787 = vst [vmem:[#allocation2 + $0x18] sm:$0xff] %v781
          %788 = vst [vmem:[#allocation2 + $0x20] sm:$0xff] %v782
          %789 = vst [vmem:[#allocation2 + $0x28] sm:$0xff] %v783
        $region100: #{uni3d_forward.3} parent=95 // pred_fallthru
          _
        %v790 = vld [vmem:[#allocation2] sm:$0xff]
        %v791 = vld [vmem:[#allocation2 + $0x8] sm:$0xff]
        %v792 = vld [vmem:[#allocation2 + $0x10] sm:$0xff]
        %v793 = vld [vmem:[#allocation2 + $0x18] sm:$0xff]
        %v794 = vld [vmem:[#allocation2 + $0x20] sm:$0xff]
        %v795 = vld [vmem:[#allocation2 + $0x28] sm:$0xff]
        %v796 = vld [vmem:[%s723] sm:$0x1]
        %v797 = vld [vmem:[%s726] sm:$0x1]
        %798 = vadd.xlane.f32.xlu0 %v790
        %v799 = vpop.xlane.xlu0 %798
        %800 = vadd.xlane.f32.xlu0 %v791
        %v801 = vpop.xlane.xlu0 %800
        %802 = vadd.xlane.f32.xlu0 %v792
        %v803 = vpop.xlane.xlu0 %802
        %804 = vadd.xlane.f32.xlu0 %v793
        %v805 = vpop.xlane.xlu0 %804
        %806 = vadd.xlane.f32.xlu0 %v794
        %v807 = vpop.xlane.xlu0 %806
        %808 = vadd.xlane.f32.xlu0 %v795
        %v809 = vpop.xlane.xlu0 %808
        %v810 = vrcp.pop 128.0
        %v811 = vmul.f32 %v799, %v810
        %v812 = vmul.f32 %v801, %v810
        %v813 = vmul.f32 %v803, %v810
        %v814 = vmul.f32 %v805, %v810
        %v815 = vmul.f32 %v807, %v810
        %v816 = vmul.f32 %v809, %v810
        %v817 = vsub.f32 %v790, %v811
        %v818 = vsub.f32 %v791, %v812
        %v819 = vsub.f32 %v792, %v813
        %v820 = vsub.f32 %v793, %v814
        %v821 = vsub.f32 %v794, %v815
        %v822 = vsub.f32 %v795, %v816
        %v823 = vmul.f32 %v817, %v817
        %v824 = vmul.f32 %v818, %v818
        %v825 = vmul.f32 %v819, %v819
        %v826 = vmul.f32 %v820, %v820
        %v827 = vmul.f32 %v821, %v821
        %v828 = vmul.f32 %v822, %v822
        %829 = vadd.xlane.f32.xlu0 %v823
        %v830 = vpop.xlane.xlu0 %829
        %831 = vadd.xlane.f32.xlu0 %v824
        %v832 = vpop.xlane.xlu0 %831
        %833 = vadd.xlane.f32.xlu0 %v825
        %v834 = vpop.xlane.xlu0 %833
        %835 = vadd.xlane.f32.xlu0 %v826
        %v836 = vpop.xlane.xlu0 %835
        %837 = vadd.xlane.f32.xlu0 %v827
        %v838 = vpop.xlane.xlu0 %837
        %839 = vadd.xlane.f32.xlu0 %v828
        %v840 = vpop.xlane.xlu0 %839
        %v841 = vmul.f32 %v830, %v810
        %v842 = vmul.f32 %v832, %v810
        %v843 = vmul.f32 %v834, %v810
        %v844 = vmul.f32 %v836, %v810
        %v845 = vmul.f32 %v838, %v810
        %v846 = vmul.f32 %v840, %v810
        %v847 = vadd.f32 %v841, 1e-05
        %v848 = vadd.f32 %v842, 1e-05
        %v849 = vadd.f32 %v843, 1e-05
        %v850 = vadd.f32 %v844, 1e-05
        %v851 = vadd.f32 %v845, 1e-05
        %v852 = vadd.f32 %v846, 1e-05
        %v853 = vrsqrt.pop %v847
        %v854 = vrsqrt.pop %v848
        %v855 = vrsqrt.pop %v849
        %v856 = vrsqrt.pop %v850
        %v857 = vrsqrt.pop %v851
        %v858 = vrsqrt.pop %v852
        %v859 = vmul.f32 %v817, %v853
        %v860 = vmul.f32 %v818, %v854
        %v861 = vmul.f32 %v819, %v855
        %v862 = vmul.f32 %v820, %v856
        %v863 = vmul.f32 %v821, %v857
        %v864 = vmul.f32 %v822, %v858
        %v866 = vlaneseq
        %v867 = vshrl.u32 %v866, 7
        %v868 = vsub.s32 0, %v867
        %v869 = vrot.slane %v796, %v868
        %v871 = vmul.f32 %v859, %v869
        %v872 = vmul.f32 %v860, %v869
        %v873 = vmul.f32 %v861, %v869
        %v874 = vmul.f32 %v862, %v869
        %v875 = vmul.f32 %v863, %v869
        %v876 = vmul.f32 %v864, %v869
        %v878 = vlaneseq
        %v879 = vshrl.u32 %v878, 7
        %v880 = vsub.s32 0, %v879
        %v881 = vrot.slane %v797, %v880
        %v883 = vadd.f32 %v871, %v881
        %v884 = vadd.f32 %v872, %v881
        %v885 = vadd.f32 %v873, %v881
        %v886 = vadd.f32 %v874, %v881
        %v887 = vadd.f32 %v875, %v881
        %v888 = vadd.f32 %v876, %v881
        %v889 = vpack.c.bf16 %v884, %v883
        %v890 = vpack.c.bf16 %v886, %v885
        %v891 = vpack.c.bf16 %v888, %v887
        %v892 = vld [vmem:[%s731] sm:$0xff]
        %v893 = vld [vmem:[%s731 + $0x8] sm:$0xf]
        %v894 = vld [vmem:[%s731 + $0xc] sm:$0xff]
        %v895 = vld [vmem:[%s731 + $0x14] sm:$0xf]
        %v896 = vld [vmem:[%s731 + $0x18] sm:$0xff]
        %v897 = vld [vmem:[%s731 + $0x20] sm:$0xf]
        %v898 = vld [vmem:[%s731 + $0x24] sm:$0xff]
        %v899 = vld [vmem:[%s731 + $0x2c] sm:$0xf]
        %v900 = vld [vmem:[%s731 + $0x30] sm:$0xff]
        %v901 = vld [vmem:[%s731 + $0x38] sm:$0xf]
        %v902 = vld [vmem:[%s731 + $0x3c] sm:$0xff]
        %v903 = vld [vmem:[%s731 + $0x44] sm:$0xf]
        %v904 = vld [vmem:[%s731 + $0x48] sm:$0xff]
        %v905 = vld [vmem:[%s731 + $0x50] sm:$0xf]
        %v906 = vld [vmem:[%s731 + $0x54] sm:$0xff]
        %v907 = vld [vmem:[%s731 + $0x5c] sm:$0xf]
        %v908 = vld [vmem:[%s731 + $0x60] sm:$0xff]
        %v909 = vld [vmem:[%s731 + $0x68] sm:$0xf]
        %v910 = vld [vmem:[%s731 + $0x6c] sm:$0xff]
        %v911 = vld [vmem:[%s731 + $0x74] sm:$0xf]
        %v912 = vld [vmem:[%s731 + $0x78] sm:$0xff]
        %v913 = vld [vmem:[%s731 + $0x80] sm:$0xf]
        %v914 = vld [vmem:[%s731 + $0x84] sm:$0xff]
        %v915 = vld [vmem:[%s731 + $0x8c] sm:$0xf]
        %v916 = vld [vmem:[%s731 + $0x90] sm:$0xff]
        %v917 = vld [vmem:[%s731 + $0x98] sm:$0xf]
        %v918 = vld [vmem:[%s731 + $0x9c] sm:$0xff]
        %v919 = vld [vmem:[%s731 + $0xa4] sm:$0xf]
        %v920 = vld [vmem:[%s731 + $0xa8] sm:$0xff]
        %v921 = vld [vmem:[%s731 + $0xb0] sm:$0xf]
        %v922 = vld [vmem:[%s731 + $0xb4] sm:$0xff]
        %v923 = vld [vmem:[%s731 + $0xbc] sm:$0xf]
        %v924 = vld [vmem:[%s735] sm:$0x7]
        %v926 = vlaneseq
        %v927 = vshrl.u32 %v926, 7
        %v928 = vsub.s32 0, %v927
        %v929 = vrot.slane %v924, %v928
        %v930 = vlaneseq
        %v931 = vshrl.u32 %v930, 7
        %v932 = vsub.s32 1, %v931
        %v933 = vrot.slane %v924, %v932
        %v934 = vlaneseq
        %v935 = vshrl.u32 %v934, 7
        %v936 = vsub.s32 2, %v935
        %v937 = vrot.slane %v924, %v936
        %v973 = vunpack.c.l.b16 %v892
        %v974 = vunpack.c.h.b16 %v892
        %v975 = vunpack.c.l.b16 %v893
        %v976 = vunpack.c.l.b16 %v894
        %v977 = vunpack.c.h.b16 %v894
        %v978 = vunpack.c.l.b16 %v895
        %v979 = vunpack.c.l.b16 %v896
        %v980 = vunpack.c.h.b16 %v896
        %v981 = vunpack.c.l.b16 %v897
        %v982 = vunpack.c.l.b16 %v898
        %v983 = vunpack.c.h.b16 %v898
        %v984 = vunpack.c.l.b16 %v899
        %v985 = vunpack.c.l.b16 %v900
        %v986 = vunpack.c.h.b16 %v900
        %v987 = vunpack.c.l.b16 %v901
        %v988 = vunpack.c.l.b16 %v902
        %v989 = vunpack.c.h.b16 %v902
        %v990 = vunpack.c.l.b16 %v903
        %v991 = vunpack.c.l.b16 %v904
        %v992 = vunpack.c.h.b16 %v904
        %v993 = vunpack.c.l.b16 %v905
        %v994 = vunpack.c.l.b16 %v906
        %v995 = vunpack.c.h.b16 %v906
        %v996 = vunpack.c.l.b16 %v907
        %v997 = vunpack.c.l.b16 %v908
        %v998 = vunpack.c.h.b16 %v908
        %v999 = vunpack.c.l.b16 %v909
        %v1000 = vunpack.c.l.b16 %v910
        %v1001 = vunpack.c.h.b16 %v910
        %v1002 = vunpack.c.l.b16 %v911
        %v1003 = vunpack.c.l.b16 %v912
        %v1004 = vunpack.c.h.b16 %v912
        %v1005 = vunpack.c.l.b16 %v913
        %v1006 = vunpack.c.l.b16 %v914
        %v1007 = vunpack.c.h.b16 %v914
        %v1008 = vunpack.c.l.b16 %v915
        %v1009 = vunpack.c.l.b16 %v916
        %v1010 = vunpack.c.h.b16 %v916
        %v1011 = vunpack.c.l.b16 %v917
        %v1012 = vunpack.c.l.b16 %v918
        %v1013 = vunpack.c.h.b16 %v918
        %v1014 = vunpack.c.l.b16 %v919
        %v1015 = vunpack.c.l.b16 %v920
        %v1016 = vunpack.c.h.b16 %v920
        %v1017 = vunpack.c.l.b16 %v921
        %v1018 = vunpack.c.l.b16 %v922
        %v1019 = vunpack.c.h.b16 %v922
        %v1020 = vunpack.c.l.b16 %v923
        %v1021 = vpack.c.b16 %v976, %v973
        %v1022 = vpack.c.b16 %v977, %v974
        %v1023 = vpack.c.b16 %v978, %v975
        %v1024 = vpack.c.b16 %v982, %v979
        %v1025 = vpack.c.b16 %v983, %v980
        %v1026 = vpack.c.b16 %v984, %v981
        %v1027 = vpack.c.b16 %v988, %v985
        %v1028 = vpack.c.b16 %v989, %v986
        %v1029 = vpack.c.b16 %v990, %v987
        %v1030 = vpack.c.b16 %v994, %v991
        %v1031 = vpack.c.b16 %v995, %v992
        %v1032 = vpack.c.b16 %v996, %v993
        %v1033 = vpack.c.b16 %v1000, %v997
        %v1034 = vpack.c.b16 %v1001, %v998
        %v1035 = vpack.c.b16 %v1002, %v999
        %v1036 = vpack.c.b16 %v1006, %v1003
        %v1037 = vpack.c.b16 %v1007, %v1004
        %v1038 = vpack.c.b16 %v1008, %v1005
        %v1039 = vpack.c.b16 %v1012, %v1009
        %v1040 = vpack.c.b16 %v1013, %v1010
        %v1041 = vpack.c.b16 %v1014, %v1011
        %v1042 = vpack.c.b16 %v1018, %v1015
        %v1043 = vpack.c.b16 %v1019, %v1016
        %v1044 = vpack.c.b16 %v1020, %v1017
        %1069 = vmatprep.subr.bf16.mxu0 %v1043
        %1070 = vmatpush1.bf16.msra.mxu0 %v1042
        %1071 = vmatprep.subr.bf16.mxu0 %v1040
        %1072 = vmatpush1.bf16.msra.mxu0 %v1039
        %1073 = vmatprep.subr.bf16.mxu0 %v1037
        %1074 = vmatpush1.bf16.msra.mxu0 %v1036
        %1075 = vmatprep.subr.bf16.mxu0 %v1034
        %1076 = vmatpush1.bf16.msra.mxu0 %v1033
        %1077 = vmatprep.subr.bf16.mxu0 %v1031
        %1078 = vmatpush1.bf16.msra.mxu0 %v1030
        %1079 = vmatprep.subr.bf16.mxu0 %v1028
        %1080 = vmatpush1.bf16.msra.mxu0 %v1027
        %1081 = vmatprep.subr.bf16.mxu0 %v1025
        %1082 = vmatpush1.bf16.msra.mxu0 %v1024
        %1083 = vmatprep.subr.bf16.mxu0 %v1022
        %1084 = vmatpush1.bf16.msra.mxu0 %v1021
        %1085 = vmatprep.subr.bf16.mxu0 0
        %1086 = vmatpush2.bf16.msra.mxu0 0
        %1087 = vmatprep.subr.bf16.mxu0 0
        %1088 = vmatpush2.bf16.msra.mxu0 0
        %1089 = vmatprep.subr.bf16.mxu0 0
        %1090 = vmatpush2.bf16.msra.mxu0 0
        %1091 = vmatprep.subr.bf16.mxu0 0
        %1092 = vmatpush2.bf16.msra.mxu0 0
        %1093 = vmatprep.subr.bf16.mxu0 0
        %1094 = vmatpush2.bf16.msra.mxu0 0
        %1095 = vmatprep.subr.bf16.mxu0 0
        %1096 = vmatpush2.bf16.msra.mxu0 0
        %1097 = vmatprep.subr.bf16.mxu0 0
        %1098 = vmatpush2.bf16.msra.mxu0 0
        %1099 = vmatprep.subr.bf16.mxu0 0
        %1100 = vmatpush2.bf16.msra.mxu0 0
        %1101 = vmatprep.mubr.bf16.mxu0 0
        %1102 = vmatmul.mubr.bf16.gmra.mxu0 %v889
        %v1103 = vpop.f32.mrf.mxu0
        %v1104 = vadd.f32 %v929, %v1103
        %v1105 = vpop.f32.mrf.mxu0
        %v1106 = vadd.f32 %v933, %v1105
        %v1107 = vpop.f32.mrf.mxu0
        %v1108 = vadd.f32 %v929, %v1107
        %v1109 = vpop.f32.mrf.mxu0
        %v1110 = vadd.f32 %v933, %v1109
        %1111 = vmatprep.mubr.bf16.mxu0 0
        %1112 = vmatmul.mubr.bf16.gmra.mxu0 %v890
        %v1113 = vpop.f32.mrf.mxu0
        %v1114 = vadd.f32 %v929, %v1113
        %v1115 = vpop.f32.mrf.mxu0
        %v1116 = vadd.f32 %v933, %v1115
        %v1117 = vpop.f32.mrf.mxu0
        %v1118 = vadd.f32 %v929, %v1117
        %v1119 = vpop.f32.mrf.mxu0
        %v1120 = vadd.f32 %v933, %v1119
        %1121 = vmatprep.mubr.bf16.mxu0 0
        %1122 = vmatmul.mubr.bf16.gmra.mxu0 %v891
        %v1123 = vpop.f32.mrf.mxu0
        %v1124 = vadd.f32 %v929, %v1123
        %v1125 = vpop.f32.mrf.mxu0
        %v1126 = vadd.f32 %v933, %v1125
        %v1127 = vpop.f32.mrf.mxu0
        %v1128 = vadd.f32 %v929, %v1127
        %v1129 = vpop.f32.mrf.mxu0
        %v1130 = vadd.f32 %v933, %v1129
        %1131 = vdwg.mxu0
        %1132 = vmatprep.subr.bf16.mxu0 0
        %1133 = vmatpush1.bf16.msra.mxu0 %v1044
        %1134 = vmatprep.subr.bf16.mxu0 0
        %1135 = vmatpush1.bf16.msra.mxu0 %v1041
        %1136 = vmatprep.subr.bf16.mxu0 0
        %1137 = vmatpush1.bf16.msra.mxu0 %v1038
        %1138 = vmatprep.subr.bf16.mxu0 0
        %1139 = vmatpush1.bf16.msra.mxu0 %v1035
        %1140 = vmatprep.subr.bf16.mxu0 0
        %1141 = vmatpush1.bf16.msra.mxu0 %v1032
        %1142 = vmatprep.subr.bf16.mxu0 0
        %1143 = vmatpush1.bf16.msra.mxu0 %v1029
        %1144 = vmatprep.subr.bf16.mxu0 0
        %1145 = vmatpush1.bf16.msra.mxu0 %v1026
        %1146 = vmatprep.subr.bf16.mxu0 0
        %1147 = vmatpush1.bf16.msra.mxu0 %v1023
        %1148 = vmatprep.subr.bf16.mxu0 0
        %1149 = vmatpush2.bf16.msra.mxu0 0
        %1150 = vmatprep.subr.bf16.mxu0 0
        %1151 = vmatpush2.bf16.msra.mxu0 0
        %1152 = vmatprep.subr.bf16.mxu0 0
        %1153 = vmatpush2.bf16.msra.mxu0 0
        %1154 = vmatprep.subr.bf16.mxu0 0
        %1155 = vmatpush2.bf16.msra.mxu0 0
        %1156 = vmatprep.subr.bf16.mxu0 0
        %1157 = vmatpush2.bf16.msra.mxu0 0
        %1158 = vmatprep.subr.bf16.mxu0 0
        %1159 = vmatpush2.bf16.msra.mxu0 0
        %1160 = vmatprep.subr.bf16.mxu0 0
        %1161 = vmatpush2.bf16.msra.mxu0 0
        %1162 = vmatprep.subr.bf16.mxu0 0
        %1163 = vmatpush2.bf16.msra.mxu0 0
        %1164 = vmatprep.mubr.bf16.mxu0 0
        %1165 = vmatmul.mubr.bf16.gmra.mxu0 %v889
        %v1166 = vpop.f32.mrf.mxu0
        %v1167 = vadd.f32 %v937, %v1166
        %v1168 = vpop.f32.mrf.mxu0
        %v1169 = vpop.f32.mrf.mxu0
        %v1170 = vadd.f32 %v937, %v1169
        %v1171 = vpop.f32.mrf.mxu0
        %1172 = vmatprep.mubr.bf16.mxu0 0
        %1173 = vmatmul.mubr.bf16.gmra.mxu0 %v890
        %v1174 = vpop.f32.mrf.mxu0
        %v1175 = vadd.f32 %v937, %v1174
        %v1176 = vpop.f32.mrf.mxu0
        %v1177 = vpop.f32.mrf.mxu0
        %v1178 = vadd.f32 %v937, %v1177
        %v1179 = vpop.f32.mrf.mxu0
        %1180 = vmatprep.mubr.bf16.mxu0 0
        %1181 = vmatmul.mubr.bf16.gmra.mxu0 %v891
        %v1182 = vpop.f32.mrf.mxu0
        %v1183 = vadd.f32 %v937, %v1182
        %v1184 = vpop.f32.mrf.mxu0
        %v1185 = vpop.f32.mrf.mxu0
        %v1186 = vadd.f32 %v937, %v1185
        %v1187 = vpop.f32.mrf.mxu0
        %1188 = vdwg.mxu0
        %v1189 = vld [vmem:[%s740] sm:$0xf]
        %v1190 = vld [vmem:[%s740 + $0x4] sm:$0xf]
        %v1191 = vld [vmem:[%s740 + $0x8] sm:$0xf]
        %v1192 = vld [vmem:[%s740 + $0xc] sm:$0xf]
        %v1193 = vld [vmem:[%s740 + $0x10] sm:$0xf]
        %v1194 = vld [vmem:[%s740 + $0x14] sm:$0xf]
        %v1195 = vld [vmem:[%s740 + $0x18] sm:$0xf]
        %v1196 = vld [vmem:[%s740 + $0x1c] sm:$0xf]
        %v1197 = vld [vmem:[%s740 + $0x20] sm:$0xf]
        %v1198 = vld [vmem:[%s740 + $0x24] sm:$0xf]
        %v1199 = vld [vmem:[%s740 + $0x28] sm:$0xf]
        %v1200 = vld [vmem:[%s740 + $0x2c] sm:$0xf]
        %v1201 = vld [vmem:[%s740 + $0x30] sm:$0xf]
        %v1202 = vld [vmem:[%s740 + $0x34] sm:$0xf]
        %v1203 = vld [vmem:[%s740 + $0x38] sm:$0xf]
        %v1204 = vld [vmem:[%s740 + $0x3c] sm:$0xf]
        %v1205 = vlaneseq
        %v1206 = vand.u32 %v1205, 127
        %vm1207 = vcmp.ge.s32.totalorder %v1206, 17
        %v1208 = vsel %vm1207, -1e+30, 0.0
        %vm1209 = vcmask 261120
        %v1211 = vsel %vm1209, %v1104, 0
        %v1214 = vsel %vm1209, %v1108, 0
        %v1217 = vsel %vm1209, %v1114, 0
        %v1220 = vsel %vm1209, %v1106, 0
        %v1223 = vsel %vm1209, %v1110, 0
        %v1226 = vsel %vm1209, %v1116, 0
        %1228 = vmatprep.subr.mxu0 0.0
        %1229 = vmatpush1.xpose.msra.mxu0 0.0
        %1230 = vmatprep.subr.mxu0 0.0
        %1231 = vmatpush1.xpose.msra.mxu0 0.0
        %1232 = vmatprep.subr.mxu0 0.0
        %1233 = vmatpush1.xpose.msra.mxu0 0.0
        %1234 = vmatprep.subr.mxu0 0.0
        %1235 = vmatpush1.xpose.msra.mxu0 0.0
        %1236 = vmatprep.subr.mxu0 0.0
        %1237 = vmatpush1.xpose.msra.mxu0 0.0
        %1238 = vmatprep.subr.mxu0 0.0
        %1239 = vmatpush1.xpose.msra.mxu0 0.0
        %1240 = vmatprep.subr.mxu0 0.0
        %1241 = vmatpush1.xpose.msra.mxu0 0.0
        %1242 = vmatprep.subr.mxu0 0.0
        %1243 = vmatpush1.xpose.msra.mxu0 0.0
        %1244 = vmatprep.subr.mxu0 0.0
        %1245 = vmatpush1.xpose.msra.mxu0 0.0
        %1246 = vmatprep.subr.mxu0 0.0
        %1247 = vmatpush1.xpose.msra.mxu0 0.0
        %1248 = vmatprep.subr.mxu0 0.0
        %1249 = vmatpush1.xpose.msra.mxu0 0.0
        %1250 = vmatprep.subr.mxu0 0.0
        %1251 = vmatpush1.xpose.msra.mxu0 0.0
        %1252 = vmatprep.subr.mxu0 0.0
        %1253 = vmatpush1.xpose.msra.mxu0 0.0
        %1254 = vmatprep.subr.mxu0 0.0
        %1255 = vmatpush1.xpose.msra.mxu0 %v1226
        %1256 = vmatprep.subr.mxu0 0.0
        %1257 = vmatpush1.xpose.msra.mxu0 %v1223
        %1258 = vmatprep.subr.mxu0 0.0
        %1259 = vmatpush1.xpose.msra.mxu0 %v1220
        %1260 = vmatprep.subr.mxu0 0.0
        %1261 = vmatpush2.xpose.msra.mxu0 0.0
        %1262 = vmatprep.subr.mxu0 0.0
        %1263 = vmatpush2.xpose.msra.mxu0 0.0
        %1264 = vmatprep.subr.mxu0 0.0
        %1265 = vmatpush2.xpose.msra.mxu0 0.0
        %1266 = vmatprep.subr.mxu0 0.0
        %1267 = vmatpush2.xpose.msra.mxu0 0.0
        %1268 = vmatprep.subr.mxu0 0.0
        %1269 = vmatpush2.xpose.msra.mxu0 0.0
        %1270 = vmatprep.subr.mxu0 0.0
        %1271 = vmatpush2.xpose.msra.mxu0 0.0
        %1272 = vmatprep.subr.mxu0 0.0
        %1273 = vmatpush2.xpose.msra.mxu0 0.0
        %1274 = vmatprep.subr.mxu0 0.0
        %1275 = vmatpush2.xpose.msra.mxu0 0.0
        %1276 = vmatprep.subr.mxu0 0.0
        %1277 = vmatpush2.xpose.msra.mxu0 0.0
        %1278 = vmatprep.subr.mxu0 0.0
        %1279 = vmatpush2.xpose.msra.mxu0 0.0
        %1280 = vmatprep.subr.mxu0 0.0
        %1281 = vmatpush2.xpose.msra.mxu0 0.0
        %1282 = vmatprep.subr.mxu0 0.0
        %1283 = vmatpush2.xpose.msra.mxu0 0.0
        %1284 = vmatprep.subr.mxu0 0.0
        %1285 = vmatpush2.xpose.msra.mxu0 0.0
        %1286 = vmatprep.subr.mxu0 0.0
        %1287 = vmatpush2.xpose.msra.mxu0 0.0
        %1288 = vmatprep.subr.mxu0 0.0
        %1289 = vmatpush2.xpose.msra.mxu0 0.0
        %1290 = vmatprep.subr.mxu0 0.0
        %1291 = vmatpush2.xpose.msra.mxu0 0.0
        %1292 = vmatprep.mubr.f32.mxu0 0.0
        %1293 = vmatmul.mubr.f32.gmra.mxu0 %v1211
        %v1294 = vpop.f32.mrf.mxu0
        %v1295 = vadd.f32 0.0, %v1294
        %v1296 = vpop.f32.mrf.mxu0
        %1297 = vmatprep.mubr.f32.mxu0 0.0
        %1298 = vmatmul.mubr.f32.gmra.mxu0 %v1214
        %v1299 = vpop.f32.mrf.mxu0
        %v1300 = vadd.f32 0.0, %v1299
        %v1301 = vpop.f32.mrf.mxu0
        %1302 = vmatprep.mubr.f32.mxu0 0.0
        %1303 = vmatmul.mubr.f32.gmra.mxu0 %v1217
        %v1304 = vpop.f32.mrf.mxu0
        %v1305 = vadd.f32 0.0, %v1304
        %v1306 = vpop.f32.mrf.mxu0
        %1307 = vdwg.mxu0
        %vm1308 = vcmask 195584
        %1309 = vst.msk [vmem:[#allocation3] sm:$0xff] %vm1308, %v1295
        %1310 = vst.msk [vmem:[#allocation3 + $0x8] sm:$0xff] %vm1308, %v1300
        %1311 = vst.msk [vmem:[#allocation3 + $0x10] sm:$0xff] %vm1308, %v1305
        %1312 = vrot.lane.b32.xlu0 %v1104, 96
        %v1313 = vpop.permute.xlu0 %1312
        %1314 = vrot.lane.b32.xlu0 %v1108, 96
        %v1315 = vpop.permute.xlu0 %1314
        %1316 = vrot.lane.b32.xlu0 %v1114, 96
        %v1317 = vpop.permute.xlu0 %1316
        %1318 = vrot.lane.b32.xlu0 %v1106, 96
        %v1319 = vpop.permute.xlu0 %1318
        %1320 = vrot.lane.b32.xlu0 %v1110, 96
        %v1321 = vpop.permute.xlu0 %1320
        %1322 = vrot.lane.b32.xlu0 %v1116, 96
        %v1323 = vpop.permute.xlu0 %1322
        %v1324 = vsel %vm1209, %v1313, 0
        %v1326 = vsel %vm1209, %v1315, 0
        %v1328 = vsel %vm1209, %v1317, 0
        %v1330 = vsel %vm1209, %v1319, 0
        %v1332 = vsel %vm1209, %v1321, 0
        %v1334 = vsel %vm1209, %v1323, 0
        %1336 = vmatprep.subr.mxu0 0.0
        %1337 = vmatpush1.xpose.msra.mxu0 0.0
        %1338 = vmatprep.subr.mxu0 0.0
        %1339 = vmatpush1.xpose.msra.mxu0 0.0
        %1340 = vmatprep.subr.mxu0 0.0
        %1341 = vmatpush1.xpose.msra.mxu0 0.0
        %1342 = vmatprep.subr.mxu0 0.0
        %1343 = vmatpush1.xpose.msra.mxu0 0.0
        %1344 = vmatprep.subr.mxu0 0.0
        %1345 = vmatpush1.xpose.msra.mxu0 0.0
        %1346 = vmatprep.subr.mxu0 0.0
        %1347 = vmatpush1.xpose.msra.mxu0 0.0
        %1348 = vmatprep.subr.mxu0 0.0
        %1349 = vmatpush1.xpose.msra.mxu0 0.0
        %1350 = vmatprep.subr.mxu0 0.0
        %1351 = vmatpush1.xpose.msra.mxu0 0.0
        %1352 = vmatprep.subr.mxu0 0.0
        %1353 = vmatpush1.xpose.msra.mxu0 0.0
        %1354 = vmatprep.subr.mxu0 0.0
        %1355 = vmatpush1.xpose.msra.mxu0 0.0
        %1356 = vmatprep.subr.mxu0 0.0
        %1357 = vmatpush1.xpose.msra.mxu0 0.0
        %1358 = vmatprep.subr.mxu0 0.0
        %1359 = vmatpush1.xpose.msra.mxu0 0.0
        %1360 = vmatprep.subr.mxu0 0.0
        %1361 = vmatpush1.xpose.msra.mxu0 0.0
        %1362 = vmatprep.subr.mxu0 0.0
        %1363 = vmatpush1.xpose.msra.mxu0 %v1334
        %1364 = vmatprep.subr.mxu0 0.0
        %1365 = vmatpush1.xpose.msra.mxu0 %v1332
        %1366 = vmatprep.subr.mxu0 0.0
        %1367 = vmatpush1.xpose.msra.mxu0 %v1330
        %1368 = vmatprep.subr.mxu0 0.0
        %1369 = vmatpush2.xpose.msra.mxu0 0.0
        %1370 = vmatprep.subr.mxu0 0.0
        %1371 = vmatpush2.xpose.msra.mxu0 0.0
        %1372 = vmatprep.subr.mxu0 0.0
        %1373 = vmatpush2.xpose.msra.mxu0 0.0
        %1374 = vmatprep.subr.mxu0 0.0
        %1375 = vmatpush2.xpose.msra.mxu0 0.0
        %1376 = vmatprep.subr.mxu0 0.0
        %1377 = vmatpush2.xpose.msra.mxu0 0.0
        %1378 = vmatprep.subr.mxu0 0.0
        %1379 = vmatpush2.xpose.msra.mxu0 0.0
        %1380 = vmatprep.subr.mxu0 0.0
        %1381 = vmatpush2.xpose.msra.mxu0 0.0
        %1382 = vmatprep.subr.mxu0 0.0
        %1383 = vmatpush2.xpose.msra.mxu0 0.0
        %1384 = vmatprep.subr.mxu0 0.0
        %1385 = vmatpush2.xpose.msra.mxu0 0.0
        %1386 = vmatprep.subr.mxu0 0.0
        %1387 = vmatpush2.xpose.msra.mxu0 0.0
        %1388 = vmatprep.subr.mxu0 0.0
        %1389 = vmatpush2.xpose.msra.mxu0 0.0
        %1390 = vmatprep.subr.mxu0 0.0
        %1391 = vmatpush2.xpose.msra.mxu0 0.0
        %1392 = vmatprep.subr.mxu0 0.0
        %1393 = vmatpush2.xpose.msra.mxu0 0.0
        %1394 = vmatprep.subr.mxu0 0.0
        %1395 = vmatpush2.xpose.msra.mxu0 0.0
        %1396 = vmatprep.subr.mxu0 0.0
        %1397 = vmatpush2.xpose.msra.mxu0 0.0
        %1398 = vmatprep.subr.mxu0 0.0
        %1399 = vmatpush2.xpose.msra.mxu0 0.0
        %1400 = vmatprep.mubr.f32.mxu0 0.0
        %1401 = vmatmul.mubr.f32.gmra.mxu0 %v1324
        %v1402 = vpop.f32.mrf.mxu0
        %v1403 = vadd.f32 0.0, %v1402
        %v1404 = vpop.f32.mrf.mxu0
        %1405 = vmatprep.mubr.f32.mxu0 0.0
        %1406 = vmatmul.mubr.f32.gmra.mxu0 %v1326
        %v1407 = vpop.f32.mrf.mxu0
        %v1408 = vadd.f32 0.0, %v1407
        %v1409 = vpop.f32.mrf.mxu0
        %1410 = vmatprep.mubr.f32.mxu0 0.0
        %1411 = vmatmul.mubr.f32.gmra.mxu0 %v1328
        %v1412 = vpop.f32.mrf.mxu0
        %v1413 = vadd.f32 0.0, %v1412
        %v1414 = vpop.f32.mrf.mxu0
        %1415 = vdwg.mxu0
        %1416 = vst.msk [vmem:[#allocation3 + $0x18] sm:$0xff] %vm1308, %v1403
        %1417 = vst.msk [vmem:[#allocation3 + $0x20] sm:$0xff] %vm1308, %v1408
        %1418 = vst.msk [vmem:[#allocation3 + $0x28] sm:$0xff] %vm1308, %v1413
        %1419 = vrot.lane.b32.xlu0 %v1104, 64
        %v1420 = vpop.permute.xlu0 %1419
        %1421 = vrot.lane.b32.xlu0 %v1108, 64
        %v1422 = vpop.permute.xlu0 %1421
        %1423 = vrot.lane.b32.xlu0 %v1114, 64
        %v1424 = vpop.permute.xlu0 %1423
        %1425 = vrot.lane.b32.xlu0 %v1106, 64
        %v1426 = vpop.permute.xlu0 %1425
        %1427 = vrot.lane.b32.xlu0 %v1110, 64
        %v1428 = vpop.permute.xlu0 %1427
        %1429 = vrot.lane.b32.xlu0 %v1116, 64
        %v1430 = vpop.permute.xlu0 %1429
        %v1431 = vsel %vm1209, %v1420, 0
        %v1433 = vsel %vm1209, %v1422, 0
        %v1435 = vsel %vm1209, %v1424, 0
        %v1437 = vsel %vm1209, %v1426, 0
        %v1439 = vsel %vm1209, %v1428, 0
        %v1441 = vsel %vm1209, %v1430, 0
        %1443 = vmatprep.subr.mxu0 0.0
        %1444 = vmatpush1.xpose.msra.mxu0 0.0
        %1445 = vmatprep.subr.mxu0 0.0
        %1446 = vmatpush1.xpose.msra.mxu0 0.0
        %1447 = vmatprep.subr.mxu0 0.0
        %1448 = vmatpush1.xpose.msra.mxu0 0.0
        %1449 = vmatprep.subr.mxu0 0.0
        %1450 = vmatpush1.xpose.msra.mxu0 0.0
        %1451 = vmatprep.subr.mxu0 0.0
        %1452 = vmatpush1.xpose.msra.mxu0 0.0
        %1453 = vmatprep.subr.mxu0 0.0
        %1454 = vmatpush1.xpose.msra.mxu0 0.0
        %1455 = vmatprep.subr.mxu0 0.0
        %1456 = vmatpush1.xpose.msra.mxu0 0.0
        %1457 = vmatprep.subr.mxu0 0.0
        %1458 = vmatpush1.xpose.msra.mxu0 0.0
        %1459 = vmatprep.subr.mxu0 0.0
        %1460 = vmatpush1.xpose.msra.mxu0 0.0
        %1461 = vmatprep.subr.mxu0 0.0
        %1462 = vmatpush1.xpose.msra.mxu0 0.0
        %1463 = vmatprep.subr.mxu0 0.0
        %1464 = vmatpush1.xpose.msra.mxu0 0.0
        %1465 = vmatprep.subr.mxu0 0.0
        %1466 = vmatpush1.xpose.msra.mxu0 0.0
        %1467 = vmatprep.subr.mxu0 0.0
        %1468 = vmatpush1.xpose.msra.mxu0 0.0
        %1469 = vmatprep.subr.mxu0 0.0
        %1470 = vmatpush1.xpose.msra.mxu0 %v1441
        %1471 = vmatprep.subr.mxu0 0.0
        %1472 = vmatpush1.xpose.msra.mxu0 %v1439
        %1473 = vmatprep.subr.mxu0 0.0
        %1474 = vmatpush1.xpose.msra.mxu0 %v1437
        %1475 = vmatprep.subr.mxu0 0.0
        %1476 = vmatpush2.xpose.msra.mxu0 0.0
        %1477 = vmatprep.subr.mxu0 0.0
        %1478 = vmatpush2.xpose.msra.mxu0 0.0
        %1479 = vmatprep.subr.mxu0 0.0
        %1480 = vmatpush2.xpose.msra.mxu0 0.0
        %1481 = vmatprep.subr.mxu0 0.0
        %1482 = vmatpush2.xpose.msra.mxu0 0.0
        %1483 = vmatprep.subr.mxu0 0.0
        %1484 = vmatpush2.xpose.msra.mxu0 0.0
        %1485 = vmatprep.subr.mxu0 0.0
        %1486 = vmatpush2.xpose.msra.mxu0 0.0
        %1487 = vmatprep.subr.mxu0 0.0
        %1488 = vmatpush2.xpose.msra.mxu0 0.0
        %1489 = vmatprep.subr.mxu0 0.0
        %1490 = vmatpush2.xpose.msra.mxu0 0.0
        %1491 = vmatprep.subr.mxu0 0.0
        %1492 = vmatpush2.xpose.msra.mxu0 0.0
        %1493 = vmatprep.subr.mxu0 0.0
        %1494 = vmatpush2.xpose.msra.mxu0 0.0
        %1495 = vmatprep.subr.mxu0 0.0
        %1496 = vmatpush2.xpose.msra.mxu0 0.0
        %1497 = vmatprep.subr.mxu0 0.0
        %1498 = vmatpush2.xpose.msra.mxu0 0.0
        %1499 = vmatprep.subr.mxu0 0.0
        %1500 = vmatpush2.xpose.msra.mxu0 0.0
        %1501 = vmatprep.subr.mxu0 0.0
        %1502 = vmatpush2.xpose.msra.mxu0 0.0
        %1503 = vmatprep.subr.mxu0 0.0
        %1504 = vmatpush2.xpose.msra.mxu0 0.0
        %1505 = vmatprep.subr.mxu0 0.0
        %1506 = vmatpush2.xpose.msra.mxu0 0.0
        %1507 = vmatprep.mubr.f32.mxu0 0.0
        %1508 = vmatmul.mubr.f32.gmra.mxu0 %v1431
        %v1509 = vpop.f32.mrf.mxu0
        %v1510 = vadd.f32 0.0, %v1509
        %v1511 = vpop.f32.mrf.mxu0
        %1512 = vmatprep.mubr.f32.mxu0 0.0
        %1513 = vmatmul.mubr.f32.gmra.mxu0 %v1433
        %v1514 = vpop.f32.mrf.mxu0
        %v1515 = vadd.f32 0.0, %v1514
        %v1516 = vpop.f32.mrf.mxu0
        %1517 = vmatprep.mubr.f32.mxu0 0.0
        %1518 = vmatmul.mubr.f32.gmra.mxu0 %v1435
        %v1519 = vpop.f32.mrf.mxu0
        %v1520 = vadd.f32 0.0, %v1519
        %v1521 = vpop.f32.mrf.mxu0
        %1522 = vdwg.mxu0
        %1523 = vst.msk [vmem:[#allocation3 + $0x30] sm:$0xff] %vm1308, %v1510
        %1524 = vst.msk [vmem:[#allocation3 + $0x38] sm:$0xff] %vm1308, %v1515
        %1525 = vst.msk [vmem:[#allocation3 + $0x40] sm:$0xff] %vm1308, %v1520
        %1526 = vrot.lane.b32.xlu0 %v1104, 32
        %v1527 = vpop.permute.xlu0 %1526
        %1528 = vrot.lane.b32.xlu0 %v1108, 32
        %v1529 = vpop.permute.xlu0 %1528
        %1530 = vrot.lane.b32.xlu0 %v1114, 32
        %v1531 = vpop.permute.xlu0 %1530
        %1532 = vrot.lane.b32.xlu0 %v1106, 32
        %v1533 = vpop.permute.xlu0 %1532
        %1534 = vrot.lane.b32.xlu0 %v1110, 32
        %v1535 = vpop.permute.xlu0 %1534
        %1536 = vrot.lane.b32.xlu0 %v1116, 32
        %v1537 = vpop.permute.xlu0 %1536
        %v1538 = vsel %vm1209, %v1527, 0
        %v1540 = vsel %vm1209, %v1529, 0
        %v1542 = vsel %vm1209, %v1531, 0
        %v1544 = vsel %vm1209, %v1533, 0
        %v1546 = vsel %vm1209, %v1535, 0
        %v1548 = vsel %vm1209, %v1537, 0
        %1550 = vmatprep.subr.mxu0 0.0
        %1551 = vmatpush1.xpose.msra.mxu0 0.0
        %1552 = vmatprep.subr.mxu0 0.0
        %1553 = vmatpush1.xpose.msra.mxu0 0.0
        %1554 = vmatprep.subr.mxu0 0.0
        %1555 = vmatpush1.xpose.msra.mxu0 0.0
        %1556 = vmatprep.subr.mxu0 0.0
        %1557 = vmatpush1.xpose.msra.mxu0 0.0
        %1558 = vmatprep.subr.mxu0 0.0
        %1559 = vmatpush1.xpose.msra.mxu0 0.0
        %1560 = vmatprep.subr.mxu0 0.0
        %1561 = vmatpush1.xpose.msra.mxu0 0.0
        %1562 = vmatprep.subr.mxu0 0.0
        %1563 = vmatpush1.xpose.msra.mxu0 0.0
        %1564 = vmatprep.subr.mxu0 0.0
        %1565 = vmatpush1.xpose.msra.mxu0 0.0
        %1566 = vmatprep.subr.mxu0 0.0
        %1567 = vmatpush1.xpose.msra.mxu0 0.0
        %1568 = vmatprep.subr.mxu0 0.0
        %1569 = vmatpush1.xpose.msra.mxu0 0.0
        %1570 = vmatprep.subr.mxu0 0.0
        %1571 = vmatpush1.xpose.msra.mxu0 0.0
        %1572 = vmatprep.subr.mxu0 0.0
        %1573 = vmatpush1.xpose.msra.mxu0 0.0
        %1574 = vmatprep.subr.mxu0 0.0
        %1575 = vmatpush1.xpose.msra.mxu0 0.0
        %1576 = vmatprep.subr.mxu0 0.0
        %1577 = vmatpush1.xpose.msra.mxu0 %v1548
        %1578 = vmatprep.subr.mxu0 0.0
        %1579 = vmatpush1.xpose.msra.mxu0 %v1546
        %1580 = vmatprep.subr.mxu0 0.0
        %1581 = vmatpush1.xpose.msra.mxu0 %v1544
        %1582 = vmatprep.subr.mxu0 0.0
        %1583 = vmatpush2.xpose.msra.mxu0 0.0
        %1584 = vmatprep.subr.mxu0 0.0
        %1585 = vmatpush2.xpose.msra.mxu0 0.0
        %1586 = vmatprep.subr.mxu0 0.0
        %1587 = vmatpush2.xpose.msra.mxu0 0.0
        %1588 = vmatprep.subr.mxu0 0.0
        %1589 = vmatpush2.xpose.msra.mxu0 0.0
        %1590 = vmatprep.subr.mxu0 0.0
        %1591 = vmatpush2.xpose.msra.mxu0 0.0
        %1592 = vmatprep.subr.mxu0 0.0
        %1593 = vmatpush2.xpose.msra.mxu0 0.0
        %1594 = vmatprep.subr.mxu0 0.0
        %1595 = vmatpush2.xpose.msra.mxu0 0.0
        %1596 = vmatprep.subr.mxu0 0.0
        %1597 = vmatpush2.xpose.msra.mxu0 0.0
        %1598 = vmatprep.subr.mxu0 0.0
        %1599 = vmatpush2.xpose.msra.mxu0 0.0
        %1600 = vmatprep.subr.mxu0 0.0
        %1601 = vmatpush2.xpose.msra.mxu0 0.0
        %1602 = vmatprep.subr.mxu0 0.0
        %1603 = vmatpush2.xpose.msra.mxu0 0.0
        %1604 = vmatprep.subr.mxu0 0.0
        %1605 = vmatpush2.xpose.msra.mxu0 0.0
        %1606 = vmatprep.subr.mxu0 0.0
        %1607 = vmatpush2.xpose.msra.mxu0 0.0
        %1608 = vmatprep.subr.mxu0 0.0
        %1609 = vmatpush2.xpose.msra.mxu0 0.0
        %1610 = vmatprep.subr.mxu0 0.0
        %1611 = vmatpush2.xpose.msra.mxu0 0.0
        %1612 = vmatprep.subr.mxu0 0.0
        %1613 = vmatpush2.xpose.msra.mxu0 0.0
        %1614 = vmatprep.mubr.f32.mxu0 0.0
        %1615 = vmatmul.mubr.f32.gmra.mxu0 %v1538
        %v1616 = vpop.f32.mrf.mxu0
        %v1617 = vadd.f32 0.0, %v1616
        %v1618 = vpop.f32.mrf.mxu0
        %1619 = vmatprep.mubr.f32.mxu0 0.0
        %1620 = vmatmul.mubr.f32.gmra.mxu0 %v1540
        %v1621 = vpop.f32.mrf.mxu0
        %v1622 = vadd.f32 0.0, %v1621
        %v1623 = vpop.f32.mrf.mxu0
        %1624 = vmatprep.mubr.f32.mxu0 0.0
        %1625 = vmatmul.mubr.f32.gmra.mxu0 %v1542
        %v1626 = vpop.f32.mrf.mxu0
        %v1627 = vadd.f32 0.0, %v1626
        %v1628 = vpop.f32.mrf.mxu0
        %1629 = vdwg.mxu0
        %1630 = vst.msk [vmem:[#allocation3 + $0x48] sm:$0xff] %vm1308, %v1617
        %1631 = vst.msk [vmem:[#allocation3 + $0x50] sm:$0xff] %vm1308, %v1622
        %1632 = vst.msk [vmem:[#allocation3 + $0x58] sm:$0xff] %vm1308, %v1627
        %v1633 = vld [vmem:[#allocation3] sm:$0xff]
        %v1634 = vld [vmem:[#allocation3 + $0x8] sm:$0xff]
        %v1635 = vld [vmem:[#allocation3 + $0x10] sm:$0xff]
        %v1636 = vld [vmem:[#allocation3 + $0x18] sm:$0xff]
        %v1637 = vld [vmem:[#allocation3 + $0x20] sm:$0xff]
        %v1638 = vld [vmem:[#allocation3 + $0x28] sm:$0xff]
        %v1639 = vld [vmem:[#allocation3 + $0x30] sm:$0xff]
        %v1640 = vld [vmem:[#allocation3 + $0x38] sm:$0xff]
        %v1641 = vld [vmem:[#allocation3 + $0x40] sm:$0xff]
        %v1642 = vld [vmem:[#allocation3 + $0x48] sm:$0xff]
        %v1643 = vld [vmem:[#allocation3 + $0x50] sm:$0xff]
        %v1644 = vld [vmem:[#allocation3 + $0x58] sm:$0xff]
        %v1645 = vadd.f32 %v1633, %v1208
        %v1646 = vadd.f32 %v1634, %v1208
        %v1647 = vadd.f32 %v1635, %v1208
        %v1648 = vadd.f32 %v1636, %v1208
        %v1649 = vadd.f32 %v1637, %v1208
        %v1650 = vadd.f32 %v1638, %v1208
        %v1651 = vadd.f32 %v1639, %v1208
        %v1652 = vadd.f32 %v1640, %v1208
        %v1653 = vadd.f32 %v1641, %v1208
        %v1654 = vadd.f32 %v1642, %v1208
        %v1655 = vadd.f32 %v1643, %v1208
        %v1656 = vadd.f32 %v1644, %v1208
        %v1657 = vsel %vm1308, %v1645, -inf
        %1658 = vmax.xlane.f32.xlu0 %v1657
        %v1659 = vpop.xlane.xlu0 %1658
        %v1660 = vsel %vm1308, %v1646, -inf
        %1661 = vmax.xlane.f32.xlu0 %v1660
        %v1662 = vpop.xlane.xlu0 %1661
        %v1663 = vsel %vm1308, %v1647, -inf
        %1664 = vmax.xlane.f32.xlu0 %v1663
        %v1665 = vpop.xlane.xlu0 %1664
        %v1666 = vsel %vm1308, %v1648, -inf
        %1667 = vmax.xlane.f32.xlu0 %v1666
        %v1668 = vpop.xlane.xlu0 %1667
        %v1669 = vsel %vm1308, %v1649, -inf
        %1670 = vmax.xlane.f32.xlu0 %v1669
        %v1671 = vpop.xlane.xlu0 %1670
        %v1672 = vsel %vm1308, %v1650, -inf
        %1673 = vmax.xlane.f32.xlu0 %v1672
        %v1674 = vpop.xlane.xlu0 %1673
        %v1675 = vsel %vm1308, %v1651, -inf
        %1676 = vmax.xlane.f32.xlu0 %v1675
        %v1677 = vpop.xlane.xlu0 %1676
        %v1678 = vsel %vm1308, %v1652, -inf
        %1679 = vmax.xlane.f32.xlu0 %v1678
        %v1680 = vpop.xlane.xlu0 %1679
        %v1681 = vsel %vm1308, %v1653, -inf
        %1682 = vmax.xlane.f32.xlu0 %v1681
        %v1683 = vpop.xlane.xlu0 %1682
        %v1684 = vsel %vm1308, %v1654, -inf
        %1685 = vmax.xlane.f32.xlu0 %v1684
        %v1686 = vpop.xlane.xlu0 %1685
        %v1687 = vsel %vm1308, %v1655, -inf
        %1688 = vmax.xlane.f32.xlu0 %v1687
        %v1689 = vpop.xlane.xlu0 %1688
        %v1690 = vsel %vm1308, %v1656, -inf
        %1691 = vmax.xlane.f32.xlu0 %v1690
        %v1692 = vpop.xlane.xlu0 %1691
        %v1693 = vsub.f32 %v1645, %v1659
        %v1694 = vsub.f32 %v1646, %v1662
        %v1695 = vsub.f32 %v1647, %v1665
        %v1696 = vsub.f32 %v1648, %v1668
        %v1697 = vsub.f32 %v1649, %v1671
        %v1698 = vsub.f32 %v1650, %v1674
        %v1699 = vsub.f32 %v1651, %v1677
        %v1700 = vsub.f32 %v1652, %v1680
        %v1701 = vsub.f32 %v1653, %v1683
        %v1702 = vsub.f32 %v1654, %v1686
        %v1703 = vsub.f32 %v1655, %v1689
        %v1704 = vsub.f32 %v1656, %v1692
        %v1705 = vmul.f32 %v1693, 1.442695
        %v1706 = vpow.pop %v1705
        %v1707 = vmul.f32 %v1694, 1.442695
        %v1708 = vpow.pop %v1707
        %v1709 = vmul.f32 %v1695, 1.442695
        %v1710 = vpow.pop %v1709
        %v1711 = vmul.f32 %v1696, 1.442695
        %v1712 = vpow.pop %v1711
        %v1713 = vmul.f32 %v1697, 1.442695
        %v1714 = vpow.pop %v1713
        %v1715 = vmul.f32 %v1698, 1.442695
        %v1716 = vpow.pop %v1715
        %v1717 = vmul.f32 %v1699, 1.442695
        %v1718 = vpow.pop %v1717
        %v1719 = vmul.f32 %v1700, 1.442695
        %v1720 = vpow.pop %v1719
        %v1721 = vmul.f32 %v1701, 1.442695
        %v1722 = vpow.pop %v1721
        %v1723 = vmul.f32 %v1702, 1.442695
        %v1724 = vpow.pop %v1723
        %v1725 = vmul.f32 %v1703, 1.442695
        %v1726 = vpow.pop %v1725
        %v1727 = vmul.f32 %v1704, 1.442695
        %v1728 = vpow.pop %v1727
        %v1729 = vsel %vm1308, %v1706, 0.0
        %1730 = vadd.xlane.f32.xlu0 %v1729
        %v1731 = vpop.xlane.xlu0 %1730
        %v1732 = vsel %vm1308, %v1708, 0.0
        %1733 = vadd.xlane.f32.xlu0 %v1732
        %v1734 = vpop.xlane.xlu0 %1733
        %v1735 = vsel %vm1308, %v1710, 0.0
        %1736 = vadd.xlane.f32.xlu0 %v1735
        %v1737 = vpop.xlane.xlu0 %1736
        %v1738 = vsel %vm1308, %v1712, 0.0
        %1739 = vadd.xlane.f32.xlu0 %v1738
        %v1740 = vpop.xlane.xlu0 %1739
        %v1741 = vsel %vm1308, %v1714, 0.0
        %1742 = vadd.xlane.f32.xlu0 %v1741
        %v1743 = vpop.xlane.xlu0 %1742
        %v1744 = vsel %vm1308, %v1716, 0.0
        %1745 = vadd.xlane.f32.xlu0 %v1744
        %v1746 = vpop.xlane.xlu0 %1745
        %v1747 = vsel %vm1308, %v1718, 0.0
        %1748 = vadd.xlane.f32.xlu0 %v1747
        %v1749 = vpop.xlane.xlu0 %1748
        %v1750 = vsel %vm1308, %v1720, 0.0
        %1751 = vadd.xlane.f32.xlu0 %v1750
        %v1752 = vpop.xlane.xlu0 %1751
        %v1753 = vsel %vm1308, %v1722, 0.0
        %1754 = vadd.xlane.f32.xlu0 %v1753
        %v1755 = vpop.xlane.xlu0 %1754
        %v1756 = vsel %vm1308, %v1724, 0.0
        %1757 = vadd.xlane.f32.xlu0 %v1756
        %v1758 = vpop.xlane.xlu0 %1757
        %v1759 = vsel %vm1308, %v1726, 0.0
        %1760 = vadd.xlane.f32.xlu0 %v1759
        %v1761 = vpop.xlane.xlu0 %1760
        %v1762 = vsel %vm1308, %v1728, 0.0
        %1763 = vadd.xlane.f32.xlu0 %v1762
        %v1764 = vpop.xlane.xlu0 %1763
        %v1765 = vrcp.pop %v1731
        %v1766 = vmul.f32 %v1706, %v1765
        %v1767 = vrcp.pop %v1734
        %v1768 = vmul.f32 %v1708, %v1767
        %v1769 = vrcp.pop %v1737
        %v1770 = vmul.f32 %v1710, %v1769
        %v1771 = vrcp.pop %v1740
        %v1772 = vmul.f32 %v1712, %v1771
        %v1773 = vrcp.pop %v1743
        %v1774 = vmul.f32 %v1714, %v1773
        %v1775 = vrcp.pop %v1746
        %v1776 = vmul.f32 %v1716, %v1775
        %v1777 = vrcp.pop %v1749
        %v1778 = vmul.f32 %v1718, %v1777
        %v1779 = vrcp.pop %v1752
        %v1780 = vmul.f32 %v1720, %v1779
        %v1781 = vrcp.pop %v1755
        %v1782 = vmul.f32 %v1722, %v1781
        %v1783 = vrcp.pop %v1758
        %v1784 = vmul.f32 %v1724, %v1783
        %v1785 = vrcp.pop %v1761
        %v1786 = vmul.f32 %v1726, %v1785
        %v1787 = vrcp.pop %v1764
        %v1788 = vmul.f32 %v1728, %v1787
        %v1790 = vsel %vm1308, %v1766, 0
        %v1793 = vsel %vm1308, %v1768, 0
        %v1796 = vsel %vm1308, %v1770, 0
        %1798 = vmatprep.subr.mxu0 0.0
        %1799 = vmatpush1.msra.mxu0 0.0
        %1800 = vmatprep.subr.mxu0 0.0
        %1801 = vmatpush1.msra.mxu0 0.0
        %1802 = vmatprep.subr.mxu0 0.0
        %1803 = vmatpush1.msra.mxu0 0.0
        %1804 = vmatprep.subr.mxu0 0.0
        %1805 = vmatpush1.msra.mxu0 0.0
        %1806 = vmatprep.subr.mxu0 0.0
        %1807 = vmatpush1.msra.mxu0 0.0
        %1808 = vmatprep.subr.mxu0 0.0
        %1809 = vmatpush1.msra.mxu0 0.0
        %1810 = vmatprep.subr.mxu0 0.0
        %1811 = vmatpush1.msra.mxu0 0.0
        %1812 = vmatprep.subr.mxu0 0.0
        %1813 = vmatpush1.msra.mxu0 0.0
        %1814 = vmatprep.subr.mxu0 0.0
        %1815 = vmatpush1.msra.mxu0 0.0
        %1816 = vmatprep.subr.mxu0 0.0
        %1817 = vmatpush1.msra.mxu0 0.0
        %1818 = vmatprep.subr.mxu0 0.0
        %1819 = vmatpush1.msra.mxu0 0.0
        %1820 = vmatprep.subr.mxu0 0.0
        %1821 = vmatpush1.msra.mxu0 0.0
        %1822 = vmatprep.subr.mxu0 0.0
        %1823 = vmatpush1.msra.mxu0 0.0
        %1824 = vmatprep.subr.mxu0 0.0
        %1825 = vmatpush1.msra.mxu0 %v1175
        %1826 = vmatprep.subr.mxu0 0.0
        %1827 = vmatpush1.msra.mxu0 %v1170
        %1828 = vmatprep.subr.mxu0 0.0
        %1829 = vmatpush1.msra.mxu0 %v1167
        %1830 = vmatprep.subr.mxu0 0.0
        %1831 = vmatpush2.msra.mxu0 0.0
        %1832 = vmatprep.subr.mxu0 0.0
        %1833 = vmatpush2.msra.mxu0 0.0
        %1834 = vmatprep.subr.mxu0 0.0
        %1835 = vmatpush2.msra.mxu0 0.0
        %1836 = vmatprep.subr.mxu0 0.0
        %1837 = vmatpush2.msra.mxu0 0.0
        %1838 = vmatprep.subr.mxu0 0.0
        %1839 = vmatpush2.msra.mxu0 0.0
        %1840 = vmatprep.subr.mxu0 0.0
        %1841 = vmatpush2.msra.mxu0 0.0
        %1842 = vmatprep.subr.mxu0 0.0
        %1843 = vmatpush2.msra.mxu0 0.0
        %1844 = vmatprep.subr.mxu0 0.0
        %1845 = vmatpush2.msra.mxu0 0.0
        %1846 = vmatprep.subr.mxu0 0.0
        %1847 = vmatpush2.msra.mxu0 0.0
        %1848 = vmatprep.subr.mxu0 0.0
        %1849 = vmatpush2.msra.mxu0 0.0
        %1850 = vmatprep.subr.mxu0 0.0
        %1851 = vmatpush2.msra.mxu0 0.0
        %1852 = vmatprep.subr.mxu0 0.0
        %1853 = vmatpush2.msra.mxu0 0.0
        %1854 = vmatprep.subr.mxu0 0.0
        %1855 = vmatpush2.msra.mxu0 0.0
        %1856 = vmatprep.subr.mxu0 0.0
        %1857 = vmatpush2.msra.mxu0 0.0
        %1858 = vmatprep.subr.mxu0 0.0
        %1859 = vmatpush2.msra.mxu0 0.0
        %1860 = vmatprep.subr.mxu0 0.0
        %1861 = vmatpush2.msra.mxu0 0.0
        %1862 = vmatprep.mubr.f32.mxu0 0.0
        %1863 = vmatmul.mubr.f32.gmra.mxu0 %v1790
        %v1864 = vpop.f32.mrf.mxu0
        %v1865 = vadd.f32 0.0, %v1864
        %v1866 = vpop.f32.mrf.mxu0
        %1867 = vmatprep.mubr.f32.mxu0 0.0
        %1868 = vmatmul.mubr.f32.gmra.mxu0 %v1793
        %v1869 = vpop.f32.mrf.mxu0
        %v1870 = vadd.f32 0.0, %v1869
        %v1871 = vpop.f32.mrf.mxu0
        %1872 = vmatprep.mubr.f32.mxu0 0.0
        %1873 = vmatmul.mubr.f32.gmra.mxu0 %v1796
        %v1874 = vpop.f32.mrf.mxu0
        %v1875 = vadd.f32 0.0, %v1874
        %v1876 = vpop.f32.mrf.mxu0
        %1877 = vdwg.mxu0
        %1878 = vst.msk [vmem:[#allocation4] sm:$0xff] %vm1209, %v1865
        %1879 = vst.msk [vmem:[#allocation4 + $0x8] sm:$0xff] %vm1209, %v1870
        %1880 = vst.msk [vmem:[#allocation4 + $0x10] sm:$0xff] %vm1209, %v1875
        %1884 = vrot.lane.b32.xlu0 %v1167, 96
        %v1885 = vpop.permute.xlu0 %1884
        %1886 = vrot.lane.b32.xlu0 %v1170, 96
        %v1887 = vpop.permute.xlu0 %1886
        %1888 = vrot.lane.b32.xlu0 %v1175, 96
        %v1889 = vpop.permute.xlu0 %1888
        %v1894 = vsel %vm1308, %v1772, 0
        %v1897 = vsel %vm1308, %v1774, 0
        %v1900 = vsel %vm1308, %v1776, 0
        %1902 = vmatprep.subr.mxu0 0.0
        %1903 = vmatpush1.msra.mxu0 0.0
        %1904 = vmatprep.subr.mxu0 0.0
        %1905 = vmatpush1.msra.mxu0 0.0
        %1906 = vmatprep.subr.mxu0 0.0
        %1907 = vmatpush1.msra.mxu0 0.0
        %1908 = vmatprep.subr.mxu0 0.0
        %1909 = vmatpush1.msra.mxu0 0.0
        %1910 = vmatprep.subr.mxu0 0.0
        %1911 = vmatpush1.msra.mxu0 0.0
        %1912 = vmatprep.subr.mxu0 0.0
        %1913 = vmatpush1.msra.mxu0 0.0
        %1914 = vmatprep.subr.mxu0 0.0
        %1915 = vmatpush1.msra.mxu0 0.0
        %1916 = vmatprep.subr.mxu0 0.0
        %1917 = vmatpush1.msra.mxu0 0.0
        %1918 = vmatprep.subr.mxu0 0.0
        %1919 = vmatpush1.msra.mxu0 0.0
        %1920 = vmatprep.subr.mxu0 0.0
        %1921 = vmatpush1.msra.mxu0 0.0
        %1922 = vmatprep.subr.mxu0 0.0
        %1923 = vmatpush1.msra.mxu0 0.0
        %1924 = vmatprep.subr.mxu0 0.0
        %1925 = vmatpush1.msra.mxu0 0.0
        %1926 = vmatprep.subr.mxu0 0.0
        %1927 = vmatpush1.msra.mxu0 0.0
        %1928 = vmatprep.subr.mxu0 0.0
        %1929 = vmatpush1.msra.mxu0 %v1889
        %1930 = vmatprep.subr.mxu0 0.0
        %1931 = vmatpush1.msra.mxu0 %v1887
        %1932 = vmatprep.subr.mxu0 0.0
        %1933 = vmatpush1.msra.mxu0 %v1885
        %1934 = vmatprep.subr.mxu0 0.0
        %1935 = vmatpush2.msra.mxu0 0.0
        %1936 = vmatprep.subr.mxu0 0.0
        %1937 = vmatpush2.msra.mxu0 0.0
        %1938 = vmatprep.subr.mxu0 0.0
        %1939 = vmatpush2.msra.mxu0 0.0
        %1940 = vmatprep.subr.mxu0 0.0
        %1941 = vmatpush2.msra.mxu0 0.0
        %1942 = vmatprep.subr.mxu0 0.0
        %1943 = vmatpush2.msra.mxu0 0.0
        %1944 = vmatprep.subr.mxu0 0.0
        %1945 = vmatpush2.msra.mxu0 0.0
        %1946 = vmatprep.subr.mxu0 0.0
        %1947 = vmatpush2.msra.mxu0 0.0
        %1948 = vmatprep.subr.mxu0 0.0
        %1949 = vmatpush2.msra.mxu0 0.0
        %1950 = vmatprep.subr.mxu0 0.0
        %1951 = vmatpush2.msra.mxu0 0.0
        %1952 = vmatprep.subr.mxu0 0.0
        %1953 = vmatpush2.msra.mxu0 0.0
        %1954 = vmatprep.subr.mxu0 0.0
        %1955 = vmatpush2.msra.mxu0 0.0
        %1956 = vmatprep.subr.mxu0 0.0
        %1957 = vmatpush2.msra.mxu0 0.0
        %1958 = vmatprep.subr.mxu0 0.0
        %1959 = vmatpush2.msra.mxu0 0.0
        %1960 = vmatprep.subr.mxu0 0.0
        %1961 = vmatpush2.msra.mxu0 0.0
        %1962 = vmatprep.subr.mxu0 0.0
        %1963 = vmatpush2.msra.mxu0 0.0
        %1964 = vmatprep.subr.mxu0 0.0
        %1965 = vmatpush2.msra.mxu0 0.0
        %1966 = vmatprep.mubr.f32.mxu0 0.0
        %1967 = vmatmul.mubr.f32.gmra.mxu0 %v1894
        %v1968 = vpop.f32.mrf.mxu0
        %v1969 = vadd.f32 0.0, %v1968
        %v1970 = vpop.f32.mrf.mxu0
        %1971 = vmatprep.mubr.f32.mxu0 0.0
        %1972 = vmatmul.mubr.f32.gmra.mxu0 %v1897
        %v1973 = vpop.f32.mrf.mxu0
        %v1974 = vadd.f32 0.0, %v1973
        %v1975 = vpop.f32.mrf.mxu0
        %1976 = vmatprep.mubr.f32.mxu0 0.0
        %1977 = vmatmul.mubr.f32.gmra.mxu0 %v1900
        %v1978 = vpop.f32.mrf.mxu0
        %v1979 = vadd.f32 0.0, %v1978
        %v1980 = vpop.f32.mrf.mxu0
        %1981 = vdwg.mxu0
        %1985 = vrot.lane.b32.xlu0 %v1969, 32
        %v1986 = vpop.permute.xlu0 %1985
        %1987 = vrot.lane.b32.xlu0 %v1974, 32
        %v1988 = vpop.permute.xlu0 %1987
        %1989 = vrot.lane.b32.xlu0 %v1979, 32
        %v1990 = vpop.permute.xlu0 %1989
        %vm1994 = vcmask 523520
        %1995 = vst.msk [vmem:[#allocation4] sm:$0xff] %vm1994, %v1986
        %1996 = vst.msk [vmem:[#allocation4 + $0x8] sm:$0xff] %vm1994, %v1988
        %1997 = vst.msk [vmem:[#allocation4 + $0x10] sm:$0xff] %vm1994, %v1990
        %1998 = vrot.lane.b32.xlu0 %v1167, 64
        %v1999 = vpop.permute.xlu0 %1998
        %2000 = vrot.lane.b32.xlu0 %v1170, 64
        %v2001 = vpop.permute.xlu0 %2000
        %2002 = vrot.lane.b32.xlu0 %v1175, 64
        %v2003 = vpop.permute.xlu0 %2002
        %v2008 = vsel %vm1308, %v1778, 0
        %v2011 = vsel %vm1308, %v1780, 0
        %v2014 = vsel %vm1308, %v1782, 0
        %2016 = vmatprep.subr.mxu0 0.0
        %2017 = vmatpush1.msra.mxu0 0.0
        %2018 = vmatprep.subr.mxu0 0.0
        %2019 = vmatpush1.msra.mxu0 0.0
        %2020 = vmatprep.subr.mxu0 0.0
        %2021 = vmatpush1.msra.mxu0 0.0
        %2022 = vmatprep.subr.mxu0 0.0
        %2023 = vmatpush1.msra.mxu0 0.0
        %2024 = vmatprep.subr.mxu0 0.0
        %2025 = vmatpush1.msra.mxu0 0.0
        %2026 = vmatprep.subr.mxu0 0.0
        %2027 = vmatpush1.msra.mxu0 0.0
        %2028 = vmatprep.subr.mxu0 0.0
        %2029 = vmatpush1.msra.mxu0 0.0
        %2030 = vmatprep.subr.mxu0 0.0
        %2031 = vmatpush1.msra.mxu0 0.0
        %2032 = vmatprep.subr.mxu0 0.0
        %2033 = vmatpush1.msra.mxu0 0.0
        %2034 = vmatprep.subr.mxu0 0.0
        %2035 = vmatpush1.msra.mxu0 0.0
        %2036 = vmatprep.subr.mxu0 0.0
        %2037 = vmatpush1.msra.mxu0 0.0
        %2038 = vmatprep.subr.mxu0 0.0
        %2039 = vmatpush1.msra.mxu0 0.0
        %2040 = vmatprep.subr.mxu0 0.0
        %2041 = vmatpush1.msra.mxu0 0.0
        %2042 = vmatprep.subr.mxu0 0.0
        %2043 = vmatpush1.msra.mxu0 %v2003
        %2044 = vmatprep.subr.mxu0 0.0
        %2045 = vmatpush1.msra.mxu0 %v2001
        %2046 = vmatprep.subr.mxu0 0.0
        %2047 = vmatpush1.msra.mxu0 %v1999
        %2048 = vmatprep.subr.mxu0 0.0
        %2049 = vmatpush2.msra.mxu0 0.0
        %2050 = vmatprep.subr.mxu0 0.0
        %2051 = vmatpush2.msra.mxu0 0.0
        %2052 = vmatprep.subr.mxu0 0.0
        %2053 = vmatpush2.msra.mxu0 0.0
        %2054 = vmatprep.subr.mxu0 0.0
        %2055 = vmatpush2.msra.mxu0 0.0
        %2056 = vmatprep.subr.mxu0 0.0
        %2057 = vmatpush2.msra.mxu0 0.0
        %2058 = vmatprep.subr.mxu0 0.0
        %2059 = vmatpush2.msra.mxu0 0.0
        %2060 = vmatprep.subr.mxu0 0.0
        %2061 = vmatpush2.msra.mxu0 0.0
        %2062 = vmatprep.subr.mxu0 0.0
        %2063 = vmatpush2.msra.mxu0 0.0
        %2064 = vmatprep.subr.mxu0 0.0
        %2065 = vmatpush2.msra.mxu0 0.0
        %2066 = vmatprep.subr.mxu0 0.0
        %2067 = vmatpush2.msra.mxu0 0.0
        %2068 = vmatprep.subr.mxu0 0.0
        %2069 = vmatpush2.msra.mxu0 0.0
        %2070 = vmatprep.subr.mxu0 0.0
        %2071 = vmatpush2.msra.mxu0 0.0
        %2072 = vmatprep.subr.mxu0 0.0
        %2073 = vmatpush2.msra.mxu0 0.0
        %2074 = vmatprep.subr.mxu0 0.0
        %2075 = vmatpush2.msra.mxu0 0.0
        %2076 = vmatprep.subr.mxu0 0.0
        %2077 = vmatpush2.msra.mxu0 0.0
        %2078 = vmatprep.subr.mxu0 0.0
        %2079 = vmatpush2.msra.mxu0 0.0
        %2080 = vmatprep.mubr.f32.mxu0 0.0
        %2081 = vmatmul.mubr.f32.gmra.mxu0 %v2008
        %v2082 = vpop.f32.mrf.mxu0
        %v2083 = vadd.f32 0.0, %v2082
        %v2084 = vpop.f32.mrf.mxu0
        %2085 = vmatprep.mubr.f32.mxu0 0.0
        %2086 = vmatmul.mubr.f32.gmra.mxu0 %v2011
        %v2087 = vpop.f32.mrf.mxu0
        %v2088 = vadd.f32 0.0, %v2087
        %v2089 = vpop.f32.mrf.mxu0
        %2090 = vmatprep.mubr.f32.mxu0 0.0
        %2091 = vmatmul.mubr.f32.gmra.mxu0 %v2014
        %v2092 = vpop.f32.mrf.mxu0
        %v2093 = vadd.f32 0.0, %v2092
        %v2094 = vpop.f32.mrf.mxu0
        %2095 = vdwg.mxu0
        %2099 = vrot.lane.b32.xlu0 %v2083, 64
        %v2100 = vpop.permute.xlu0 %2099
        %2101 = vrot.lane.b32.xlu0 %v2088, 64
        %v2102 = vpop.permute.xlu0 %2101
        %2103 = vrot.lane.b32.xlu0 %v2093, 64
        %v2104 = vpop.permute.xlu0 %2103
        %vm2108 = vcmask 785920
        %2109 = vst.msk [vmem:[#allocation4] sm:$0xff] %vm2108, %v2100
        %2110 = vst.msk [vmem:[#allocation4 + $0x8] sm:$0xff] %vm2108, %v2102
        %2111 = vst.msk [vmem:[#allocation4 + $0x10] sm:$0xff] %vm2108, %v2104
        %2112 = vrot.lane.b32.xlu0 %v1167, 32
        %v2113 = vpop.permute.xlu0 %2112
        %2114 = vrot.lane.b32.xlu0 %v1170, 32
        %v2115 = vpop.permute.xlu0 %2114
        %2116 = vrot.lane.b32.xlu0 %v1175, 32
        %v2117 = vpop.permute.xlu0 %2116
        %v2122 = vsel %vm1308, %v1784, 0
        %v2125 = vsel %vm1308, %v1786, 0
        %v2128 = vsel %vm1308, %v1788, 0
        %2130 = vmatprep.subr.mxu0 0.0
        %2131 = vmatpush1.msra.mxu0 0.0
        %2132 = vmatprep.subr.mxu0 0.0
        %2133 = vmatpush1.msra.mxu0 0.0
        %2134 = vmatprep.subr.mxu0 0.0
        %2135 = vmatpush1.msra.mxu0 0.0
        %2136 = vmatprep.subr.mxu0 0.0
        %2137 = vmatpush1.msra.mxu0 0.0
        %2138 = vmatprep.subr.mxu0 0.0
        %2139 = vmatpush1.msra.mxu0 0.0
        %2140 = vmatprep.subr.mxu0 0.0
        %2141 = vmatpush1.msra.mxu0 0.0
        %2142 = vmatprep.subr.mxu0 0.0
        %2143 = vmatpush1.msra.mxu0 0.0
        %2144 = vmatprep.subr.mxu0 0.0
        %2145 = vmatpush1.msra.mxu0 0.0
        %2146 = vmatprep.subr.mxu0 0.0
        %2147 = vmatpush1.msra.mxu0 0.0
        %2148 = vmatprep.subr.mxu0 0.0
        %2149 = vmatpush1.msra.mxu0 0.0
        %2150 = vmatprep.subr.mxu0 0.0
        %2151 = vmatpush1.msra.mxu0 0.0
        %2152 = vmatprep.subr.mxu0 0.0
        %2153 = vmatpush1.msra.mxu0 0.0
        %2154 = vmatprep.subr.mxu0 0.0
        %2155 = vmatpush1.msra.mxu0 0.0
        %2156 = vmatprep.subr.mxu0 0.0
        %2157 = vmatpush1.msra.mxu0 %v2117
        %2158 = vmatprep.subr.mxu0 0.0
        %2159 = vmatpush1.msra.mxu0 %v2115
        %2160 = vmatprep.subr.mxu0 0.0
        %2161 = vmatpush1.msra.mxu0 %v2113
        %2162 = vmatprep.subr.mxu0 0.0
        %2163 = vmatpush2.msra.mxu0 0.0
        %2164 = vmatprep.subr.mxu0 0.0
        %2165 = vmatpush2.msra.mxu0 0.0
        %2166 = vmatprep.subr.mxu0 0.0
        %2167 = vmatpush2.msra.mxu0 0.0
        %2168 = vmatprep.subr.mxu0 0.0
        %2169 = vmatpush2.msra.mxu0 0.0
        %2170 = vmatprep.subr.mxu0 0.0
        %2171 = vmatpush2.msra.mxu0 0.0
        %2172 = vmatprep.subr.mxu0 0.0
        %2173 = vmatpush2.msra.mxu0 0.0
        %2174 = vmatprep.subr.mxu0 0.0
        %2175 = vmatpush2.msra.mxu0 0.0
        %2176 = vmatprep.subr.mxu0 0.0
        %2177 = vmatpush2.msra.mxu0 0.0
        %2178 = vmatprep.subr.mxu0 0.0
        %2179 = vmatpush2.msra.mxu0 0.0
        %2180 = vmatprep.subr.mxu0 0.0
        %2181 = vmatpush2.msra.mxu0 0.0
        %2182 = vmatprep.subr.mxu0 0.0
        %2183 = vmatpush2.msra.mxu0 0.0
        %2184 = vmatprep.subr.mxu0 0.0
        %2185 = vmatpush2.msra.mxu0 0.0
        %2186 = vmatprep.subr.mxu0 0.0
        %2187 = vmatpush2.msra.mxu0 0.0
        %2188 = vmatprep.subr.mxu0 0.0
        %2189 = vmatpush2.msra.mxu0 0.0
        %2190 = vmatprep.subr.mxu0 0.0
        %2191 = vmatpush2.msra.mxu0 0.0
        %2192 = vmatprep.subr.mxu0 0.0
        %2193 = vmatpush2.msra.mxu0 0.0
        %2194 = vmatprep.mubr.f32.mxu0 0.0
        %2195 = vmatmul.mubr.f32.gmra.mxu0 %v2122
        %v2196 = vpop.f32.mrf.mxu0
        %v2197 = vadd.f32 0.0, %v2196
        %v2198 = vpop.f32.mrf.mxu0
        %2199 = vmatprep.mubr.f32.mxu0 0.0
        %2200 = vmatmul.mubr.f32.gmra.mxu0 %v2125
        %v2201 = vpop.f32.mrf.mxu0
        %v2202 = vadd.f32 0.0, %v2201
        %v2203 = vpop.f32.mrf.mxu0
        %2204 = vmatprep.mubr.f32.mxu0 0.0
        %2205 = vmatmul.mubr.f32.gmra.mxu0 %v2128
        %v2206 = vpop.f32.mrf.mxu0
        %v2207 = vadd.f32 0.0, %v2206
        %v2208 = vpop.f32.mrf.mxu0
        %2209 = vdwg.mxu0
        %2213 = vrot.lane.b32.xlu0 %v2197, 96
        %v2214 = vpop.permute.xlu0 %2213
        %2215 = vrot.lane.b32.xlu0 %v2202, 96
        %v2216 = vpop.permute.xlu0 %2215
        %2217 = vrot.lane.b32.xlu0 %v2207, 96
        %v2218 = vpop.permute.xlu0 %2217
        %vm2222 = vcmask 1048320
        %2223 = vst.msk [vmem:[#allocation4] sm:$0xff] %vm2222, %v2214
        %2224 = vst.msk [vmem:[#allocation4 + $0x8] sm:$0xff] %vm2222, %v2216
        %2225 = vst.msk [vmem:[#allocation4 + $0x10] sm:$0xff] %vm2222, %v2218
        %v2226 = vld [vmem:[#allocation4] sm:$0xff]
        %v2227 = vld [vmem:[#allocation4 + $0x8] sm:$0xff]
        %v2228 = vld [vmem:[#allocation4 + $0x10] sm:$0xff]
        %v2229 = vpack.c.bf16 %v2227, %v2226
        %v2230 = vpack.c.bf16 %v2228, %v2228
        %v2247 = vunpack.c.l.b16 %v1189
        %v2248 = vunpack.c.l.b16 %v1190
        %v2249 = vunpack.c.l.b16 %v1191
        %v2250 = vunpack.c.l.b16 %v1192
        %v2251 = vunpack.c.l.b16 %v1193
        %v2252 = vunpack.c.l.b16 %v1194
        %v2253 = vunpack.c.l.b16 %v1195
        %v2254 = vunpack.c.l.b16 %v1196
        %v2255 = vunpack.c.l.b16 %v1197
        %v2256 = vunpack.c.l.b16 %v1198
        %v2257 = vunpack.c.l.b16 %v1199
        %v2258 = vunpack.c.l.b16 %v1200
        %v2259 = vunpack.c.l.b16 %v1201
        %v2260 = vunpack.c.l.b16 %v1202
        %v2261 = vunpack.c.l.b16 %v1203
        %v2262 = vunpack.c.l.b16 %v1204
        %v2263 = vpack.c.b16 %v2248, %v2247
        %v2264 = vpack.c.b16 %v2250, %v2249
        %v2265 = vpack.c.b16 %v2252, %v2251
        %v2266 = vpack.c.b16 %v2254, %v2253
        %v2267 = vpack.c.b16 %v2256, %v2255
        %v2268 = vpack.c.b16 %v2258, %v2257
        %v2269 = vpack.c.b16 %v2260, %v2259
        %v2270 = vpack.c.b16 %v2262, %v2261
        %2279 = vmatprep.subr.bf16.mxu0 0
        %2280 = vmatpush1.bf16.msra.mxu0 %v2270
        %2281 = vmatprep.subr.bf16.mxu0 0
        %2282 = vmatpush1.bf16.msra.mxu0 %v2269
        %2283 = vmatprep.subr.bf16.mxu0 0
        %2284 = vmatpush1.bf16.msra.mxu0 %v2268
        %2285 = vmatprep.subr.bf16.mxu0 0
        %2286 = vmatpush1.bf16.msra.mxu0 %v2267
        %2287 = vmatprep.subr.bf16.mxu0 0
        %2288 = vmatpush1.bf16.msra.mxu0 %v2266
        %2289 = vmatprep.subr.bf16.mxu0 0
        %2290 = vmatpush1.bf16.msra.mxu0 %v2265
        %2291 = vmatprep.subr.bf16.mxu0 0
        %2292 = vmatpush1.bf16.msra.mxu0 %v2264
        %2293 = vmatprep.subr.bf16.mxu0 0
        %2294 = vmatpush1.bf16.msra.mxu0 %v2263
        %2295 = vmatprep.subr.bf16.mxu0 0
        %2296 = vmatpush2.bf16.msra.mxu0 0
        %2297 = vmatprep.subr.bf16.mxu0 0
        %2298 = vmatpush2.bf16.msra.mxu0 0
        %2299 = vmatprep.subr.bf16.mxu0 0
        %2300 = vmatpush2.bf16.msra.mxu0 0
        %2301 = vmatprep.subr.bf16.mxu0 0
        %2302 = vmatpush2.bf16.msra.mxu0 0
        %2303 = vmatprep.subr.bf16.mxu0 0
        %2304 = vmatpush2.bf16.msra.mxu0 0
        %2305 = vmatprep.subr.bf16.mxu0 0
        %2306 = vmatpush2.bf16.msra.mxu0 0
        %2307 = vmatprep.subr.bf16.mxu0 0
        %2308 = vmatpush2.bf16.msra.mxu0 0
        %2309 = vmatprep.subr.bf16.mxu0 0
        %2310 = vmatpush2.bf16.msra.mxu0 0
        %2311 = vmatprep.mubr.bf16.mxu0 0
        %2312 = vmatmul.mubr.bf16.gmra.mxu0 %v2229
        %v2313 = vpop.f32.mrf.mxu0
        %v2314 = vadd.f32 0.0, %v2313
        %v2315 = vpop.f32.mrf.mxu0
        %v2316 = vpop.f32.mrf.mxu0
        %v2317 = vadd.f32 0.0, %v2316
        %v2318 = vpop.f32.mrf.mxu0
        %2319 = vmatprep.mubr.bf16.mxu0 0
        %2320 = vmatmul.mubr.bf16.gmra.mxu0 %v2230
        %v2321 = vpop.f32.mrf.mxu0
        %v2322 = vadd.f32 0.0, %v2321
        %v2323 = vpop.f32.mrf.mxu0
        %v2324 = vpop.f32.mrf.mxu0
        %v2325 = vpop.f32.mrf.mxu0
        %2326 = vdwg.mxu0
        %v2328 = vsel %vm1209, %v1118, 0
        %v2331 = vsel %vm1209, %v1124, 0
        %v2334 = vsel %vm1209, %v1128, 0
        %v2337 = vsel %vm1209, %v1120, 0
        %v2340 = vsel %vm1209, %v1126, 0
        %v2343 = vsel %vm1209, %v1130, 0
        %2345 = vmatprep.subr.mxu0 0.0
        %2346 = vmatpush1.xpose.msra.mxu0 0.0
        %2347 = vmatprep.subr.mxu0 0.0
        %2348 = vmatpush1.xpose.msra.mxu0 0.0
        %2349 = vmatprep.subr.mxu0 0.0
        %2350 = vmatpush1.xpose.msra.mxu0 0.0
        %2351 = vmatprep.subr.mxu0 0.0
        %2352 = vmatpush1.xpose.msra.mxu0 0.0
        %2353 = vmatprep.subr.mxu0 0.0
        %2354 = vmatpush1.xpose.msra.mxu0 0.0
        %2355 = vmatprep.subr.mxu0 0.0
        %2356 = vmatpush1.xpose.msra.mxu0 0.0
        %2357 = vmatprep.subr.mxu0 0.0
        %2358 = vmatpush1.xpose.msra.mxu0 0.0
        %2359 = vmatprep.subr.mxu0 0.0
        %2360 = vmatpush1.xpose.msra.mxu0 0.0
        %2361 = vmatprep.subr.mxu0 0.0
        %2362 = vmatpush1.xpose.msra.mxu0 0.0
        %2363 = vmatprep.subr.mxu0 0.0
        %2364 = vmatpush1.xpose.msra.mxu0 0.0
        %2365 = vmatprep.subr.mxu0 0.0
        %2366 = vmatpush1.xpose.msra.mxu0 0.0
        %2367 = vmatprep.subr.mxu0 0.0
        %2368 = vmatpush1.xpose.msra.mxu0 0.0
        %2369 = vmatprep.subr.mxu0 0.0
        %2370 = vmatpush1.xpose.msra.mxu0 0.0
        %2371 = vmatprep.subr.mxu0 0.0
        %2372 = vmatpush1.xpose.msra.mxu0 %v2343
        %2373 = vmatprep.subr.mxu0 0.0
        %2374 = vmatpush1.xpose.msra.mxu0 %v2340
        %2375 = vmatprep.subr.mxu0 0.0
        %2376 = vmatpush1.xpose.msra.mxu0 %v2337
        %2377 = vmatprep.subr.mxu0 0.0
        %2378 = vmatpush2.xpose.msra.mxu0 0.0
        %2379 = vmatprep.subr.mxu0 0.0
        %2380 = vmatpush2.xpose.msra.mxu0 0.0
        %2381 = vmatprep.subr.mxu0 0.0
        %2382 = vmatpush2.xpose.msra.mxu0 0.0
        %2383 = vmatprep.subr.mxu0 0.0
        %2384 = vmatpush2.xpose.msra.mxu0 0.0
        %2385 = vmatprep.subr.mxu0 0.0
        %2386 = vmatpush2.xpose.msra.mxu0 0.0
        %2387 = vmatprep.subr.mxu0 0.0
        %2388 = vmatpush2.xpose.msra.mxu0 0.0
        %2389 = vmatprep.subr.mxu0 0.0
        %2390 = vmatpush2.xpose.msra.mxu0 0.0
        %2391 = vmatprep.subr.mxu0 0.0
        %2392 = vmatpush2.xpose.msra.mxu0 0.0
        %2393 = vmatprep.subr.mxu0 0.0
        %2394 = vmatpush2.xpose.msra.mxu0 0.0
        %2395 = vmatprep.subr.mxu0 0.0
        %2396 = vmatpush2.xpose.msra.mxu0 0.0
        %2397 = vmatprep.subr.mxu0 0.0
        %2398 = vmatpush2.xpose.msra.mxu0 0.0
        %2399 = vmatprep.subr.mxu0 0.0
        %2400 = vmatpush2.xpose.msra.mxu0 0.0
        %2401 = vmatprep.subr.mxu0 0.0
        %2402 = vmatpush2.xpose.msra.mxu0 0.0
        %2403 = vmatprep.subr.mxu0 0.0
        %2404 = vmatpush2.xpose.msra.mxu0 0.0
        %2405 = vmatprep.subr.mxu0 0.0
        %2406 = vmatpush2.xpose.msra.mxu0 0.0
        %2407 = vmatprep.subr.mxu0 0.0
        %2408 = vmatpush2.xpose.msra.mxu0 0.0
        %2409 = vmatprep.mubr.f32.mxu0 0.0
        %2410 = vmatmul.mubr.f32.gmra.mxu0 %v2328
        %v2411 = vpop.f32.mrf.mxu0
        %v2412 = vadd.f32 0.0, %v2411
        %v2413 = vpop.f32.mrf.mxu0
        %2414 = vmatprep.mubr.f32.mxu0 0.0
        %2415 = vmatmul.mubr.f32.gmra.mxu0 %v2331
        %v2416 = vpop.f32.mrf.mxu0
        %v2417 = vadd.f32 0.0, %v2416
        %v2418 = vpop.f32.mrf.mxu0
        %2419 = vmatprep.mubr.f32.mxu0 0.0
        %2420 = vmatmul.mubr.f32.gmra.mxu0 %v2334
        %v2421 = vpop.f32.mrf.mxu0
        %v2422 = vadd.f32 0.0, %v2421
        %v2423 = vpop.f32.mrf.mxu0
        %2424 = vdwg.mxu0
        %2425 = vst.msk [vmem:[#allocation3] sm:$0xff] %vm1308, %v2412
        %2426 = vst.msk [vmem:[#allocation3 + $0x8] sm:$0xff] %vm1308, %v2417
        %2427 = vst.msk [vmem:[#allocation3 + $0x10] sm:$0xff] %vm1308, %v2422
        %2428 = vrot.lane.b32.xlu0 %v1118, 96
        %v2429 = vpop.permute.xlu0 %2428
        %2430 = vrot.lane.b32.xlu0 %v1124, 96
        %v2431 = vpop.permute.xlu0 %2430
        %2432 = vrot.lane.b32.xlu0 %v1128, 96
        %v2433 = vpop.permute.xlu0 %2432
        %2434 = vrot.lane.b32.xlu0 %v1120, 96
        %v2435 = vpop.permute.xlu0 %2434
        %2436 = vrot.lane.b32.xlu0 %v1126, 96
        %v2437 = vpop.permute.xlu0 %2436
        %2438 = vrot.lane.b32.xlu0 %v1130, 96
        %v2439 = vpop.permute.xlu0 %2438
        %v2440 = vsel %vm1209, %v2429, 0
        %v2442 = vsel %vm1209, %v2431, 0
        %v2444 = vsel %vm1209, %v2433, 0
        %v2446 = vsel %vm1209, %v2435, 0
        %v2448 = vsel %vm1209, %v2437, 0
        %v2450 = vsel %vm1209, %v2439, 0
        %2452 = vmatprep.subr.mxu0 0.0
        %2453 = vmatpush1.xpose.msra.mxu0 0.0
        %2454 = vmatprep.subr.mxu0 0.0
        %2455 = vmatpush1.xpose.msra.mxu0 0.0
        %2456 = vmatprep.subr.mxu0 0.0
        %2457 = vmatpush1.xpose.msra.mxu0 0.0
        %2458 = vmatprep.subr.mxu0 0.0
        %2459 = vmatpush1.xpose.msra.mxu0 0.0
        %2460 = vmatprep.subr.mxu0 0.0
        %2461 = vmatpush1.xpose.msra.mxu0 0.0
        %2462 = vmatprep.subr.mxu0 0.0
        %2463 = vmatpush1.xpose.msra.mxu0 0.0
        %2464 = vmatprep.subr.mxu0 0.0
        %2465 = vmatpush1.xpose.msra.mxu0 0.0
        %2466 = vmatprep.subr.mxu0 0.0
        %2467 = vmatpush1.xpose.msra.mxu0 0.0
        %2468 = vmatprep.subr.mxu0 0.0
        %2469 = vmatpush1.xpose.msra.mxu0 0.0
        %2470 = vmatprep.subr.mxu0 0.0
        %2471 = vmatpush1.xpose.msra.mxu0 0.0
        %2472 = vmatprep.subr.mxu0 0.0
        %2473 = vmatpush1.xpose.msra.mxu0 0.0
        %2474 = vmatprep.subr.mxu0 0.0
        %2475 = vmatpush1.xpose.msra.mxu0 0.0
        %2476 = vmatprep.subr.mxu0 0.0
        %2477 = vmatpush1.xpose.msra.mxu0 0.0
        %2478 = vmatprep.subr.mxu0 0.0
        %2479 = vmatpush1.xpose.msra.mxu0 %v2450
        %2480 = vmatprep.subr.mxu0 0.0
        %2481 = vmatpush1.xpose.msra.mxu0 %v2448
        %2482 = vmatprep.subr.mxu0 0.0
        %2483 = vmatpush1.xpose.msra.mxu0 %v2446
        %2484 = vmatprep.subr.mxu0 0.0
        %2485 = vmatpush2.xpose.msra.mxu0 0.0
        %2486 = vmatprep.subr.mxu0 0.0
        %2487 = vmatpush2.xpose.msra.mxu0 0.0
        %2488 = vmatprep.subr.mxu0 0.0
        %2489 = vmatpush2.xpose.msra.mxu0 0.0
        %2490 = vmatprep.subr.mxu0 0.0
        %2491 = vmatpush2.xpose.msra.mxu0 0.0
        %2492 = vmatprep.subr.mxu0 0.0
        %2493 = vmatpush2.xpose.msra.mxu0 0.0
        %2494 = vmatprep.subr.mxu0 0.0
        %2495 = vmatpush2.xpose.msra.mxu0 0.0
        %2496 = vmatprep.subr.mxu0 0.0
        %2497 = vmatpush2.xpose.msra.mxu0 0.0
        %2498 = vmatprep.subr.mxu0 0.0
        %2499 = vmatpush2.xpose.msra.mxu0 0.0
        %2500 = vmatprep.subr.mxu0 0.0
        %2501 = vmatpush2.xpose.msra.mxu0 0.0
        %2502 = vmatprep.subr.mxu0 0.0
        %2503 = vmatpush2.xpose.msra.mxu0 0.0
        %2504 = vmatprep.subr.mxu0 0.0
        %2505 = vmatpush2.xpose.msra.mxu0 0.0
        %2506 = vmatprep.subr.mxu0 0.0
        %2507 = vmatpush2.xpose.msra.mxu0 0.0
        %2508 = vmatprep.subr.mxu0 0.0
        %2509 = vmatpush2.xpose.msra.mxu0 0.0
        %2510 = vmatprep.subr.mxu0 0.0
        %2511 = vmatpush2.xpose.msra.mxu0 0.0
        %2512 = vmatprep.subr.mxu0 0.0
        %2513 = vmatpush2.xpose.msra.mxu0 0.0
        %2514 = vmatprep.subr.mxu0 0.0
        %2515 = vmatpush2.xpose.msra.mxu0 0.0
        %2516 = vmatprep.mubr.f32.mxu0 0.0
        %2517 = vmatmul.mubr.f32.gmra.mxu0 %v2440
        %v2518 = vpop.f32.mrf.mxu0
        %v2519 = vadd.f32 0.0, %v2518
        %v2520 = vpop.f32.mrf.mxu0
        %2521 = vmatprep.mubr.f32.mxu0 0.0
        %2522 = vmatmul.mubr.f32.gmra.mxu0 %v2442
        %v2523 = vpop.f32.mrf.mxu0
        %v2524 = vadd.f32 0.0, %v2523
        %v2525 = vpop.f32.mrf.mxu0
        %2526 = vmatprep.mubr.f32.mxu0 0.0
        %2527 = vmatmul.mubr.f32.gmra.mxu0 %v2444
        %v2528 = vpop.f32.mrf.mxu0
        %v2529 = vadd.f32 0.0, %v2528
        %v2530 = vpop.f32.mrf.mxu0
        %2531 = vdwg.mxu0
        %2532 = vst.msk [vmem:[#allocation3 + $0x18] sm:$0xff] %vm1308, %v2519
        %2533 = vst.msk [vmem:[#allocation3 + $0x20] sm:$0xff] %vm1308, %v2524
        %2534 = vst.msk [vmem:[#allocation3 + $0x28] sm:$0xff] %vm1308, %v2529
        %2535 = vrot.lane.b32.xlu0 %v1118, 64
        %v2536 = vpop.permute.xlu0 %2535
        %2537 = vrot.lane.b32.xlu0 %v1124, 64
        %v2538 = vpop.permute.xlu0 %2537
        %2539 = vrot.lane.b32.xlu0 %v1128, 64
        %v2540 = vpop.permute.xlu0 %2539
        %2541 = vrot.lane.b32.xlu0 %v1120, 64
        %v2542 = vpop.permute.xlu0 %2541
        %2543 = vrot.lane.b32.xlu0 %v1126, 64
        %v2544 = vpop.permute.xlu0 %2543
        %2545 = vrot.lane.b32.xlu0 %v1130, 64
        %v2546 = vpop.permute.xlu0 %2545
        %v2547 = vsel %vm1209, %v2536, 0
        %v2549 = vsel %vm1209, %v2538, 0
        %v2551 = vsel %vm1209, %v2540, 0
        %v2553 = vsel %vm1209, %v2542, 0
        %v2555 = vsel %vm1209, %v2544, 0
        %v2557 = vsel %vm1209, %v2546, 0
        %2559 = vmatprep.subr.mxu0 0.0
        %2560 = vmatpush1.xpose.msra.mxu0 0.0
        %2561 = vmatprep.subr.mxu0 0.0
        %2562 = vmatpush1.xpose.msra.mxu0 0.0
        %2563 = vmatprep.subr.mxu0 0.0
        %2564 = vmatpush1.xpose.msra.mxu0 0.0
        %2565 = vmatprep.subr.mxu0 0.0
        %2566 = vmatpush1.xpose.msra.mxu0 0.0
        %2567 = vmatprep.subr.mxu0 0.0
        %2568 = vmatpush1.xpose.msra.mxu0 0.0
        %2569 = vmatprep.subr.mxu0 0.0
        %2570 = vmatpush1.xpose.msra.mxu0 0.0
        %2571 = vmatprep.subr.mxu0 0.0
        %2572 = vmatpush1.xpose.msra.mxu0 0.0
        %2573 = vmatprep.subr.mxu0 0.0
        %2574 = vmatpush1.xpose.msra.mxu0 0.0
        %2575 = vmatprep.subr.mxu0 0.0
        %2576 = vmatpush1.xpose.msra.mxu0 0.0
        %2577 = vmatprep.subr.mxu0 0.0
        %2578 = vmatpush1.xpose.msra.mxu0 0.0
        %2579 = vmatprep.subr.mxu0 0.0
        %2580 = vmatpush1.xpose.msra.mxu0 0.0
        %2581 = vmatprep.subr.mxu0 0.0
        %2582 = vmatpush1.xpose.msra.mxu0 0.0
        %2583 = vmatprep.subr.mxu0 0.0
        %2584 = vmatpush1.xpose.msra.mxu0 0.0
        %2585 = vmatprep.subr.mxu0 0.0
        %2586 = vmatpush1.xpose.msra.mxu0 %v2557
        %2587 = vmatprep.subr.mxu0 0.0
        %2588 = vmatpush1.xpose.msra.mxu0 %v2555
        %2589 = vmatprep.subr.mxu0 0.0
        %2590 = vmatpush1.xpose.msra.mxu0 %v2553
        %2591 = vmatprep.subr.mxu0 0.0
        %2592 = vmatpush2.xpose.msra.mxu0 0.0
        %2593 = vmatprep.subr.mxu0 0.0
        %2594 = vmatpush2.xpose.msra.mxu0 0.0
        %2595 = vmatprep.subr.mxu0 0.0
        %2596 = vmatpush2.xpose.msra.mxu0 0.0
        %2597 = vmatprep.subr.mxu0 0.0
        %2598 = vmatpush2.xpose.msra.mxu0 0.0
        %2599 = vmatprep.subr.mxu0 0.0
        %2600 = vmatpush2.xpose.msra.mxu0 0.0
        %2601 = vmatprep.subr.mxu0 0.0
        %2602 = vmatpush2.xpose.msra.mxu0 0.0
        %2603 = vmatprep.subr.mxu0 0.0
        %2604 = vmatpush2.xpose.msra.mxu0 0.0
        %2605 = vmatprep.subr.mxu0 0.0
        %2606 = vmatpush2.xpose.msra.mxu0 0.0
        %2607 = vmatprep.subr.mxu0 0.0
        %2608 = vmatpush2.xpose.msra.mxu0 0.0
        %2609 = vmatprep.subr.mxu0 0.0
        %2610 = vmatpush2.xpose.msra.mxu0 0.0
        %2611 = vmatprep.subr.mxu0 0.0
        %2612 = vmatpush2.xpose.msra.mxu0 0.0
        %2613 = vmatprep.subr.mxu0 0.0
        %2614 = vmatpush2.xpose.msra.mxu0 0.0
        %2615 = vmatprep.subr.mxu0 0.0
        %2616 = vmatpush2.xpose.msra.mxu0 0.0
        %2617 = vmatprep.subr.mxu0 0.0
        %2618 = vmatpush2.xpose.msra.mxu0 0.0
        %2619 = vmatprep.subr.mxu0 0.0
        %2620 = vmatpush2.xpose.msra.mxu0 0.0
        %2621 = vmatprep.subr.mxu0 0.0
        %2622 = vmatpush2.xpose.msra.mxu0 0.0
        %2623 = vmatprep.mubr.f32.mxu0 0.0
        %2624 = vmatmul.mubr.f32.gmra.mxu0 %v2547
        %v2625 = vpop.f32.mrf.mxu0
        %v2626 = vadd.f32 0.0, %v2625
        %v2627 = vpop.f32.mrf.mxu0
        %2628 = vmatprep.mubr.f32.mxu0 0.0
        %2629 = vmatmul.mubr.f32.gmra.mxu0 %v2549
        %v2630 = vpop.f32.mrf.mxu0
        %v2631 = vadd.f32 0.0, %v2630
        %v2632 = vpop.f32.mrf.mxu0
        %2633 = vmatprep.mubr.f32.mxu0 0.0
        %2634 = vmatmul.mubr.f32.gmra.mxu0 %v2551
        %v2635 = vpop.f32.mrf.mxu0
        %v2636 = vadd.f32 0.0, %v2635
        %v2637 = vpop.f32.mrf.mxu0
        %2638 = vdwg.mxu0
        %2639 = vst.msk [vmem:[#allocation3 + $0x30] sm:$0xff] %vm1308, %v2626
        %2640 = vst.msk [vmem:[#allocation3 + $0x38] sm:$0xff] %vm1308, %v2631
        %2641 = vst.msk [vmem:[#allocation3 + $0x40] sm:$0xff] %vm1308, %v2636
        %2642 = vrot.lane.b32.xlu0 %v1118, 32
        %v2643 = vpop.permute.xlu0 %2642
        %2644 = vrot.lane.b32.xlu0 %v1124, 32
        %v2645 = vpop.permute.xlu0 %2644
        %2646 = vrot.lane.b32.xlu0 %v1128, 32
        %v2647 = vpop.permute.xlu0 %2646
        %2648 = vrot.lane.b32.xlu0 %v1120, 32
        %v2649 = vpop.permute.xlu0 %2648
        %2650 = vrot.lane.b32.xlu0 %v1126, 32
        %v2651 = vpop.permute.xlu0 %2650
        %2652 = vrot.lane.b32.xlu0 %v1130, 32
        %v2653 = vpop.permute.xlu0 %2652
        %v2654 = vsel %vm1209, %v2643, 0
        %v2656 = vsel %vm1209, %v2645, 0
        %v2658 = vsel %vm1209, %v2647, 0
        %v2660 = vsel %vm1209, %v2649, 0
        %v2662 = vsel %vm1209, %v2651, 0
        %v2664 = vsel %vm1209, %v2653, 0
        %2666 = vmatprep.subr.mxu0 0.0
        %2667 = vmatpush1.xpose.msra.mxu0 0.0
        %2668 = vmatprep.subr.mxu0 0.0
        %2669 = vmatpush1.xpose.msra.mxu0 0.0
        %2670 = vmatprep.subr.mxu0 0.0
        %2671 = vmatpush1.xpose.msra.mxu0 0.0
        %2672 = vmatprep.subr.mxu0 0.0
        %2673 = vmatpush1.xpose.msra.mxu0 0.0
        %2674 = vmatprep.subr.mxu0 0.0
        %2675 = vmatpush1.xpose.msra.mxu0 0.0
        %2676 = vmatprep.subr.mxu0 0.0
        %2677 = vmatpush1.xpose.msra.mxu0 0.0
        %2678 = vmatprep.subr.mxu0 0.0
        %2679 = vmatpush1.xpose.msra.mxu0 0.0
        %2680 = vmatprep.subr.mxu0 0.0
        %2681 = vmatpush1.xpose.msra.mxu0 0.0
        %2682 = vmatprep.subr.mxu0 0.0
        %2683 = vmatpush1.xpose.msra.mxu0 0.0
        %2684 = vmatprep.subr.mxu0 0.0
        %2685 = vmatpush1.xpose.msra.mxu0 0.0
        %2686 = vmatprep.subr.mxu0 0.0
        %2687 = vmatpush1.xpose.msra.mxu0 0.0
        %2688 = vmatprep.subr.mxu0 0.0
        %2689 = vmatpush1.xpose.msra.mxu0 0.0
        %2690 = vmatprep.subr.mxu0 0.0
        %2691 = vmatpush1.xpose.msra.mxu0 0.0
        %2692 = vmatprep.subr.mxu0 0.0
        %2693 = vmatpush1.xpose.msra.mxu0 %v2664
        %2694 = vmatprep.subr.mxu0 0.0
        %2695 = vmatpush1.xpose.msra.mxu0 %v2662
        %2696 = vmatprep.subr.mxu0 0.0
        %2697 = vmatpush1.xpose.msra.mxu0 %v2660
        %2698 = vmatprep.subr.mxu0 0.0
        %2699 = vmatpush2.xpose.msra.mxu0 0.0
        %2700 = vmatprep.subr.mxu0 0.0
        %2701 = vmatpush2.xpose.msra.mxu0 0.0
        %2702 = vmatprep.subr.mxu0 0.0
        %2703 = vmatpush2.xpose.msra.mxu0 0.0
        %2704 = vmatprep.subr.mxu0 0.0
        %2705 = vmatpush2.xpose.msra.mxu0 0.0
        %2706 = vmatprep.subr.mxu0 0.0
        %2707 = vmatpush2.xpose.msra.mxu0 0.0
        %2708 = vmatprep.subr.mxu0 0.0
        %2709 = vmatpush2.xpose.msra.mxu0 0.0
        %2710 = vmatprep.subr.mxu0 0.0
        %2711 = vmatpush2.xpose.msra.mxu0 0.0
        %2712 = vmatprep.subr.mxu0 0.0
        %2713 = vmatpush2.xpose.msra.mxu0 0.0
        %2714 = vmatprep.subr.mxu0 0.0
        %2715 = vmatpush2.xpose.msra.mxu0 0.0
        %2716 = vmatprep.subr.mxu0 0.0
        %2717 = vmatpush2.xpose.msra.mxu0 0.0
        %2718 = vmatprep.subr.mxu0 0.0
        %2719 = vmatpush2.xpose.msra.mxu0 0.0
        %2720 = vmatprep.subr.mxu0 0.0
        %2721 = vmatpush2.xpose.msra.mxu0 0.0
        %2722 = vmatprep.subr.mxu0 0.0
        %2723 = vmatpush2.xpose.msra.mxu0 0.0
        %2724 = vmatprep.subr.mxu0 0.0
        %2725 = vmatpush2.xpose.msra.mxu0 0.0
        %2726 = vmatprep.subr.mxu0 0.0
        %2727 = vmatpush2.xpose.msra.mxu0 0.0
        %2728 = vmatprep.subr.mxu0 0.0
        %2729 = vmatpush2.xpose.msra.mxu0 0.0
        %2730 = vmatprep.mubr.f32.mxu0 0.0
        %2731 = vmatmul.mubr.f32.gmra.mxu0 %v2654
        %v2732 = vpop.f32.mrf.mxu0
        %v2733 = vadd.f32 0.0, %v2732
        %v2734 = vpop.f32.mrf.mxu0
        %2735 = vmatprep.mubr.f32.mxu0 0.0
        %2736 = vmatmul.mubr.f32.gmra.mxu0 %v2656
        %v2737 = vpop.f32.mrf.mxu0
        %v2738 = vadd.f32 0.0, %v2737
        %v2739 = vpop.f32.mrf.mxu0
        %2740 = vmatprep.mubr.f32.mxu0 0.0
        %2741 = vmatmul.mubr.f32.gmra.mxu0 %v2658
        %v2742 = vpop.f32.mrf.mxu0
        %v2743 = vadd.f32 0.0, %v2742
        %v2744 = vpop.f32.mrf.mxu0
        %2745 = vdwg.mxu0
        %2746 = vst.msk [vmem:[#allocation3 + $0x48] sm:$0xff] %vm1308, %v2733
        %2747 = vst.msk [vmem:[#allocation3 + $0x50] sm:$0xff] %vm1308, %v2738
        %2748 = vst.msk [vmem:[#allocation3 + $0x58] sm:$0xff] %vm1308, %v2743
        %v2749 = vld [vmem:[#allocation3] sm:$0xff]
        %v2750 = vld [vmem:[#allocation3 + $0x8] sm:$0xff]
        %v2751 = vld [vmem:[#allocation3 + $0x10] sm:$0xff]
        %v2752 = vld [vmem:[#allocation3 + $0x18] sm:$0xff]
        %v2753 = vld [vmem:[#allocation3 + $0x20] sm:$0xff]
        %v2754 = vld [vmem:[#allocation3 + $0x28] sm:$0xff]
        %v2755 = vld [vmem:[#allocation3 + $0x30] sm:$0xff]
        %v2756 = vld [vmem:[#allocation3 + $0x38] sm:$0xff]
        %v2757 = vld [vmem:[#allocation3 + $0x40] sm:$0xff]
        %v2758 = vld [vmem:[#allocation3 + $0x48] sm:$0xff]
        %v2759 = vld [vmem:[#allocation3 + $0x50] sm:$0xff]
        %v2760 = vld [vmem:[#allocation3 + $0x58] sm:$0xff]
        %v2761 = vadd.f32 %v2749, %v1208
        %v2762 = vadd.f32 %v2750, %v1208
        %v2763 = vadd.f32 %v2751, %v1208
        %v2764 = vadd.f32 %v2752, %v1208
        %v2765 = vadd.f32 %v2753, %v1208
        %v2766 = vadd.f32 %v2754, %v1208
        %v2767 = vadd.f32 %v2755, %v1208
        %v2768 = vadd.f32 %v2756, %v1208
        %v2769 = vadd.f32 %v2757, %v1208
        %v2770 = vadd.f32 %v2758, %v1208
        %v2771 = vadd.f32 %v2759, %v1208
        %v2772 = vadd.f32 %v2760, %v1208
        %v2773 = vsel %vm1308, %v2761, -inf
        %2774 = vmax.xlane.f32.xlu0 %v2773
        %v2775 = vpop.xlane.xlu0 %2774
        %v2776 = vsel %vm1308, %v2762, -inf
        %2777 = vmax.xlane.f32.xlu0 %v2776
        %v2778 = vpop.xlane.xlu0 %2777
        %v2779 = vsel %vm1308, %v2763, -inf
        %2780 = vmax.xlane.f32.xlu0 %v2779
        %v2781 = vpop.xlane.xlu0 %2780
        %v2782 = vsel %vm1308, %v2764, -inf
        %2783 = vmax.xlane.f32.xlu0 %v2782
        %v2784 = vpop.xlane.xlu0 %2783
        %v2785 = vsel %vm1308, %v2765, -inf
        %2786 = vmax.xlane.f32.xlu0 %v2785
        %v2787 = vpop.xlane.xlu0 %2786
        %v2788 = vsel %vm1308, %v2766, -inf
        %2789 = vmax.xlane.f32.xlu0 %v2788
        %v2790 = vpop.xlane.xlu0 %2789
        %v2791 = vsel %vm1308, %v2767, -inf
        %2792 = vmax.xlane.f32.xlu0 %v2791
        %v2793 = vpop.xlane.xlu0 %2792
        %v2794 = vsel %vm1308, %v2768, -inf
        %2795 = vmax.xlane.f32.xlu0 %v2794
        %v2796 = vpop.xlane.xlu0 %2795
        %v2797 = vsel %vm1308, %v2769, -inf
        %2798 = vmax.xlane.f32.xlu0 %v2797
        %v2799 = vpop.xlane.xlu0 %2798
        %v2800 = vsel %vm1308, %v2770, -inf
        %2801 = vmax.xlane.f32.xlu0 %v2800
        %v2802 = vpop.xlane.xlu0 %2801
        %v2803 = vsel %vm1308, %v2771, -inf
        %2804 = vmax.xlane.f32.xlu0 %v2803
        %v2805 = vpop.xlane.xlu0 %2804
        %v2806 = vsel %vm1308, %v2772, -inf
        %2807 = vmax.xlane.f32.xlu0 %v2806
        %v2808 = vpop.xlane.xlu0 %2807
        %v2809 = vsub.f32 %v2761, %v2775
        %v2810 = vsub.f32 %v2762, %v2778
        %v2811 = vsub.f32 %v2763, %v2781
        %v2812 = vsub.f32 %v2764, %v2784
        %v2813 = vsub.f32 %v2765, %v2787
        %v2814 = vsub.f32 %v2766, %v2790
        %v2815 = vsub.f32 %v2767, %v2793
        %v2816 = vsub.f32 %v2768, %v2796
        %v2817 = vsub.f32 %v2769, %v2799
        %v2818 = vsub.f32 %v2770, %v2802
        %v2819 = vsub.f32 %v2771, %v2805
        %v2820 = vsub.f32 %v2772, %v2808
        %v2821 = vmul.f32 %v2809, 1.442695
        %v2822 = vpow.pop %v2821
        %v2823 = vmul.f32 %v2810, 1.442695
        %v2824 = vpow.pop %v2823
        %v2825 = vmul.f32 %v2811, 1.442695
        %v2826 = vpow.pop %v2825
        %v2827 = vmul.f32 %v2812, 1.442695
        %v2828 = vpow.pop %v2827
        %v2829 = vmul.f32 %v2813, 1.442695
        %v2830 = vpow.pop %v2829
        %v2831 = vmul.f32 %v2814, 1.442695
        %v2832 = vpow.pop %v2831
        %v2833 = vmul.f32 %v2815, 1.442695
        %v2834 = vpow.pop %v2833
        %v2835 = vmul.f32 %v2816, 1.442695
        %v2836 = vpow.pop %v2835
        %v2837 = vmul.f32 %v2817, 1.442695
        %v2838 = vpow.pop %v2837
        %v2839 = vmul.f32 %v2818, 1.442695
        %v2840 = vpow.pop %v2839
        %v2841 = vmul.f32 %v2819, 1.442695
        %v2842 = vpow.pop %v2841
        %v2843 = vmul.f32 %v2820, 1.442695
        %v2844 = vpow.pop %v2843
        %v2845 = vsel %vm1308, %v2822, 0.0
        %2846 = vadd.xlane.f32.xlu0 %v2845
        %v2847 = vpop.xlane.xlu0 %2846
        %v2848 = vsel %vm1308, %v2824, 0.0
        %2849 = vadd.xlane.f32.xlu0 %v2848
        %v2850 = vpop.xlane.xlu0 %2849
        %v2851 = vsel %vm1308, %v2826, 0.0
        %2852 = vadd.xlane.f32.xlu0 %v2851
        %v2853 = vpop.xlane.xlu0 %2852
        %v2854 = vsel %vm1308, %v2828, 0.0
        %2855 = vadd.xlane.f32.xlu0 %v2854
        %v2856 = vpop.xlane.xlu0 %2855
        %v2857 = vsel %vm1308, %v2830, 0.0
        %2858 = vadd.xlane.f32.xlu0 %v2857
        %v2859 = vpop.xlane.xlu0 %2858
        %v2860 = vsel %vm1308, %v2832, 0.0
        %2861 = vadd.xlane.f32.xlu0 %v2860
        %v2862 = vpop.xlane.xlu0 %2861
        %v2863 = vsel %vm1308, %v2834, 0.0
        %2864 = vadd.xlane.f32.xlu0 %v2863
        %v2865 = vpop.xlane.xlu0 %2864
        %v2866 = vsel %vm1308, %v2836, 0.0
        %2867 = vadd.xlane.f32.xlu0 %v2866
        %v2868 = vpop.xlane.xlu0 %2867
        %v2869 = vsel %vm1308, %v2838, 0.0
        %2870 = vadd.xlane.f32.xlu0 %v2869
        %v2871 = vpop.xlane.xlu0 %2870
        %v2872 = vsel %vm1308, %v2840, 0.0
        %2873 = vadd.xlane.f32.xlu0 %v2872
        %v2874 = vpop.xlane.xlu0 %2873
        %v2875 = vsel %vm1308, %v2842, 0.0
        %2876 = vadd.xlane.f32.xlu0 %v2875
        %v2877 = vpop.xlane.xlu0 %2876
        %v2878 = vsel %vm1308, %v2844, 0.0
        %2879 = vadd.xlane.f32.xlu0 %v2878
        %v2880 = vpop.xlane.xlu0 %2879
        %v2881 = vrcp.pop %v2847
        %v2882 = vmul.f32 %v2822, %v2881
        %v2883 = vrcp.pop %v2850
        %v2884 = vmul.f32 %v2824, %v2883
        %v2885 = vrcp.pop %v2853
        %v2886 = vmul.f32 %v2826, %v2885
        %v2887 = vrcp.pop %v2856
        %v2888 = vmul.f32 %v2828, %v2887
        %v2889 = vrcp.pop %v2859
        %v2890 = vmul.f32 %v2830, %v2889
        %v2891 = vrcp.pop %v2862
        %v2892 = vmul.f32 %v2832, %v2891
        %v2893 = vrcp.pop %v2865
        %v2894 = vmul.f32 %v2834, %v2893
        %v2895 = vrcp.pop %v2868
        %v2896 = vmul.f32 %v2836, %v2895
        %v2897 = vrcp.pop %v2871
        %v2898 = vmul.f32 %v2838, %v2897
        %v2899 = vrcp.pop %v2874
        %v2900 = vmul.f32 %v2840, %v2899
        %v2901 = vrcp.pop %v2877
        %v2902 = vmul.f32 %v2842, %v2901
        %v2903 = vrcp.pop %v2880
        %v2904 = vmul.f32 %v2844, %v2903
        %v2906 = vsel %vm1308, %v2882, 0
        %v2909 = vsel %vm1308, %v2884, 0
        %v2912 = vsel %vm1308, %v2886, 0
        %2914 = vmatprep.subr.mxu0 0.0
        %2915 = vmatpush1.msra.mxu0 0.0
        %2916 = vmatprep.subr.mxu0 0.0
        %2917 = vmatpush1.msra.mxu0 0.0
        %2918 = vmatprep.subr.mxu0 0.0
        %2919 = vmatpush1.msra.mxu0 0.0
        %2920 = vmatprep.subr.mxu0 0.0
        %2921 = vmatpush1.msra.mxu0 0.0
        %2922 = vmatprep.subr.mxu0 0.0
        %2923 = vmatpush1.msra.mxu0 0.0
        %2924 = vmatprep.subr.mxu0 0.0
        %2925 = vmatpush1.msra.mxu0 0.0
        %2926 = vmatprep.subr.mxu0 0.0
        %2927 = vmatpush1.msra.mxu0 0.0
        %2928 = vmatprep.subr.mxu0 0.0
        %2929 = vmatpush1.msra.mxu0 0.0
        %2930 = vmatprep.subr.mxu0 0.0
        %2931 = vmatpush1.msra.mxu0 0.0
        %2932 = vmatprep.subr.mxu0 0.0
        %2933 = vmatpush1.msra.mxu0 0.0
        %2934 = vmatprep.subr.mxu0 0.0
        %2935 = vmatpush1.msra.mxu0 0.0
        %2936 = vmatprep.subr.mxu0 0.0
        %2937 = vmatpush1.msra.mxu0 0.0
        %2938 = vmatprep.subr.mxu0 0.0
        %2939 = vmatpush1.msra.mxu0 0.0
        %2940 = vmatprep.subr.mxu0 0.0
        %2941 = vmatpush1.msra.mxu0 %v1186
        %2942 = vmatprep.subr.mxu0 0.0
        %2943 = vmatpush1.msra.mxu0 %v1183
        %2944 = vmatprep.subr.mxu0 0.0
        %2945 = vmatpush1.msra.mxu0 %v1178
        %2946 = vmatprep.subr.mxu0 0.0
        %2947 = vmatpush2.msra.mxu0 0.0
        %2948 = vmatprep.subr.mxu0 0.0
        %2949 = vmatpush2.msra.mxu0 0.0
        %2950 = vmatprep.subr.mxu0 0.0
        %2951 = vmatpush2.msra.mxu0 0.0
        %2952 = vmatprep.subr.mxu0 0.0
        %2953 = vmatpush2.msra.mxu0 0.0
        %2954 = vmatprep.subr.mxu0 0.0
        %2955 = vmatpush2.msra.mxu0 0.0
        %2956 = vmatprep.subr.mxu0 0.0
        %2957 = vmatpush2.msra.mxu0 0.0
        %2958 = vmatprep.subr.mxu0 0.0
        %2959 = vmatpush2.msra.mxu0 0.0
        %2960 = vmatprep.subr.mxu0 0.0
        %2961 = vmatpush2.msra.mxu0 0.0
        %2962 = vmatprep.subr.mxu0 0.0
        %2963 = vmatpush2.msra.mxu0 0.0
        %2964 = vmatprep.subr.mxu0 0.0
        %2965 = vmatpush2.msra.mxu0 0.0
        %2966 = vmatprep.subr.mxu0 0.0
        %2967 = vmatpush2.msra.mxu0 0.0
        %2968 = vmatprep.subr.mxu0 0.0
        %2969 = vmatpush2.msra.mxu0 0.0
        %2970 = vmatprep.subr.mxu0 0.0
        %2971 = vmatpush2.msra.mxu0 0.0
        %2972 = vmatprep.subr.mxu0 0.0
        %2973 = vmatpush2.msra.mxu0 0.0
        %2974 = vmatprep.subr.mxu0 0.0
        %2975 = vmatpush2.msra.mxu0 0.0
        %2976 = vmatprep.subr.mxu0 0.0
        %2977 = vmatpush2.msra.mxu0 0.0
        %2978 = vmatprep.mubr.f32.mxu0 0.0
        %2979 = vmatmul.mubr.f32.gmra.mxu0 %v2906
        %v2980 = vpop.f32.mrf.mxu0
        %v2981 = vadd.f32 0.0, %v2980
        %v2982 = vpop.f32.mrf.mxu0
        %2983 = vmatprep.mubr.f32.mxu0 0.0
        %2984 = vmatmul.mubr.f32.gmra.mxu0 %v2909
        %v2985 = vpop.f32.mrf.mxu0
        %v2986 = vadd.f32 0.0, %v2985
        %v2987 = vpop.f32.mrf.mxu0
        %2988 = vmatprep.mubr.f32.mxu0 0.0
        %2989 = vmatmul.mubr.f32.gmra.mxu0 %v2912
        %v2990 = vpop.f32.mrf.mxu0
        %v2991 = vadd.f32 0.0, %v2990
        %v2992 = vpop.f32.mrf.mxu0
        %2993 = vdwg.mxu0
        %2994 = vst.msk [vmem:[#allocation4] sm:$0xff] %vm1209, %v2981
        %2995 = vst.msk [vmem:[#allocation4 + $0x8] sm:$0xff] %vm1209, %v2986
        %2996 = vst.msk [vmem:[#allocation4 + $0x10] sm:$0xff] %vm1209, %v2991
        %3000 = vrot.lane.b32.xlu0 %v1178, 96
        %v3001 = vpop.permute.xlu0 %3000
        %3002 = vrot.lane.b32.xlu0 %v1183, 96
        %v3003 = vpop.permute.xlu0 %3002
        %3004 = vrot.lane.b32.xlu0 %v1186, 96
        %v3005 = vpop.permute.xlu0 %3004
        %v3010 = vsel %vm1308, %v2888, 0
        %v3013 = vsel %vm1308, %v2890, 0
        %v3016 = vsel %vm1308, %v2892, 0
        %3018 = vmatprep.subr.mxu0 0.0
        %3019 = vmatpush1.msra.mxu0 0.0
        %3020 = vmatprep.subr.mxu0 0.0
        %3021 = vmatpush1.msra.mxu0 0.0
        %3022 = vmatprep.subr.mxu0 0.0
        %3023 = vmatpush1.msra.mxu0 0.0
        %3024 = vmatprep.subr.mxu0 0.0
        %3025 = vmatpush1.msra.mxu0 0.0
        %3026 = vmatprep.subr.mxu0 0.0
        %3027 = vmatpush1.msra.mxu0 0.0
        %3028 = vmatprep.subr.mxu0 0.0
        %3029 = vmatpush1.msra.mxu0 0.0
        %3030 = vmatprep.subr.mxu0 0.0
        %3031 = vmatpush1.msra.mxu0 0.0
        %3032 = vmatprep.subr.mxu0 0.0
        %3033 = vmatpush1.msra.mxu0 0.0
        %3034 = vmatprep.subr.mxu0 0.0
        %3035 = vmatpush1.msra.mxu0 0.0
        %3036 = vmatprep.subr.mxu0 0.0
        %3037 = vmatpush1.msra.mxu0 0.0
        %3038 = vmatprep.subr.mxu0 0.0
        %3039 = vmatpush1.msra.mxu0 0.0
        %3040 = vmatprep.subr.mxu0 0.0
        %3041 = vmatpush1.msra.mxu0 0.0
        %3042 = vmatprep.subr.mxu0 0.0
        %3043 = vmatpush1.msra.mxu0 0.0
        %3044 = vmatprep.subr.mxu0 0.0
        %3045 = vmatpush1.msra.mxu0 %v3005
        %3046 = vmatprep.subr.mxu0 0.0
        %3047 = vmatpush1.msra.mxu0 %v3003
        %3048 = vmatprep.subr.mxu0 0.0
        %3049 = vmatpush1.msra.mxu0 %v3001
        %3050 = vmatprep.subr.mxu0 0.0
        %3051 = vmatpush2.msra.mxu0 0.0
        %3052 = vmatprep.subr.mxu0 0.0
        %3053 = vmatpush2.msra.mxu0 0.0
        %3054 = vmatprep.subr.mxu0 0.0
        %3055 = vmatpush2.msra.mxu0 0.0
        %3056 = vmatprep.subr.mxu0 0.0
        %3057 = vmatpush2.msra.mxu0 0.0
        %3058 = vmatprep.subr.mxu0 0.0
        %3059 = vmatpush2.msra.mxu0 0.0
        %3060 = vmatprep.subr.mxu0 0.0
        %3061 = vmatpush2.msra.mxu0 0.0
        %3062 = vmatprep.subr.mxu0 0.0
        %3063 = vmatpush2.msra.mxu0 0.0
        %3064 = vmatprep.subr.mxu0 0.0
        %3065 = vmatpush2.msra.mxu0 0.0
        %3066 = vmatprep.subr.mxu0 0.0
        %3067 = vmatpush2.msra.mxu0 0.0
        %3068 = vmatprep.subr.mxu0 0.0
        %3069 = vmatpush2.msra.mxu0 0.0
        %3070 = vmatprep.subr.mxu0 0.0
        %3071 = vmatpush2.msra.mxu0 0.0
        %3072 = vmatprep.subr.mxu0 0.0
        %3073 = vmatpush2.msra.mxu0 0.0
        %3074 = vmatprep.subr.mxu0 0.0
        %3075 = vmatpush2.msra.mxu0 0.0
        %3076 = vmatprep.subr.mxu0 0.0
        %3077 = vmatpush2.msra.mxu0 0.0
        %3078 = vmatprep.subr.mxu0 0.0
        %3079 = vmatpush2.msra.mxu0 0.0
        %3080 = vmatprep.subr.mxu0 0.0
        %3081 = vmatpush2.msra.mxu0 0.0
        %3082 = vmatprep.mubr.f32.mxu0 0.0
        %3083 = vmatmul.mubr.f32.gmra.mxu0 %v3010
        %v3084 = vpop.f32.mrf.mxu0
        %v3085 = vadd.f32 0.0, %v3084
        %v3086 = vpop.f32.mrf.mxu0
        %3087 = vmatprep.mubr.f32.mxu0 0.0
        %3088 = vmatmul.mubr.f32.gmra.mxu0 %v3013
        %v3089 = vpop.f32.mrf.mxu0
        %v3090 = vadd.f32 0.0, %v3089
        %v3091 = vpop.f32.mrf.mxu0
        %3092 = vmatprep.mubr.f32.mxu0 0.0
        %3093 = vmatmul.mubr.f32.gmra.mxu0 %v3016
        %v3094 = vpop.f32.mrf.mxu0
        %v3095 = vadd.f32 0.0, %v3094
        %v3096 = vpop.f32.mrf.mxu0
        %3097 = vdwg.mxu0
        %3101 = vrot.lane.b32.xlu0 %v3085, 32
        %v3102 = vpop.permute.xlu0 %3101
        %3103 = vrot.lane.b32.xlu0 %v3090, 32
        %v3104 = vpop.permute.xlu0 %3103
        %3105 = vrot.lane.b32.xlu0 %v3095, 32
        %v3106 = vpop.permute.xlu0 %3105
        %3110 = vst.msk [vmem:[#allocation4] sm:$0xff] %vm1994, %v3102
        %3111 = vst.msk [vmem:[#allocation4 + $0x8] sm:$0xff] %vm1994, %v3104
        %3112 = vst.msk [vmem:[#allocation4 + $0x10] sm:$0xff] %vm1994, %v3106
        %3113 = vrot.lane.b32.xlu0 %v1178, 64
        %v3114 = vpop.permute.xlu0 %3113
        %3115 = vrot.lane.b32.xlu0 %v1183, 64
        %v3116 = vpop.permute.xlu0 %3115
        %3117 = vrot.lane.b32.xlu0 %v1186, 64
        %v3118 = vpop.permute.xlu0 %3117
        %v3123 = vsel %vm1308, %v2894, 0
        %v3126 = vsel %vm1308, %v2896, 0
        %v3129 = vsel %vm1308, %v2898, 0
        %3131 = vmatprep.subr.mxu0 0.0
        %3132 = vmatpush1.msra.mxu0 0.0
        %3133 = vmatprep.subr.mxu0 0.0
        %3134 = vmatpush1.msra.mxu0 0.0
        %3135 = vmatprep.subr.mxu0 0.0
        %3136 = vmatpush1.msra.mxu0 0.0
        %3137 = vmatprep.subr.mxu0 0.0
        %3138 = vmatpush1.msra.mxu0 0.0
        %3139 = vmatprep.subr.mxu0 0.0
        %3140 = vmatpush1.msra.mxu0 0.0
        %3141 = vmatprep.subr.mxu0 0.0
        %3142 = vmatpush1.msra.mxu0 0.0
        %3143 = vmatprep.subr.mxu0 0.0
        %3144 = vmatpush1.msra.mxu0 0.0
        %3145 = vmatprep.subr.mxu0 0.0
        %3146 = vmatpush1.msra.mxu0 0.0
        %3147 = vmatprep.subr.mxu0 0.0
        %3148 = vmatpush1.msra.mxu0 0.0
        %3149 = vmatprep.subr.mxu0 0.0
        %3150 = vmatpush1.msra.mxu0 0.0
        %3151 = vmatprep.subr.mxu0 0.0
        %3152 = vmatpush1.msra.mxu0 0.0
        %3153 = vmatprep.subr.mxu0 0.0
        %3154 = vmatpush1.msra.mxu0 0.0
        %3155 = vmatprep.subr.mxu0 0.0
        %3156 = vmatpush1.msra.mxu0 0.0
        %3157 = vmatprep.subr.mxu0 0.0
        %3158 = vmatpush1.msra.mxu0 %v3118
        %3159 = vmatprep.subr.mxu0 0.0
        %3160 = vmatpush1.msra.mxu0 %v3116
        %3161 = vmatprep.subr.mxu0 0.0
        %3162 = vmatpush1.msra.mxu0 %v3114
        %3163 = vmatprep.subr.mxu0 0.0
        %3164 = vmatpush2.msra.mxu0 0.0
        %3165 = vmatprep.subr.mxu0 0.0
        %3166 = vmatpush2.msra.mxu0 0.0
        %3167 = vmatprep.subr.mxu0 0.0
        %3168 = vmatpush2.msra.mxu0 0.0
        %3169 = vmatprep.subr.mxu0 0.0
        %3170 = vmatpush2.msra.mxu0 0.0
        %3171 = vmatprep.subr.mxu0 0.0
        %3172 = vmatpush2.msra.mxu0 0.0
        %3173 = vmatprep.subr.mxu0 0.0
        %3174 = vmatpush2.msra.mxu0 0.0
        %3175 = vmatprep.subr.mxu0 0.0
        %3176 = vmatpush2.msra.mxu0 0.0
        %3177 = vmatprep.subr.mxu0 0.0
        %3178 = vmatpush2.msra.mxu0 0.0
        %3179 = vmatprep.subr.mxu0 0.0
        %3180 = vmatpush2.msra.mxu0 0.0
        %3181 = vmatprep.subr.mxu0 0.0
        %3182 = vmatpush2.msra.mxu0 0.0
        %3183 = vmatprep.subr.mxu0 0.0
        %3184 = vmatpush2.msra.mxu0 0.0
        %3185 = vmatprep.subr.mxu0 0.0
        %3186 = vmatpush2.msra.mxu0 0.0
        %3187 = vmatprep.subr.mxu0 0.0
        %3188 = vmatpush2.msra.mxu0 0.0
        %3189 = vmatprep.subr.mxu0 0.0
        %3190 = vmatpush2.msra.mxu0 0.0
        %3191 = vmatprep.subr.mxu0 0.0
        %3192 = vmatpush2.msra.mxu0 0.0
        %3193 = vmatprep.subr.mxu0 0.0
        %3194 = vmatpush2.msra.mxu0 0.0
        %3195 = vmatprep.mubr.f32.mxu0 0.0
        %3196 = vmatmul.mubr.f32.gmra.mxu0 %v3123
        %v3197 = vpop.f32.mrf.mxu0
        %v3198 = vadd.f32 0.0, %v3197
        %v3199 = vpop.f32.mrf.mxu0
        %3200 = vmatprep.mubr.f32.mxu0 0.0
        %3201 = vmatmul.mubr.f32.gmra.mxu0 %v3126
        %v3202 = vpop.f32.mrf.mxu0
        %v3203 = vadd.f32 0.0, %v3202
        %v3204 = vpop.f32.mrf.mxu0
        %3205 = vmatprep.mubr.f32.mxu0 0.0
        %3206 = vmatmul.mubr.f32.gmra.mxu0 %v3129
        %v3207 = vpop.f32.mrf.mxu0
        %v3208 = vadd.f32 0.0, %v3207
        %v3209 = vpop.f32.mrf.mxu0
        %3210 = vdwg.mxu0
        %3214 = vrot.lane.b32.xlu0 %v3198, 64
        %v3215 = vpop.permute.xlu0 %3214
        %3216 = vrot.lane.b32.xlu0 %v3203, 64
        %v3217 = vpop.permute.xlu0 %3216
        %3218 = vrot.lane.b32.xlu0 %v3208, 64
        %v3219 = vpop.permute.xlu0 %3218
        %3223 = vst.msk [vmem:[#allocation4] sm:$0xff] %vm2108, %v3215
        %3224 = vst.msk [vmem:[#allocation4 + $0x8] sm:$0xff] %vm2108, %v3217
        %3225 = vst.msk [vmem:[#allocation4 + $0x10] sm:$0xff] %vm2108, %v3219
        %3226 = vrot.lane.b32.xlu0 %v1178, 32
        %v3227 = vpop.permute.xlu0 %3226
        %3228 = vrot.lane.b32.xlu0 %v1183, 32
        %v3229 = vpop.permute.xlu0 %3228
        %3230 = vrot.lane.b32.xlu0 %v1186, 32
        %v3231 = vpop.permute.xlu0 %3230
        %v3236 = vsel %vm1308, %v2900, 0
        %v3239 = vsel %vm1308, %v2902, 0
        %v3242 = vsel %vm1308, %v2904, 0
        %3244 = vmatprep.subr.mxu0 0.0
        %3245 = vmatpush1.msra.mxu0 0.0
        %3246 = vmatprep.subr.mxu0 0.0
        %3247 = vmatpush1.msra.mxu0 0.0
        %3248 = vmatprep.subr.mxu0 0.0
        %3249 = vmatpush1.msra.mxu0 0.0
        %3250 = vmatprep.subr.mxu0 0.0
        %3251 = vmatpush1.msra.mxu0 0.0
        %3252 = vmatprep.subr.mxu0 0.0
        %3253 = vmatpush1.msra.mxu0 0.0
        %3254 = vmatprep.subr.mxu0 0.0
        %3255 = vmatpush1.msra.mxu0 0.0
        %3256 = vmatprep.subr.mxu0 0.0
        %3257 = vmatpush1.msra.mxu0 0.0
        %3258 = vmatprep.subr.mxu0 0.0
        %3259 = vmatpush1.msra.mxu0 0.0
        %3260 = vmatprep.subr.mxu0 0.0
        %3261 = vmatpush1.msra.mxu0 0.0
        %3262 = vmatprep.subr.mxu0 0.0
        %3263 = vmatpush1.msra.mxu0 0.0
        %3264 = vmatprep.subr.mxu0 0.0
        %3265 = vmatpush1.msra.mxu0 0.0
        %3266 = vmatprep.subr.mxu0 0.0
        %3267 = vmatpush1.msra.mxu0 0.0
        %3268 = vmatprep.subr.mxu0 0.0
        %3269 = vmatpush1.msra.mxu0 0.0
        %3270 = vmatprep.subr.mxu0 0.0
        %3271 = vmatpush1.msra.mxu0 %v3231
        %3272 = vmatprep.subr.mxu0 0.0
        %3273 = vmatpush1.msra.mxu0 %v3229
        %3274 = vmatprep.subr.mxu0 0.0
        %3275 = vmatpush1.msra.mxu0 %v3227
        %3276 = vmatprep.subr.mxu0 0.0
        %3277 = vmatpush2.msra.mxu0 0.0
        %3278 = vmatprep.subr.mxu0 0.0
        %3279 = vmatpush2.msra.mxu0 0.0
        %3280 = vmatprep.subr.mxu0 0.0
        %3281 = vmatpush2.msra.mxu0 0.0
        %3282 = vmatprep.subr.mxu0 0.0
        %3283 = vmatpush2.msra.mxu0 0.0
        %3284 = vmatprep.subr.mxu0 0.0
        %3285 = vmatpush2.msra.mxu0 0.0
        %3286 = vmatprep.subr.mxu0 0.0
        %3287 = vmatpush2.msra.mxu0 0.0
        %3288 = vmatprep.subr.mxu0 0.0
        %3289 = vmatpush2.msra.mxu0 0.0
        %3290 = vmatprep.subr.mxu0 0.0
        %3291 = vmatpush2.msra.mxu0 0.0
        %3292 = vmatprep.subr.mxu0 0.0
        %3293 = vmatpush2.msra.mxu0 0.0
        %3294 = vmatprep.subr.mxu0 0.0
        %3295 = vmatpush2.msra.mxu0 0.0
        %3296 = vmatprep.subr.mxu0 0.0
        %3297 = vmatpush2.msra.mxu0 0.0
        %3298 = vmatprep.subr.mxu0 0.0
        %3299 = vmatpush2.msra.mxu0 0.0
        %3300 = vmatprep.subr.mxu0 0.0
        %3301 = vmatpush2.msra.mxu0 0.0
        %3302 = vmatprep.subr.mxu0 0.0
        %3303 = vmatpush2.msra.mxu0 0.0
        %3304 = vmatprep.subr.mxu0 0.0
        %3305 = vmatpush2.msra.mxu0 0.0
        %3306 = vmatprep.subr.mxu0 0.0
        %3307 = vmatpush2.msra.mxu0 0.0
        %3308 = vmatprep.mubr.f32.mxu0 0.0
        %3309 = vmatmul.mubr.f32.gmra.mxu0 %v3236
        %v3310 = vpop.f32.mrf.mxu0
        %v3311 = vadd.f32 0.0, %v3310
        %v3312 = vpop.f32.mrf.mxu0
        %3313 = vmatprep.mubr.f32.mxu0 0.0
        %3314 = vmatmul.mubr.f32.gmra.mxu0 %v3239
        %v3315 = vpop.f32.mrf.mxu0
        %v3316 = vadd.f32 0.0, %v3315
        %v3317 = vpop.f32.mrf.mxu0
        %3318 = vmatprep.mubr.f32.mxu0 0.0
        %3319 = vmatmul.mubr.f32.gmra.mxu0 %v3242
        %v3320 = vpop.f32.mrf.mxu0
        %v3321 = vadd.f32 0.0, %v3320
        %v3322 = vpop.f32.mrf.mxu0
        %3323 = vdwg.mxu0
        %3327 = vrot.lane.b32.xlu0 %v3311, 96
        %v3328 = vpop.permute.xlu0 %3327
        %3329 = vrot.lane.b32.xlu0 %v3316, 96
        %v3330 = vpop.permute.xlu0 %3329
        %3331 = vrot.lane.b32.xlu0 %v3321, 96
        %v3332 = vpop.permute.xlu0 %3331
        %3336 = vst.msk [vmem:[#allocation4] sm:$0xff] %vm2222, %v3328
        %3337 = vst.msk [vmem:[#allocation4 + $0x8] sm:$0xff] %vm2222, %v3330
        %3338 = vst.msk [vmem:[#allocation4 + $0x10] sm:$0xff] %vm2222, %v3332
        %v3339 = vld [vmem:[#allocation4] sm:$0xff]
        %v3340 = vld [vmem:[#allocation4 + $0x8] sm:$0xff]
        %v3341 = vld [vmem:[#allocation4 + $0x10] sm:$0xff]
        %v3342 = vpack.c.bf16 %v3340, %v3339
        %v3343 = vpack.c.bf16 %v3341, %v3341
        %3344 = vmatprep.subr.bf16.mxu0 0
        %3345 = vmatpush1.bf16.msra.mxu0 %v2270
        %3346 = vmatprep.subr.bf16.mxu0 0
        %3347 = vmatpush1.bf16.msra.mxu0 %v2269
        %3348 = vmatprep.subr.bf16.mxu0 0
        %3349 = vmatpush1.bf16.msra.mxu0 %v2268
        %3350 = vmatprep.subr.bf16.mxu0 0
        %3351 = vmatpush1.bf16.msra.mxu0 %v2267
        %3352 = vmatprep.subr.bf16.mxu0 0
        %3353 = vmatpush1.bf16.msra.mxu0 %v2266
        %3354 = vmatprep.subr.bf16.mxu0 0
        %3355 = vmatpush1.bf16.msra.mxu0 %v2265
        %3356 = vmatprep.subr.bf16.mxu0 0
        %3357 = vmatpush1.bf16.msra.mxu0 %v2264
        %3358 = vmatprep.subr.bf16.mxu0 0
        %3359 = vmatpush1.bf16.msra.mxu0 %v2263
        %3360 = vmatprep.subr.bf16.mxu0 0
        %3361 = vmatpush2.bf16.msra.mxu0 0
        %3362 = vmatprep.subr.bf16.mxu0 0
        %3363 = vmatpush2.bf16.msra.mxu0 0
        %3364 = vmatprep.subr.bf16.mxu0 0
        %3365 = vmatpush2.bf16.msra.mxu0 0
        %3366 = vmatprep.subr.bf16.mxu0 0
        %3367 = vmatpush2.bf16.msra.mxu0 0
        %3368 = vmatprep.subr.bf16.mxu0 0
        %3369 = vmatpush2.bf16.msra.mxu0 0
        %3370 = vmatprep.subr.bf16.mxu0 0
        %3371 = vmatpush2.bf16.msra.mxu0 0
        %3372 = vmatprep.subr.bf16.mxu0 0
        %3373 = vmatpush2.bf16.msra.mxu0 0
        %3374 = vmatprep.subr.bf16.mxu0 0
        %3375 = vmatpush2.bf16.msra.mxu0 0
        %3376 = vmatprep.mubr.bf16.mxu0 0
        %3377 = vmatmul.mubr.bf16.gmra.mxu0 %v3342
        %v3378 = vpop.f32.mrf.mxu0
        %v3379 = vadd.f32 0.0, %v3378
        %v3380 = vpop.f32.mrf.mxu0
        %v3381 = vpop.f32.mrf.mxu0
        %v3382 = vadd.f32 0.0, %v3381
        %v3383 = vpop.f32.mrf.mxu0
        %3384 = vmatprep.mubr.bf16.mxu0 0
        %3385 = vmatmul.mubr.bf16.gmra.mxu0 %v3343
        %v3386 = vpop.f32.mrf.mxu0
        %v3387 = vadd.f32 0.0, %v3386
        %v3388 = vpop.f32.mrf.mxu0
        %v3389 = vpop.f32.mrf.mxu0
        %v3390 = vpop.f32.mrf.mxu0
        %3391 = vdwg.mxu0
        %v3392 = vadd.f32 %v790, %v2314
        %v3393 = vadd.f32 %v791, %v2317
        %v3394 = vadd.f32 %v792, %v2322
        %v3395 = vadd.f32 %v793, %v3379
        %v3396 = vadd.f32 %v794, %v3382
        %v3397 = vadd.f32 %v795, %v3387
        %v3398 = vld [vmem:[%s743] sm:$0x1]
        %v3400 = vlaneseq
        %v3401 = vshrl.u32 %v3400, 7
        %v3402 = vsub.s32 0, %v3401
        %v3403 = vrot.slane %v3398, %v3402
        %v3405 = vadd.f32 %v3392, %v3403
        %v3406 = vadd.f32 %v3393, %v3403
        %v3407 = vadd.f32 %v3394, %v3403
        %v3408 = vadd.f32 %v3395, %v3403
        %v3409 = vadd.f32 %v3396, %v3403
        %v3410 = vadd.f32 %v3397, %v3403
        %v3411 = vld [vmem:[%s746] sm:$0x1]
        %v3412 = vld [vmem:[%s749] sm:$0x1]
        %3413 = vadd.xlane.f32.xlu0 %v3405
        %v3414 = vpop.xlane.xlu0 %3413
        %3415 = vadd.xlane.f32.xlu0 %v3406
        %v3416 = vpop.xlane.xlu0 %3415
        %3417 = vadd.xlane.f32.xlu0 %v3407
        %v3418 = vpop.xlane.xlu0 %3417
        %3419 = vadd.xlane.f32.xlu0 %v3408
        %v3420 = vpop.xlane.xlu0 %3419
        %3421 = vadd.xlane.f32.xlu0 %v3409
        %v3422 = vpop.xlane.xlu0 %3421
        %3423 = vadd.xlane.f32.xlu0 %v3410
        %v3424 = vpop.xlane.xlu0 %3423
        %v3425 = vmul.f32 %v3414, %v810
        %v3426 = vmul.f32 %v3416, %v810
        %v3427 = vmul.f32 %v3418, %v810
        %v3428 = vmul.f32 %v3420, %v810
        %v3429 = vmul.f32 %v3422, %v810
        %v3430 = vmul.f32 %v3424, %v810
        %v3431 = vsub.f32 %v3405, %v3425
        %v3432 = vsub.f32 %v3406, %v3426
        %v3433 = vsub.f32 %v3407, %v3427
        %v3434 = vsub.f32 %v3408, %v3428
        %v3435 = vsub.f32 %v3409, %v3429
        %v3436 = vsub.f32 %v3410, %v3430
        %v3437 = vmul.f32 %v3431, %v3431
        %v3438 = vmul.f32 %v3432, %v3432
        %v3439 = vmul.f32 %v3433, %v3433
        %v3440 = vmul.f32 %v3434, %v3434
        %v3441 = vmul.f32 %v3435, %v3435
        %v3442 = vmul.f32 %v3436, %v3436
        %3443 = vadd.xlane.f32.xlu0 %v3437
        %v3444 = vpop.xlane.xlu0 %3443
        %3445 = vadd.xlane.f32.xlu0 %v3438
        %v3446 = vpop.xlane.xlu0 %3445
        %3447 = vadd.xlane.f32.xlu0 %v3439
        %v3448 = vpop.xlane.xlu0 %3447
        %3449 = vadd.xlane.f32.xlu0 %v3440
        %v3450 = vpop.xlane.xlu0 %3449
        %3451 = vadd.xlane.f32.xlu0 %v3441
        %v3452 = vpop.xlane.xlu0 %3451
        %3453 = vadd.xlane.f32.xlu0 %v3442
        %v3454 = vpop.xlane.xlu0 %3453
        %v3455 = vmul.f32 %v3444, %v810
        %v3456 = vmul.f32 %v3446, %v810
        %v3457 = vmul.f32 %v3448, %v810
        %v3458 = vmul.f32 %v3450, %v810
        %v3459 = vmul.f32 %v3452, %v810
        %v3460 = vmul.f32 %v3454, %v810
        %v3461 = vadd.f32 %v3455, 1e-05
        %v3462 = vadd.f32 %v3456, 1e-05
        %v3463 = vadd.f32 %v3457, 1e-05
        %v3464 = vadd.f32 %v3458, 1e-05
        %v3465 = vadd.f32 %v3459, 1e-05
        %v3466 = vadd.f32 %v3460, 1e-05
        %v3467 = vrsqrt.pop %v3461
        %v3468 = vrsqrt.pop %v3462
        %v3469 = vrsqrt.pop %v3463
        %v3470 = vrsqrt.pop %v3464
        %v3471 = vrsqrt.pop %v3465
        %v3472 = vrsqrt.pop %v3466
        %v3473 = vmul.f32 %v3431, %v3467
        %v3474 = vmul.f32 %v3432, %v3468
        %v3475 = vmul.f32 %v3433, %v3469
        %v3476 = vmul.f32 %v3434, %v3470
        %v3477 = vmul.f32 %v3435, %v3471
        %v3478 = vmul.f32 %v3436, %v3472
        %v3480 = vlaneseq
        %v3481 = vshrl.u32 %v3480, 7
        %v3482 = vsub.s32 0, %v3481
        %v3483 = vrot.slane %v3411, %v3482
        %v3485 = vmul.f32 %v3473, %v3483
        %v3486 = vmul.f32 %v3474, %v3483
        %v3487 = vmul.f32 %v3475, %v3483
        %v3488 = vmul.f32 %v3476, %v3483
        %v3489 = vmul.f32 %v3477, %v3483
        %v3490 = vmul.f32 %v3478, %v3483
        %v3492 = vlaneseq
        %v3493 = vshrl.u32 %v3492, 7
        %v3494 = vsub.s32 0, %v3493
        %v3495 = vrot.slane %v3412, %v3494
        %v3497 = vadd.f32 %v3485, %v3495
        %v3498 = vadd.f32 %v3486, %v3495
        %v3499 = vadd.f32 %v3487, %v3495
        %v3500 = vadd.f32 %v3488, %v3495
        %v3501 = vadd.f32 %v3489, %v3495
        %v3502 = vadd.f32 %v3490, %v3495
        %v3503 = vpack.c.bf16 %v3498, %v3497
        %v3504 = vpack.c.bf16 %v3500, %v3499
        %v3505 = vpack.c.bf16 %v3502, %v3501
        %v3506 = vld [vmem:[%s754] sm:$0xff]
        %v3507 = vld [vmem:[%s754 + $0x8] sm:$0xff]
        %v3508 = vld [vmem:[%s754 + $0x10] sm:$0xff]
        %v3509 = vld [vmem:[%s754 + $0x18] sm:$0xff]
        %v3510 = vld [vmem:[%s754 + $0x20] sm:$0xff]
        %v3511 = vld [vmem:[%s754 + $0x28] sm:$0xff]
        %v3512 = vld [vmem:[%s754 + $0x30] sm:$0xff]
        %v3513 = vld [vmem:[%s754 + $0x38] sm:$0xff]
        %v3514 = vld [vmem:[%s754 + $0x40] sm:$0xff]
        %v3515 = vld [vmem:[%s754 + $0x48] sm:$0xff]
        %v3516 = vld [vmem:[%s754 + $0x50] sm:$0xff]
        %v3517 = vld [vmem:[%s754 + $0x58] sm:$0xff]
        %v3518 = vld [vmem:[%s754 + $0x60] sm:$0xff]
        %v3519 = vld [vmem:[%s754 + $0x68] sm:$0xff]
        %v3520 = vld [vmem:[%s754 + $0x70] sm:$0xff]
        %v3521 = vld [vmem:[%s754 + $0x78] sm:$0xff]
        %v3522 = vld [vmem:[%s754 + $0x80] sm:$0xff]
        %v3523 = vld [vmem:[%s754 + $0x88] sm:$0xff]
        %v3524 = vld [vmem:[%s754 + $0x90] sm:$0xff]
        %v3525 = vld [vmem:[%s754 + $0x98] sm:$0xff]
        %v3526 = vld [vmem:[%s754 + $0xa0] sm:$0xff]
        %v3527 = vld [vmem:[%s754 + $0xa8] sm:$0xff]
        %v3528 = vld [vmem:[%s754 + $0xb0] sm:$0xff]
        %v3529 = vld [vmem:[%s754 + $0xb8] sm:$0xff]
        %v3530 = vld [vmem:[%s754 + $0xc0] sm:$0xff]
        %v3531 = vld [vmem:[%s754 + $0xc8] sm:$0xff]
        %v3532 = vld [vmem:[%s754 + $0xd0] sm:$0xff]
        %v3533 = vld [vmem:[%s754 + $0xd8] sm:$0xff]
        %v3534 = vld [vmem:[%s754 + $0xe0] sm:$0xff]
        %v3535 = vld [vmem:[%s754 + $0xe8] sm:$0xff]
        %v3536 = vld [vmem:[%s754 + $0xf0] sm:$0xff]
        %v3537 = vld [vmem:[%s754 + $0xf8] sm:$0xff]
        %v3538 = vld [vmem:[%s758] sm:$0xf]
        %v3540 = vlaneseq
        %v3541 = vshrl.u32 %v3540, 7
        %v3542 = vsub.s32 0, %v3541
        %v3543 = vrot.slane %v3538, %v3542
        %v3544 = vlaneseq
        %v3545 = vshrl.u32 %v3544, 7
        %v3546 = vsub.s32 1, %v3545
        %v3547 = vrot.slane %v3538, %v3546
        %v3548 = vlaneseq
        %v3549 = vshrl.u32 %v3548, 7
        %v3550 = vsub.s32 2, %v3549
        %v3551 = vrot.slane %v3538, %v3550
        %v3552 = vlaneseq
        %v3553 = vshrl.u32 %v3552, 7
        %v3554 = vsub.s32 3, %v3553
        %v3555 = vrot.slane %v3538, %v3554
        %v3592 = vunpack.c.l.b16 %v3506
        %v3593 = vunpack.c.h.b16 %v3506
        %v3594 = vunpack.c.l.b16 %v3507
        %v3595 = vunpack.c.h.b16 %v3507
        %v3596 = vunpack.c.l.b16 %v3508
        %v3597 = vunpack.c.h.b16 %v3508
        %v3598 = vunpack.c.l.b16 %v3509
        %v3599 = vunpack.c.h.b16 %v3509
        %v3600 = vunpack.c.l.b16 %v3510
        %v3601 = vunpack.c.h.b16 %v3510
        %v3602 = vunpack.c.l.b16 %v3511
        %v3603 = vunpack.c.h.b16 %v3511
        %v3604 = vunpack.c.l.b16 %v3512
        %v3605 = vunpack.c.h.b16 %v3512
        %v3606 = vunpack.c.l.b16 %v3513
        %v3607 = vunpack.c.h.b16 %v3513
        %v3608 = vunpack.c.l.b16 %v3514
        %v3609 = vunpack.c.h.b16 %v3514
        %v3610 = vunpack.c.l.b16 %v3515
        %v3611 = vunpack.c.h.b16 %v3515
        %v3612 = vunpack.c.l.b16 %v3516
        %v3613 = vunpack.c.h.b16 %v3516
        %v3614 = vunpack.c.l.b16 %v3517
        %v3615 = vunpack.c.h.b16 %v3517
        %v3616 = vunpack.c.l.b16 %v3518
        %v3617 = vunpack.c.h.b16 %v3518
        %v3618 = vunpack.c.l.b16 %v3519
        %v3619 = vunpack.c.h.b16 %v3519
        %v3620 = vunpack.c.l.b16 %v3520
        %v3621 = vunpack.c.h.b16 %v3520
        %v3622 = vunpack.c.l.b16 %v3521
        %v3623 = vunpack.c.h.b16 %v3521
        %v3624 = vunpack.c.l.b16 %v3522
        %v3625 = vunpack.c.h.b16 %v3522
        %v3626 = vunpack.c.l.b16 %v3523
        %v3627 = vunpack.c.h.b16 %v3523
        %v3628 = vunpack.c.l.b16 %v3524
        %v3629 = vunpack.c.h.b16 %v3524
        %v3630 = vunpack.c.l.b16 %v3525
        %v3631 = vunpack.c.h.b16 %v3525
        %v3632 = vunpack.c.l.b16 %v3526
        %v3633 = vunpack.c.h.b16 %v3526
        %v3634 = vunpack.c.l.b16 %v3527
        %v3635 = vunpack.c.h.b16 %v3527
        %v3636 = vunpack.c.l.b16 %v3528
        %v3637 = vunpack.c.h.b16 %v3528
        %v3638 = vunpack.c.l.b16 %v3529
        %v3639 = vunpack.c.h.b16 %v3529
        %v3640 = vunpack.c.l.b16 %v3530
        %v3641 = vunpack.c.h.b16 %v3530
        %v3642 = vunpack.c.l.b16 %v3531
        %v3643 = vunpack.c.h.b16 %v3531
        %v3644 = vunpack.c.l.b16 %v3532
        %v3645 = vunpack.c.h.b16 %v3532
        %v3646 = vunpack.c.l.b16 %v3533
        %v3647 = vunpack.c.h.b16 %v3533
        %v3648 = vunpack.c.l.b16 %v3534
        %v3649 = vunpack.c.h.b16 %v3534
        %v3650 = vunpack.c.l.b16 %v3535
        %v3651 = vunpack.c.h.b16 %v3535
        %v3652 = vunpack.c.l.b16 %v3536
        %v3653 = vunpack.c.h.b16 %v3536
        %v3654 = vunpack.c.l.b16 %v3537
        %v3655 = vunpack.c.h.b16 %v3537
        %v3656 = vpack.c.b16 %v3596, %v3592
        %v3657 = vpack.c.b16 %v3597, %v3593
        %v3658 = vpack.c.b16 %v3598, %v3594
        %v3659 = vpack.c.b16 %v3599, %v3595
        %v3660 = vpack.c.b16 %v3604, %v3600
        %v3661 = vpack.c.b16 %v3605, %v3601
        %v3662 = vpack.c.b16 %v3606, %v3602
        %v3663 = vpack.c.b16 %v3607, %v3603
        %v3664 = vpack.c.b16 %v3612, %v3608
        %v3665 = vpack.c.b16 %v3613, %v3609
        %v3666 = vpack.c.b16 %v3614, %v3610
        %v3667 = vpack.c.b16 %v3615, %v3611
        %v3668 = vpack.c.b16 %v3620, %v3616
        %v3669 = vpack.c.b16 %v3621, %v3617
        %v3670 = vpack.c.b16 %v3622, %v3618
        %v3671 = vpack.c.b16 %v3623, %v3619
        %v3672 = vpack.c.b16 %v3628, %v3624
        %v3673 = vpack.c.b16 %v3629, %v3625
        %v3674 = vpack.c.b16 %v3630, %v3626
        %v3675 = vpack.c.b16 %v3631, %v3627
        %v3676 = vpack.c.b16 %v3636, %v3632
        %v3677 = vpack.c.b16 %v3637, %v3633
        %v3678 = vpack.c.b16 %v3638, %v3634
        %v3679 = vpack.c.b16 %v3639, %v3635
        %v3680 = vpack.c.b16 %v3644, %v3640
        %v3681 = vpack.c.b16 %v3645, %v3641
        %v3682 = vpack.c.b16 %v3646, %v3642
        %v3683 = vpack.c.b16 %v3647, %v3643
        %v3684 = vpack.c.b16 %v3652, %v3648
        %v3685 = vpack.c.b16 %v3653, %v3649
        %v3686 = vpack.c.b16 %v3654, %v3650
        %v3687 = vpack.c.b16 %v3655, %v3651
        %3720 = vmatprep.subr.bf16.mxu0 %v3685
        %3721 = vmatpush1.bf16.msra.mxu0 %v3684
        %3722 = vmatprep.subr.bf16.mxu0 %v3681
        %3723 = vmatpush1.bf16.msra.mxu0 %v3680
        %3724 = vmatprep.subr.bf16.mxu0 %v3677
        %3725 = vmatpush1.bf16.msra.mxu0 %v3676
        %3726 = vmatprep.subr.bf16.mxu0 %v3673
        %3727 = vmatpush1.bf16.msra.mxu0 %v3672
        %3728 = vmatprep.subr.bf16.mxu0 %v3669
        %3729 = vmatpush1.bf16.msra.mxu0 %v3668
        %3730 = vmatprep.subr.bf16.mxu0 %v3665
        %3731 = vmatpush1.bf16.msra.mxu0 %v3664
        %3732 = vmatprep.subr.bf16.mxu0 %v3661
        %3733 = vmatpush1.bf16.msra.mxu0 %v3660
        %3734 = vmatprep.subr.bf16.mxu0 %v3657
        %3735 = vmatpush1.bf16.msra.mxu0 %v3656
        %3736 = vmatprep.subr.bf16.mxu0 0
        %3737 = vmatpush2.bf16.msra.mxu0 0
        %3738 = vmatprep.subr.bf16.mxu0 0
        %3739 = vmatpush2.bf16.msra.mxu0 0
        %3740 = vmatprep.subr.bf16.mxu0 0
        %3741 = vmatpush2.bf16.msra.mxu0 0
        %3742 = vmatprep.subr.bf16.mxu0 0
        %3743 = vmatpush2.bf16.msra.mxu0 0
        %3744 = vmatprep.subr.bf16.mxu0 0
        %3745 = vmatpush2.bf16.msra.mxu0 0
        %3746 = vmatprep.subr.bf16.mxu0 0
        %3747 = vmatpush2.bf16.msra.mxu0 0
        %3748 = vmatprep.subr.bf16.mxu0 0
        %3749 = vmatpush2.bf16.msra.mxu0 0
        %3750 = vmatprep.subr.bf16.mxu0 0
        %3751 = vmatpush2.bf16.msra.mxu0 0
        %3752 = vmatprep.mubr.bf16.mxu0 0
        %3753 = vmatmul.mubr.bf16.gmra.mxu0 %v3503
        %v3754 = vpop.f32.mrf.mxu0
        %v3755 = vadd.f32 %v3543, %v3754
        %v3756 = vpop.f32.mrf.mxu0
        %v3757 = vadd.f32 %v3547, %v3756
        %v3758 = vpop.f32.mrf.mxu0
        %v3759 = vadd.f32 %v3543, %v3758
        %v3760 = vpop.f32.mrf.mxu0
        %v3761 = vadd.f32 %v3547, %v3760
        %3762 = vmatprep.mubr.bf16.mxu0 0
        %3763 = vmatmul.mubr.bf16.gmra.mxu0 %v3504
        %v3764 = vpop.f32.mrf.mxu0
        %v3765 = vadd.f32 %v3543, %v3764
        %v3766 = vpop.f32.mrf.mxu0
        %v3767 = vadd.f32 %v3547, %v3766
        %v3768 = vpop.f32.mrf.mxu0
        %v3769 = vadd.f32 %v3543, %v3768
        %v3770 = vpop.f32.mrf.mxu0
        %v3771 = vadd.f32 %v3547, %v3770
        %3772 = vmatprep.mubr.bf16.mxu0 0
        %3773 = vmatmul.mubr.bf16.gmra.mxu0 %v3505
        %v3774 = vpop.f32.mrf.mxu0
        %v3775 = vadd.f32 %v3543, %v3774
        %v3776 = vpop.f32.mrf.mxu0
        %v3777 = vadd.f32 %v3547, %v3776
        %v3778 = vpop.f32.mrf.mxu0
        %v3779 = vadd.f32 %v3543, %v3778
        %v3780 = vpop.f32.mrf.mxu0
        %v3781 = vadd.f32 %v3547, %v3780
        %3782 = vdwg.mxu0
        %3783 = vmatprep.subr.bf16.mxu0 %v3687
        %3784 = vmatpush1.bf16.msra.mxu0 %v3686
        %3785 = vmatprep.subr.bf16.mxu0 %v3683
        %3786 = vmatpush1.bf16.msra.mxu0 %v3682
        %3787 = vmatprep.subr.bf16.mxu0 %v3679
        %3788 = vmatpush1.bf16.msra.mxu0 %v3678
        %3789 = vmatprep.subr.bf16.mxu0 %v3675
        %3790 = vmatpush1.bf16.msra.mxu0 %v3674
        %3791 = vmatprep.subr.bf16.mxu0 %v3671
        %3792 = vmatpush1.bf16.msra.mxu0 %v3670
        %3793 = vmatprep.subr.bf16.mxu0 %v3667
        %3794 = vmatpush1.bf16.msra.mxu0 %v3666
        %3795 = vmatprep.subr.bf16.mxu0 %v3663
        %3796 = vmatpush1.bf16.msra.mxu0 %v3662
        %3797 = vmatprep.subr.bf16.mxu0 %v3659
        %3798 = vmatpush1.bf16.msra.mxu0 %v3658
        %3799 = vmatprep.subr.bf16.mxu0 0
        %3800 = vmatpush2.bf16.msra.mxu0 0
        %3801 = vmatprep.subr.bf16.mxu0 0
        %3802 = vmatpush2.bf16.msra.mxu0 0
        %3803 = vmatprep.subr.bf16.mxu0 0
        %3804 = vmatpush2.bf16.msra.mxu0 0
        %3805 = vmatprep.subr.bf16.mxu0 0
        %3806 = vmatpush2.bf16.msra.mxu0 0
        %3807 = vmatprep.subr.bf16.mxu0 0
        %3808 = vmatpush2.bf16.msra.mxu0 0
        %3809 = vmatprep.subr.bf16.mxu0 0
        %3810 = vmatpush2.bf16.msra.mxu0 0
        %3811 = vmatprep.subr.bf16.mxu0 0
        %3812 = vmatpush2.bf16.msra.mxu0 0
        %3813 = vmatprep.subr.bf16.mxu0 0
        %3814 = vmatpush2.bf16.msra.mxu0 0
        %3815 = vmatprep.mubr.bf16.mxu0 0
        %3816 = vmatmul.mubr.bf16.gmra.mxu0 %v3503
        %v3817 = vpop.f32.mrf.mxu0
        %v3818 = vadd.f32 %v3551, %v3817
        %v3819 = vpop.f32.mrf.mxu0
        %v3820 = vadd.f32 %v3555, %v3819
        %v3821 = vpop.f32.mrf.mxu0
        %v3822 = vadd.f32 %v3551, %v3821
        %v3823 = vpop.f32.mrf.mxu0
        %v3824 = vadd.f32 %v3555, %v3823
        %3825 = vmatprep.mubr.bf16.mxu0 0
        %3826 = vmatmul.mubr.bf16.gmra.mxu0 %v3504
        %v3827 = vpop.f32.mrf.mxu0
        %v3828 = vadd.f32 %v3551, %v3827
        %v3829 = vpop.f32.mrf.mxu0
        %v3830 = vadd.f32 %v3555, %v3829
        %v3831 = vpop.f32.mrf.mxu0
        %v3832 = vadd.f32 %v3551, %v3831
        %v3833 = vpop.f32.mrf.mxu0
        %v3834 = vadd.f32 %v3555, %v3833
        %3835 = vmatprep.mubr.bf16.mxu0 0
        %3836 = vmatmul.mubr.bf16.gmra.mxu0 %v3505
        %v3837 = vpop.f32.mrf.mxu0
        %v3838 = vadd.f32 %v3551, %v3837
        %v3839 = vpop.f32.mrf.mxu0
        %v3840 = vadd.f32 %v3555, %v3839
        %v3841 = vpop.f32.mrf.mxu0
        %v3842 = vadd.f32 %v3551, %v3841
        %v3843 = vpop.f32.mrf.mxu0
        %v3844 = vadd.f32 %v3555, %v3843
        %3845 = vdwg.mxu0
        %v3846 = vmul.f32 %v3755, %v3755
        %v3847 = vmul.f32 %v3757, %v3757
        %v3848 = vmul.f32 %v3818, %v3818
        %v3849 = vmul.f32 %v3820, %v3820
        %v3850 = vmul.f32 %v3759, %v3759
        %v3851 = vmul.f32 %v3761, %v3761
        %v3852 = vmul.f32 %v3822, %v3822
        %v3853 = vmul.f32 %v3824, %v3824
        %v3854 = vmul.f32 %v3765, %v3765
        %v3855 = vmul.f32 %v3767, %v3767
        %v3856 = vmul.f32 %v3828, %v3828
        %v3857 = vmul.f32 %v3830, %v3830
        %v3858 = vmul.f32 %v3769, %v3769
        %v3859 = vmul.f32 %v3771, %v3771
        %v3860 = vmul.f32 %v3832, %v3832
        %v3861 = vmul.f32 %v3834, %v3834
        %v3862 = vmul.f32 %v3775, %v3775
        %v3863 = vmul.f32 %v3777, %v3777
        %v3864 = vmul.f32 %v3838, %v3838
        %v3865 = vmul.f32 %v3840, %v3840
        %v3866 = vmul.f32 %v3779, %v3779
        %v3867 = vmul.f32 %v3781, %v3781
        %v3868 = vmul.f32 %v3842, %v3842
        %v3869 = vmul.f32 %v3844, %v3844
        %v3870 = vmul.f32 %v3755, %v3846
        %v3871 = vmul.f32 %v3757, %v3847
        %v3872 = vmul.f32 %v3818, %v3848
        %v3873 = vmul.f32 %v3820, %v3849
        %v3874 = vmul.f32 %v3759, %v3850
        %v3875 = vmul.f32 %v3761, %v3851
        %v3876 = vmul.f32 %v3822, %v3852
        %v3877 = vmul.f32 %v3824, %v3853
        %v3878 = vmul.f32 %v3765, %v3854
        %v3879 = vmul.f32 %v3767, %v3855
        %v3880 = vmul.f32 %v3828, %v3856
        %v3881 = vmul.f32 %v3830, %v3857
        %v3882 = vmul.f32 %v3769, %v3858
        %v3883 = vmul.f32 %v3771, %v3859
        %v3884 = vmul.f32 %v3832, %v3860
        %v3885 = vmul.f32 %v3834, %v3861
        %v3886 = vmul.f32 %v3775, %v3862
        %v3887 = vmul.f32 %v3777, %v3863
        %v3888 = vmul.f32 %v3838, %v3864
        %v3889 = vmul.f32 %v3840, %v3865
        %v3890 = vmul.f32 %v3779, %v3866
        %v3891 = vmul.f32 %v3781, %v3867
        %v3892 = vmul.f32 %v3842, %v3868
        %v3893 = vmul.f32 %v3844, %v3869
        %v3894 = vmul.f32 %v3870, 0.044715
        %v3895 = vmul.f32 %v3871, 0.044715
        %v3896 = vmul.f32 %v3872, 0.044715
        %v3897 = vmul.f32 %v3873, 0.044715
        %v3898 = vmul.f32 %v3874, 0.044715
        %v3899 = vmul.f32 %v3875, 0.044715
        %v3900 = vmul.f32 %v3876, 0.044715
        %v3901 = vmul.f32 %v3877, 0.044715
        %v3902 = vmul.f32 %v3878, 0.044715
        %v3903 = vmul.f32 %v3879, 0.044715
        %v3904 = vmul.f32 %v3880, 0.044715
        %v3905 = vmul.f32 %v3881, 0.044715
        %v3906 = vmul.f32 %v3882, 0.044715
        %v3907 = vmul.f32 %v3883, 0.044715
        %v3908 = vmul.f32 %v3884, 0.044715
        %v3909 = vmul.f32 %v3885, 0.044715
        %v3910 = vmul.f32 %v3886, 0.044715
        %v3911 = vmul.f32 %v3887, 0.044715
        %v3912 = vmul.f32 %v3888, 0.044715
        %v3913 = vmul.f32 %v3889, 0.044715
        %v3914 = vmul.f32 %v3890, 0.044715
        %v3915 = vmul.f32 %v3891, 0.044715
        %v3916 = vmul.f32 %v3892, 0.044715
        %v3917 = vmul.f32 %v3893, 0.044715
        %v3918 = vadd.f32 %v3755, %v3894
        %v3919 = vadd.f32 %v3757, %v3895
        %v3920 = vadd.f32 %v3818, %v3896
        %v3921 = vadd.f32 %v3820, %v3897
        %v3922 = vadd.f32 %v3759, %v3898
        %v3923 = vadd.f32 %v3761, %v3899
        %v3924 = vadd.f32 %v3822, %v3900
        %v3925 = vadd.f32 %v3824, %v3901
        %v3926 = vadd.f32 %v3765, %v3902
        %v3927 = vadd.f32 %v3767, %v3903
        %v3928 = vadd.f32 %v3828, %v3904
        %v3929 = vadd.f32 %v3830, %v3905
        %v3930 = vadd.f32 %v3769, %v3906
        %v3931 = vadd.f32 %v3771, %v3907
        %v3932 = vadd.f32 %v3832, %v3908
        %v3933 = vadd.f32 %v3834, %v3909
        %v3934 = vadd.f32 %v3775, %v3910
        %v3935 = vadd.f32 %v3777, %v3911
        %v3936 = vadd.f32 %v3838, %v3912
        %v3937 = vadd.f32 %v3840, %v3913
        %v3938 = vadd.f32 %v3779, %v3914
        %v3939 = vadd.f32 %v3781, %v3915
        %v3940 = vadd.f32 %v3842, %v3916
        %v3941 = vadd.f32 %v3844, %v3917
        %v3942 = vmul.f32 %v3918, 0.7978846
        %v3943 = vmul.f32 %v3919, 0.7978846
        %v3944 = vmul.f32 %v3920, 0.7978846
        %v3945 = vmul.f32 %v3921, 0.7978846
        %v3946 = vmul.f32 %v3922, 0.7978846
        %v3947 = vmul.f32 %v3923, 0.7978846
        %v3948 = vmul.f32 %v3924, 0.7978846
        %v3949 = vmul.f32 %v3925, 0.7978846
        %v3950 = vmul.f32 %v3926, 0.7978846
        %v3951 = vmul.f32 %v3927, 0.7978846
        %v3952 = vmul.f32 %v3928, 0.7978846
        %v3953 = vmul.f32 %v3929, 0.7978846
        %v3954 = vmul.f32 %v3930, 0.7978846
        %v3955 = vmul.f32 %v3931, 0.7978846
        %v3956 = vmul.f32 %v3932, 0.7978846
        %v3957 = vmul.f32 %v3933, 0.7978846
        %v3958 = vmul.f32 %v3934, 0.7978846
        %v3959 = vmul.f32 %v3935, 0.7978846
        %v3960 = vmul.f32 %v3936, 0.7978846
        %v3961 = vmul.f32 %v3937, 0.7978846
        %v3962 = vmul.f32 %v3938, 0.7978846
        %v3963 = vmul.f32 %v3939, 0.7978846
        %v3964 = vmul.f32 %v3940, 0.7978846
        %v3965 = vmul.f32 %v3941, 0.7978846
        %v3966 = vtanh.pop %v3942
        %v3967 = vtanh.pop %v3943
        %v3968 = vtanh.pop %v3944
        %v3969 = vtanh.pop %v3945
        %v3970 = vtanh.pop %v3946
        %v3971 = vtanh.pop %v3947
        %v3972 = vtanh.pop %v3948
        %v3973 = vtanh.pop %v3949
        %v3974 = vtanh.pop %v3950
        %v3975 = vtanh.pop %v3951
        %v3976 = vtanh.pop %v3952
        %v3977 = vtanh.pop %v3953
        %v3978 = vtanh.pop %v3954
        %v3979 = vtanh.pop %v3955
        %v3980 = vtanh.pop %v3956
        %v3981 = vtanh.pop %v3957
        %v3982 = vtanh.pop %v3958
        %v3983 = vtanh.pop %v3959
        %v3984 = vtanh.pop %v3960
        %v3985 = vtanh.pop %v3961
        %v3986 = vtanh.pop %v3962
        %v3987 = vtanh.pop %v3963
        %v3988 = vtanh.pop %v3964
        %v3989 = vtanh.pop %v3965
        %v3990 = vadd.f32 %v3966, 1.0
        %v3991 = vadd.f32 %v3967, 1.0
        %v3992 = vadd.f32 %v3968, 1.0
        %v3993 = vadd.f32 %v3969, 1.0
        %v3994 = vadd.f32 %v3970, 1.0
        %v3995 = vadd.f32 %v3971, 1.0
        %v3996 = vadd.f32 %v3972, 1.0
        %v3997 = vadd.f32 %v3973, 1.0
        %v3998 = vadd.f32 %v3974, 1.0
        %v3999 = vadd.f32 %v3975, 1.0
        %v4000 = vadd.f32 %v3976, 1.0
        %v4001 = vadd.f32 %v3977, 1.0
        %v4002 = vadd.f32 %v3978, 1.0
        %v4003 = vadd.f32 %v3979, 1.0
        %v4004 = vadd.f32 %v3980, 1.0
        %v4005 = vadd.f32 %v3981, 1.0
        %v4006 = vadd.f32 %v3982, 1.0
        %v4007 = vadd.f32 %v3983, 1.0
        %v4008 = vadd.f32 %v3984, 1.0
        %v4009 = vadd.f32 %v3985, 1.0
        %v4010 = vadd.f32 %v3986, 1.0
        %v4011 = vadd.f32 %v3987, 1.0
        %v4012 = vadd.f32 %v3988, 1.0
        %v4013 = vadd.f32 %v3989, 1.0
        %v4014 = vmul.f32 %v3990, 0.5
        %v4015 = vmul.f32 %v3991, 0.5
        %v4016 = vmul.f32 %v3992, 0.5
        %v4017 = vmul.f32 %v3993, 0.5
        %v4018 = vmul.f32 %v3994, 0.5
        %v4019 = vmul.f32 %v3995, 0.5
        %v4020 = vmul.f32 %v3996, 0.5
        %v4021 = vmul.f32 %v3997, 0.5
        %v4022 = vmul.f32 %v3998, 0.5
        %v4023 = vmul.f32 %v3999, 0.5
        %v4024 = vmul.f32 %v4000, 0.5
        %v4025 = vmul.f32 %v4001, 0.5
        %v4026 = vmul.f32 %v4002, 0.5
        %v4027 = vmul.f32 %v4003, 0.5
        %v4028 = vmul.f32 %v4004, 0.5
        %v4029 = vmul.f32 %v4005, 0.5
        %v4030 = vmul.f32 %v4006, 0.5
        %v4031 = vmul.f32 %v4007, 0.5
        %v4032 = vmul.f32 %v4008, 0.5
        %v4033 = vmul.f32 %v4009, 0.5
        %v4034 = vmul.f32 %v4010, 0.5
        %v4035 = vmul.f32 %v4011, 0.5
        %v4036 = vmul.f32 %v4012, 0.5
        %v4037 = vmul.f32 %v4013, 0.5
        %v4038 = vmul.f32 %v3755, %v4014
        %v4039 = vmul.f32 %v3757, %v4015
        %v4040 = vmul.f32 %v3818, %v4016
        %v4041 = vmul.f32 %v3820, %v4017
        %v4042 = vmul.f32 %v3759, %v4018
        %v4043 = vmul.f32 %v3761, %v4019
        %v4044 = vmul.f32 %v3822, %v4020
        %v4045 = vmul.f32 %v3824, %v4021
        %v4046 = vmul.f32 %v3765, %v4022
        %v4047 = vmul.f32 %v3767, %v4023
        %v4048 = vmul.f32 %v3828, %v4024
        %v4049 = vmul.f32 %v3830, %v4025
        %v4050 = vmul.f32 %v3769, %v4026
        %v4051 = vmul.f32 %v3771, %v4027
        %v4052 = vmul.f32 %v3832, %v4028
        %v4053 = vmul.f32 %v3834, %v4029
        %v4054 = vmul.f32 %v3775, %v4030
        %v4055 = vmul.f32 %v3777, %v4031
        %v4056 = vmul.f32 %v3838, %v4032
        %v4057 = vmul.f32 %v3840, %v4033
        %v4058 = vmul.f32 %v3779, %v4034
        %v4059 = vmul.f32 %v3781, %v4035
        %v4060 = vmul.f32 %v3842, %v4036
        %v4061 = vmul.f32 %v3844, %v4037
        %v4062 = vpack.c.bf16 %v4042, %v4038
        %v4063 = vpack.c.bf16 %v4043, %v4039
        %v4064 = vpack.c.bf16 %v4044, %v4040
        %v4065 = vpack.c.bf16 %v4045, %v4041
        %v4066 = vpack.c.bf16 %v4050, %v4046
        %v4067 = vpack.c.bf16 %v4051, %v4047
        %v4068 = vpack.c.bf16 %v4052, %v4048
        %v4069 = vpack.c.bf16 %v4053, %v4049
        %v4070 = vpack.c.bf16 %v4058, %v4054
        %v4071 = vpack.c.bf16 %v4059, %v4055
        %v4072 = vpack.c.bf16 %v4060, %v4056
        %v4073 = vpack.c.bf16 %v4061, %v4057
        %v4074 = vld [vmem:[%s763] sm:$0xf]
        %v4075 = vld [vmem:[%s763 + $0x4] sm:$0xf]
        %v4076 = vld [vmem:[%s763 + $0x8] sm:$0xf]
        %v4077 = vld [vmem:[%s763 + $0xc] sm:$0xf]
        %v4078 = vld [vmem:[%s763 + $0x10] sm:$0xf]
        %v4079 = vld [vmem:[%s763 + $0x14] sm:$0xf]
        %v4080 = vld [vmem:[%s763 + $0x18] sm:$0xf]
        %v4081 = vld [vmem:[%s763 + $0x1c] sm:$0xf]
        %v4082 = vld [vmem:[%s763 + $0x20] sm:$0xf]
        %v4083 = vld [vmem:[%s763 + $0x24] sm:$0xf]
        %v4084 = vld [vmem:[%s763 + $0x28] sm:$0xf]
        %v4085 = vld [vmem:[%s763 + $0x2c] sm:$0xf]
        %v4086 = vld [vmem:[%s763 + $0x30] sm:$0xf]
        %v4087 = vld [vmem:[%s763 + $0x34] sm:$0xf]
        %v4088 = vld [vmem:[%s763 + $0x38] sm:$0xf]
        %v4089 = vld [vmem:[%s763 + $0x3c] sm:$0xf]
        %v4090 = vld [vmem:[%s763 + $0x40] sm:$0xf]
        %v4091 = vld [vmem:[%s763 + $0x44] sm:$0xf]
        %v4092 = vld [vmem:[%s763 + $0x48] sm:$0xf]
        %v4093 = vld [vmem:[%s763 + $0x4c] sm:$0xf]
        %v4094 = vld [vmem:[%s763 + $0x50] sm:$0xf]
        %v4095 = vld [vmem:[%s763 + $0x54] sm:$0xf]
        %v4096 = vld [vmem:[%s763 + $0x58] sm:$0xf]
        %v4097 = vld [vmem:[%s763 + $0x5c] sm:$0xf]
        %v4098 = vld [vmem:[%s763 + $0x60] sm:$0xf]
        %v4099 = vld [vmem:[%s763 + $0x64] sm:$0xf]
        %v4100 = vld [vmem:[%s763 + $0x68] sm:$0xf]
        %v4101 = vld [vmem:[%s763 + $0x6c] sm:$0xf]
        %v4102 = vld [vmem:[%s763 + $0x70] sm:$0xf]
        %v4103 = vld [vmem:[%s763 + $0x74] sm:$0xf]
        %v4104 = vld [vmem:[%s763 + $0x78] sm:$0xf]
        %v4105 = vld [vmem:[%s763 + $0x7c] sm:$0xf]
        %v4106 = vld [vmem:[%s763 + $0x80] sm:$0xf]
        %v4107 = vld [vmem:[%s763 + $0x84] sm:$0xf]
        %v4108 = vld [vmem:[%s763 + $0x88] sm:$0xf]
        %v4109 = vld [vmem:[%s763 + $0x8c] sm:$0xf]
        %v4110 = vld [vmem:[%s763 + $0x90] sm:$0xf]
        %v4111 = vld [vmem:[%s763 + $0x94] sm:$0xf]
        %v4112 = vld [vmem:[%s763 + $0x98] sm:$0xf]
        %v4113 = vld [vmem:[%s763 + $0x9c] sm:$0xf]
        %v4114 = vld [vmem:[%s763 + $0xa0] sm:$0xf]
        %v4115 = vld [vmem:[%s763 + $0xa4] sm:$0xf]
        %v4116 = vld [vmem:[%s763 + $0xa8] sm:$0xf]
        %v4117 = vld [vmem:[%s763 + $0xac] sm:$0xf]
        %v4118 = vld [vmem:[%s763 + $0xb0] sm:$0xf]
        %v4119 = vld [vmem:[%s763 + $0xb4] sm:$0xf]
        %v4120 = vld [vmem:[%s763 + $0xb8] sm:$0xf]
        %v4121 = vld [vmem:[%s763 + $0xbc] sm:$0xf]
        %v4122 = vld [vmem:[%s763 + $0xc0] sm:$0xf]
        %v4123 = vld [vmem:[%s763 + $0xc4] sm:$0xf]
        %v4124 = vld [vmem:[%s763 + $0xc8] sm:$0xf]
        %v4125 = vld [vmem:[%s763 + $0xcc] sm:$0xf]
        %v4126 = vld [vmem:[%s763 + $0xd0] sm:$0xf]
        %v4127 = vld [vmem:[%s763 + $0xd4] sm:$0xf]
        %v4128 = vld [vmem:[%s763 + $0xd8] sm:$0xf]
        %v4129 = vld [vmem:[%s763 + $0xdc] sm:$0xf]
        %v4130 = vld [vmem:[%s763 + $0xe0] sm:$0xf]
        %v4131 = vld [vmem:[%s763 + $0xe4] sm:$0xf]
        %v4132 = vld [vmem:[%s763 + $0xe8] sm:$0xf]
        %v4133 = vld [vmem:[%s763 + $0xec] sm:$0xf]
        %v4134 = vld [vmem:[%s763 + $0xf0] sm:$0xf]
        %v4135 = vld [vmem:[%s763 + $0xf4] sm:$0xf]
        %v4136 = vld [vmem:[%s763 + $0xf8] sm:$0xf]
        %v4137 = vld [vmem:[%s763 + $0xfc] sm:$0xf]
        %v4138 = vld [vmem:[%s766] sm:$0x1]
        %v4140 = vlaneseq
        %v4141 = vshrl.u32 %v4140, 7
        %v4142 = vsub.s32 0, %v4141
        %v4143 = vrot.slane %v4138, %v4142
        %v4209 = vunpack.c.l.b16 %v4074
        %v4210 = vunpack.c.l.b16 %v4075
        %v4211 = vunpack.c.l.b16 %v4076
        %v4212 = vunpack.c.l.b16 %v4077
        %v4213 = vunpack.c.l.b16 %v4078
        %v4214 = vunpack.c.l.b16 %v4079
        %v4215 = vunpack.c.l.b16 %v4080
        %v4216 = vunpack.c.l.b16 %v4081
        %v4217 = vunpack.c.l.b16 %v4082
        %v4218 = vunpack.c.l.b16 %v4083
        %v4219 = vunpack.c.l.b16 %v4084
        %v4220 = vunpack.c.l.b16 %v4085
        %v4221 = vunpack.c.l.b16 %v4086
        %v4222 = vunpack.c.l.b16 %v4087
        %v4223 = vunpack.c.l.b16 %v4088
        %v4224 = vunpack.c.l.b16 %v4089
        %v4225 = vunpack.c.l.b16 %v4090
        %v4226 = vunpack.c.l.b16 %v4091
        %v4227 = vunpack.c.l.b16 %v4092
        %v4228 = vunpack.c.l.b16 %v4093
        %v4229 = vunpack.c.l.b16 %v4094
        %v4230 = vunpack.c.l.b16 %v4095
        %v4231 = vunpack.c.l.b16 %v4096
        %v4232 = vunpack.c.l.b16 %v4097
        %v4233 = vunpack.c.l.b16 %v4098
        %v4234 = vunpack.c.l.b16 %v4099
        %v4235 = vunpack.c.l.b16 %v4100
        %v4236 = vunpack.c.l.b16 %v4101
        %v4237 = vunpack.c.l.b16 %v4102
        %v4238 = vunpack.c.l.b16 %v4103
        %v4239 = vunpack.c.l.b16 %v4104
        %v4240 = vunpack.c.l.b16 %v4105
        %v4241 = vunpack.c.l.b16 %v4106
        %v4242 = vunpack.c.l.b16 %v4107
        %v4243 = vunpack.c.l.b16 %v4108
        %v4244 = vunpack.c.l.b16 %v4109
        %v4245 = vunpack.c.l.b16 %v4110
        %v4246 = vunpack.c.l.b16 %v4111
        %v4247 = vunpack.c.l.b16 %v4112
        %v4248 = vunpack.c.l.b16 %v4113
        %v4249 = vunpack.c.l.b16 %v4114
        %v4250 = vunpack.c.l.b16 %v4115
        %v4251 = vunpack.c.l.b16 %v4116
        %v4252 = vunpack.c.l.b16 %v4117
        %v4253 = vunpack.c.l.b16 %v4118
        %v4254 = vunpack.c.l.b16 %v4119
        %v4255 = vunpack.c.l.b16 %v4120
        %v4256 = vunpack.c.l.b16 %v4121
        %v4257 = vunpack.c.l.b16 %v4122
        %v4258 = vunpack.c.l.b16 %v4123
        %v4259 = vunpack.c.l.b16 %v4124
        %v4260 = vunpack.c.l.b16 %v4125
        %v4261 = vunpack.c.l.b16 %v4126
        %v4262 = vunpack.c.l.b16 %v4127
        %v4263 = vunpack.c.l.b16 %v4128
        %v4264 = vunpack.c.l.b16 %v4129
        %v4265 = vunpack.c.l.b16 %v4130
        %v4266 = vunpack.c.l.b16 %v4131
        %v4267 = vunpack.c.l.b16 %v4132
        %v4268 = vunpack.c.l.b16 %v4133
        %v4269 = vunpack.c.l.b16 %v4134
        %v4270 = vunpack.c.l.b16 %v4135
        %v4271 = vunpack.c.l.b16 %v4136
        %v4272 = vunpack.c.l.b16 %v4137
        %v4273 = vpack.c.b16 %v4210, %v4209
        %v4274 = vpack.c.b16 %v4212, %v4211
        %v4275 = vpack.c.b16 %v4214, %v4213
        %v4276 = vpack.c.b16 %v4216, %v4215
        %v4277 = vpack.c.b16 %v4218, %v4217
        %v4278 = vpack.c.b16 %v4220, %v4219
        %v4279 = vpack.c.b16 %v4222, %v4221
        %v4280 = vpack.c.b16 %v4224, %v4223
        %v4281 = vpack.c.b16 %v4226, %v4225
        %v4282 = vpack.c.b16 %v4228, %v4227
        %v4283 = vpack.c.b16 %v4230, %v4229
        %v4284 = vpack.c.b16 %v4232, %v4231
        %v4285 = vpack.c.b16 %v4234, %v4233
        %v4286 = vpack.c.b16 %v4236, %v4235
        %v4287 = vpack.c.b16 %v4238, %v4237
        %v4288 = vpack.c.b16 %v4240, %v4239
        %v4289 = vpack.c.b16 %v4242, %v4241
        %v4290 = vpack.c.b16 %v4244, %v4243
        %v4291 = vpack.c.b16 %v4246, %v4245
        %v4292 = vpack.c.b16 %v4248, %v4247
        %v4293 = vpack.c.b16 %v4250, %v4249
        %v4294 = vpack.c.b16 %v4252, %v4251
        %v4295 = vpack.c.b16 %v4254, %v4253
        %v4296 = vpack.c.b16 %v4256, %v4255
        %v4297 = vpack.c.b16 %v4258, %v4257
        %v4298 = vpack.c.b16 %v4260, %v4259
        %v4299 = vpack.c.b16 %v4262, %v4261
        %v4300 = vpack.c.b16 %v4264, %v4263
        %v4301 = vpack.c.b16 %v4266, %v4265
        %v4302 = vpack.c.b16 %v4268, %v4267
        %v4303 = vpack.c.b16 %v4270, %v4269
        %v4304 = vpack.c.b16 %v4272, %v4271
        %4337 = vmatprep.subr.bf16.mxu0 0
        %4338 = vmatpush1.bf16.msra.mxu0 %v4280
        %4339 = vmatprep.subr.bf16.mxu0 0
        %4340 = vmatpush1.bf16.msra.mxu0 %v4279
        %4341 = vmatprep.subr.bf16.mxu0 0
        %4342 = vmatpush1.bf16.msra.mxu0 %v4278
        %4343 = vmatprep.subr.bf16.mxu0 0
        %4344 = vmatpush1.bf16.msra.mxu0 %v4277
        %4345 = vmatprep.subr.bf16.mxu0 0
        %4346 = vmatpush1.bf16.msra.mxu0 %v4276
        %4347 = vmatprep.subr.bf16.mxu0 0
        %4348 = vmatpush1.bf16.msra.mxu0 %v4275
        %4349 = vmatprep.subr.bf16.mxu0 0
        %4350 = vmatpush1.bf16.msra.mxu0 %v4274
        %4351 = vmatprep.subr.bf16.mxu0 0
        %4352 = vmatpush1.bf16.msra.mxu0 %v4273
        %4353 = vmatprep.subr.bf16.mxu0 0
        %4354 = vmatpush2.bf16.msra.mxu0 %v4288
        %4355 = vmatprep.subr.bf16.mxu0 0
        %4356 = vmatpush2.bf16.msra.mxu0 %v4287
        %4357 = vmatprep.subr.bf16.mxu0 0
        %4358 = vmatpush2.bf16.msra.mxu0 %v4286
        %4359 = vmatprep.subr.bf16.mxu0 0
        %4360 = vmatpush2.bf16.msra.mxu0 %v4285
        %4361 = vmatprep.subr.bf16.mxu0 0
        %4362 = vmatpush2.bf16.msra.mxu0 %v4284
        %4363 = vmatprep.subr.bf16.mxu0 0
        %4364 = vmatpush2.bf16.msra.mxu0 %v4283
        %4365 = vmatprep.subr.bf16.mxu0 0
        %4366 = vmatpush2.bf16.msra.mxu0 %v4282
        %4367 = vmatprep.subr.bf16.mxu0 0
        %4368 = vmatpush2.bf16.msra.mxu0 %v4281
        %4369 = vmatprep.mubr.bf16.mxu0 %v4063
        %4370 = vmatmul.mubr.bf16.gmra.mxu0 %v4062
        %v4371 = vpop.f32.mrf.mxu0
        %v4372 = vadd.f32 %v4143, %v4371
        %v4373 = vpop.f32.mrf.mxu0
        %v4374 = vpop.f32.mrf.mxu0
        %v4375 = vadd.f32 %v4143, %v4374
        %v4376 = vpop.f32.mrf.mxu0
        %4377 = vmatprep.mubr.bf16.mxu0 %v4067
        %4378 = vmatmul.mubr.bf16.gmra.mxu0 %v4066
        %v4379 = vpop.f32.mrf.mxu0
        %v4380 = vadd.f32 %v4143, %v4379
        %v4381 = vpop.f32.mrf.mxu0
        %v4382 = vpop.f32.mrf.mxu0
        %v4383 = vadd.f32 %v4143, %v4382
        %v4384 = vpop.f32.mrf.mxu0
        %4385 = vmatprep.mubr.bf16.mxu0 %v4071
        %4386 = vmatmul.mubr.bf16.gmra.mxu0 %v4070
        %v4387 = vpop.f32.mrf.mxu0
        %v4388 = vadd.f32 %v4143, %v4387
        %v4389 = vpop.f32.mrf.mxu0
        %v4390 = vpop.f32.mrf.mxu0
        %v4391 = vadd.f32 %v4143, %v4390
        %v4392 = vpop.f32.mrf.mxu0
        %4393 = vdwg.mxu0
        %4394 = vmatprep.subr.bf16.mxu0 0
        %4395 = vmatpush1.bf16.msra.mxu0 %v4296
        %4396 = vmatprep.subr.bf16.mxu0 0
        %4397 = vmatpush1.bf16.msra.mxu0 %v4295
        %4398 = vmatprep.subr.bf16.mxu0 0
        %4399 = vmatpush1.bf16.msra.mxu0 %v4294
        %4400 = vmatprep.subr.bf16.mxu0 0
        %4401 = vmatpush1.bf16.msra.mxu0 %v4293
        %4402 = vmatprep.subr.bf16.mxu0 0
        %4403 = vmatpush1.bf16.msra.mxu0 %v4292
        %4404 = vmatprep.subr.bf16.mxu0 0
        %4405 = vmatpush1.bf16.msra.mxu0 %v4291
        %4406 = vmatprep.subr.bf16.mxu0 0
        %4407 = vmatpush1.bf16.msra.mxu0 %v4290
        %4408 = vmatprep.subr.bf16.mxu0 0
        %4409 = vmatpush1.bf16.msra.mxu0 %v4289
        %4410 = vmatprep.subr.bf16.mxu0 0
        %4411 = vmatpush2.bf16.msra.mxu0 %v4304
        %4412 = vmatprep.subr.bf16.mxu0 0
        %4413 = vmatpush2.bf16.msra.mxu0 %v4303
        %4414 = vmatprep.subr.bf16.mxu0 0
        %4415 = vmatpush2.bf16.msra.mxu0 %v4302
        %4416 = vmatprep.subr.bf16.mxu0 0
        %4417 = vmatpush2.bf16.msra.mxu0 %v4301
        %4418 = vmatprep.subr.bf16.mxu0 0
        %4419 = vmatpush2.bf16.msra.mxu0 %v4300
        %4420 = vmatprep.subr.bf16.mxu0 0
        %4421 = vmatpush2.bf16.msra.mxu0 %v4299
        %4422 = vmatprep.subr.bf16.mxu0 0
        %4423 = vmatpush2.bf16.msra.mxu0 %v4298
        %4424 = vmatprep.subr.bf16.mxu0 0
        %4425 = vmatpush2.bf16.msra.mxu0 %v4297
        %4426 = vmatprep.mubr.bf16.mxu0 %v4065
        %4427 = vmatmul.mubr.bf16.gmra.mxu0 %v4064
        %v4428 = vpop.f32.mrf.mxu0
        %v4429 = vadd.f32 %v4372, %v4428
        %v4430 = vpop.f32.mrf.mxu0
        %v4431 = vpop.f32.mrf.mxu0
        %v4432 = vadd.f32 %v4375, %v4431
        %v4433 = vpop.f32.mrf.mxu0
        %4434 = vmatprep.mubr.bf16.mxu0 %v4069
        %4435 = vmatmul.mubr.bf16.gmra.mxu0 %v4068
        %v4436 = vpop.f32.mrf.mxu0
        %v4437 = vadd.f32 %v4380, %v4436
        %v4438 = vpop.f32.mrf.mxu0
        %v4439 = vpop.f32.mrf.mxu0
        %v4440 = vadd.f32 %v4383, %v4439
        %v4441 = vpop.f32.mrf.mxu0
        %4442 = vmatprep.mubr.bf16.mxu0 %v4073
        %4443 = vmatmul.mubr.bf16.gmra.mxu0 %v4072
        %v4444 = vpop.f32.mrf.mxu0
        %v4445 = vadd.f32 %v4388, %v4444
        %v4446 = vpop.f32.mrf.mxu0
        %v4447 = vpop.f32.mrf.mxu0
        %v4448 = vadd.f32 %v4391, %v4447
        %v4449 = vpop.f32.mrf.mxu0
        %4450 = vdwg.mxu0
        %v4451 = vadd.f32 %v3405, %v4429
        %v4452 = vadd.f32 %v3406, %v4432
        %v4453 = vadd.f32 %v3407, %v4437
        %v4454 = vadd.f32 %v3408, %v4440
        %v4455 = vadd.f32 %v3409, %v4445
        %v4456 = vadd.f32 %v3410, %v4448
        %4457 = vst [vmem:[#allocation2] sm:$0xff] %v4451
        %4458 = vst [vmem:[#allocation2 + $0x8] sm:$0xff] %v4452
        %4459 = vst [vmem:[#allocation2 + $0x10] sm:$0xff] %v4453
        %4460 = vst [vmem:[#allocation2 + $0x18] sm:$0xff] %v4454
        %4461 = vst [vmem:[#allocation2 + $0x20] sm:$0xff] %v4455
        %4462 = vst [vmem:[#allocation2 + $0x28] sm:$0xff] %v4456
        %p4463 = scmp.eq.s32.totalorder %s31, 1
        // Predicated region
        $region101: #{uni3d_forward.3} parent=95 // pred_check
          %p4464 = pneg %p4463
        $region102: #{uni3d_forward.3} parent=95 // pred_check_branch
          %4466 = sbr.rel (%p4464) target = $region104
        $region103: #{uni3d_forward.3} parent=95 // pred_region
          %v4468 = vrot.slane %v4454, 7
          %vm4470 = vcmask 1040384
          %v4471 = vsel %vm4470, %v4451, %v4468
          %v4472 = vld [vmem:[%s13] sm:$0x1]
          %v4473 = vld [vmem:[%s14] sm:$0x1]
          %vm4474 = vcmask 1041408
          %v4475 = vsel %vm4474, %v4471, 0.0
          %4476 = vadd.xlane.f32.xlu0 %v4475
          %v4477 = vpop.xlane.xlu0 %4476
          %v4478 = vmul.f32 %v4477, %v810
          %v4479 = vsub.f32 %v4471, %v4478
          %v4480 = vmul.f32 %v4479, %v4479
          %v4481 = vsel %vm4474, %v4480, 0.0
          %4482 = vadd.xlane.f32.xlu0 %v4481
          %v4483 = vpop.xlane.xlu0 %4482
          %v4484 = vmul.f32 %v4483, %v810
          %v4485 = vadd.f32 %v4484, 1e-05
          %v4486 = vrsqrt.pop %v4485
          %v4487 = vmul.f32 %v4479, %v4486
          %v4489 = vlaneseq
          %v4490 = vshrl.u32 %v4489, 7
          %v4491 = vsub.s32 0, %v4490
          %v4492 = vrot.slane %v4472, %v4491
          %v4494 = vmul.f32 %v4487, %v4492
          %v4496 = vlaneseq
          %v4497 = vshrl.u32 %v4496, 7
          %v4498 = vsub.s32 0, %v4497
          %v4499 = vrot.slane %v4473, %v4498
          %v4501 = vadd.f32 %v4494, %v4499
          %v4502 = vld [vmem:[%s15] sm:$0x1]
          %v4503 = vld [vmem:[%s16] sm:$0x1]
          %v4504 = vsel %vm4474, %v4501, 0.0
          %4505 = vadd.xlane.f32.xlu0 %v4504
          %v4506 = vpop.xlane.xlu0 %4505
          %v4507 = vmul.f32 %v4506, %v810
          %v4508 = vsub.f32 %v4501, %v4507
          %v4509 = vmul.f32 %v4508, %v4508
          %v4510 = vsel %vm4474, %v4509, 0.0
          %4511 = vadd.xlane.f32.xlu0 %v4510
          %v4512 = vpop.xlane.xlu0 %4511
          %v4513 = vmul.f32 %v4512, %v810
          %v4514 = vadd.f32 %v4513, 1e-05
          %v4515 = vrsqrt.pop %v4514
          %v4516 = vmul.f32 %v4508, %v4515
          %v4518 = vlaneseq
          %v4519 = vshrl.u32 %v4518, 7
          %v4520 = vsub.s32 0, %v4519
          %v4521 = vrot.slane %v4502, %v4520
          %v4523 = vmul.f32 %v4516, %v4521
          %v4525 = vlaneseq
          %v4526 = vshrl.u32 %v4525, 7
          %v4527 = vsub.s32 0, %v4526
          %v4528 = vrot.slane %v4503, %v4527
          %v4530 = vadd.f32 %v4523, %v4528
          %v4531 = vpack.c.bf16 %v4530, %v4530
          %v4532 = vld [vmem:[%s17] sm:$0xf]
          %v4533 = vld [vmem:[%s17 + $0x4] sm:$0xf]
          %v4534 = vld [vmem:[%s17 + $0x8] sm:$0xf]
          %v4535 = vld [vmem:[%s17 + $0xc] sm:$0xf]
          %v4536 = vld [vmem:[%s17 + $0x10] sm:$0xf]
          %v4537 = vld [vmem:[%s17 + $0x14] sm:$0xf]
          %v4538 = vld [vmem:[%s17 + $0x18] sm:$0xf]
          %v4539 = vld [vmem:[%s17 + $0x1c] sm:$0xf]
          %v4540 = vld [vmem:[%s17 + $0x20] sm:$0xf]
          %v4541 = vld [vmem:[%s17 + $0x24] sm:$0xf]
          %v4542 = vld [vmem:[%s17 + $0x28] sm:$0xf]
          %v4543 = vld [vmem:[%s17 + $0x2c] sm:$0xf]
          %v4544 = vld [vmem:[%s17 + $0x30] sm:$0xf]
          %v4545 = vld [vmem:[%s17 + $0x34] sm:$0xf]
          %v4546 = vld [vmem:[%s17 + $0x38] sm:$0xf]
          %v4547 = vld [vmem:[%s17 + $0x3c] sm:$0xf]
          %v4548 = vld [vmem:[%s18] sm:$0x1]
          %v4550 = vlaneseq
          %v4551 = vshrl.u32 %v4550, 7
          %v4552 = vsub.s32 0, %v4551
          %v4553 = vrot.slane %v4548, %v4552
          %v4571 = vunpack.c.l.b16 %v4532
          %v4572 = vunpack.c.l.b16 %v4533
          %v4573 = vunpack.c.l.b16 %v4534
          %v4574 = vunpack.c.l.b16 %v4535
          %v4575 = vunpack.c.l.b16 %v4536
          %v4576 = vunpack.c.l.b16 %v4537
          %v4577 = vunpack.c.l.b16 %v4538
          %v4578 = vunpack.c.l.b16 %v4539
          %v4579 = vunpack.c.l.b16 %v4540
          %v4580 = vunpack.c.l.b16 %v4541
          %v4581 = vunpack.c.l.b16 %v4542
          %v4582 = vunpack.c.l.b16 %v4543
          %v4583 = vunpack.c.l.b16 %v4544
          %v4584 = vunpack.c.l.b16 %v4545
          %v4585 = vunpack.c.l.b16 %v4546
          %v4586 = vunpack.c.l.b16 %v4547
          %v4587 = vpack.c.b16 %v4572, %v4571
          %v4588 = vpack.c.b16 %v4574, %v4573
          %v4589 = vpack.c.b16 %v4576, %v4575
          %v4590 = vpack.c.b16 %v4578, %v4577
          %v4591 = vpack.c.b16 %v4580, %v4579
          %v4592 = vpack.c.b16 %v4582, %v4581
          %v4593 = vpack.c.b16 %v4584, %v4583
          %v4594 = vpack.c.b16 %v4586, %v4585
          %4603 = vmatprep.subr.bf16.mxu0 0
          %4604 = vmatpush1.bf16.msra.mxu0 %v4594
          %4605 = vmatprep.subr.bf16.mxu0 0
          %4606 = vmatpush1.bf16.msra.mxu0 %v4593
          %4607 = vmatprep.subr.bf16.mxu0 0
          %4608 = vmatpush1.bf16.msra.mxu0 %v4592
          %4609 = vmatprep.subr.bf16.mxu0 0
          %4610 = vmatpush1.bf16.msra.mxu0 %v4591
          %4611 = vmatprep.subr.bf16.mxu0 0
          %4612 = vmatpush1.bf16.msra.mxu0 %v4590
          %4613 = vmatprep.subr.bf16.mxu0 0
          %4614 = vmatpush1.bf16.msra.mxu0 %v4589
          %4615 = vmatprep.subr.bf16.mxu0 0
          %4616 = vmatpush1.bf16.msra.mxu0 %v4588
          %4617 = vmatprep.subr.bf16.mxu0 0
          %4618 = vmatpush1.bf16.msra.mxu0 %v4587
          %4619 = vmatprep.subr.bf16.mxu0 0
          %4620 = vmatpush2.bf16.msra.mxu0 0
          %4621 = vmatprep.subr.bf16.mxu0 0
          %4622 = vmatpush2.bf16.msra.mxu0 0
          %4623 = vmatprep.subr.bf16.mxu0 0
          %4624 = vmatpush2.bf16.msra.mxu0 0
          %4625 = vmatprep.subr.bf16.mxu0 0
          %4626 = vmatpush2.bf16.msra.mxu0 0
          %4627 = vmatprep.subr.bf16.mxu0 0
          %4628 = vmatpush2.bf16.msra.mxu0 0
          %4629 = vmatprep.subr.bf16.mxu0 0
          %4630 = vmatpush2.bf16.msra.mxu0 0
          %4631 = vmatprep.subr.bf16.mxu0 0
          %4632 = vmatpush2.bf16.msra.mxu0 0
          %4633 = vmatprep.subr.bf16.mxu0 0
          %4634 = vmatpush2.bf16.msra.mxu0 0
          %4635 = vmatprep.mubr.bf16.mxu0 0
          %4636 = vmatmul.mubr.bf16.gmra.mxu0 %v4531
          %v4637 = vpop.f32.mrf.mxu0
          %v4638 = vadd.f32 %v4553, %v4637
          %v4639 = vpop.f32.mrf.mxu0
          %v4640 = vpop.f32.mrf.mxu0
          %v4641 = vpop.f32.mrf.mxu0
          %4642 = vdwg.mxu0
          %4643 = vst [vmem:[#allocation5] sm:$0x3] %v4638
        $region104: #{uni3d_forward.3} parent=95 // pred_fallthru
          _
        // Predicated region
        $region105: #{uni3d_forward.3} parent=95 // pred_check
          %p4644 = pneg %p503
        $region106: #{uni3d_forward.3} parent=95 // pred_check_branch
          %4646 = sbr.rel (%p4644) target = $region108
        $region107: #{uni3d_forward.3} parent=95 // pred_region
          %s4648 = ssub.s32 32, 32
          %4649 = vsyncadd [#allocation6], %s4648
          %s4651 = sshll.u32 [#allocation5], 4
          %s4652 = int_to_ptr.vmem [resolvable:$true] %s4651
          %4654 = dma.vmem_to_hbm [thread:$0]  %s4652, 32, %s19, [#allocation6]
        $region108: #{uni3d_forward.3} parent=95 // pred_fallthru
          _
        // Predicated region
        $region109: #{uni3d_forward.3} parent=95 // pred_check
          %p4655 = pneg %p503
        $region110: #{uni3d_forward.3} parent=95 // pred_check_branch
          %4657 = sbr.rel (%p4655) target = $region112
        $region111: #{uni3d_forward.3} parent=95 // pred_region
          %4658 = dma.done [#allocation6], 32
        $region112: #{uni3d_forward.3} parent=95 // pred_fallthru
          _
      $region96: #{uni3d_forward.3} parent=5 // pred_fallthru
        _
      %p4659 = scmp.le.s32.totalorder 2, %s26
      // Predicated region
      $region113: #{uni3d_forward.3} parent=5 // pred_check
        %p4660 = pneg %p4659
      $region114: #{uni3d_forward.3} parent=5 // pred_check_branch
        %4662 = sbr.rel (%p4660) target = $region116
      $region115: #{uni3d_forward.3} parent=5 // pred_region
        %s4663 = ssub.s32 %s26, 2
      $region116: #{uni3d_forward.3} parent=5 // pred_fallthru
        _
    $region6: #{uni3d_forward.3} parent=1 // loop_footer
      %s30 = sadd.s32 1, %s26
    $region7: #{uni3d_forward.3} parent=1 // loop_footer_branch
      %25 = sbr.rel target = $region3
    $region8: #{uni3d_forward.3} parent=1 // loop_exit
      _
    %4664 = vsyncpa [#allocation6], 1
    %s4665 = scalar_lea.sflag [#allocation6], 1
    %4666 = vsyncpa %s4665, 1

</llo_original>
